<compile_context>
chip_gen: v6e
topology: v6e:2x2x1
jax: 0.10.0
libtpu: 0.0.40
codegen_flags: <defaults>
</compile_context>

<pallas_src>
import functools
import math

import jax
import jax.numpy as jnp
from jax import lax
from jax.experimental import pallas as pl
from jax.experimental.pallas import tpu as pltpu

NEG_BIG = -1.0e30  # finite "-inf"; plain Python float -> compile-time literal


# ----------------------------- Pallas kernel -----------------------------

def _flash_sdpa_kernel(q_ref, k_ref, v_ref, *rest, scale, compute_dtype, causal,
                       has_mask, block_q, block_k, num_heads, dv):
    # q_ref: (1, H, Bq, dk)   k_ref: (1, H, Bk, dk)   v_ref: (1, H, Bk, dv)
    # mask_ref (optional): (1, Bq, Bk) bf16, 1.0 == masked
    # o_ref: (1, Bq, H*dv)    scratch: m (H,Bq,1), l (H,Bq,1), acc (H,Bq,dv) f32
    if has_mask:
        m_ref, o_ref, m_sc, l_sc, acc_sc = rest
    else:
        o_ref, m_sc, l_sc, acc_sc = rest
        m_ref = None

    iq = pl.program_id(1)
    ik = pl.program_id(2)
    use_bf16 = jnp.dtype(compute_dtype) == jnp.dtype(jnp.bfloat16)

    @pl.when(ik == 0)
    def _init():
        m_sc[...] = jnp.full(m_sc.shape, -jnp.inf, dtype=m_sc.dtype)
        l_sc[...] = jnp.zeros(l_sc.shape, dtype=l_sc.dtype)
        acc_sc[...] = jnp.zeros(acc_sc.shape, dtype=acc_sc.dtype)

    def compute_block():
        # Fold 1/sqrt(d_k) into Q (smaller tile than the score matrix).
        q = q_ref[0] * scale                       # (H, Bq, dk) compute dtype
        k = k_ref[0]                               # (H, Bk, dk)
        v = v_ref[0]                               # (H, Bk, dv)

        # Batched QK^T over heads, f32 accumulation on the MXU.
        s = jnp.einsum("hqd,hkd->hqk", q, k,
                       preferred_element_type=jnp.float32)       # (H, Bq, Bk) f32

        if m_ref is not None:
            # Additive masking (== masked_fill(mask, -inf) for not-fully-masked rows).
            s = s + m_ref[0].astype(jnp.float32)[None, :, :] * NEG_BIG
        if causal:
            # In-kernel causal mask: zero DMA, zero VMEM.
            q_pos = iq * block_q + lax.broadcasted_iota(jnp.int32, (block_q, block_k), 0)
            k_pos = ik * block_k + lax.broadcasted_iota(jnp.int32, (block_q, block_k), 1)
            s = s + jnp.where(k_pos > q_pos, NEG_BIG, 0.0)[None, :, :]

        # Online (streaming) softmax update.
        m_prev = m_sc[...]
        m_new = jnp.maximum(m_prev, jnp.max(s, axis=-1, keepdims=True))
        alpha = jnp.exp(m_prev - m_new)
        su = s - m_new
        if use_bf16:
            p = jnp.exp(su.astype(jnp.bfloat16))   # bf16 EUP exp (v6e/v7x)
        else:
            p = jnp.exp(su)                        # f32 exp (exact path / v5e)
        p_sum = jnp.sum(p, axis=-1, keepdims=True, dtype=jnp.float32)
        pv = jnp.einsum("hqk,hkd->hqd", p.astype(compute_dtype), v,
                        preferred_element_type=jnp.float32)      # (H, Bq, dv) f32

        l_sc[...] = alpha * l_sc[...] + p_sum
        acc_sc[...] = alpha * acc_sc[...] + pv
        m_sc[...] = m_new

    if causal:
        # Skip key blocks that lie entirely above the diagonal.
        @pl.when(ik * block_k <= iq * block_q + (block_q - 1))
        def _():
            compute_block()
    else:
        compute_block()

    @pl.when(ik == pl.num_programs(2) - 1)
    def _finalize():
        inv = pl.reciprocal(l_sc[...], approx=use_bf16)          # EUP reciprocal
        out = acc_sc[...] * inv                                  # (H, Bq, dv) f32
        # Fold heads into the lane dim -> one unmasked, lane-dense (Bq, H*dv) store.
        out_folded = jnp.concatenate([out[h] for h in range(num_heads)], axis=-1)
        o_ref[0] = out_folded.astype(o_ref.dtype)


# ----------------------------- wrapper -----------------------------

def scaled_dot_product_attention(q, k, v, mask=None, *, key_dim=None,
                                 compute_dtype=jnp.float32, causal=False,
                                 block_q=None, block_k=None,
                                 fold_heads=False, vmem_limit_bytes=None):
    """Fused flash-style scaled-dot-product attention.

    q: (B, H, Sq, dk), k: (B, H, Sk, dk), v: (B, H, Sk, dv)
    mask: optional (B, Sq, Sk), nonzero == masked, broadcast over heads.
    causal=True generates the causal mask in-kernel (no mask array needed).
    """
    B, H, Sq, dk = q.shape
    _, _, Sk, dv = v.shape
    if key_dim is None:
        key_dim = dk
    scale = 1.0 / math.sqrt(key_dim)

    # v6e/v5e (128 MiB VMEM) tolerate block_q up to 512; keep <=256 for v7x (64 MiB).
    if block_q is None:
        block_q = min(Sq, 256)
    if block_k is None:
        block_k = min(Sk, 512)
    assert Sq % block_q == 0, "Sq must be divisible by block_q"
    assert Sk % block_k == 0, "Sk must be divisible by block_k"
    nq, nk = Sq // block_q, Sk // block_k

    # Wrapper-side casts: on the bf16 path this halves HBM->VMEM DMA and VMEM footprint.
    qc = q.astype(compute_dtype)
    kc = k.astype(compute_dtype)
    vc = v.astype(compute_dtype)

    in_specs = [
        pl.BlockSpec((1, H, block_q, dk), lambda b, iq, ik: (b, 0, iq, 0)),
        pl.BlockSpec((1, H, block_k, dk), lambda b, iq, ik: (b, 0, ik, 0)),
        pl.BlockSpec((1, H, block_k, dv), lambda b, iq, ik: (b, 0, ik, 0)),
    ]
    args = [qc, kc, vc]
    if mask is not None:
        in_specs.append(pl.BlockSpec((1, block_q, block_k),
                                     lambda b, iq, ik: (b, iq, ik)))
        args.append((mask != 0).astype(jnp.bfloat16))   # half-width mask DMA

    kernel = functools.partial(
        _flash_sdpa_kernel, scale=scale, compute_dtype=compute_dtype, causal=causal,
        has_mask=mask is not None, block_q=block_q, block_k=block_k,
        num_heads=H, dv=dv)

    # VMEM budget: double-buffered blocks + f32 online-softmax scratch + score temporaries.
    itemsize = jnp.dtype(compute_dtype).itemsize
    out_itemsize = jnp.dtype(q.dtype).itemsize
    block_bytes = (
        2 * H * block_q * dk * itemsize                       # Q (double-buffered)
        + 2 * H * block_k * dk * itemsize                     # K
        + 2 * H * block_k * dv * itemsize                     # V
        + (2 * block_q * block_k * 2 if mask is not None else 0)   # bf16 mask
        + 2 * block_q * H * dv * out_itemsize                 # lane-dense out block
        + H * block_q * (dv + 2) * 4                          # m/l/acc scratch (f32)
    )
    temp_bytes = 4 * H * block_q * block_k * 4                # s / p / exp temporaries
    if vmem_limit_bytes is None:
        vmem_limit_bytes = min(max(2 * (block_bytes + temp_bytes) + (4 << 20), 32 << 20),
                               100 << 20)

    grid_spec = pltpu.PrefetchScalarGridSpec(
        num_scalar_prefetch=0,
        grid=(B, nq, nk),
        in_specs=in_specs,
        out_specs=pl.BlockSpec((1, block_q, H * dv), lambda b, iq, ik: (b, iq, 0)),
        scratch_shapes=[
            pltpu.VMEM((H, block_q, 1), jnp.float32),    # running max
            pltpu.VMEM((H, block_q, 1), jnp.float32),    # running sum
            pltpu.VMEM((H, block_q, dv), jnp.float32),   # output accumulator
        ],
    )

    out_folded = pl.pallas_call(
        kernel,
        out_shape=jax.ShapeDtypeStruct((B, Sq, H * dv), q.dtype),
        grid_spec=grid_spec,
        compiler_params=pltpu.CompilerParams(
            dimension_semantics=("parallel", "parallel", "arbitrary"),
            vmem_limit_bytes=vmem_limit_bytes),
    )(*args)

    if fold_heads:
        return out_folded                                   # (B, Sq, H*dv) — MHA layout
    return out_folded.reshape(B, Sq, H, dv).transpose(0, 2, 1, 3)   # module layout


# ----------------------------- pure-JAX reference -----------------------------

def sdpa_ref(q, k, v, mask=None, *, key_dim, compute_dtype=jnp.float32):
    scale = 1.0 / math.sqrt(key_dim)
    qc = (q.astype(compute_dtype) * scale)
    kc = k.astype(compute_dtype)
    vc = v.astype(compute_dtype)
    s = jnp.einsum("bhqd,bhkd->bhqk", qc, kc, preferred_element_type=jnp.float32)
    if mask is not None:
        s = jnp.where(mask[:, None, :, :] != 0, -jnp.inf, s)
    p = jax.nn.softmax(s, axis=-1)
    return jnp.einsum("bhqk,bhkd->bhqd", p.astype(compute_dtype), vc,
                      preferred_element_type=jnp.float32)


# ------------------------------------ main ------------------------------------

if __name__ == "__main__":
    B, H, S, dk, dv = 2, 4, 256, 64, 64

    key = jax.random.PRNGKey(0)
    kq, kk, kv = jax.random.split(key, 3)
    q = jax.random.normal(kq, (B, H, S, dk), jnp.float32)
    k = jax.random.normal(kk, (B, H, S, dk), jnp.float32)
    v = jax.random.normal(kv, (B, H, S, dv), jnp.float32)

    # causal mask (1.0 = masked), broadcast over batch; no fully-masked rows.
    causal_np = (jnp.arange(S)[None, :] > jnp.arange(S)[:, None]).astype(jnp.float32)
    mask = jnp.broadcast_to(causal_np, (B, S, S))

    ref_masked = sdpa_ref(q, k, v, mask, key_dim=dk)

    # 1) f32 path, explicit (DMA'd) mask — exercises nq=2, nk=2 flash tiling.
    out = jax.block_until_ready(
        scaled_dot_product_attention(q, k, v, mask, key_dim=dk,
                                     block_q=128, block_k=128))
    assert out.shape == (B, H, S, dv)
    assert jnp.allclose(out, ref_masked, atol=2e-3, rtol=2e-3), "f32 masked mismatch"

    # 2) f32 path, in-kernel causal mask (zero mask DMA, upper blocks skipped).
    out_c = jax.block_until_ready(
        scaled_dot_product_attention(q, k, v, None, key_dim=dk, causal=True,
                                     block_q=128, block_k=128))
    assert jnp.allclose(out_c, ref_masked, atol=2e-3, rtol=2e-3), "f32 causal mismatch"

    # 3) f32 path, no mask.
    out_nm = jax.block_until_ready(
        scaled_dot_product_attention(q, k, v, None, key_dim=dk,
                                     block_q=128, block_k=128))
    ref_nm = sdpa_ref(q, k, v, None, key_dim=dk)
    assert jnp.allclose(out_nm, ref_nm, atol=2e-3, rtol=2e-3), "f32 unmasked mismatch"

    # 4) bf16 MXU path, causal, lane-dense folded-head output layout.
    out_bf = jax.block_until_ready(
        scaled_dot_product_attention(q, k, v, None, key_dim=dk, causal=True,
                                     compute_dtype=jnp.bfloat16,
                                     block_q=128, block_k=128, fold_heads=True))
    ref_bf = sdpa_ref(q, k, v, mask, key_dim=dk, compute_dtype=jnp.bfloat16)
    ref_bf_folded = jnp.transpose(ref_bf, (0, 2, 1, 3)).reshape(B, S, H * dv)
    assert out_bf.shape == (B, S, H * dv)
    assert jnp.allclose(out_bf, ref_bf_folded, atol=5e-2, rtol=5e-2), "bf16 mismatch"

    print("KERNEL_OK")
</pallas_src>

<mosaic_0001>
module attributes {stable_mosaic.version = 11 : i64} {
  func.func @_flash_sdpa_kernel(%arg0: i32, %arg1: i32, %arg2: i32, %arg3: memref<1x4x128x64xf32, #tpu.memory_space<vmem>>, %arg4: memref<1x4x128x64xf32, #tpu.memory_space<vmem>>, %arg5: memref<1x4x128x64xf32, #tpu.memory_space<vmem>>, %arg6: memref<1x128x128xbf16, #tpu.memory_space<vmem>>, %arg7: memref<1x128x256xf32, #tpu.memory_space<vmem>>, %arg8: memref<4x128x1xf32, #tpu.memory_space<vmem>>, %arg9: memref<4x128x1xf32, #tpu.memory_space<vmem>>, %arg10: memref<4x128x64xf32, #tpu.memory_space<vmem>>) attributes {dimension_semantics = [#tpu.dimension_semantics<parallel>, #tpu.dimension_semantics<parallel>, #tpu.dimension_semantics<arbitrary>], iteration_bounds = array<i64: 2, 2, 2>, scalar_prefetch = 0 : i64, scratch_operands = 3 : i64, tpu.core_type = #tpu.core_type<tc>, window_params = [{transform_indices = @transform_0, window_bounds = array<i64: 1, 4, 128, 64>}, {transform_indices = @transform_1, window_bounds = array<i64: 1, 4, 128, 64>}, {transform_indices = @transform_2, window_bounds = array<i64: 1, 4, 128, 64>}, {transform_indices = @transform_3, window_bounds = array<i64: 1, 128, 128>}, {transform_indices = @transform_4, window_bounds = array<i64: 1, 128, 256>}]} {
    %c0_i32 = arith.constant 0 : i32
    %0 = arith.cmpi eq, %arg2, %c0_i32 : i32
    %1 = arith.extui %0 : i1 to i32
    %c0_i32_0 = arith.constant 0 : i32
    %2 = arith.cmpi ne, %1, %c0_i32_0 : i32
    scf.if %2 {
      %cst_39 = arith.constant 0xFF800000 : f32
      %45 = vector.broadcast %cst_39 : f32 to vector<4x128x1xf32>
      %c0_40 = arith.constant 0 : index
      %c0_41 = arith.constant 0 : index
      %c0_42 = arith.constant 0 : index
      %46 = vector.load %arg8[%c0_40, %c0_41, %c0_42] : memref<4x128x1xf32, #tpu.memory_space<vmem>>, vector<4x128x1xf32>
      tpu.vector_store %arg8[%c0_40, %c0_41, %c0_42], %45 {strides = array<i32>} : memref<4x128x1xf32, #tpu.memory_space<vmem>>, vector<4x128x1xf32>,
      %cst_43 = arith.constant 0.000000e+00 : f32
      %47 = vector.broadcast %cst_43 : f32 to vector<4x128x1xf32>
      %c0_44 = arith.constant 0 : index
      %c0_45 = arith.constant 0 : index
      %c0_46 = arith.constant 0 : index
      %48 = vector.load %arg9[%c0_44, %c0_45, %c0_46] : memref<4x128x1xf32, #tpu.memory_space<vmem>>, vector<4x128x1xf32>
      tpu.vector_store %arg9[%c0_44, %c0_45, %c0_46], %47 {strides = array<i32>} : memref<4x128x1xf32, #tpu.memory_space<vmem>>, vector<4x128x1xf32>,
      %cst_47 = arith.constant 0.000000e+00 : f32
      %49 = vector.broadcast %cst_47 : f32 to vector<4x128x64xf32>
      %c0_48 = arith.constant 0 : index
      %c0_49 = arith.constant 0 : index
      %c0_50 = arith.constant 0 : index
      %50 = vector.load %arg10[%c0_48, %c0_49, %c0_50] : memref<4x128x64xf32, #tpu.memory_space<vmem>>, vector<4x128x64xf32>
      tpu.vector_store %arg10[%c0_48, %c0_49, %c0_50], %49 {strides = array<i32>} : memref<4x128x64xf32, #tpu.memory_space<vmem>>, vector<4x128x64xf32>,
    } else {
    }
    %c0 = arith.constant 0 : index
    %c0_1 = arith.constant 0 : index
    %c0_2 = arith.constant 0 : index
    %c0_3 = arith.constant 0 : index
    %3 = vector.load %arg3[%c0, %c0_1, %c0_2, %c0_3] : memref<1x4x128x64xf32, #tpu.memory_space<vmem>>, vector<1x4x128x64xf32>
    %4 = vector.shape_cast %3 : vector<1x4x128x64xf32> to vector<4x128x64xf32>
    %cst = arith.constant 1.250000e-01 : f32
    %5 = vector.broadcast %cst : f32 to vector<4x128x64xf32>
    %6 = arith.mulf %4, %5 : vector<4x128x64xf32>
    %c0_4 = arith.constant 0 : index
    %c0_5 = arith.constant 0 : index
    %c0_6 = arith.constant 0 : index
    %c0_7 = arith.constant 0 : index
    %7 = vector.load %arg4[%c0_4, %c0_5, %c0_6, %c0_7] : memref<1x4x128x64xf32, #tpu.memory_space<vmem>>, vector<1x4x128x64xf32>
    %8 = vector.shape_cast %7 : vector<1x4x128x64xf32> to vector<4x128x64xf32>
    %c0_8 = arith.constant 0 : index
    %c0_9 = arith.constant 0 : index
    %c0_10 = arith.constant 0 : index
    %c0_11 = arith.constant 0 : index
    %9 = vector.load %arg5[%c0_8, %c0_9, %c0_10, %c0_11] : memref<1x4x128x64xf32, #tpu.memory_space<vmem>>, vector<1x4x128x64xf32>
    %10 = vector.shape_cast %9 : vector<1x4x128x64xf32> to vector<4x128x64xf32>
    "tpu.trace_start"() <{level = 10 : i32, message = "hqd,hkd->hqk"}> : () -> ()
    %cst_12 = arith.constant dense<0.000000e+00> : vector<4x128x128xf32>
    %11 = tpu.matmul %6, %8, %cst_12 {dimension_numbers = #tpu.dot_dimension_numbers<[2], [2], [1], [1], [0, 0, 0, 1, 1, 1], [0], [0]>} : vector<4x128x64xf32>, vector<4x128x64xf32>, vector<4x128x128xf32> -> vector<4x128x128xf32>
    "tpu.trace_stop"() : () -> ()
    %c0_13 = arith.constant 0 : index
    %c0_14 = arith.constant 0 : index
    %c0_15 = arith.constant 0 : index
    %12 = vector.load %arg6[%c0_13, %c0_14, %c0_15] : memref<1x128x128xbf16, #tpu.memory_space<vmem>>, vector<1x128x128xbf16>
    %13 = vector.shape_cast %12 : vector<1x128x128xbf16> to vector<128x128xbf16>
    %14 = arith.extf %13 : vector<128x128xbf16> to vector<128x128xf32>
    %15 = vector.shape_cast %14 : vector<128x128xf32> to vector<1x128x128xf32>
    %cst_16 = arith.constant -1.000000e+30 : f32
    %16 = vector.broadcast %cst_16 : f32 to vector<1x128x128xf32>
    %17 = arith.mulf %15, %16 : vector<1x128x128xf32>
    %18 = vector.broadcast %17 : vector<1x128x128xf32> to vector<4x128x128xf32>
    %19 = arith.addf %11, %18 : vector<4x128x128xf32>
    %c0_17 = arith.constant 0 : index
    %c0_18 = arith.constant 0 : index
    %c0_19 = arith.constant 0 : index
    %20 = vector.load %arg8[%c0_17, %c0_18, %c0_19] : memref<4x128x1xf32, #tpu.memory_space<vmem>>, vector<4x128x1xf32>
    %cst_20 = arith.constant dense<0xFF800000> : vector<4x128xf32>
    %21 = vector.multi_reduction <maximumf>, %19, %cst_20 [2] : vector<4x128x128xf32> to vector<4x128xf32>
    %22 = vector.shape_cast %21 : vector<4x128xf32> to vector<4x128x1xf32>
    %23 = arith.maximumf %20, %22 : vector<4x128x1xf32>
    %24 = arith.subf %20, %23 : vector<4x128x1xf32>
    %25 = math.exp %24 : vector<4x128x1xf32>
    %26 = vector.broadcast %23 : vector<4x128x1xf32> to vector<4x128x128xf32>
    %27 = arith.subf %19, %26 : vector<4x128x128xf32>
    %28 = math.exp %27 : vector<4x128x128xf32>
    %cst_21 = arith.constant dense<0.000000e+00> : vector<4x128xf32>
    %29 = vector.multi_reduction <add>, %28, %cst_21 [2] : vector<4x128x128xf32> to vector<4x128xf32>
    %30 = vector.shape_cast %29 : vector<4x128xf32> to vector<4x128x1xf32>
    "tpu.trace_start"() <{level = 10 : i32, message = "hqk,hkd->hqd"}> : () -> ()
    %cst_22 = arith.constant dense<0.000000e+00> : vector<4x128x64xf32>
    %31 = tpu.matmul %28, %10, %cst_22 {dimension_numbers = #tpu.dot_dimension_numbers<[2], [1], [1], [2], [0, 0, 0, 1, 1, 2], [0], [0]>} : vector<4x128x128xf32>, vector<4x128x64xf32>, vector<4x128x64xf32> -> vector<4x128x64xf32>
    "tpu.trace_stop"() : () -> ()
    %c0_23 = arith.constant 0 : index
    %c0_24 = arith.constant 0 : index
    %c0_25 = arith.constant 0 : index
    %32 = vector.load %arg9[%c0_23, %c0_24, %c0_25] : memref<4x128x1xf32, #tpu.memory_space<vmem>>, vector<4x128x1xf32>
    %33 = arith.mulf %25, %32 : vector<4x128x1xf32>
    %34 = arith.addf %33, %30 : vector<4x128x1xf32>
    %c0_26 = arith.constant 0 : index
    %c0_27 = arith.constant 0 : index
    %c0_28 = arith.constant 0 : index
    %35 = vector.load %arg9[%c0_26, %c0_27, %c0_28] : memref<4x128x1xf32, #tpu.memory_space<vmem>>, vector<4x128x1xf32>
    tpu.vector_store %arg9[%c0_26, %c0_27, %c0_28], %34 {strides = array<i32>} : memref<4x128x1xf32, #tpu.memory_space<vmem>>, vector<4x128x1xf32>,
    %c0_29 = arith.constant 0 : index
    %c0_30 = arith.constant 0 : index
    %c0_31 = arith.constant 0 : index
    %36 = vector.load %arg10[%c0_29, %c0_30, %c0_31] : memref<4x128x64xf32, #tpu.memory_space<vmem>>, vector<4x128x64xf32>
    %37 = vector.broadcast %25 : vector<4x128x1xf32> to vector<4x128x64xf32>
    %38 = arith.mulf %37, %36 : vector<4x128x64xf32>
    %39 = arith.addf %38, %31 : vector<4x128x64xf32>
    %c0_32 = arith.constant 0 : index
    %c0_33 = arith.constant 0 : index
    %c0_34 = arith.constant 0 : index
    %40 = vector.load %arg10[%c0_32, %c0_33, %c0_34] : memref<4x128x64xf32, #tpu.memory_space<vmem>>, vector<4x128x64xf32>
    tpu.vector_store %arg10[%c0_32, %c0_33, %c0_34], %39 {strides = array<i32>} : memref<4x128x64xf32, #tpu.memory_space<vmem>>, vector<4x128x64xf32>,
    %c0_35 = arith.constant 0 : index
    %c0_36 = arith.constant 0 : index
    %c0_37 = arith.constant 0 : index
    %41 = vector.load %arg8[%c0_35, %c0_36, %c0_37] : memref<4x128x1xf32, #tpu.memory_space<vmem>>, vector<4x128x1xf32>
    tpu.vector_store %arg8[%c0_35, %c0_36, %c0_37], %23 {strides = array<i32>} : memref<4x128x1xf32, #tpu.memory_space<vmem>>, vector<4x128x1xf32>,
    %c1_i32 = arith.constant 1 : i32
    %42 = arith.cmpi eq, %arg2, %c1_i32 : i32
    %43 = arith.extui %42 : i1 to i32
    %c0_i32_38 = arith.constant 0 : i32
    %44 = arith.cmpi ne, %43, %c0_i32_38 : i32
    scf.if %44 {
      %c0_39 = arith.constant 0 : index
      %c0_40 = arith.constant 0 : index
      %c0_41 = arith.constant 0 : index
      %45 = vector.load %arg9[%c0_39, %c0_40, %c0_41] : memref<4x128x1xf32, #tpu.memory_space<vmem>>, vector<4x128x1xf32>
      %46 = tpu.reciprocal %45 : vector<4x128x1xf32> -> vector<4x128x1xf32>
      %c0_42 = arith.constant 0 : index
      %c0_43 = arith.constant 0 : index
      %c0_44 = arith.constant 0 : index
      %47 = vector.load %arg10[%c0_42, %c0_43, %c0_44] : memref<4x128x64xf32, #tpu.memory_space<vmem>>, vector<4x128x64xf32>
      %48 = vector.broadcast %46 : vector<4x128x1xf32> to vector<4x128x64xf32>
      %49 = arith.mulf %47, %48 : vector<4x128x64xf32>
      %50 = vector.extract_strided_slice %49 {offsets = [0, 0, 0], sizes = [1, 128, 64], strides = [1, 1, 1]} : vector<4x128x64xf32> to vector<1x128x64xf32>
      %51 = vector.shape_cast %50 : vector<1x128x64xf32> to vector<128x64xf32>
      %52 = vector.extract_strided_slice %49 {offsets = [1, 0, 0], sizes = [1, 128, 64], strides = [1, 1, 1]} : vector<4x128x64xf32> to vector<1x128x64xf32>
      %53 = vector.shape_cast %52 : vector<1x128x64xf32> to vector<128x64xf32>
      %54 = vector.extract_strided_slice %49 {offsets = [2, 0, 0], sizes = [1, 128, 64], strides = [1, 1, 1]} : vector<4x128x64xf32> to vector<1x128x64xf32>
      %55 = vector.shape_cast %54 : vector<1x128x64xf32> to vector<128x64xf32>
      %56 = vector.extract_strided_slice %49 {offsets = [3, 0, 0], sizes = [1, 128, 64], strides = [1, 1, 1]} : vector<4x128x64xf32> to vector<1x128x64xf32>
      %57 = vector.shape_cast %56 : vector<1x128x64xf32> to vector<128x64xf32>
      %58 = tpu.concatenate %51, %53, %55, %57 in 1 : vector<128x64xf32>, vector<128x64xf32>, vector<128x64xf32>, vector<128x64xf32> -> vector<128x256xf32>
      %c0_45 = arith.constant 0 : index
      %c0_46 = arith.constant 0 : index
      %c0_47 = arith.constant 0 : index
      %59 = vector.load %arg7[%c0_45, %c0_46, %c0_47] : memref<1x128x256xf32, #tpu.memory_space<vmem>>, vector<1x128x256xf32>
      %60 = vector.shape_cast %59 : vector<1x128x256xf32> to vector<128x256xf32>
      %61 = vector.shape_cast %58 : vector<128x256xf32> to vector<1x128x256xf32>
      tpu.vector_store %arg7[%c0_45, %c0_46, %c0_47], %61 {strides = array<i32>} : memref<1x128x256xf32, #tpu.memory_space<vmem>>, vector<1x128x256xf32>,
    } else {
    }
    return
  }
  func.func @transform_0(%arg0: i32, %arg1: i32, %arg2: i32) -> (i32, i32, i32, i32) {
    %c0_i32 = arith.constant 0 : i32
    %c0_i32_0 = arith.constant 0 : i32
    %c0_i32_1 = arith.constant 0 : i32
    return %arg0, %c0_i32, %arg1, %c0_i32_0 : i32, i32, i32, i32
  }
  func.func @transform_1(%arg0: i32, %arg1: i32, %arg2: i32) -> (i32, i32, i32, i32) {
    %c0_i32 = arith.constant 0 : i32
    %c0_i32_0 = arith.constant 0 : i32
    %c0_i32_1 = arith.constant 0 : i32
    return %arg0, %c0_i32, %arg2, %c0_i32_0 : i32, i32, i32, i32
  }
  func.func @transform_2(%arg0: i32, %arg1: i32, %arg2: i32) -> (i32, i32, i32, i32) {
    %c0_i32 = arith.constant 0 : i32
    %c0_i32_0 = arith.constant 0 : i32
    %c0_i32_1 = arith.constant 0 : i32
    return %arg0, %c0_i32, %arg2, %c0_i32_0 : i32, i32, i32, i32
  }
  func.func @transform_3(%arg0: i32, %arg1: i32, %arg2: i32) -> (i32, i32, i32) {
    %c0_i32 = arith.constant 0 : i32
    return %arg0, %arg1, %arg2 : i32, i32, i32
  }
  func.func @transform_4(%arg0: i32, %arg1: i32, %arg2: i32) -> (i32, i32, i32) {
    %c0_i32 = arith.constant 0 : i32
    %c0_i32_0 = arith.constant 0 : i32
    return %arg0, %arg1, %c0_i32 : i32, i32, i32
  }
}

</mosaic_0001>

<llo_original>
// kernel: tpu_custom_call.1
$region0: #{tpu_custom_call.1}
  #allocation0 [shape = 'u32[]', space=smem, size = 0x4, offset = 0x4, fixed_abs, tag = 'smem constant byte address 0x4 - core index']
  #allocation1 [shape = 'u32[144,128]{1,0:T(1,128)}', space=vmem, size = 0x12000, scoped, tag = 'internal scratch']
  #allocation2 [shape = 'f32[4,128,1]{2,1,0:T(8,128)}', space=vmem, size = 0x40000, scoped, tag = 'scratch operand']
  #allocation3 [shape = 'f32[4,128,1]{2,1,0:T(8,128)}', space=vmem, size = 0x40000, scoped, tag = 'scratch operand']
  #allocation4 [shape = 'f32[4,128,64]{2,1,0:T(8,128)}', space=vmem, size = 0x40000, scoped, tag = 'scratch operand']
  %s0 = inlined_call_operand.vmem [shape: f32[2,4,256,64], index: 0, kind: input, shape index: {}]
  %s1 = inlined_call_operand.vmem [shape: f32[2,4,256,64], index: 1, kind: input, shape index: {}]
  %s2 = inlined_call_operand.vmem [shape: f32[2,4,256,64], index: 2, kind: input, shape index: {}]
  %s3 = inlined_call_operand.vmem [shape: bf16[2,256,256], index: 3, kind: input, shape index: {}]
  %s4 = inlined_call_operand.hbm [shape: f32[2,256,256], index: 4, kind: output, shape index: {}]
  %s5 = sld [smem:[#allocation0]]
  $region212: #{tpu_custom_call.1} parent=0
    _
  %s7 = ssub.s32 1, %s5
  %s8 = scalar_select 0, %s7, %s5
  $region1: #{tpu_custom_call.1} parent=0
    #allocation5 [shape = 'u8[524288]{0}', space=vmem, size = 0x80000, scoped, tag = 'input window, operand 0']
    #allocation6 [shape = 'u8[524288]{0}', space=vmem, size = 0x80000, scoped, tag = 'input window, operand 1']
    #allocation7 [shape = 'u8[524288]{0}', space=vmem, size = 0x80000, scoped, tag = 'input window, operand 2']
    #allocation8 [shape = 'u8[65536]{0}', space=vmem, size = 0x10000, scoped, tag = 'input window, operand 3']
    #allocation9 [shape = 'u8[262144]{0}', space=vmem, size = 0x40000, scoped, tag = 'output window, operand 0']
    #allocation10 [shape = 's32[2]{0}', space=sflag, size = 0x8, scoped, tag = 'scoped memory for tpu_custom_call.1']
    %9 = vsyncpa [#allocation10], 0
    %s10 = scalar_lea.sflag [#allocation10], 1
    %11 = vsyncpa %s10, 0
    loop: start=0, step=1, limit=10
    $region2: #{tpu_custom_call.1} parent=1 // loop_pre_header
      _
    $region3: #{tpu_custom_call.1} parent=1 // loop_header
      %s13 = sphi 0, %s17
      %p14 = scmp.ge.s32.totalorder %s13, 10
      %s20 = sphi 0, %s39
      %s21 = sphi 0, %s35
      %s22 = sphi 0, %s31
      %s23 = sphi 0, %s20
      %s24 = sphi 0, %s21
      %s25 = sphi 0, %s22
      %s26 = sphi 0, %s23
      %s27 = sphi 0, %s24
      %s28 = sphi 0, %s25
      %s44 = sphi 0, %s46
      %s47 = sphi 0, %s44
      %s48 = sphi 0, %s47
      %s64 = sphi 0, %s48
      %s72 = sphi 0, %s74
      %s75 = sphi 0, %s72
      %s76 = sphi 0, %s75
      %s92 = sphi 0, %s76
      %s100 = sphi 0, %s102
      %s103 = sphi 0, %s100
      %s104 = sphi 0, %s103
      %s120 = sphi 0, %s104
      %s130 = sphi 0, %s132
      %s133 = sphi 0, %s130
      %s134 = sphi 0, %s133
      %s150 = sphi 0, %s134
      %s158 = sphi 0, %s160
      %s161 = sphi 0, %s158
      %s162 = sphi 0, %s161
      %s178 = sphi 0, %s162
    $region4: #{tpu_custom_call.1} parent=1 // loop_header_branch
      %16 = sbr.rel (%p14) target = $region8
    $region5: #{tpu_custom_call.1} parent=1 // loop_body
      %s18 = ssub.s32 %s13, 1
      %s19 = ssub.s32 %s13, 2
      %s29 = sadd.s32 1, %s22
      %p30 = scmp.ge.s32.totalorder %s29, 2
      %s31 = scalar_select %p30, 0, %s29
      %s32 = sadd.s32 1, %s21
      %s33 = scalar_select %p30, %s32, %s21
      %p34 = scmp.ge.s32.totalorder %s33, 2
      %s35 = scalar_select %p34, 0, %s33
      %s36 = sadd.s32 1, %s20
      %s37 = scalar_select %p34, %s36, %s20
      %p38 = scmp.ge.s32.totalorder %s37, 2
      %s39 = scalar_select %p38, 0, %s37
      %s40 = ssub.s32 %s20, %s39
      %s41 = ssub.s32 %s21, %s35
      %s42 = sor.u32 %s40, %s41
      %p43 = scmp.eq.s32.totalorder %s42, 0
      %s45 = sadd.s32 %s44, 1
      %s46 = scalar_select %p43, %s44, %s45
      %p49 = pneg %p43
      %p50 = scmp.eq.s32.totalorder %s13, 7
      %p51 = por %p49, %p50
      %p52 = scmp.ne.s32.totalorder %s44, %s47
      %p53 = scmp.eq.s32.totalorder %s13, 0
      %p54 = por %p52, %p53
      %p55 = scmp.ne.s32.totalorder %s44, %s47
      %p56 = scmp.eq.s32.totalorder %s18, 7
      %p57 = por %p55, %p56
      %p58 = scmp.ne.s32.totalorder %s47, %s48
      %p59 = scmp.eq.s32.totalorder %s18, 0
      %p60 = por %p58, %p59
      %p61 = scmp.ne.s32.totalorder %s47, %s48
      %p62 = scmp.eq.s32.totalorder %s19, 7
      %p63 = por %p61, %p62
      %p65 = scmp.ne.s32.totalorder %s48, %s64
      %p66 = scmp.eq.s32.totalorder %s19, 0
      %p67 = por %p65, %p66
      %s68 = ssub.s32 %s20, %s39
      %s69 = ssub.s32 %s22, %s31
      %s70 = sor.u32 %s68, %s69
      %p71 = scmp.eq.s32.totalorder %s70, 0
      %s73 = sadd.s32 %s72, 1
      %s74 = scalar_select %p71, %s72, %s73
      %p77 = pneg %p71
      %p78 = scmp.eq.s32.totalorder %s13, 7
      %p79 = por %p77, %p78
      %p80 = scmp.ne.s32.totalorder %s72, %s75
      %p81 = scmp.eq.s32.totalorder %s13, 0
      %p82 = por %p80, %p81
      %p83 = scmp.ne.s32.totalorder %s72, %s75
      %p84 = scmp.eq.s32.totalorder %s18, 7
      %p85 = por %p83, %p84
      %p86 = scmp.ne.s32.totalorder %s75, %s76
      %p87 = scmp.eq.s32.totalorder %s18, 0
      %p88 = por %p86, %p87
      %p89 = scmp.ne.s32.totalorder %s75, %s76
      %p90 = scmp.eq.s32.totalorder %s19, 7
      %p91 = por %p89, %p90
      %p93 = scmp.ne.s32.totalorder %s76, %s92
      %p94 = scmp.eq.s32.totalorder %s19, 0
      %p95 = por %p93, %p94
      %s96 = ssub.s32 %s20, %s39
      %s97 = ssub.s32 %s22, %s31
      %s98 = sor.u32 %s96, %s97
      %p99 = scmp.eq.s32.totalorder %s98, 0
      %s101 = sadd.s32 %s100, 1
      %s102 = scalar_select %p99, %s100, %s101
      %p105 = pneg %p99
      %p106 = scmp.eq.s32.totalorder %s13, 7
      %p107 = por %p105, %p106
      %p108 = scmp.ne.s32.totalorder %s100, %s103
      %p109 = scmp.eq.s32.totalorder %s13, 0
      %p110 = por %p108, %p109
      %p111 = scmp.ne.s32.totalorder %s100, %s103
      %p112 = scmp.eq.s32.totalorder %s18, 7
      %p113 = por %p111, %p112
      %p114 = scmp.ne.s32.totalorder %s103, %s104
      %p115 = scmp.eq.s32.totalorder %s18, 0
      %p116 = por %p114, %p115
      %p117 = scmp.ne.s32.totalorder %s103, %s104
      %p118 = scmp.eq.s32.totalorder %s19, 7
      %p119 = por %p117, %p118
      %p121 = scmp.ne.s32.totalorder %s104, %s120
      %p122 = scmp.eq.s32.totalorder %s19, 0
      %p123 = por %p121, %p122
      %s124 = ssub.s32 %s20, %s39
      %s125 = ssub.s32 %s21, %s35
      %s126 = sor.u32 %s124, %s125
      %s127 = ssub.s32 %s22, %s31
      %s128 = sor.u32 %s126, %s127
      %p129 = scmp.eq.s32.totalorder %s128, 0
      %s131 = sadd.s32 %s130, 1
      %s132 = scalar_select %p129, %s130, %s131
      %p135 = pneg %p129
      %p136 = scmp.eq.s32.totalorder %s13, 7
      %p137 = por %p135, %p136
      %p138 = scmp.ne.s32.totalorder %s130, %s133
      %p139 = scmp.eq.s32.totalorder %s13, 0
      %p140 = por %p138, %p139
      %p141 = scmp.ne.s32.totalorder %s130, %s133
      %p142 = scmp.eq.s32.totalorder %s18, 7
      %p143 = por %p141, %p142
      %p144 = scmp.ne.s32.totalorder %s133, %s134
      %p145 = scmp.eq.s32.totalorder %s18, 0
      %p146 = por %p144, %p145
      %p147 = scmp.ne.s32.totalorder %s133, %s134
      %p148 = scmp.eq.s32.totalorder %s19, 7
      %p149 = por %p147, %p148
      %p151 = scmp.ne.s32.totalorder %s134, %s150
      %p152 = scmp.eq.s32.totalorder %s19, 0
      %p153 = por %p151, %p152
      %s154 = ssub.s32 %s20, %s39
      %s155 = ssub.s32 %s21, %s35
      %s156 = sor.u32 %s154, %s155
      %p157 = scmp.eq.s32.totalorder %s156, 0
      %s159 = sadd.s32 %s158, 1
      %s160 = scalar_select %p157, %s158, %s159
      %p163 = pneg %p157
      %p164 = scmp.eq.s32.totalorder %s13, 7
      %p165 = por %p163, %p164
      %p166 = scmp.ne.s32.totalorder %s158, %s161
      %p167 = scmp.eq.s32.totalorder %s13, 0
      %p168 = por %p166, %p167
      %p169 = scmp.ne.s32.totalorder %s158, %s161
      %p170 = scmp.eq.s32.totalorder %s18, 7
      %p171 = por %p169, %p170
      %p172 = scmp.ne.s32.totalorder %s161, %s162
      %p173 = scmp.eq.s32.totalorder %s18, 0
      %p174 = por %p172, %p173
      %p175 = scmp.ne.s32.totalorder %s161, %s162
      %p176 = scmp.eq.s32.totalorder %s19, 7
      %p177 = por %p175, %p176
      %p179 = scmp.ne.s32.totalorder %s162, %s178
      %p180 = scmp.eq.s32.totalorder %s19, 0
      %p181 = por %p179, %p180
      %p182 = scmp.le.s32.totalorder 1, %s13
      %p183 = scmp.lt.s32.totalorder %s13, 9
      %p184 = pnand %p182, %p183
      %p185 = pneg %p184
      // Predicated region
      $region9: #{tpu_custom_call.1} parent=5 // pred_check
        _
      $region10: #{tpu_custom_call.1} parent=5 // pred_check_branch
        %187 = sbr.rel (%p184) target = $region12
      $region11: #{tpu_custom_call.1} parent=5 // pred_region
        %s188 = ssub.s32 %s13, 1
      $region12: #{tpu_custom_call.1} parent=5 // pred_fallthru
        _
      %p189 = scmp.lt.s32.totalorder %s13, 8
      // Predicated region
      $region13: #{tpu_custom_call.1} parent=5 // pred_check
        %p190 = pneg %p189
      $region14: #{tpu_custom_call.1} parent=5 // pred_check_branch
        %192 = sbr.rel (%p190) target = $region16
      $region15: #{tpu_custom_call.1} parent=5 // pred_region
        // Predicated region
        $region17: #{tpu_custom_call.1} parent=15 // pred_check
          %p193 = pneg %p54
        $region18: #{tpu_custom_call.1} parent=15 // pred_check_branch
          %195 = sbr.rel (%p193) target = $region20
        $region19: #{tpu_custom_call.1} parent=15 // pred_region
          %s196 = sand.u32 %s44, 1
          %s197 = sand.u32 %s44, 1
          %s198 = smul.addr %s197, 512
          %s199 = scalar_lea.vmem [#allocation5], %s198
          %s200 = smul.u32 16, %s21
          %s201 = smul.addr %s20, 128
          %s202 = sadd.s32 %s200, %s201
          %s203 = smul.addr %s202, 8
          %s204 = scalar_lea.vmem %s0, %s203
          // Predicated region
          $region21: #{tpu_custom_call.1} parent=19 // pred_check
            _
          $region22: #{tpu_custom_call.1} parent=19 // pred_check_branch
            %206 = sbr.rel (0) target = $region24
          $region23: #{tpu_custom_call.1} parent=19 // pred_region
            // Predicated region
            $region25: #{tpu_custom_call.1} parent=23 // pred_check
              _
            $region26: #{tpu_custom_call.1} parent=23 // pred_check_branch
              %208 = sbr.rel (0) target = $region28
            $region27: #{tpu_custom_call.1} parent=23 // pred_region
              // Predicated region
              $region40: #{tpu_custom_call.1} parent=27 // pred_check
                _
              $region41: #{tpu_custom_call.1} parent=27 // pred_check_branch
                %350 = sbr.rel (0) target = $region43
              $region42: #{tpu_custom_call.1} parent=27 // pred_region
                loop: start=0, step=1, limit=1
                $region44: #{tpu_custom_call.1} parent=42 // loop_pre_header
                  _
                $region45: #{tpu_custom_call.1} parent=42 // loop_header
                  %s352 = sphi 0, %s356
                  %p353 = scmp.ge.s32.totalorder %s352, 1
                  %s357 = sphi %s204, %s204
                  %s358 = sphi %s199, %s199
                $region46: #{tpu_custom_call.1} parent=42 // loop_header_branch
                  %355 = sbr.rel (%p353) target = $region50
                $region47: #{tpu_custom_call.1} parent=42 // loop_body
                  %v359 = vld [vmem:[%s357] sm:$0xff]
                  %360 = vst [vmem:[%s358] sm:$0xff] %v359
                  %v361 = vld [vmem:[%s357 + $0x8] sm:$0xff]
                  %362 = vst [vmem:[%s358 + $0x8] sm:$0xff] %v361
                  %v363 = vld [vmem:[%s357 + $0x10] sm:$0xff]
                  %364 = vst [vmem:[%s358 + $0x10] sm:$0xff] %v363
                  %v365 = vld [vmem:[%s357 + $0x18] sm:$0xff]
                  %366 = vst [vmem:[%s358 + $0x18] sm:$0xff] %v365
                  %v367 = vld [vmem:[%s357 + $0x20] sm:$0xff]
                  %368 = vst [vmem:[%s358 + $0x20] sm:$0xff] %v367
                  %v369 = vld [vmem:[%s357 + $0x28] sm:$0xff]
                  %370 = vst [vmem:[%s358 + $0x28] sm:$0xff] %v369
                  %v371 = vld [vmem:[%s357 + $0x30] sm:$0xff]
                  %372 = vst [vmem:[%s358 + $0x30] sm:$0xff] %v371
                  %v373 = vld [vmem:[%s357 + $0x38] sm:$0xff]
                  %374 = vst [vmem:[%s358 + $0x38] sm:$0xff] %v373
                  %v375 = vld [vmem:[%s357 + $0x40] sm:$0xff]
                  %376 = vst [vmem:[%s358 + $0x40] sm:$0xff] %v375
                  %v377 = vld [vmem:[%s357 + $0x48] sm:$0xff]
                  %378 = vst [vmem:[%s358 + $0x48] sm:$0xff] %v377
                  %v379 = vld [vmem:[%s357 + $0x50] sm:$0xff]
                  %380 = vst [vmem:[%s358 + $0x50] sm:$0xff] %v379
                  %v381 = vld [vmem:[%s357 + $0x58] sm:$0xff]
                  %382 = vst [vmem:[%s358 + $0x58] sm:$0xff] %v381
                  %v383 = vld [vmem:[%s357 + $0x60] sm:$0xff]
                  %384 = vst [vmem:[%s358 + $0x60] sm:$0xff] %v383
                  %v385 = vld [vmem:[%s357 + $0x68] sm:$0xff]
                  %386 = vst [vmem:[%s358 + $0x68] sm:$0xff] %v385
                  %v387 = vld [vmem:[%s357 + $0x70] sm:$0xff]
                  %388 = vst [vmem:[%s358 + $0x70] sm:$0xff] %v387
                  %v389 = vld [vmem:[%s357 + $0x78] sm:$0xff]
                  %390 = vst [vmem:[%s358 + $0x78] sm:$0xff] %v389
                  %v391 = vld [vmem:[%s357 + $0x100] sm:$0xff]
                  %392 = vst [vmem:[%s358 + $0x80] sm:$0xff] %v391
                  %v393 = vld [vmem:[%s357 + $0x108] sm:$0xff]
                  %394 = vst [vmem:[%s358 + $0x88] sm:$0xff] %v393
                  %v395 = vld [vmem:[%s357 + $0x110] sm:$0xff]
                  %396 = vst [vmem:[%s358 + $0x90] sm:$0xff] %v395
                  %v397 = vld [vmem:[%s357 + $0x118] sm:$0xff]
                  %398 = vst [vmem:[%s358 + $0x98] sm:$0xff] %v397
                  %v399 = vld [vmem:[%s357 + $0x120] sm:$0xff]
                  %400 = vst [vmem:[%s358 + $0xa0] sm:$0xff] %v399
                  %v401 = vld [vmem:[%s357 + $0x128] sm:$0xff]
                  %402 = vst [vmem:[%s358 + $0xa8] sm:$0xff] %v401
                  %v403 = vld [vmem:[%s357 + $0x130] sm:$0xff]
                  %404 = vst [vmem:[%s358 + $0xb0] sm:$0xff] %v403
                  %v405 = vld [vmem:[%s357 + $0x138] sm:$0xff]
                  %406 = vst [vmem:[%s358 + $0xb8] sm:$0xff] %v405
                  %v407 = vld [vmem:[%s357 + $0x140] sm:$0xff]
                  %408 = vst [vmem:[%s358 + $0xc0] sm:$0xff] %v407
                  %v409 = vld [vmem:[%s357 + $0x148] sm:$0xff]
                  %410 = vst [vmem:[%s358 + $0xc8] sm:$0xff] %v409
                  %v411 = vld [vmem:[%s357 + $0x150] sm:$0xff]
                  %412 = vst [vmem:[%s358 + $0xd0] sm:$0xff] %v411
                  %v413 = vld [vmem:[%s357 + $0x158] sm:$0xff]
                  %414 = vst [vmem:[%s358 + $0xd8] sm:$0xff] %v413
                  %v415 = vld [vmem:[%s357 + $0x160] sm:$0xff]
                  %416 = vst [vmem:[%s358 + $0xe0] sm:$0xff] %v415
                  %v417 = vld [vmem:[%s357 + $0x168] sm:$0xff]
                  %418 = vst [vmem:[%s358 + $0xe8] sm:$0xff] %v417
                  %v419 = vld [vmem:[%s357 + $0x170] sm:$0xff]
                  %420 = vst [vmem:[%s358 + $0xf0] sm:$0xff] %v419
                  %v421 = vld [vmem:[%s357 + $0x178] sm:$0xff]
                  %422 = vst [vmem:[%s358 + $0xf8] sm:$0xff] %v421
                  %v423 = vld [vmem:[%s357 + $0x200] sm:$0xff]
                  %424 = vst [vmem:[%s358 + $0x100] sm:$0xff] %v423
                  %v425 = vld [vmem:[%s357 + $0x208] sm:$0xff]
                  %426 = vst [vmem:[%s358 + $0x108] sm:$0xff] %v425
                  %v427 = vld [vmem:[%s357 + $0x210] sm:$0xff]
                  %428 = vst [vmem:[%s358 + $0x110] sm:$0xff] %v427
                  %v429 = vld [vmem:[%s357 + $0x218] sm:$0xff]
                  %430 = vst [vmem:[%s358 + $0x118] sm:$0xff] %v429
                  %v431 = vld [vmem:[%s357 + $0x220] sm:$0xff]
                  %432 = vst [vmem:[%s358 + $0x120] sm:$0xff] %v431
                  %v433 = vld [vmem:[%s357 + $0x228] sm:$0xff]
                  %434 = vst [vmem:[%s358 + $0x128] sm:$0xff] %v433
                  %v435 = vld [vmem:[%s357 + $0x230] sm:$0xff]
                  %436 = vst [vmem:[%s358 + $0x130] sm:$0xff] %v435
                  %v437 = vld [vmem:[%s357 + $0x238] sm:$0xff]
                  %438 = vst [vmem:[%s358 + $0x138] sm:$0xff] %v437
                  %v439 = vld [vmem:[%s357 + $0x240] sm:$0xff]
                  %440 = vst [vmem:[%s358 + $0x140] sm:$0xff] %v439
                  %v441 = vld [vmem:[%s357 + $0x248] sm:$0xff]
                  %442 = vst [vmem:[%s358 + $0x148] sm:$0xff] %v441
                  %v443 = vld [vmem:[%s357 + $0x250] sm:$0xff]
                  %444 = vst [vmem:[%s358 + $0x150] sm:$0xff] %v443
                  %v445 = vld [vmem:[%s357 + $0x258] sm:$0xff]
                  %446 = vst [vmem:[%s358 + $0x158] sm:$0xff] %v445
                  %v447 = vld [vmem:[%s357 + $0x260] sm:$0xff]
                  %448 = vst [vmem:[%s358 + $0x160] sm:$0xff] %v447
                  %v449 = vld [vmem:[%s357 + $0x268] sm:$0xff]
                  %450 = vst [vmem:[%s358 + $0x168] sm:$0xff] %v449
                  %v451 = vld [vmem:[%s357 + $0x270] sm:$0xff]
                  %452 = vst [vmem:[%s358 + $0x170] sm:$0xff] %v451
                  %v453 = vld [vmem:[%s357 + $0x278] sm:$0xff]
                  %454 = vst [vmem:[%s358 + $0x178] sm:$0xff] %v453
                  %v455 = vld [vmem:[%s357 + $0x300] sm:$0xff]
                  %456 = vst [vmem:[%s358 + $0x180] sm:$0xff] %v455
                  %v457 = vld [vmem:[%s357 + $0x308] sm:$0xff]
                  %458 = vst [vmem:[%s358 + $0x188] sm:$0xff] %v457
                  %v459 = vld [vmem:[%s357 + $0x310] sm:$0xff]
                  %460 = vst [vmem:[%s358 + $0x190] sm:$0xff] %v459
                  %v461 = vld [vmem:[%s357 + $0x318] sm:$0xff]
                  %462 = vst [vmem:[%s358 + $0x198] sm:$0xff] %v461
                  %v463 = vld [vmem:[%s357 + $0x320] sm:$0xff]
                  %464 = vst [vmem:[%s358 + $0x1a0] sm:$0xff] %v463
                  %v465 = vld [vmem:[%s357 + $0x328] sm:$0xff]
                  %466 = vst [vmem:[%s358 + $0x1a8] sm:$0xff] %v465
                  %v467 = vld [vmem:[%s357 + $0x330] sm:$0xff]
                  %468 = vst [vmem:[%s358 + $0x1b0] sm:$0xff] %v467
                  %v469 = vld [vmem:[%s357 + $0x338] sm:$0xff]
                  %470 = vst [vmem:[%s358 + $0x1b8] sm:$0xff] %v469
                  %v471 = vld [vmem:[%s357 + $0x340] sm:$0xff]
                  %472 = vst [vmem:[%s358 + $0x1c0] sm:$0xff] %v471
                  %v473 = vld [vmem:[%s357 + $0x348] sm:$0xff]
                  %474 = vst [vmem:[%s358 + $0x1c8] sm:$0xff] %v473
                  %v475 = vld [vmem:[%s357 + $0x350] sm:$0xff]
                  %476 = vst [vmem:[%s358 + $0x1d0] sm:$0xff] %v475
                  %v477 = vld [vmem:[%s357 + $0x358] sm:$0xff]
                  %478 = vst [vmem:[%s358 + $0x1d8] sm:$0xff] %v477
                  %v479 = vld [vmem:[%s357 + $0x360] sm:$0xff]
                  %480 = vst [vmem:[%s358 + $0x1e0] sm:$0xff] %v479
                  %v481 = vld [vmem:[%s357 + $0x368] sm:$0xff]
                  %482 = vst [vmem:[%s358 + $0x1e8] sm:$0xff] %v481
                  %v483 = vld [vmem:[%s357 + $0x370] sm:$0xff]
                  %484 = vst [vmem:[%s358 + $0x1f0] sm:$0xff] %v483
                  %v485 = vld [vmem:[%s357 + $0x378] sm:$0xff]
                  %486 = vst [vmem:[%s358 + $0x1f8] sm:$0xff] %v485
                $region48: #{tpu_custom_call.1} parent=42 // loop_footer
                  %s356 = sadd.s32 1, %s352
                $region49: #{tpu_custom_call.1} parent=42 // loop_footer_branch
                  %351 = sbr.rel target = $region45
                $region50: #{tpu_custom_call.1} parent=42 // loop_exit
                  _
              $region43: #{tpu_custom_call.1} parent=27 // pred_fallthru
                _
              // Predicated region
              $region51: #{tpu_custom_call.1} parent=27 // pred_check
                _
              $region52: #{tpu_custom_call.1} parent=27 // pred_check_branch
                %488 = sbr.rel target = $region54
              $region53: #{tpu_custom_call.1} parent=27 // pred_region
                _
              $region54: #{tpu_custom_call.1} parent=27 // pred_fallthru
                _
            $region28: #{tpu_custom_call.1} parent=23 // pred_fallthru
              _
            // Predicated region
            $region29: #{tpu_custom_call.1} parent=23 // pred_check
              _
            $region30: #{tpu_custom_call.1} parent=23 // pred_check_branch
              %210 = sbr.rel target = $region32
            $region31: #{tpu_custom_call.1} parent=23 // pred_region
              %s212 = ssub.s32 256, 1
              loop: start=0, step=1, limit=1
              $region33: #{tpu_custom_call.1} parent=31 // loop_pre_header
                _
              $region34: #{tpu_custom_call.1} parent=31 // loop_header
                %s214 = sphi 0, %s218
                %p215 = scmp.ge.s32.totalorder %s214, 1
                %s219 = sphi %s204, %s204
                %s220 = sphi %s199, %s199
              $region35: #{tpu_custom_call.1} parent=31 // loop_header_branch
                %217 = sbr.rel (%p215) target = $region39
              $region36: #{tpu_custom_call.1} parent=31 // loop_body
                %v221 = vld [vmem:[%s219] sm:%s212]
                %222 = vst [vmem:[%s220] sm:%s212] %v221
                %v223 = vld [vmem:[%s219 + $0x8] sm:%s212]
                %224 = vst [vmem:[%s220 + $0x8] sm:%s212] %v223
                %v225 = vld [vmem:[%s219 + $0x10] sm:%s212]
                %226 = vst [vmem:[%s220 + $0x10] sm:%s212] %v225
                %v227 = vld [vmem:[%s219 + $0x18] sm:%s212]
                %228 = vst [vmem:[%s220 + $0x18] sm:%s212] %v227
                %v229 = vld [vmem:[%s219 + $0x20] sm:%s212]
                %230 = vst [vmem:[%s220 + $0x20] sm:%s212] %v229
                %v231 = vld [vmem:[%s219 + $0x28] sm:%s212]
                %232 = vst [vmem:[%s220 + $0x28] sm:%s212] %v231
                %v233 = vld [vmem:[%s219 + $0x30] sm:%s212]
                %234 = vst [vmem:[%s220 + $0x30] sm:%s212] %v233
                %v235 = vld [vmem:[%s219 + $0x38] sm:%s212]
                %236 = vst [vmem:[%s220 + $0x38] sm:%s212] %v235
                %v237 = vld [vmem:[%s219 + $0x40] sm:%s212]
                %238 = vst [vmem:[%s220 + $0x40] sm:%s212] %v237
                %v239 = vld [vmem:[%s219 + $0x48] sm:%s212]
                %240 = vst [vmem:[%s220 + $0x48] sm:%s212] %v239
                %v241 = vld [vmem:[%s219 + $0x50] sm:%s212]
                %242 = vst [vmem:[%s220 + $0x50] sm:%s212] %v241
                %v243 = vld [vmem:[%s219 + $0x58] sm:%s212]
                %244 = vst [vmem:[%s220 + $0x58] sm:%s212] %v243
                %v245 = vld [vmem:[%s219 + $0x60] sm:%s212]
                %246 = vst [vmem:[%s220 + $0x60] sm:%s212] %v245
                %v247 = vld [vmem:[%s219 + $0x68] sm:%s212]
                %248 = vst [vmem:[%s220 + $0x68] sm:%s212] %v247
                %v249 = vld [vmem:[%s219 + $0x70] sm:%s212]
                %250 = vst [vmem:[%s220 + $0x70] sm:%s212] %v249
                %v251 = vld [vmem:[%s219 + $0x78] sm:%s212]
                %252 = vst [vmem:[%s220 + $0x78] sm:%s212] %v251
                %v253 = vld [vmem:[%s219 + $0x100] sm:%s212]
                %254 = vst [vmem:[%s220 + $0x80] sm:%s212] %v253
                %v255 = vld [vmem:[%s219 + $0x108] sm:%s212]
                %256 = vst [vmem:[%s220 + $0x88] sm:%s212] %v255
                %v257 = vld [vmem:[%s219 + $0x110] sm:%s212]
                %258 = vst [vmem:[%s220 + $0x90] sm:%s212] %v257
                %v259 = vld [vmem:[%s219 + $0x118] sm:%s212]
                %260 = vst [vmem:[%s220 + $0x98] sm:%s212] %v259
                %v261 = vld [vmem:[%s219 + $0x120] sm:%s212]
                %262 = vst [vmem:[%s220 + $0xa0] sm:%s212] %v261
                %v263 = vld [vmem:[%s219 + $0x128] sm:%s212]
                %264 = vst [vmem:[%s220 + $0xa8] sm:%s212] %v263
                %v265 = vld [vmem:[%s219 + $0x130] sm:%s212]
                %266 = vst [vmem:[%s220 + $0xb0] sm:%s212] %v265
                %v267 = vld [vmem:[%s219 + $0x138] sm:%s212]
                %268 = vst [vmem:[%s220 + $0xb8] sm:%s212] %v267
                %v269 = vld [vmem:[%s219 + $0x140] sm:%s212]
                %270 = vst [vmem:[%s220 + $0xc0] sm:%s212] %v269
                %v271 = vld [vmem:[%s219 + $0x148] sm:%s212]
                %272 = vst [vmem:[%s220 + $0xc8] sm:%s212] %v271
                %v273 = vld [vmem:[%s219 + $0x150] sm:%s212]
                %274 = vst [vmem:[%s220 + $0xd0] sm:%s212] %v273
                %v275 = vld [vmem:[%s219 + $0x158] sm:%s212]
                %276 = vst [vmem:[%s220 + $0xd8] sm:%s212] %v275
                %v277 = vld [vmem:[%s219 + $0x160] sm:%s212]
                %278 = vst [vmem:[%s220 + $0xe0] sm:%s212] %v277
                %v279 = vld [vmem:[%s219 + $0x168] sm:%s212]
                %280 = vst [vmem:[%s220 + $0xe8] sm:%s212] %v279
                %v281 = vld [vmem:[%s219 + $0x170] sm:%s212]
                %282 = vst [vmem:[%s220 + $0xf0] sm:%s212] %v281
                %v283 = vld [vmem:[%s219 + $0x178] sm:%s212]
                %284 = vst [vmem:[%s220 + $0xf8] sm:%s212] %v283
                %v285 = vld [vmem:[%s219 + $0x200] sm:%s212]
                %286 = vst [vmem:[%s220 + $0x100] sm:%s212] %v285
                %v287 = vld [vmem:[%s219 + $0x208] sm:%s212]
                %288 = vst [vmem:[%s220 + $0x108] sm:%s212] %v287
                %v289 = vld [vmem:[%s219 + $0x210] sm:%s212]
                %290 = vst [vmem:[%s220 + $0x110] sm:%s212] %v289
                %v291 = vld [vmem:[%s219 + $0x218] sm:%s212]
                %292 = vst [vmem:[%s220 + $0x118] sm:%s212] %v291
                %v293 = vld [vmem:[%s219 + $0x220] sm:%s212]
                %294 = vst [vmem:[%s220 + $0x120] sm:%s212] %v293
                %v295 = vld [vmem:[%s219 + $0x228] sm:%s212]
                %296 = vst [vmem:[%s220 + $0x128] sm:%s212] %v295
                %v297 = vld [vmem:[%s219 + $0x230] sm:%s212]
                %298 = vst [vmem:[%s220 + $0x130] sm:%s212] %v297
                %v299 = vld [vmem:[%s219 + $0x238] sm:%s212]
                %300 = vst [vmem:[%s220 + $0x138] sm:%s212] %v299
                %v301 = vld [vmem:[%s219 + $0x240] sm:%s212]
                %302 = vst [vmem:[%s220 + $0x140] sm:%s212] %v301
                %v303 = vld [vmem:[%s219 + $0x248] sm:%s212]
                %304 = vst [vmem:[%s220 + $0x148] sm:%s212] %v303
                %v305 = vld [vmem:[%s219 + $0x250] sm:%s212]
                %306 = vst [vmem:[%s220 + $0x150] sm:%s212] %v305
                %v307 = vld [vmem:[%s219 + $0x258] sm:%s212]
                %308 = vst [vmem:[%s220 + $0x158] sm:%s212] %v307
                %v309 = vld [vmem:[%s219 + $0x260] sm:%s212]
                %310 = vst [vmem:[%s220 + $0x160] sm:%s212] %v309
                %v311 = vld [vmem:[%s219 + $0x268] sm:%s212]
                %312 = vst [vmem:[%s220 + $0x168] sm:%s212] %v311
                %v313 = vld [vmem:[%s219 + $0x270] sm:%s212]
                %314 = vst [vmem:[%s220 + $0x170] sm:%s212] %v313
                %v315 = vld [vmem:[%s219 + $0x278] sm:%s212]
                %316 = vst [vmem:[%s220 + $0x178] sm:%s212] %v315
                %v317 = vld [vmem:[%s219 + $0x300] sm:%s212]
                %318 = vst [vmem:[%s220 + $0x180] sm:%s212] %v317
                %v319 = vld [vmem:[%s219 + $0x308] sm:%s212]
                %320 = vst [vmem:[%s220 + $0x188] sm:%s212] %v319
                %v321 = vld [vmem:[%s219 + $0x310] sm:%s212]
                %322 = vst [vmem:[%s220 + $0x190] sm:%s212] %v321
                %v323 = vld [vmem:[%s219 + $0x318] sm:%s212]
                %324 = vst [vmem:[%s220 + $0x198] sm:%s212] %v323
                %v325 = vld [vmem:[%s219 + $0x320] sm:%s212]
                %326 = vst [vmem:[%s220 + $0x1a0] sm:%s212] %v325
                %v327 = vld [vmem:[%s219 + $0x328] sm:%s212]
                %328 = vst [vmem:[%s220 + $0x1a8] sm:%s212] %v327
                %v329 = vld [vmem:[%s219 + $0x330] sm:%s212]
                %330 = vst [vmem:[%s220 + $0x1b0] sm:%s212] %v329
                %v331 = vld [vmem:[%s219 + $0x338] sm:%s212]
                %332 = vst [vmem:[%s220 + $0x1b8] sm:%s212] %v331
                %v333 = vld [vmem:[%s219 + $0x340] sm:%s212]
                %334 = vst [vmem:[%s220 + $0x1c0] sm:%s212] %v333
                %v335 = vld [vmem:[%s219 + $0x348] sm:%s212]
                %336 = vst [vmem:[%s220 + $0x1c8] sm:%s212] %v335
                %v337 = vld [vmem:[%s219 + $0x350] sm:%s212]
                %338 = vst [vmem:[%s220 + $0x1d0] sm:%s212] %v337
                %v339 = vld [vmem:[%s219 + $0x358] sm:%s212]
                %340 = vst [vmem:[%s220 + $0x1d8] sm:%s212] %v339
                %v341 = vld [vmem:[%s219 + $0x360] sm:%s212]
                %342 = vst [vmem:[%s220 + $0x1e0] sm:%s212] %v341
                %v343 = vld [vmem:[%s219 + $0x368] sm:%s212]
                %344 = vst [vmem:[%s220 + $0x1e8] sm:%s212] %v343
                %v345 = vld [vmem:[%s219 + $0x370] sm:%s212]
                %346 = vst [vmem:[%s220 + $0x1f0] sm:%s212] %v345
                %v347 = vld [vmem:[%s219 + $0x378] sm:%s212]
                %348 = vst [vmem:[%s220 + $0x1f8] sm:%s212] %v347
              $region37: #{tpu_custom_call.1} parent=31 // loop_footer
                %s218 = sadd.s32 1, %s214
              $region38: #{tpu_custom_call.1} parent=31 // loop_footer_branch
                %213 = sbr.rel target = $region34
              $region39: #{tpu_custom_call.1} parent=31 // loop_exit
                _
            $region32: #{tpu_custom_call.1} parent=23 // pred_fallthru
              _
          $region24: #{tpu_custom_call.1} parent=19 // pred_fallthru
            _
          %489 = vnop
        $region20: #{tpu_custom_call.1} parent=15 // pred_fallthru
          _
        // Predicated region
        $region55: #{tpu_custom_call.1} parent=15 // pred_check
          %p490 = pneg %p82
        $region56: #{tpu_custom_call.1} parent=15 // pred_check_branch
          %492 = sbr.rel (%p490) target = $region58
        $region57: #{tpu_custom_call.1} parent=15 // pred_region
          %s493 = sand.u32 %s72, 1
          %s494 = sand.u32 %s72, 1
          %s495 = smul.addr %s494, 512
          %s496 = scalar_lea.vmem [#allocation6], %s495
          %s497 = smul.u32 16, %s22
          %s498 = smul.addr %s20, 128
          %s499 = sadd.s32 %s497, %s498
          %s500 = smul.addr %s499, 8
          %s501 = scalar_lea.vmem %s1, %s500
          // Predicated region
          $region59: #{tpu_custom_call.1} parent=57 // pred_check
            _
          $region60: #{tpu_custom_call.1} parent=57 // pred_check_branch
            %503 = sbr.rel (0) target = $region62
          $region61: #{tpu_custom_call.1} parent=57 // pred_region
            // Predicated region
            $region63: #{tpu_custom_call.1} parent=61 // pred_check
              _
            $region64: #{tpu_custom_call.1} parent=61 // pred_check_branch
              %505 = sbr.rel (0) target = $region66
            $region65: #{tpu_custom_call.1} parent=61 // pred_region
              // Predicated region
              $region78: #{tpu_custom_call.1} parent=65 // pred_check
                _
              $region79: #{tpu_custom_call.1} parent=65 // pred_check_branch
                %647 = sbr.rel (0) target = $region81
              $region80: #{tpu_custom_call.1} parent=65 // pred_region
                loop: start=0, step=1, limit=1
                $region82: #{tpu_custom_call.1} parent=80 // loop_pre_header
                  _
                $region83: #{tpu_custom_call.1} parent=80 // loop_header
                  %s649 = sphi 0, %s653
                  %p650 = scmp.ge.s32.totalorder %s649, 1
                  %s654 = sphi %s501, %s501
                  %s655 = sphi %s496, %s496
                $region84: #{tpu_custom_call.1} parent=80 // loop_header_branch
                  %652 = sbr.rel (%p650) target = $region88
                $region85: #{tpu_custom_call.1} parent=80 // loop_body
                  %v656 = vld [vmem:[%s654] sm:$0xff]
                  %657 = vst [vmem:[%s655] sm:$0xff] %v656
                  %v658 = vld [vmem:[%s654 + $0x8] sm:$0xff]
                  %659 = vst [vmem:[%s655 + $0x8] sm:$0xff] %v658
                  %v660 = vld [vmem:[%s654 + $0x10] sm:$0xff]
                  %661 = vst [vmem:[%s655 + $0x10] sm:$0xff] %v660
                  %v662 = vld [vmem:[%s654 + $0x18] sm:$0xff]
                  %663 = vst [vmem:[%s655 + $0x18] sm:$0xff] %v662
                  %v664 = vld [vmem:[%s654 + $0x20] sm:$0xff]
                  %665 = vst [vmem:[%s655 + $0x20] sm:$0xff] %v664
                  %v666 = vld [vmem:[%s654 + $0x28] sm:$0xff]
                  %667 = vst [vmem:[%s655 + $0x28] sm:$0xff] %v666
                  %v668 = vld [vmem:[%s654 + $0x30] sm:$0xff]
                  %669 = vst [vmem:[%s655 + $0x30] sm:$0xff] %v668
                  %v670 = vld [vmem:[%s654 + $0x38] sm:$0xff]
                  %671 = vst [vmem:[%s655 + $0x38] sm:$0xff] %v670
                  %v672 = vld [vmem:[%s654 + $0x40] sm:$0xff]
                  %673 = vst [vmem:[%s655 + $0x40] sm:$0xff] %v672
                  %v674 = vld [vmem:[%s654 + $0x48] sm:$0xff]
                  %675 = vst [vmem:[%s655 + $0x48] sm:$0xff] %v674
                  %v676 = vld [vmem:[%s654 + $0x50] sm:$0xff]
                  %677 = vst [vmem:[%s655 + $0x50] sm:$0xff] %v676
                  %v678 = vld [vmem:[%s654 + $0x58] sm:$0xff]
                  %679 = vst [vmem:[%s655 + $0x58] sm:$0xff] %v678
                  %v680 = vld [vmem:[%s654 + $0x60] sm:$0xff]
                  %681 = vst [vmem:[%s655 + $0x60] sm:$0xff] %v680
                  %v682 = vld [vmem:[%s654 + $0x68] sm:$0xff]
                  %683 = vst [vmem:[%s655 + $0x68] sm:$0xff] %v682
                  %v684 = vld [vmem:[%s654 + $0x70] sm:$0xff]
                  %685 = vst [vmem:[%s655 + $0x70] sm:$0xff] %v684
                  %v686 = vld [vmem:[%s654 + $0x78] sm:$0xff]
                  %687 = vst [vmem:[%s655 + $0x78] sm:$0xff] %v686
                  %v688 = vld [vmem:[%s654 + $0x100] sm:$0xff]
                  %689 = vst [vmem:[%s655 + $0x80] sm:$0xff] %v688
                  %v690 = vld [vmem:[%s654 + $0x108] sm:$0xff]
                  %691 = vst [vmem:[%s655 + $0x88] sm:$0xff] %v690
                  %v692 = vld [vmem:[%s654 + $0x110] sm:$0xff]
                  %693 = vst [vmem:[%s655 + $0x90] sm:$0xff] %v692
                  %v694 = vld [vmem:[%s654 + $0x118] sm:$0xff]
                  %695 = vst [vmem:[%s655 + $0x98] sm:$0xff] %v694
                  %v696 = vld [vmem:[%s654 + $0x120] sm:$0xff]
                  %697 = vst [vmem:[%s655 + $0xa0] sm:$0xff] %v696
                  %v698 = vld [vmem:[%s654 + $0x128] sm:$0xff]
                  %699 = vst [vmem:[%s655 + $0xa8] sm:$0xff] %v698
                  %v700 = vld [vmem:[%s654 + $0x130] sm:$0xff]
                  %701 = vst [vmem:[%s655 + $0xb0] sm:$0xff] %v700
                  %v702 = vld [vmem:[%s654 + $0x138] sm:$0xff]
                  %703 = vst [vmem:[%s655 + $0xb8] sm:$0xff] %v702
                  %v704 = vld [vmem:[%s654 + $0x140] sm:$0xff]
                  %705 = vst [vmem:[%s655 + $0xc0] sm:$0xff] %v704
                  %v706 = vld [vmem:[%s654 + $0x148] sm:$0xff]
                  %707 = vst [vmem:[%s655 + $0xc8] sm:$0xff] %v706
                  %v708 = vld [vmem:[%s654 + $0x150] sm:$0xff]
                  %709 = vst [vmem:[%s655 + $0xd0] sm:$0xff] %v708
                  %v710 = vld [vmem:[%s654 + $0x158] sm:$0xff]
                  %711 = vst [vmem:[%s655 + $0xd8] sm:$0xff] %v710
                  %v712 = vld [vmem:[%s654 + $0x160] sm:$0xff]
                  %713 = vst [vmem:[%s655 + $0xe0] sm:$0xff] %v712
                  %v714 = vld [vmem:[%s654 + $0x168] sm:$0xff]
                  %715 = vst [vmem:[%s655 + $0xe8] sm:$0xff] %v714
                  %v716 = vld [vmem:[%s654 + $0x170] sm:$0xff]
                  %717 = vst [vmem:[%s655 + $0xf0] sm:$0xff] %v716
                  %v718 = vld [vmem:[%s654 + $0x178] sm:$0xff]
                  %719 = vst [vmem:[%s655 + $0xf8] sm:$0xff] %v718
                  %v720 = vld [vmem:[%s654 + $0x200] sm:$0xff]
                  %721 = vst [vmem:[%s655 + $0x100] sm:$0xff] %v720
                  %v722 = vld [vmem:[%s654 + $0x208] sm:$0xff]
                  %723 = vst [vmem:[%s655 + $0x108] sm:$0xff] %v722
                  %v724 = vld [vmem:[%s654 + $0x210] sm:$0xff]
                  %725 = vst [vmem:[%s655 + $0x110] sm:$0xff] %v724
                  %v726 = vld [vmem:[%s654 + $0x218] sm:$0xff]
                  %727 = vst [vmem:[%s655 + $0x118] sm:$0xff] %v726
                  %v728 = vld [vmem:[%s654 + $0x220] sm:$0xff]
                  %729 = vst [vmem:[%s655 + $0x120] sm:$0xff] %v728
                  %v730 = vld [vmem:[%s654 + $0x228] sm:$0xff]
                  %731 = vst [vmem:[%s655 + $0x128] sm:$0xff] %v730
                  %v732 = vld [vmem:[%s654 + $0x230] sm:$0xff]
                  %733 = vst [vmem:[%s655 + $0x130] sm:$0xff] %v732
                  %v734 = vld [vmem:[%s654 + $0x238] sm:$0xff]
                  %735 = vst [vmem:[%s655 + $0x138] sm:$0xff] %v734
                  %v736 = vld [vmem:[%s654 + $0x240] sm:$0xff]
                  %737 = vst [vmem:[%s655 + $0x140] sm:$0xff] %v736
                  %v738 = vld [vmem:[%s654 + $0x248] sm:$0xff]
                  %739 = vst [vmem:[%s655 + $0x148] sm:$0xff] %v738
                  %v740 = vld [vmem:[%s654 + $0x250] sm:$0xff]
                  %741 = vst [vmem:[%s655 + $0x150] sm:$0xff] %v740
                  %v742 = vld [vmem:[%s654 + $0x258] sm:$0xff]
                  %743 = vst [vmem:[%s655 + $0x158] sm:$0xff] %v742
                  %v744 = vld [vmem:[%s654 + $0x260] sm:$0xff]
                  %745 = vst [vmem:[%s655 + $0x160] sm:$0xff] %v744
                  %v746 = vld [vmem:[%s654 + $0x268] sm:$0xff]
                  %747 = vst [vmem:[%s655 + $0x168] sm:$0xff] %v746
                  %v748 = vld [vmem:[%s654 + $0x270] sm:$0xff]
                  %749 = vst [vmem:[%s655 + $0x170] sm:$0xff] %v748
                  %v750 = vld [vmem:[%s654 + $0x278] sm:$0xff]
                  %751 = vst [vmem:[%s655 + $0x178] sm:$0xff] %v750
                  %v752 = vld [vmem:[%s654 + $0x300] sm:$0xff]
                  %753 = vst [vmem:[%s655 + $0x180] sm:$0xff] %v752
                  %v754 = vld [vmem:[%s654 + $0x308] sm:$0xff]
                  %755 = vst [vmem:[%s655 + $0x188] sm:$0xff] %v754
                  %v756 = vld [vmem:[%s654 + $0x310] sm:$0xff]
                  %757 = vst [vmem:[%s655 + $0x190] sm:$0xff] %v756
                  %v758 = vld [vmem:[%s654 + $0x318] sm:$0xff]
                  %759 = vst [vmem:[%s655 + $0x198] sm:$0xff] %v758
                  %v760 = vld [vmem:[%s654 + $0x320] sm:$0xff]
                  %761 = vst [vmem:[%s655 + $0x1a0] sm:$0xff] %v760
                  %v762 = vld [vmem:[%s654 + $0x328] sm:$0xff]
                  %763 = vst [vmem:[%s655 + $0x1a8] sm:$0xff] %v762
                  %v764 = vld [vmem:[%s654 + $0x330] sm:$0xff]
                  %765 = vst [vmem:[%s655 + $0x1b0] sm:$0xff] %v764
                  %v766 = vld [vmem:[%s654 + $0x338] sm:$0xff]
                  %767 = vst [vmem:[%s655 + $0x1b8] sm:$0xff] %v766
                  %v768 = vld [vmem:[%s654 + $0x340] sm:$0xff]
                  %769 = vst [vmem:[%s655 + $0x1c0] sm:$0xff] %v768
                  %v770 = vld [vmem:[%s654 + $0x348] sm:$0xff]
                  %771 = vst [vmem:[%s655 + $0x1c8] sm:$0xff] %v770
                  %v772 = vld [vmem:[%s654 + $0x350] sm:$0xff]
                  %773 = vst [vmem:[%s655 + $0x1d0] sm:$0xff] %v772
                  %v774 = vld [vmem:[%s654 + $0x358] sm:$0xff]
                  %775 = vst [vmem:[%s655 + $0x1d8] sm:$0xff] %v774
                  %v776 = vld [vmem:[%s654 + $0x360] sm:$0xff]
                  %777 = vst [vmem:[%s655 + $0x1e0] sm:$0xff] %v776
                  %v778 = vld [vmem:[%s654 + $0x368] sm:$0xff]
                  %779 = vst [vmem:[%s655 + $0x1e8] sm:$0xff] %v778
                  %v780 = vld [vmem:[%s654 + $0x370] sm:$0xff]
                  %781 = vst [vmem:[%s655 + $0x1f0] sm:$0xff] %v780
                  %v782 = vld [vmem:[%s654 + $0x378] sm:$0xff]
                  %783 = vst [vmem:[%s655 + $0x1f8] sm:$0xff] %v782
                $region86: #{tpu_custom_call.1} parent=80 // loop_footer
                  %s653 = sadd.s32 1, %s649
                $region87: #{tpu_custom_call.1} parent=80 // loop_footer_branch
                  %648 = sbr.rel target = $region83
                $region88: #{tpu_custom_call.1} parent=80 // loop_exit
                  _
              $region81: #{tpu_custom_call.1} parent=65 // pred_fallthru
                _
              // Predicated region
              $region89: #{tpu_custom_call.1} parent=65 // pred_check
                _
              $region90: #{tpu_custom_call.1} parent=65 // pred_check_branch
                %785 = sbr.rel target = $region92
              $region91: #{tpu_custom_call.1} parent=65 // pred_region
                _
              $region92: #{tpu_custom_call.1} parent=65 // pred_fallthru
                _
            $region66: #{tpu_custom_call.1} parent=61 // pred_fallthru
              _
            // Predicated region
            $region67: #{tpu_custom_call.1} parent=61 // pred_check
              _
            $region68: #{tpu_custom_call.1} parent=61 // pred_check_branch
              %507 = sbr.rel target = $region70
            $region69: #{tpu_custom_call.1} parent=61 // pred_region
              %s509 = ssub.s32 256, 1
              loop: start=0, step=1, limit=1
              $region71: #{tpu_custom_call.1} parent=69 // loop_pre_header
                _
              $region72: #{tpu_custom_call.1} parent=69 // loop_header
                %s511 = sphi 0, %s515
                %p512 = scmp.ge.s32.totalorder %s511, 1
                %s516 = sphi %s501, %s501
                %s517 = sphi %s496, %s496
              $region73: #{tpu_custom_call.1} parent=69 // loop_header_branch
                %514 = sbr.rel (%p512) target = $region77
              $region74: #{tpu_custom_call.1} parent=69 // loop_body
                %v518 = vld [vmem:[%s516] sm:%s509]
                %519 = vst [vmem:[%s517] sm:%s509] %v518
                %v520 = vld [vmem:[%s516 + $0x8] sm:%s509]
                %521 = vst [vmem:[%s517 + $0x8] sm:%s509] %v520
                %v522 = vld [vmem:[%s516 + $0x10] sm:%s509]
                %523 = vst [vmem:[%s517 + $0x10] sm:%s509] %v522
                %v524 = vld [vmem:[%s516 + $0x18] sm:%s509]
                %525 = vst [vmem:[%s517 + $0x18] sm:%s509] %v524
                %v526 = vld [vmem:[%s516 + $0x20] sm:%s509]
                %527 = vst [vmem:[%s517 + $0x20] sm:%s509] %v526
                %v528 = vld [vmem:[%s516 + $0x28] sm:%s509]
                %529 = vst [vmem:[%s517 + $0x28] sm:%s509] %v528
                %v530 = vld [vmem:[%s516 + $0x30] sm:%s509]
                %531 = vst [vmem:[%s517 + $0x30] sm:%s509] %v530
                %v532 = vld [vmem:[%s516 + $0x38] sm:%s509]
                %533 = vst [vmem:[%s517 + $0x38] sm:%s509] %v532
                %v534 = vld [vmem:[%s516 + $0x40] sm:%s509]
                %535 = vst [vmem:[%s517 + $0x40] sm:%s509] %v534
                %v536 = vld [vmem:[%s516 + $0x48] sm:%s509]
                %537 = vst [vmem:[%s517 + $0x48] sm:%s509] %v536
                %v538 = vld [vmem:[%s516 + $0x50] sm:%s509]
                %539 = vst [vmem:[%s517 + $0x50] sm:%s509] %v538
                %v540 = vld [vmem:[%s516 + $0x58] sm:%s509]
                %541 = vst [vmem:[%s517 + $0x58] sm:%s509] %v540
                %v542 = vld [vmem:[%s516 + $0x60] sm:%s509]
                %543 = vst [vmem:[%s517 + $0x60] sm:%s509] %v542
                %v544 = vld [vmem:[%s516 + $0x68] sm:%s509]
                %545 = vst [vmem:[%s517 + $0x68] sm:%s509] %v544
                %v546 = vld [vmem:[%s516 + $0x70] sm:%s509]
                %547 = vst [vmem:[%s517 + $0x70] sm:%s509] %v546
                %v548 = vld [vmem:[%s516 + $0x78] sm:%s509]
                %549 = vst [vmem:[%s517 + $0x78] sm:%s509] %v548
                %v550 = vld [vmem:[%s516 + $0x100] sm:%s509]
                %551 = vst [vmem:[%s517 + $0x80] sm:%s509] %v550
                %v552 = vld [vmem:[%s516 + $0x108] sm:%s509]
                %553 = vst [vmem:[%s517 + $0x88] sm:%s509] %v552
                %v554 = vld [vmem:[%s516 + $0x110] sm:%s509]
                %555 = vst [vmem:[%s517 + $0x90] sm:%s509] %v554
                %v556 = vld [vmem:[%s516 + $0x118] sm:%s509]
                %557 = vst [vmem:[%s517 + $0x98] sm:%s509] %v556
                %v558 = vld [vmem:[%s516 + $0x120] sm:%s509]
                %559 = vst [vmem:[%s517 + $0xa0] sm:%s509] %v558
                %v560 = vld [vmem:[%s516 + $0x128] sm:%s509]
                %561 = vst [vmem:[%s517 + $0xa8] sm:%s509] %v560
                %v562 = vld [vmem:[%s516 + $0x130] sm:%s509]
                %563 = vst [vmem:[%s517 + $0xb0] sm:%s509] %v562
                %v564 = vld [vmem:[%s516 + $0x138] sm:%s509]
                %565 = vst [vmem:[%s517 + $0xb8] sm:%s509] %v564
                %v566 = vld [vmem:[%s516 + $0x140] sm:%s509]
                %567 = vst [vmem:[%s517 + $0xc0] sm:%s509] %v566
                %v568 = vld [vmem:[%s516 + $0x148] sm:%s509]
                %569 = vst [vmem:[%s517 + $0xc8] sm:%s509] %v568
                %v570 = vld [vmem:[%s516 + $0x150] sm:%s509]
                %571 = vst [vmem:[%s517 + $0xd0] sm:%s509] %v570
                %v572 = vld [vmem:[%s516 + $0x158] sm:%s509]
                %573 = vst [vmem:[%s517 + $0xd8] sm:%s509] %v572
                %v574 = vld [vmem:[%s516 + $0x160] sm:%s509]
                %575 = vst [vmem:[%s517 + $0xe0] sm:%s509] %v574
                %v576 = vld [vmem:[%s516 + $0x168] sm:%s509]
                %577 = vst [vmem:[%s517 + $0xe8] sm:%s509] %v576
                %v578 = vld [vmem:[%s516 + $0x170] sm:%s509]
                %579 = vst [vmem:[%s517 + $0xf0] sm:%s509] %v578
                %v580 = vld [vmem:[%s516 + $0x178] sm:%s509]
                %581 = vst [vmem:[%s517 + $0xf8] sm:%s509] %v580
                %v582 = vld [vmem:[%s516 + $0x200] sm:%s509]
                %583 = vst [vmem:[%s517 + $0x100] sm:%s509] %v582
                %v584 = vld [vmem:[%s516 + $0x208] sm:%s509]
                %585 = vst [vmem:[%s517 + $0x108] sm:%s509] %v584
                %v586 = vld [vmem:[%s516 + $0x210] sm:%s509]
                %587 = vst [vmem:[%s517 + $0x110] sm:%s509] %v586
                %v588 = vld [vmem:[%s516 + $0x218] sm:%s509]
                %589 = vst [vmem:[%s517 + $0x118] sm:%s509] %v588
                %v590 = vld [vmem:[%s516 + $0x220] sm:%s509]
                %591 = vst [vmem:[%s517 + $0x120] sm:%s509] %v590
                %v592 = vld [vmem:[%s516 + $0x228] sm:%s509]
                %593 = vst [vmem:[%s517 + $0x128] sm:%s509] %v592
                %v594 = vld [vmem:[%s516 + $0x230] sm:%s509]
                %595 = vst [vmem:[%s517 + $0x130] sm:%s509] %v594
                %v596 = vld [vmem:[%s516 + $0x238] sm:%s509]
                %597 = vst [vmem:[%s517 + $0x138] sm:%s509] %v596
                %v598 = vld [vmem:[%s516 + $0x240] sm:%s509]
                %599 = vst [vmem:[%s517 + $0x140] sm:%s509] %v598
                %v600 = vld [vmem:[%s516 + $0x248] sm:%s509]
                %601 = vst [vmem:[%s517 + $0x148] sm:%s509] %v600
                %v602 = vld [vmem:[%s516 + $0x250] sm:%s509]
                %603 = vst [vmem:[%s517 + $0x150] sm:%s509] %v602
                %v604 = vld [vmem:[%s516 + $0x258] sm:%s509]
                %605 = vst [vmem:[%s517 + $0x158] sm:%s509] %v604
                %v606 = vld [vmem:[%s516 + $0x260] sm:%s509]
                %607 = vst [vmem:[%s517 + $0x160] sm:%s509] %v606
                %v608 = vld [vmem:[%s516 + $0x268] sm:%s509]
                %609 = vst [vmem:[%s517 + $0x168] sm:%s509] %v608
                %v610 = vld [vmem:[%s516 + $0x270] sm:%s509]
                %611 = vst [vmem:[%s517 + $0x170] sm:%s509] %v610
                %v612 = vld [vmem:[%s516 + $0x278] sm:%s509]
                %613 = vst [vmem:[%s517 + $0x178] sm:%s509] %v612
                %v614 = vld [vmem:[%s516 + $0x300] sm:%s509]
                %615 = vst [vmem:[%s517 + $0x180] sm:%s509] %v614
                %v616 = vld [vmem:[%s516 + $0x308] sm:%s509]
                %617 = vst [vmem:[%s517 + $0x188] sm:%s509] %v616
                %v618 = vld [vmem:[%s516 + $0x310] sm:%s509]
                %619 = vst [vmem:[%s517 + $0x190] sm:%s509] %v618
                %v620 = vld [vmem:[%s516 + $0x318] sm:%s509]
                %621 = vst [vmem:[%s517 + $0x198] sm:%s509] %v620
                %v622 = vld [vmem:[%s516 + $0x320] sm:%s509]
                %623 = vst [vmem:[%s517 + $0x1a0] sm:%s509] %v622
                %v624 = vld [vmem:[%s516 + $0x328] sm:%s509]
                %625 = vst [vmem:[%s517 + $0x1a8] sm:%s509] %v624
                %v626 = vld [vmem:[%s516 + $0x330] sm:%s509]
                %627 = vst [vmem:[%s517 + $0x1b0] sm:%s509] %v626
                %v628 = vld [vmem:[%s516 + $0x338] sm:%s509]
                %629 = vst [vmem:[%s517 + $0x1b8] sm:%s509] %v628
                %v630 = vld [vmem:[%s516 + $0x340] sm:%s509]
                %631 = vst [vmem:[%s517 + $0x1c0] sm:%s509] %v630
                %v632 = vld [vmem:[%s516 + $0x348] sm:%s509]
                %633 = vst [vmem:[%s517 + $0x1c8] sm:%s509] %v632
                %v634 = vld [vmem:[%s516 + $0x350] sm:%s509]
                %635 = vst [vmem:[%s517 + $0x1d0] sm:%s509] %v634
                %v636 = vld [vmem:[%s516 + $0x358] sm:%s509]
                %637 = vst [vmem:[%s517 + $0x1d8] sm:%s509] %v636
                %v638 = vld [vmem:[%s516 + $0x360] sm:%s509]
                %639 = vst [vmem:[%s517 + $0x1e0] sm:%s509] %v638
                %v640 = vld [vmem:[%s516 + $0x368] sm:%s509]
                %641 = vst [vmem:[%s517 + $0x1e8] sm:%s509] %v640
                %v642 = vld [vmem:[%s516 + $0x370] sm:%s509]
                %643 = vst [vmem:[%s517 + $0x1f0] sm:%s509] %v642
                %v644 = vld [vmem:[%s516 + $0x378] sm:%s509]
                %645 = vst [vmem:[%s517 + $0x1f8] sm:%s509] %v644
              $region75: #{tpu_custom_call.1} parent=69 // loop_footer
                %s515 = sadd.s32 1, %s511
              $region76: #{tpu_custom_call.1} parent=69 // loop_footer_branch
                %510 = sbr.rel target = $region72
              $region77: #{tpu_custom_call.1} parent=69 // loop_exit
                _
            $region70: #{tpu_custom_call.1} parent=61 // pred_fallthru
              _
          $region62: #{tpu_custom_call.1} parent=57 // pred_fallthru
            _
          %786 = vnop
        $region58: #{tpu_custom_call.1} parent=15 // pred_fallthru
          _
        // Predicated region
        $region93: #{tpu_custom_call.1} parent=15 // pred_check
          %p787 = pneg %p110
        $region94: #{tpu_custom_call.1} parent=15 // pred_check_branch
          %789 = sbr.rel (%p787) target = $region96
        $region95: #{tpu_custom_call.1} parent=15 // pred_region
          %s790 = sand.u32 %s100, 1
          %s791 = sand.u32 %s100, 1
          %s792 = smul.addr %s791, 512
          %s793 = scalar_lea.vmem [#allocation7], %s792
          %s794 = smul.u32 16, %s22
          %s795 = smul.addr %s20, 128
          %s796 = sadd.s32 %s794, %s795
          %s797 = smul.addr %s796, 8
          %s798 = scalar_lea.vmem %s2, %s797
          // Predicated region
          $region97: #{tpu_custom_call.1} parent=95 // pred_check
            _
          $region98: #{tpu_custom_call.1} parent=95 // pred_check_branch
            %800 = sbr.rel (0) target = $region100
          $region99: #{tpu_custom_call.1} parent=95 // pred_region
            // Predicated region
            $region101: #{tpu_custom_call.1} parent=99 // pred_check
              _
            $region102: #{tpu_custom_call.1} parent=99 // pred_check_branch
              %802 = sbr.rel (0) target = $region104
            $region103: #{tpu_custom_call.1} parent=99 // pred_region
              // Predicated region
              $region116: #{tpu_custom_call.1} parent=103 // pred_check
                _
              $region117: #{tpu_custom_call.1} parent=103 // pred_check_branch
                %944 = sbr.rel (0) target = $region119
              $region118: #{tpu_custom_call.1} parent=103 // pred_region
                loop: start=0, step=1, limit=1
                $region120: #{tpu_custom_call.1} parent=118 // loop_pre_header
                  _
                $region121: #{tpu_custom_call.1} parent=118 // loop_header
                  %s946 = sphi 0, %s950
                  %p947 = scmp.ge.s32.totalorder %s946, 1
                  %s951 = sphi %s798, %s798
                  %s952 = sphi %s793, %s793
                $region122: #{tpu_custom_call.1} parent=118 // loop_header_branch
                  %949 = sbr.rel (%p947) target = $region126
                $region123: #{tpu_custom_call.1} parent=118 // loop_body
                  %v953 = vld [vmem:[%s951] sm:$0xff]
                  %954 = vst [vmem:[%s952] sm:$0xff] %v953
                  %v955 = vld [vmem:[%s951 + $0x8] sm:$0xff]
                  %956 = vst [vmem:[%s952 + $0x8] sm:$0xff] %v955
                  %v957 = vld [vmem:[%s951 + $0x10] sm:$0xff]
                  %958 = vst [vmem:[%s952 + $0x10] sm:$0xff] %v957
                  %v959 = vld [vmem:[%s951 + $0x18] sm:$0xff]
                  %960 = vst [vmem:[%s952 + $0x18] sm:$0xff] %v959
                  %v961 = vld [vmem:[%s951 + $0x20] sm:$0xff]
                  %962 = vst [vmem:[%s952 + $0x20] sm:$0xff] %v961
                  %v963 = vld [vmem:[%s951 + $0x28] sm:$0xff]
                  %964 = vst [vmem:[%s952 + $0x28] sm:$0xff] %v963
                  %v965 = vld [vmem:[%s951 + $0x30] sm:$0xff]
                  %966 = vst [vmem:[%s952 + $0x30] sm:$0xff] %v965
                  %v967 = vld [vmem:[%s951 + $0x38] sm:$0xff]
                  %968 = vst [vmem:[%s952 + $0x38] sm:$0xff] %v967
                  %v969 = vld [vmem:[%s951 + $0x40] sm:$0xff]
                  %970 = vst [vmem:[%s952 + $0x40] sm:$0xff] %v969
                  %v971 = vld [vmem:[%s951 + $0x48] sm:$0xff]
                  %972 = vst [vmem:[%s952 + $0x48] sm:$0xff] %v971
                  %v973 = vld [vmem:[%s951 + $0x50] sm:$0xff]
                  %974 = vst [vmem:[%s952 + $0x50] sm:$0xff] %v973
                  %v975 = vld [vmem:[%s951 + $0x58] sm:$0xff]
                  %976 = vst [vmem:[%s952 + $0x58] sm:$0xff] %v975
                  %v977 = vld [vmem:[%s951 + $0x60] sm:$0xff]
                  %978 = vst [vmem:[%s952 + $0x60] sm:$0xff] %v977
                  %v979 = vld [vmem:[%s951 + $0x68] sm:$0xff]
                  %980 = vst [vmem:[%s952 + $0x68] sm:$0xff] %v979
                  %v981 = vld [vmem:[%s951 + $0x70] sm:$0xff]
                  %982 = vst [vmem:[%s952 + $0x70] sm:$0xff] %v981
                  %v983 = vld [vmem:[%s951 + $0x78] sm:$0xff]
                  %984 = vst [vmem:[%s952 + $0x78] sm:$0xff] %v983
                  %v985 = vld [vmem:[%s951 + $0x100] sm:$0xff]
                  %986 = vst [vmem:[%s952 + $0x80] sm:$0xff] %v985
                  %v987 = vld [vmem:[%s951 + $0x108] sm:$0xff]
                  %988 = vst [vmem:[%s952 + $0x88] sm:$0xff] %v987
                  %v989 = vld [vmem:[%s951 + $0x110] sm:$0xff]
                  %990 = vst [vmem:[%s952 + $0x90] sm:$0xff] %v989
                  %v991 = vld [vmem:[%s951 + $0x118] sm:$0xff]
                  %992 = vst [vmem:[%s952 + $0x98] sm:$0xff] %v991
                  %v993 = vld [vmem:[%s951 + $0x120] sm:$0xff]
                  %994 = vst [vmem:[%s952 + $0xa0] sm:$0xff] %v993
                  %v995 = vld [vmem:[%s951 + $0x128] sm:$0xff]
                  %996 = vst [vmem:[%s952 + $0xa8] sm:$0xff] %v995
                  %v997 = vld [vmem:[%s951 + $0x130] sm:$0xff]
                  %998 = vst [vmem:[%s952 + $0xb0] sm:$0xff] %v997
                  %v999 = vld [vmem:[%s951 + $0x138] sm:$0xff]
                  %1000 = vst [vmem:[%s952 + $0xb8] sm:$0xff] %v999
                  %v1001 = vld [vmem:[%s951 + $0x140] sm:$0xff]
                  %1002 = vst [vmem:[%s952 + $0xc0] sm:$0xff] %v1001
                  %v1003 = vld [vmem:[%s951 + $0x148] sm:$0xff]
                  %1004 = vst [vmem:[%s952 + $0xc8] sm:$0xff] %v1003
                  %v1005 = vld [vmem:[%s951 + $0x150] sm:$0xff]
                  %1006 = vst [vmem:[%s952 + $0xd0] sm:$0xff] %v1005
                  %v1007 = vld [vmem:[%s951 + $0x158] sm:$0xff]
                  %1008 = vst [vmem:[%s952 + $0xd8] sm:$0xff] %v1007
                  %v1009 = vld [vmem:[%s951 + $0x160] sm:$0xff]
                  %1010 = vst [vmem:[%s952 + $0xe0] sm:$0xff] %v1009
                  %v1011 = vld [vmem:[%s951 + $0x168] sm:$0xff]
                  %1012 = vst [vmem:[%s952 + $0xe8] sm:$0xff] %v1011
                  %v1013 = vld [vmem:[%s951 + $0x170] sm:$0xff]
                  %1014 = vst [vmem:[%s952 + $0xf0] sm:$0xff] %v1013
                  %v1015 = vld [vmem:[%s951 + $0x178] sm:$0xff]
                  %1016 = vst [vmem:[%s952 + $0xf8] sm:$0xff] %v1015
                  %v1017 = vld [vmem:[%s951 + $0x200] sm:$0xff]
                  %1018 = vst [vmem:[%s952 + $0x100] sm:$0xff] %v1017
                  %v1019 = vld [vmem:[%s951 + $0x208] sm:$0xff]
                  %1020 = vst [vmem:[%s952 + $0x108] sm:$0xff] %v1019
                  %v1021 = vld [vmem:[%s951 + $0x210] sm:$0xff]
                  %1022 = vst [vmem:[%s952 + $0x110] sm:$0xff] %v1021
                  %v1023 = vld [vmem:[%s951 + $0x218] sm:$0xff]
                  %1024 = vst [vmem:[%s952 + $0x118] sm:$0xff] %v1023
                  %v1025 = vld [vmem:[%s951 + $0x220] sm:$0xff]
                  %1026 = vst [vmem:[%s952 + $0x120] sm:$0xff] %v1025
                  %v1027 = vld [vmem:[%s951 + $0x228] sm:$0xff]
                  %1028 = vst [vmem:[%s952 + $0x128] sm:$0xff] %v1027
                  %v1029 = vld [vmem:[%s951 + $0x230] sm:$0xff]
                  %1030 = vst [vmem:[%s952 + $0x130] sm:$0xff] %v1029
                  %v1031 = vld [vmem:[%s951 + $0x238] sm:$0xff]
                  %1032 = vst [vmem:[%s952 + $0x138] sm:$0xff] %v1031
                  %v1033 = vld [vmem:[%s951 + $0x240] sm:$0xff]
                  %1034 = vst [vmem:[%s952 + $0x140] sm:$0xff] %v1033
                  %v1035 = vld [vmem:[%s951 + $0x248] sm:$0xff]
                  %1036 = vst [vmem:[%s952 + $0x148] sm:$0xff] %v1035
                  %v1037 = vld [vmem:[%s951 + $0x250] sm:$0xff]
                  %1038 = vst [vmem:[%s952 + $0x150] sm:$0xff] %v1037
                  %v1039 = vld [vmem:[%s951 + $0x258] sm:$0xff]
                  %1040 = vst [vmem:[%s952 + $0x158] sm:$0xff] %v1039
                  %v1041 = vld [vmem:[%s951 + $0x260] sm:$0xff]
                  %1042 = vst [vmem:[%s952 + $0x160] sm:$0xff] %v1041
                  %v1043 = vld [vmem:[%s951 + $0x268] sm:$0xff]
                  %1044 = vst [vmem:[%s952 + $0x168] sm:$0xff] %v1043
                  %v1045 = vld [vmem:[%s951 + $0x270] sm:$0xff]
                  %1046 = vst [vmem:[%s952 + $0x170] sm:$0xff] %v1045
                  %v1047 = vld [vmem:[%s951 + $0x278] sm:$0xff]
                  %1048 = vst [vmem:[%s952 + $0x178] sm:$0xff] %v1047
                  %v1049 = vld [vmem:[%s951 + $0x300] sm:$0xff]
                  %1050 = vst [vmem:[%s952 + $0x180] sm:$0xff] %v1049
                  %v1051 = vld [vmem:[%s951 + $0x308] sm:$0xff]
                  %1052 = vst [vmem:[%s952 + $0x188] sm:$0xff] %v1051
                  %v1053 = vld [vmem:[%s951 + $0x310] sm:$0xff]
                  %1054 = vst [vmem:[%s952 + $0x190] sm:$0xff] %v1053
                  %v1055 = vld [vmem:[%s951 + $0x318] sm:$0xff]
                  %1056 = vst [vmem:[%s952 + $0x198] sm:$0xff] %v1055
                  %v1057 = vld [vmem:[%s951 + $0x320] sm:$0xff]
                  %1058 = vst [vmem:[%s952 + $0x1a0] sm:$0xff] %v1057
                  %v1059 = vld [vmem:[%s951 + $0x328] sm:$0xff]
                  %1060 = vst [vmem:[%s952 + $0x1a8] sm:$0xff] %v1059
                  %v1061 = vld [vmem:[%s951 + $0x330] sm:$0xff]
                  %1062 = vst [vmem:[%s952 + $0x1b0] sm:$0xff] %v1061
                  %v1063 = vld [vmem:[%s951 + $0x338] sm:$0xff]
                  %1064 = vst [vmem:[%s952 + $0x1b8] sm:$0xff] %v1063
                  %v1065 = vld [vmem:[%s951 + $0x340] sm:$0xff]
                  %1066 = vst [vmem:[%s952 + $0x1c0] sm:$0xff] %v1065
                  %v1067 = vld [vmem:[%s951 + $0x348] sm:$0xff]
                  %1068 = vst [vmem:[%s952 + $0x1c8] sm:$0xff] %v1067
                  %v1069 = vld [vmem:[%s951 + $0x350] sm:$0xff]
                  %1070 = vst [vmem:[%s952 + $0x1d0] sm:$0xff] %v1069
                  %v1071 = vld [vmem:[%s951 + $0x358] sm:$0xff]
                  %1072 = vst [vmem:[%s952 + $0x1d8] sm:$0xff] %v1071
                  %v1073 = vld [vmem:[%s951 + $0x360] sm:$0xff]
                  %1074 = vst [vmem:[%s952 + $0x1e0] sm:$0xff] %v1073
                  %v1075 = vld [vmem:[%s951 + $0x368] sm:$0xff]
                  %1076 = vst [vmem:[%s952 + $0x1e8] sm:$0xff] %v1075
                  %v1077 = vld [vmem:[%s951 + $0x370] sm:$0xff]
                  %1078 = vst [vmem:[%s952 + $0x1f0] sm:$0xff] %v1077
                  %v1079 = vld [vmem:[%s951 + $0x378] sm:$0xff]
                  %1080 = vst [vmem:[%s952 + $0x1f8] sm:$0xff] %v1079
                $region124: #{tpu_custom_call.1} parent=118 // loop_footer
                  %s950 = sadd.s32 1, %s946
                $region125: #{tpu_custom_call.1} parent=118 // loop_footer_branch
                  %945 = sbr.rel target = $region121
                $region126: #{tpu_custom_call.1} parent=118 // loop_exit
                  _
              $region119: #{tpu_custom_call.1} parent=103 // pred_fallthru
                _
              // Predicated region
              $region127: #{tpu_custom_call.1} parent=103 // pred_check
                _
              $region128: #{tpu_custom_call.1} parent=103 // pred_check_branch
                %1082 = sbr.rel target = $region130
              $region129: #{tpu_custom_call.1} parent=103 // pred_region
                _
              $region130: #{tpu_custom_call.1} parent=103 // pred_fallthru
                _
            $region104: #{tpu_custom_call.1} parent=99 // pred_fallthru
              _
            // Predicated region
            $region105: #{tpu_custom_call.1} parent=99 // pred_check
              _
            $region106: #{tpu_custom_call.1} parent=99 // pred_check_branch
              %804 = sbr.rel target = $region108
            $region107: #{tpu_custom_call.1} parent=99 // pred_region
              %s806 = ssub.s32 256, 1
              loop: start=0, step=1, limit=1
              $region109: #{tpu_custom_call.1} parent=107 // loop_pre_header
                _
              $region110: #{tpu_custom_call.1} parent=107 // loop_header
                %s808 = sphi 0, %s812
                %p809 = scmp.ge.s32.totalorder %s808, 1
                %s813 = sphi %s798, %s798
                %s814 = sphi %s793, %s793
              $region111: #{tpu_custom_call.1} parent=107 // loop_header_branch
                %811 = sbr.rel (%p809) target = $region115
              $region112: #{tpu_custom_call.1} parent=107 // loop_body
                %v815 = vld [vmem:[%s813] sm:%s806]
                %816 = vst [vmem:[%s814] sm:%s806] %v815
                %v817 = vld [vmem:[%s813 + $0x8] sm:%s806]
                %818 = vst [vmem:[%s814 + $0x8] sm:%s806] %v817
                %v819 = vld [vmem:[%s813 + $0x10] sm:%s806]
                %820 = vst [vmem:[%s814 + $0x10] sm:%s806] %v819
                %v821 = vld [vmem:[%s813 + $0x18] sm:%s806]
                %822 = vst [vmem:[%s814 + $0x18] sm:%s806] %v821
                %v823 = vld [vmem:[%s813 + $0x20] sm:%s806]
                %824 = vst [vmem:[%s814 + $0x20] sm:%s806] %v823
                %v825 = vld [vmem:[%s813 + $0x28] sm:%s806]
                %826 = vst [vmem:[%s814 + $0x28] sm:%s806] %v825
                %v827 = vld [vmem:[%s813 + $0x30] sm:%s806]
                %828 = vst [vmem:[%s814 + $0x30] sm:%s806] %v827
                %v829 = vld [vmem:[%s813 + $0x38] sm:%s806]
                %830 = vst [vmem:[%s814 + $0x38] sm:%s806] %v829
                %v831 = vld [vmem:[%s813 + $0x40] sm:%s806]
                %832 = vst [vmem:[%s814 + $0x40] sm:%s806] %v831
                %v833 = vld [vmem:[%s813 + $0x48] sm:%s806]
                %834 = vst [vmem:[%s814 + $0x48] sm:%s806] %v833
                %v835 = vld [vmem:[%s813 + $0x50] sm:%s806]
                %836 = vst [vmem:[%s814 + $0x50] sm:%s806] %v835
                %v837 = vld [vmem:[%s813 + $0x58] sm:%s806]
                %838 = vst [vmem:[%s814 + $0x58] sm:%s806] %v837
                %v839 = vld [vmem:[%s813 + $0x60] sm:%s806]
                %840 = vst [vmem:[%s814 + $0x60] sm:%s806] %v839
                %v841 = vld [vmem:[%s813 + $0x68] sm:%s806]
                %842 = vst [vmem:[%s814 + $0x68] sm:%s806] %v841
                %v843 = vld [vmem:[%s813 + $0x70] sm:%s806]
                %844 = vst [vmem:[%s814 + $0x70] sm:%s806] %v843
                %v845 = vld [vmem:[%s813 + $0x78] sm:%s806]
                %846 = vst [vmem:[%s814 + $0x78] sm:%s806] %v845
                %v847 = vld [vmem:[%s813 + $0x100] sm:%s806]
                %848 = vst [vmem:[%s814 + $0x80] sm:%s806] %v847
                %v849 = vld [vmem:[%s813 + $0x108] sm:%s806]
                %850 = vst [vmem:[%s814 + $0x88] sm:%s806] %v849
                %v851 = vld [vmem:[%s813 + $0x110] sm:%s806]
                %852 = vst [vmem:[%s814 + $0x90] sm:%s806] %v851
                %v853 = vld [vmem:[%s813 + $0x118] sm:%s806]
                %854 = vst [vmem:[%s814 + $0x98] sm:%s806] %v853
                %v855 = vld [vmem:[%s813 + $0x120] sm:%s806]
                %856 = vst [vmem:[%s814 + $0xa0] sm:%s806] %v855
                %v857 = vld [vmem:[%s813 + $0x128] sm:%s806]
                %858 = vst [vmem:[%s814 + $0xa8] sm:%s806] %v857
                %v859 = vld [vmem:[%s813 + $0x130] sm:%s806]
                %860 = vst [vmem:[%s814 + $0xb0] sm:%s806] %v859
                %v861 = vld [vmem:[%s813 + $0x138] sm:%s806]
                %862 = vst [vmem:[%s814 + $0xb8] sm:%s806] %v861
                %v863 = vld [vmem:[%s813 + $0x140] sm:%s806]
                %864 = vst [vmem:[%s814 + $0xc0] sm:%s806] %v863
                %v865 = vld [vmem:[%s813 + $0x148] sm:%s806]
                %866 = vst [vmem:[%s814 + $0xc8] sm:%s806] %v865
                %v867 = vld [vmem:[%s813 + $0x150] sm:%s806]
                %868 = vst [vmem:[%s814 + $0xd0] sm:%s806] %v867
                %v869 = vld [vmem:[%s813 + $0x158] sm:%s806]
                %870 = vst [vmem:[%s814 + $0xd8] sm:%s806] %v869
                %v871 = vld [vmem:[%s813 + $0x160] sm:%s806]
                %872 = vst [vmem:[%s814 + $0xe0] sm:%s806] %v871
                %v873 = vld [vmem:[%s813 + $0x168] sm:%s806]
                %874 = vst [vmem:[%s814 + $0xe8] sm:%s806] %v873
                %v875 = vld [vmem:[%s813 + $0x170] sm:%s806]
                %876 = vst [vmem:[%s814 + $0xf0] sm:%s806] %v875
                %v877 = vld [vmem:[%s813 + $0x178] sm:%s806]
                %878 = vst [vmem:[%s814 + $0xf8] sm:%s806] %v877
                %v879 = vld [vmem:[%s813 + $0x200] sm:%s806]
                %880 = vst [vmem:[%s814 + $0x100] sm:%s806] %v879
                %v881 = vld [vmem:[%s813 + $0x208] sm:%s806]
                %882 = vst [vmem:[%s814 + $0x108] sm:%s806] %v881
                %v883 = vld [vmem:[%s813 + $0x210] sm:%s806]
                %884 = vst [vmem:[%s814 + $0x110] sm:%s806] %v883
                %v885 = vld [vmem:[%s813 + $0x218] sm:%s806]
                %886 = vst [vmem:[%s814 + $0x118] sm:%s806] %v885
                %v887 = vld [vmem:[%s813 + $0x220] sm:%s806]
                %888 = vst [vmem:[%s814 + $0x120] sm:%s806] %v887
                %v889 = vld [vmem:[%s813 + $0x228] sm:%s806]
                %890 = vst [vmem:[%s814 + $0x128] sm:%s806] %v889
                %v891 = vld [vmem:[%s813 + $0x230] sm:%s806]
                %892 = vst [vmem:[%s814 + $0x130] sm:%s806] %v891
                %v893 = vld [vmem:[%s813 + $0x238] sm:%s806]
                %894 = vst [vmem:[%s814 + $0x138] sm:%s806] %v893
                %v895 = vld [vmem:[%s813 + $0x240] sm:%s806]
                %896 = vst [vmem:[%s814 + $0x140] sm:%s806] %v895
                %v897 = vld [vmem:[%s813 + $0x248] sm:%s806]
                %898 = vst [vmem:[%s814 + $0x148] sm:%s806] %v897
                %v899 = vld [vmem:[%s813 + $0x250] sm:%s806]
                %900 = vst [vmem:[%s814 + $0x150] sm:%s806] %v899
                %v901 = vld [vmem:[%s813 + $0x258] sm:%s806]
                %902 = vst [vmem:[%s814 + $0x158] sm:%s806] %v901
                %v903 = vld [vmem:[%s813 + $0x260] sm:%s806]
                %904 = vst [vmem:[%s814 + $0x160] sm:%s806] %v903
                %v905 = vld [vmem:[%s813 + $0x268] sm:%s806]
                %906 = vst [vmem:[%s814 + $0x168] sm:%s806] %v905
                %v907 = vld [vmem:[%s813 + $0x270] sm:%s806]
                %908 = vst [vmem:[%s814 + $0x170] sm:%s806] %v907
                %v909 = vld [vmem:[%s813 + $0x278] sm:%s806]
                %910 = vst [vmem:[%s814 + $0x178] sm:%s806] %v909
                %v911 = vld [vmem:[%s813 + $0x300] sm:%s806]
                %912 = vst [vmem:[%s814 + $0x180] sm:%s806] %v911
                %v913 = vld [vmem:[%s813 + $0x308] sm:%s806]
                %914 = vst [vmem:[%s814 + $0x188] sm:%s806] %v913
                %v915 = vld [vmem:[%s813 + $0x310] sm:%s806]
                %916 = vst [vmem:[%s814 + $0x190] sm:%s806] %v915
                %v917 = vld [vmem:[%s813 + $0x318] sm:%s806]
                %918 = vst [vmem:[%s814 + $0x198] sm:%s806] %v917
                %v919 = vld [vmem:[%s813 + $0x320] sm:%s806]
                %920 = vst [vmem:[%s814 + $0x1a0] sm:%s806] %v919
                %v921 = vld [vmem:[%s813 + $0x328] sm:%s806]
                %922 = vst [vmem:[%s814 + $0x1a8] sm:%s806] %v921
                %v923 = vld [vmem:[%s813 + $0x330] sm:%s806]
                %924 = vst [vmem:[%s814 + $0x1b0] sm:%s806] %v923
                %v925 = vld [vmem:[%s813 + $0x338] sm:%s806]
                %926 = vst [vmem:[%s814 + $0x1b8] sm:%s806] %v925
                %v927 = vld [vmem:[%s813 + $0x340] sm:%s806]
                %928 = vst [vmem:[%s814 + $0x1c0] sm:%s806] %v927
                %v929 = vld [vmem:[%s813 + $0x348] sm:%s806]
                %930 = vst [vmem:[%s814 + $0x1c8] sm:%s806] %v929
                %v931 = vld [vmem:[%s813 + $0x350] sm:%s806]
                %932 = vst [vmem:[%s814 + $0x1d0] sm:%s806] %v931
                %v933 = vld [vmem:[%s813 + $0x358] sm:%s806]
                %934 = vst [vmem:[%s814 + $0x1d8] sm:%s806] %v933
                %v935 = vld [vmem:[%s813 + $0x360] sm:%s806]
                %936 = vst [vmem:[%s814 + $0x1e0] sm:%s806] %v935
                %v937 = vld [vmem:[%s813 + $0x368] sm:%s806]
                %938 = vst [vmem:[%s814 + $0x1e8] sm:%s806] %v937
                %v939 = vld [vmem:[%s813 + $0x370] sm:%s806]
                %940 = vst [vmem:[%s814 + $0x1f0] sm:%s806] %v939
                %v941 = vld [vmem:[%s813 + $0x378] sm:%s806]
                %942 = vst [vmem:[%s814 + $0x1f8] sm:%s806] %v941
              $region113: #{tpu_custom_call.1} parent=107 // loop_footer
                %s812 = sadd.s32 1, %s808
              $region114: #{tpu_custom_call.1} parent=107 // loop_footer_branch
                %807 = sbr.rel target = $region110
              $region115: #{tpu_custom_call.1} parent=107 // loop_exit
                _
            $region108: #{tpu_custom_call.1} parent=99 // pred_fallthru
              _
          $region100: #{tpu_custom_call.1} parent=95 // pred_fallthru
            _
          %1083 = vnop
        $region96: #{tpu_custom_call.1} parent=15 // pred_fallthru
          _
        // Predicated region
        $region131: #{tpu_custom_call.1} parent=15 // pred_check
          %p1084 = pneg %p140
        $region132: #{tpu_custom_call.1} parent=15 // pred_check_branch
          %1086 = sbr.rel (%p1084) target = $region134
        $region133: #{tpu_custom_call.1} parent=15 // pred_region
          %s1087 = sand.u32 %s130, 1
          %s1088 = sand.u32 %s130, 1
          %s1089 = smul.addr %s1088, 64
          %s1090 = scalar_lea.vmem [#allocation8], %s1089
          %s1091 = smul.u32 16, %s21
          %s1092 = smul.addr %s1091, 2
          %s1093 = sadd.s32 %s22, %s1092
          %s1094 = smul.addr %s20, 64
          %s1095 = sadd.s32 %s1093, %s1094
          %s1096 = smul.addr %s1095, 4
          %s1097 = scalar_lea.vmem %s3, %s1096
          // Predicated region
          $region135: #{tpu_custom_call.1} parent=133 // pred_check
            _
          $region136: #{tpu_custom_call.1} parent=133 // pred_check_branch
            %1099 = sbr.rel (0) target = $region138
          $region137: #{tpu_custom_call.1} parent=133 // pred_region
            // Predicated region
            $region139: #{tpu_custom_call.1} parent=137 // pred_check
              _
            $region140: #{tpu_custom_call.1} parent=137 // pred_check_branch
              %1101 = sbr.rel target = $region142
            $region141: #{tpu_custom_call.1} parent=137 // pred_region
              // Predicated region
              $region154: #{tpu_custom_call.1} parent=141 // pred_check
                _
              $region155: #{tpu_custom_call.1} parent=141 // pred_check_branch
                %1147 = sbr.rel (0) target = $region157
              $region156: #{tpu_custom_call.1} parent=141 // pred_region
                loop: start=0, step=1, limit=1
                $region158: #{tpu_custom_call.1} parent=156 // loop_pre_header
                  _
                $region159: #{tpu_custom_call.1} parent=156 // loop_header
                  %s1149 = sphi 0, %s1153
                  %p1150 = scmp.ge.s32.totalorder %s1149, 1
                  %s1154 = sphi %s1097, %s1097
                  %s1155 = sphi %s1090, %s1090
                $region160: #{tpu_custom_call.1} parent=156 // loop_header_branch
                  %1152 = sbr.rel (%p1150) target = $region164
                $region161: #{tpu_custom_call.1} parent=156 // loop_body
                  _
                $region162: #{tpu_custom_call.1} parent=156 // loop_footer
                  %s1153 = sadd.s32 1, %s1149
                $region163: #{tpu_custom_call.1} parent=156 // loop_footer_branch
                  %1148 = sbr.rel target = $region159
                $region164: #{tpu_custom_call.1} parent=156 // loop_exit
                  _
                %s1157 = ssub.s32 16, 1
                loop: start=0, step=1, limit=1
                $region165: #{tpu_custom_call.1} parent=156 // loop_pre_header
                  _
                $region166: #{tpu_custom_call.1} parent=156 // loop_header
                  %s1159 = sphi 0, %s1163
                  %p1160 = scmp.ge.s32.totalorder %s1159, 1
                  %s1164 = sphi %s1097, %s1097
                  %s1165 = sphi %s1090, %s1090
                $region167: #{tpu_custom_call.1} parent=156 // loop_header_branch
                  %1162 = sbr.rel (%p1160) target = $region171
                $region168: #{tpu_custom_call.1} parent=156 // loop_body
                  %v1166 = vld [vmem:[%s1164] sm:%s1157]
                  %1167 = vst [vmem:[%s1165] sm:%s1157] %v1166
                  %v1168 = vld [vmem:[%s1164 + $0x8] sm:%s1157]
                  %1169 = vst [vmem:[%s1165 + $0x4] sm:%s1157] %v1168
                  %v1170 = vld [vmem:[%s1164 + $0x10] sm:%s1157]
                  %1171 = vst [vmem:[%s1165 + $0x8] sm:%s1157] %v1170
                  %v1172 = vld [vmem:[%s1164 + $0x18] sm:%s1157]
                  %1173 = vst [vmem:[%s1165 + $0xc] sm:%s1157] %v1172
                  %v1174 = vld [vmem:[%s1164 + $0x20] sm:%s1157]
                  %1175 = vst [vmem:[%s1165 + $0x10] sm:%s1157] %v1174
                  %v1176 = vld [vmem:[%s1164 + $0x28] sm:%s1157]
                  %1177 = vst [vmem:[%s1165 + $0x14] sm:%s1157] %v1176
                  %v1178 = vld [vmem:[%s1164 + $0x30] sm:%s1157]
                  %1179 = vst [vmem:[%s1165 + $0x18] sm:%s1157] %v1178
                  %v1180 = vld [vmem:[%s1164 + $0x38] sm:%s1157]
                  %1181 = vst [vmem:[%s1165 + $0x1c] sm:%s1157] %v1180
                  %v1182 = vld [vmem:[%s1164 + $0x40] sm:%s1157]
                  %1183 = vst [vmem:[%s1165 + $0x20] sm:%s1157] %v1182
                  %v1184 = vld [vmem:[%s1164 + $0x48] sm:%s1157]
                  %1185 = vst [vmem:[%s1165 + $0x24] sm:%s1157] %v1184
                  %v1186 = vld [vmem:[%s1164 + $0x50] sm:%s1157]
                  %1187 = vst [vmem:[%s1165 + $0x28] sm:%s1157] %v1186
                  %v1188 = vld [vmem:[%s1164 + $0x58] sm:%s1157]
                  %1189 = vst [vmem:[%s1165 + $0x2c] sm:%s1157] %v1188
                  %v1190 = vld [vmem:[%s1164 + $0x60] sm:%s1157]
                  %1191 = vst [vmem:[%s1165 + $0x30] sm:%s1157] %v1190
                  %v1192 = vld [vmem:[%s1164 + $0x68] sm:%s1157]
                  %1193 = vst [vmem:[%s1165 + $0x34] sm:%s1157] %v1192
                  %v1194 = vld [vmem:[%s1164 + $0x70] sm:%s1157]
                  %1195 = vst [vmem:[%s1165 + $0x38] sm:%s1157] %v1194
                  %v1196 = vld [vmem:[%s1164 + $0x78] sm:%s1157]
                  %1197 = vst [vmem:[%s1165 + $0x3c] sm:%s1157] %v1196
                $region169: #{tpu_custom_call.1} parent=156 // loop_footer
                  %s1163 = sadd.s32 1, %s1159
                $region170: #{tpu_custom_call.1} parent=156 // loop_footer_branch
                  %1158 = sbr.rel target = $region166
                $region171: #{tpu_custom_call.1} parent=156 // loop_exit
                  _
              $region157: #{tpu_custom_call.1} parent=141 // pred_fallthru
                _
            $region142: #{tpu_custom_call.1} parent=137 // pred_fallthru
              _
            // Predicated region
            $region143: #{tpu_custom_call.1} parent=137 // pred_check
              _
            $region144: #{tpu_custom_call.1} parent=137 // pred_check_branch
              %1103 = sbr.rel (0) target = $region146
            $region145: #{tpu_custom_call.1} parent=137 // pred_region
              %s1105 = ssub.s32 16, 1
              loop: start=0, step=1, limit=1
              $region147: #{tpu_custom_call.1} parent=145 // loop_pre_header
                _
              $region148: #{tpu_custom_call.1} parent=145 // loop_header
                %s1107 = sphi 0, %s1111
                %p1108 = scmp.ge.s32.totalorder %s1107, 1
                %s1112 = sphi %s1097, %s1097
                %s1113 = sphi %s1090, %s1090
              $region149: #{tpu_custom_call.1} parent=145 // loop_header_branch
                %1110 = sbr.rel (%p1108) target = $region153
              $region150: #{tpu_custom_call.1} parent=145 // loop_body
                %v1114 = vld [vmem:[%s1112] sm:%s1105]
                %1115 = vst [vmem:[%s1113] sm:%s1105] %v1114
                %v1116 = vld [vmem:[%s1112 + $0x8] sm:%s1105]
                %1117 = vst [vmem:[%s1113 + $0x4] sm:%s1105] %v1116
                %v1118 = vld [vmem:[%s1112 + $0x10] sm:%s1105]
                %1119 = vst [vmem:[%s1113 + $0x8] sm:%s1105] %v1118
                %v1120 = vld [vmem:[%s1112 + $0x18] sm:%s1105]
                %1121 = vst [vmem:[%s1113 + $0xc] sm:%s1105] %v1120
                %v1122 = vld [vmem:[%s1112 + $0x20] sm:%s1105]
                %1123 = vst [vmem:[%s1113 + $0x10] sm:%s1105] %v1122
                %v1124 = vld [vmem:[%s1112 + $0x28] sm:%s1105]
                %1125 = vst [vmem:[%s1113 + $0x14] sm:%s1105] %v1124
                %v1126 = vld [vmem:[%s1112 + $0x30] sm:%s1105]
                %1127 = vst [vmem:[%s1113 + $0x18] sm:%s1105] %v1126
                %v1128 = vld [vmem:[%s1112 + $0x38] sm:%s1105]
                %1129 = vst [vmem:[%s1113 + $0x1c] sm:%s1105] %v1128
                %v1130 = vld [vmem:[%s1112 + $0x40] sm:%s1105]
                %1131 = vst [vmem:[%s1113 + $0x20] sm:%s1105] %v1130
                %v1132 = vld [vmem:[%s1112 + $0x48] sm:%s1105]
                %1133 = vst [vmem:[%s1113 + $0x24] sm:%s1105] %v1132
                %v1134 = vld [vmem:[%s1112 + $0x50] sm:%s1105]
                %1135 = vst [vmem:[%s1113 + $0x28] sm:%s1105] %v1134
                %v1136 = vld [vmem:[%s1112 + $0x58] sm:%s1105]
                %1137 = vst [vmem:[%s1113 + $0x2c] sm:%s1105] %v1136
                %v1138 = vld [vmem:[%s1112 + $0x60] sm:%s1105]
                %1139 = vst [vmem:[%s1113 + $0x30] sm:%s1105] %v1138
                %v1140 = vld [vmem:[%s1112 + $0x68] sm:%s1105]
                %1141 = vst [vmem:[%s1113 + $0x34] sm:%s1105] %v1140
                %v1142 = vld [vmem:[%s1112 + $0x70] sm:%s1105]
                %1143 = vst [vmem:[%s1113 + $0x38] sm:%s1105] %v1142
                %v1144 = vld [vmem:[%s1112 + $0x78] sm:%s1105]
                %1145 = vst [vmem:[%s1113 + $0x3c] sm:%s1105] %v1144
              $region151: #{tpu_custom_call.1} parent=145 // loop_footer
                %s1111 = sadd.s32 1, %s1107
              $region152: #{tpu_custom_call.1} parent=145 // loop_footer_branch
                %1106 = sbr.rel target = $region148
              $region153: #{tpu_custom_call.1} parent=145 // loop_exit
                _
            $region146: #{tpu_custom_call.1} parent=137 // pred_fallthru
              _
          $region138: #{tpu_custom_call.1} parent=133 // pred_fallthru
            _
          %1198 = vnop
        $region134: #{tpu_custom_call.1} parent=15 // pred_fallthru
          _
      $region16: #{tpu_custom_call.1} parent=5 // pred_fallthru
        _
      %p1199 = scmp.le.s32.totalorder 1, %s13
      %p1200 = scmp.lt.s32.totalorder %s13, 9
      %p1201 = pnand %p1199, %p1200
      %p1202 = pneg %p1201
      // Predicated region
      $region172: #{tpu_custom_call.1} parent=5 // pred_check
        _
      $region173: #{tpu_custom_call.1} parent=5 // pred_check_branch
        %1204 = sbr.rel (%p1201) target = $region175
      $region174: #{tpu_custom_call.1} parent=5 // pred_region
        %s1205 = ssub.s32 %s13, 1
        %s1206 = sand.u32 %s47, 1
        %s1207 = sand.u32 %s47, 1
        %s1208 = smul.addr %s1207, 512
        %s1209 = scalar_lea.vmem [#allocation5], %s1208
        // Predicated region
        $region176: #{tpu_custom_call.1} parent=174 // pred_check
          %p1210 = pneg %p60
        $region177: #{tpu_custom_call.1} parent=174 // pred_check_branch
          %1212 = sbr.rel (%p1210) target = $region179
        $region178: #{tpu_custom_call.1} parent=174 // pred_region
          _
        $region179: #{tpu_custom_call.1} parent=174 // pred_fallthru
          _
        %s1213 = sand.u32 %s75, 1
        %s1214 = sand.u32 %s75, 1
        %s1215 = smul.addr %s1214, 512
        %s1216 = scalar_lea.vmem [#allocation6], %s1215
        // Predicated region
        $region180: #{tpu_custom_call.1} parent=174 // pred_check
          %p1217 = pneg %p88
        $region181: #{tpu_custom_call.1} parent=174 // pred_check_branch
          %1219 = sbr.rel (%p1217) target = $region183
        $region182: #{tpu_custom_call.1} parent=174 // pred_region
          _
        $region183: #{tpu_custom_call.1} parent=174 // pred_fallthru
          _
        %s1220 = sand.u32 %s103, 1
        %s1221 = sand.u32 %s103, 1
        %s1222 = smul.addr %s1221, 512
        %s1223 = scalar_lea.vmem [#allocation7], %s1222
        // Predicated region
        $region184: #{tpu_custom_call.1} parent=174 // pred_check
          %p1224 = pneg %p116
        $region185: #{tpu_custom_call.1} parent=174 // pred_check_branch
          %1226 = sbr.rel (%p1224) target = $region187
        $region186: #{tpu_custom_call.1} parent=174 // pred_region
          _
        $region187: #{tpu_custom_call.1} parent=174 // pred_fallthru
          _
        %s1227 = sand.u32 %s133, 1
        %s1228 = sand.u32 %s133, 1
        %s1229 = smul.addr %s1228, 64
        %s1230 = scalar_lea.vmem [#allocation8], %s1229
        // Predicated region
        $region188: #{tpu_custom_call.1} parent=174 // pred_check
          %p1231 = pneg %p146
        $region189: #{tpu_custom_call.1} parent=174 // pred_check_branch
          %1233 = sbr.rel (%p1231) target = $region191
        $region190: #{tpu_custom_call.1} parent=174 // pred_region
          _
        $region191: #{tpu_custom_call.1} parent=174 // pred_fallthru
          _
        %s1234 = sand.u32 %s47, 1
        %s1235 = sand.u32 %s47, 1
        %s1236 = smul.addr %s1235, 512
        %s1237 = scalar_lea.vmem [#allocation5], %s1236
        %p1238 = pneg %p60
        %p1239 = pneg %p57
        %s1240 = sand.u32 %s75, 1
        %s1241 = sand.u32 %s75, 1
        %s1242 = smul.addr %s1241, 512
        %s1243 = scalar_lea.vmem [#allocation6], %s1242
        %p1244 = pneg %p88
        %p1245 = pneg %p85
        %s1246 = sand.u32 %s103, 1
        %s1247 = sand.u32 %s103, 1
        %s1248 = smul.addr %s1247, 512
        %s1249 = scalar_lea.vmem [#allocation7], %s1248
        %p1250 = pneg %p116
        %p1251 = pneg %p113
        %s1252 = sand.u32 %s133, 1
        %s1253 = sand.u32 %s133, 1
        %s1254 = smul.addr %s1253, 64
        %s1255 = scalar_lea.vmem [#allocation8], %s1254
        %p1256 = pneg %p146
        %p1257 = pneg %p143
        %p1258 = pneg %p174
        %p1259 = pneg %p171
        %s1260 = sand.u32 %s161, 1
        %s1261 = scalar_lea.sflag [#allocation10], %s1260
        %s1262 = sand.u32 %s161, 1
        %s1263 = smul.addr %s1262, 256
        %s1264 = scalar_lea.vmem [#allocation9], %s1263
        %s1265 = smul.u32 16, %s24
        %s1266 = smul.u32 16, %s25
        %s1267 = smul.u32 16, %s25
        %s1268 = smul.u32 16, %s24
        %s1269 = smul.u32 16, %s24
        %p1270 = scmp.eq.s32.totalorder %s25, 0
        // Predicated region
        $region192: #{tpu_custom_call.1} parent=174 // pred_check
          %p1271 = pneg %p1270
        $region193: #{tpu_custom_call.1} parent=174 // pred_check_branch
          %1273 = sbr.rel (%p1271) target = $region195
        $region194: #{tpu_custom_call.1} parent=174 // pred_region
          %vm1274 = vcmask 7168
          %1275 = vst.msk [vmem:[#allocation2] sm:$0xff] %vm1274, -inf
          %1276 = vst.msk [vmem:[#allocation2 + $0x8] sm:$0xff] %vm1274, -inf
          %1277 = vst.msk [vmem:[#allocation2 + $0x10] sm:$0xff] %vm1274, -inf
          %1278 = vst.msk [vmem:[#allocation2 + $0x18] sm:$0xff] %vm1274, -inf
          %1279 = vst.msk [vmem:[#allocation2 + $0x20] sm:$0xff] %vm1274, -inf
          %1280 = vst.msk [vmem:[#allocation2 + $0x28] sm:$0xff] %vm1274, -inf
          %1281 = vst.msk [vmem:[#allocation2 + $0x30] sm:$0xff] %vm1274, -inf
          %1282 = vst.msk [vmem:[#allocation2 + $0x38] sm:$0xff] %vm1274, -inf
          %1283 = vst.msk [vmem:[#allocation2 + $0x40] sm:$0xff] %vm1274, -inf
          %1284 = vst.msk [vmem:[#allocation2 + $0x48] sm:$0xff] %vm1274, -inf
          %1285 = vst.msk [vmem:[#allocation2 + $0x50] sm:$0xff] %vm1274, -inf
          %1286 = vst.msk [vmem:[#allocation2 + $0x58] sm:$0xff] %vm1274, -inf
          %1287 = vst.msk [vmem:[#allocation2 + $0x60] sm:$0xff] %vm1274, -inf
          %1288 = vst.msk [vmem:[#allocation2 + $0x68] sm:$0xff] %vm1274, -inf
          %1289 = vst.msk [vmem:[#allocation2 + $0x70] sm:$0xff] %vm1274, -inf
          %1290 = vst.msk [vmem:[#allocation2 + $0x78] sm:$0xff] %vm1274, -inf
          %1291 = vst.msk [vmem:[#allocation2 + $0x80] sm:$0xff] %vm1274, -inf
          %1292 = vst.msk [vmem:[#allocation2 + $0x88] sm:$0xff] %vm1274, -inf
          %1293 = vst.msk [vmem:[#allocation2 + $0x90] sm:$0xff] %vm1274, -inf
          %1294 = vst.msk [vmem:[#allocation2 + $0x98] sm:$0xff] %vm1274, -inf
          %1295 = vst.msk [vmem:[#allocation2 + $0xa0] sm:$0xff] %vm1274, -inf
          %1296 = vst.msk [vmem:[#allocation2 + $0xa8] sm:$0xff] %vm1274, -inf
          %1297 = vst.msk [vmem:[#allocation2 + $0xb0] sm:$0xff] %vm1274, -inf
          %1298 = vst.msk [vmem:[#allocation2 + $0xb8] sm:$0xff] %vm1274, -inf
          %1299 = vst.msk [vmem:[#allocation2 + $0xc0] sm:$0xff] %vm1274, -inf
          %1300 = vst.msk [vmem:[#allocation2 + $0xc8] sm:$0xff] %vm1274, -inf
          %1301 = vst.msk [vmem:[#allocation2 + $0xd0] sm:$0xff] %vm1274, -inf
          %1302 = vst.msk [vmem:[#allocation2 + $0xd8] sm:$0xff] %vm1274, -inf
          %1303 = vst.msk [vmem:[#allocation2 + $0xe0] sm:$0xff] %vm1274, -inf
          %1304 = vst.msk [vmem:[#allocation2 + $0xe8] sm:$0xff] %vm1274, -inf
          %1305 = vst.msk [vmem:[#allocation2 + $0xf0] sm:$0xff] %vm1274, -inf
          %1306 = vst.msk [vmem:[#allocation2 + $0xf8] sm:$0xff] %vm1274, -inf
          %1307 = vst.msk [vmem:[#allocation2 + $0x100] sm:$0xff] %vm1274, -inf
          %1308 = vst.msk [vmem:[#allocation2 + $0x108] sm:$0xff] %vm1274, -inf
          %1309 = vst.msk [vmem:[#allocation2 + $0x110] sm:$0xff] %vm1274, -inf
          %1310 = vst.msk [vmem:[#allocation2 + $0x118] sm:$0xff] %vm1274, -inf
          %1311 = vst.msk [vmem:[#allocation2 + $0x120] sm:$0xff] %vm1274, -inf
          %1312 = vst.msk [vmem:[#allocation2 + $0x128] sm:$0xff] %vm1274, -inf
          %1313 = vst.msk [vmem:[#allocation2 + $0x130] sm:$0xff] %vm1274, -inf
          %1314 = vst.msk [vmem:[#allocation2 + $0x138] sm:$0xff] %vm1274, -inf
          %1315 = vst.msk [vmem:[#allocation2 + $0x140] sm:$0xff] %vm1274, -inf
          %1316 = vst.msk [vmem:[#allocation2 + $0x148] sm:$0xff] %vm1274, -inf
          %1317 = vst.msk [vmem:[#allocation2 + $0x150] sm:$0xff] %vm1274, -inf
          %1318 = vst.msk [vmem:[#allocation2 + $0x158] sm:$0xff] %vm1274, -inf
          %1319 = vst.msk [vmem:[#allocation2 + $0x160] sm:$0xff] %vm1274, -inf
          %1320 = vst.msk [vmem:[#allocation2 + $0x168] sm:$0xff] %vm1274, -inf
          %1321 = vst.msk [vmem:[#allocation2 + $0x170] sm:$0xff] %vm1274, -inf
          %1322 = vst.msk [vmem:[#allocation2 + $0x178] sm:$0xff] %vm1274, -inf
          %1323 = vst.msk [vmem:[#allocation2 + $0x180] sm:$0xff] %vm1274, -inf
          %1324 = vst.msk [vmem:[#allocation2 + $0x188] sm:$0xff] %vm1274, -inf
          %1325 = vst.msk [vmem:[#allocation2 + $0x190] sm:$0xff] %vm1274, -inf
          %1326 = vst.msk [vmem:[#allocation2 + $0x198] sm:$0xff] %vm1274, -inf
          %1327 = vst.msk [vmem:[#allocation2 + $0x1a0] sm:$0xff] %vm1274, -inf
          %1328 = vst.msk [vmem:[#allocation2 + $0x1a8] sm:$0xff] %vm1274, -inf
          %1329 = vst.msk [vmem:[#allocation2 + $0x1b0] sm:$0xff] %vm1274, -inf
          %1330 = vst.msk [vmem:[#allocation2 + $0x1b8] sm:$0xff] %vm1274, -inf
          %1331 = vst.msk [vmem:[#allocation2 + $0x1c0] sm:$0xff] %vm1274, -inf
          %1332 = vst.msk [vmem:[#allocation2 + $0x1c8] sm:$0xff] %vm1274, -inf
          %1333 = vst.msk [vmem:[#allocation2 + $0x1d0] sm:$0xff] %vm1274, -inf
          %1334 = vst.msk [vmem:[#allocation2 + $0x1d8] sm:$0xff] %vm1274, -inf
          %1335 = vst.msk [vmem:[#allocation2 + $0x1e0] sm:$0xff] %vm1274, -inf
          %1336 = vst.msk [vmem:[#allocation2 + $0x1e8] sm:$0xff] %vm1274, -inf
          %1337 = vst.msk [vmem:[#allocation2 + $0x1f0] sm:$0xff] %vm1274, -inf
          %1338 = vst.msk [vmem:[#allocation2 + $0x1f8] sm:$0xff] %vm1274, -inf
          %1339 = vst.msk [vmem:[#allocation3] sm:$0xff] %vm1274, 0.0
          %1340 = vst.msk [vmem:[#allocation3 + $0x8] sm:$0xff] %vm1274, 0.0
          %1341 = vst.msk [vmem:[#allocation3 + $0x10] sm:$0xff] %vm1274, 0.0
          %1342 = vst.msk [vmem:[#allocation3 + $0x18] sm:$0xff] %vm1274, 0.0
          %1343 = vst.msk [vmem:[#allocation3 + $0x20] sm:$0xff] %vm1274, 0.0
          %1344 = vst.msk [vmem:[#allocation3 + $0x28] sm:$0xff] %vm1274, 0.0
          %1345 = vst.msk [vmem:[#allocation3 + $0x30] sm:$0xff] %vm1274, 0.0
          %1346 = vst.msk [vmem:[#allocation3 + $0x38] sm:$0xff] %vm1274, 0.0
          %1347 = vst.msk [vmem:[#allocation3 + $0x40] sm:$0xff] %vm1274, 0.0
          %1348 = vst.msk [vmem:[#allocation3 + $0x48] sm:$0xff] %vm1274, 0.0
          %1349 = vst.msk [vmem:[#allocation3 + $0x50] sm:$0xff] %vm1274, 0.0
          %1350 = vst.msk [vmem:[#allocation3 + $0x58] sm:$0xff] %vm1274, 0.0
          %1351 = vst.msk [vmem:[#allocation3 + $0x60] sm:$0xff] %vm1274, 0.0
          %1352 = vst.msk [vmem:[#allocation3 + $0x68] sm:$0xff] %vm1274, 0.0
          %1353 = vst.msk [vmem:[#allocation3 + $0x70] sm:$0xff] %vm1274, 0.0
          %1354 = vst.msk [vmem:[#allocation3 + $0x78] sm:$0xff] %vm1274, 0.0
          %1355 = vst.msk [vmem:[#allocation3 + $0x80] sm:$0xff] %vm1274, 0.0
          %1356 = vst.msk [vmem:[#allocation3 + $0x88] sm:$0xff] %vm1274, 0.0
          %1357 = vst.msk [vmem:[#allocation3 + $0x90] sm:$0xff] %vm1274, 0.0
          %1358 = vst.msk [vmem:[#allocation3 + $0x98] sm:$0xff] %vm1274, 0.0
          %1359 = vst.msk [vmem:[#allocation3 + $0xa0] sm:$0xff] %vm1274, 0.0
          %1360 = vst.msk [vmem:[#allocation3 + $0xa8] sm:$0xff] %vm1274, 0.0
          %1361 = vst.msk [vmem:[#allocation3 + $0xb0] sm:$0xff] %vm1274, 0.0
          %1362 = vst.msk [vmem:[#allocation3 + $0xb8] sm:$0xff] %vm1274, 0.0
          %1363 = vst.msk [vmem:[#allocation3 + $0xc0] sm:$0xff] %vm1274, 0.0
          %1364 = vst.msk [vmem:[#allocation3 + $0xc8] sm:$0xff] %vm1274, 0.0
          %1365 = vst.msk [vmem:[#allocation3 + $0xd0] sm:$0xff] %vm1274, 0.0
          %1366 = vst.msk [vmem:[#allocation3 + $0xd8] sm:$0xff] %vm1274, 0.0
          %1367 = vst.msk [vmem:[#allocation3 + $0xe0] sm:$0xff] %vm1274, 0.0
          %1368 = vst.msk [vmem:[#allocation3 + $0xe8] sm:$0xff] %vm1274, 0.0
          %1369 = vst.msk [vmem:[#allocation3 + $0xf0] sm:$0xff] %vm1274, 0.0
          %1370 = vst.msk [vmem:[#allocation3 + $0xf8] sm:$0xff] %vm1274, 0.0
          %1371 = vst.msk [vmem:[#allocation3 + $0x100] sm:$0xff] %vm1274, 0.0
          %1372 = vst.msk [vmem:[#allocation3 + $0x108] sm:$0xff] %vm1274, 0.0
          %1373 = vst.msk [vmem:[#allocation3 + $0x110] sm:$0xff] %vm1274, 0.0
          %1374 = vst.msk [vmem:[#allocation3 + $0x118] sm:$0xff] %vm1274, 0.0
          %1375 = vst.msk [vmem:[#allocation3 + $0x120] sm:$0xff] %vm1274, 0.0
          %1376 = vst.msk [vmem:[#allocation3 + $0x128] sm:$0xff] %vm1274, 0.0
          %1377 = vst.msk [vmem:[#allocation3 + $0x130] sm:$0xff] %vm1274, 0.0
          %1378 = vst.msk [vmem:[#allocation3 + $0x138] sm:$0xff] %vm1274, 0.0
          %1379 = vst.msk [vmem:[#allocation3 + $0x140] sm:$0xff] %vm1274, 0.0
          %1380 = vst.msk [vmem:[#allocation3 + $0x148] sm:$0xff] %vm1274, 0.0
          %1381 = vst.msk [vmem:[#allocation3 + $0x150] sm:$0xff] %vm1274, 0.0
          %1382 = vst.msk [vmem:[#allocation3 + $0x158] sm:$0xff] %vm1274, 0.0
          %1383 = vst.msk [vmem:[#allocation3 + $0x160] sm:$0xff] %vm1274, 0.0
          %1384 = vst.msk [vmem:[#allocation3 + $0x168] sm:$0xff] %vm1274, 0.0
          %1385 = vst.msk [vmem:[#allocation3 + $0x170] sm:$0xff] %vm1274, 0.0
          %1386 = vst.msk [vmem:[#allocation3 + $0x178] sm:$0xff] %vm1274, 0.0
          %1387 = vst.msk [vmem:[#allocation3 + $0x180] sm:$0xff] %vm1274, 0.0
          %1388 = vst.msk [vmem:[#allocation3 + $0x188] sm:$0xff] %vm1274, 0.0
          %1389 = vst.msk [vmem:[#allocation3 + $0x190] sm:$0xff] %vm1274, 0.0
          %1390 = vst.msk [vmem:[#allocation3 + $0x198] sm:$0xff] %vm1274, 0.0
          %1391 = vst.msk [vmem:[#allocation3 + $0x1a0] sm:$0xff] %vm1274, 0.0
          %1392 = vst.msk [vmem:[#allocation3 + $0x1a8] sm:$0xff] %vm1274, 0.0
          %1393 = vst.msk [vmem:[#allocation3 + $0x1b0] sm:$0xff] %vm1274, 0.0
          %1394 = vst.msk [vmem:[#allocation3 + $0x1b8] sm:$0xff] %vm1274, 0.0
          %1395 = vst.msk [vmem:[#allocation3 + $0x1c0] sm:$0xff] %vm1274, 0.0
          %1396 = vst.msk [vmem:[#allocation3 + $0x1c8] sm:$0xff] %vm1274, 0.0
          %1397 = vst.msk [vmem:[#allocation3 + $0x1d0] sm:$0xff] %vm1274, 0.0
          %1398 = vst.msk [vmem:[#allocation3 + $0x1d8] sm:$0xff] %vm1274, 0.0
          %1399 = vst.msk [vmem:[#allocation3 + $0x1e0] sm:$0xff] %vm1274, 0.0
          %1400 = vst.msk [vmem:[#allocation3 + $0x1e8] sm:$0xff] %vm1274, 0.0
          %1401 = vst.msk [vmem:[#allocation3 + $0x1f0] sm:$0xff] %vm1274, 0.0
          %1402 = vst.msk [vmem:[#allocation3 + $0x1f8] sm:$0xff] %vm1274, 0.0
          %vm1403 = vcmask 523264
          %1404 = vst.msk [vmem:[#allocation4] sm:$0xff] %vm1403, 0.0
          %1405 = vst.msk [vmem:[#allocation4 + $0x8] sm:$0xff] %vm1403, 0.0
          %1406 = vst.msk [vmem:[#allocation4 + $0x10] sm:$0xff] %vm1403, 0.0
          %1407 = vst.msk [vmem:[#allocation4 + $0x18] sm:$0xff] %vm1403, 0.0
          %1408 = vst.msk [vmem:[#allocation4 + $0x20] sm:$0xff] %vm1403, 0.0
          %1409 = vst.msk [vmem:[#allocation4 + $0x28] sm:$0xff] %vm1403, 0.0
          %1410 = vst.msk [vmem:[#allocation4 + $0x30] sm:$0xff] %vm1403, 0.0
          %1411 = vst.msk [vmem:[#allocation4 + $0x38] sm:$0xff] %vm1403, 0.0
          %1412 = vst.msk [vmem:[#allocation4 + $0x40] sm:$0xff] %vm1403, 0.0
          %1413 = vst.msk [vmem:[#allocation4 + $0x48] sm:$0xff] %vm1403, 0.0
          %1414 = vst.msk [vmem:[#allocation4 + $0x50] sm:$0xff] %vm1403, 0.0
          %1415 = vst.msk [vmem:[#allocation4 + $0x58] sm:$0xff] %vm1403, 0.0
          %1416 = vst.msk [vmem:[#allocation4 + $0x60] sm:$0xff] %vm1403, 0.0
          %1417 = vst.msk [vmem:[#allocation4 + $0x68] sm:$0xff] %vm1403, 0.0
          %1418 = vst.msk [vmem:[#allocation4 + $0x70] sm:$0xff] %vm1403, 0.0
          %1419 = vst.msk [vmem:[#allocation4 + $0x78] sm:$0xff] %vm1403, 0.0
          %1420 = vst.msk [vmem:[#allocation4 + $0x80] sm:$0xff] %vm1403, 0.0
          %1421 = vst.msk [vmem:[#allocation4 + $0x88] sm:$0xff] %vm1403, 0.0
          %1422 = vst.msk [vmem:[#allocation4 + $0x90] sm:$0xff] %vm1403, 0.0
          %1423 = vst.msk [vmem:[#allocation4 + $0x98] sm:$0xff] %vm1403, 0.0
          %1424 = vst.msk [vmem:[#allocation4 + $0xa0] sm:$0xff] %vm1403, 0.0
          %1425 = vst.msk [vmem:[#allocation4 + $0xa8] sm:$0xff] %vm1403, 0.0
          %1426 = vst.msk [vmem:[#allocation4 + $0xb0] sm:$0xff] %vm1403, 0.0
          %1427 = vst.msk [vmem:[#allocation4 + $0xb8] sm:$0xff] %vm1403, 0.0
          %1428 = vst.msk [vmem:[#allocation4 + $0xc0] sm:$0xff] %vm1403, 0.0
          %1429 = vst.msk [vmem:[#allocation4 + $0xc8] sm:$0xff] %vm1403, 0.0
          %1430 = vst.msk [vmem:[#allocation4 + $0xd0] sm:$0xff] %vm1403, 0.0
          %1431 = vst.msk [vmem:[#allocation4 + $0xd8] sm:$0xff] %vm1403, 0.0
          %1432 = vst.msk [vmem:[#allocation4 + $0xe0] sm:$0xff] %vm1403, 0.0
          %1433 = vst.msk [vmem:[#allocation4 + $0xe8] sm:$0xff] %vm1403, 0.0
          %1434 = vst.msk [vmem:[#allocation4 + $0xf0] sm:$0xff] %vm1403, 0.0
          %1435 = vst.msk [vmem:[#allocation4 + $0xf8] sm:$0xff] %vm1403, 0.0
          %1436 = vst.msk [vmem:[#allocation4 + $0x100] sm:$0xff] %vm1403, 0.0
          %1437 = vst.msk [vmem:[#allocation4 + $0x108] sm:$0xff] %vm1403, 0.0
          %1438 = vst.msk [vmem:[#allocation4 + $0x110] sm:$0xff] %vm1403, 0.0
          %1439 = vst.msk [vmem:[#allocation4 + $0x118] sm:$0xff] %vm1403, 0.0
          %1440 = vst.msk [vmem:[#allocation4 + $0x120] sm:$0xff] %vm1403, 0.0
          %1441 = vst.msk [vmem:[#allocation4 + $0x128] sm:$0xff] %vm1403, 0.0
          %1442 = vst.msk [vmem:[#allocation4 + $0x130] sm:$0xff] %vm1403, 0.0
          %1443 = vst.msk [vmem:[#allocation4 + $0x138] sm:$0xff] %vm1403, 0.0
          %1444 = vst.msk [vmem:[#allocation4 + $0x140] sm:$0xff] %vm1403, 0.0
          %1445 = vst.msk [vmem:[#allocation4 + $0x148] sm:$0xff] %vm1403, 0.0
          %1446 = vst.msk [vmem:[#allocation4 + $0x150] sm:$0xff] %vm1403, 0.0
          %1447 = vst.msk [vmem:[#allocation4 + $0x158] sm:$0xff] %vm1403, 0.0
          %1448 = vst.msk [vmem:[#allocation4 + $0x160] sm:$0xff] %vm1403, 0.0
          %1449 = vst.msk [vmem:[#allocation4 + $0x168] sm:$0xff] %vm1403, 0.0
          %1450 = vst.msk [vmem:[#allocation4 + $0x170] sm:$0xff] %vm1403, 0.0
          %1451 = vst.msk [vmem:[#allocation4 + $0x178] sm:$0xff] %vm1403, 0.0
          %1452 = vst.msk [vmem:[#allocation4 + $0x180] sm:$0xff] %vm1403, 0.0
          %1453 = vst.msk [vmem:[#allocation4 + $0x188] sm:$0xff] %vm1403, 0.0
          %1454 = vst.msk [vmem:[#allocation4 + $0x190] sm:$0xff] %vm1403, 0.0
          %1455 = vst.msk [vmem:[#allocation4 + $0x198] sm:$0xff] %vm1403, 0.0
          %1456 = vst.msk [vmem:[#allocation4 + $0x1a0] sm:$0xff] %vm1403, 0.0
          %1457 = vst.msk [vmem:[#allocation4 + $0x1a8] sm:$0xff] %vm1403, 0.0
          %1458 = vst.msk [vmem:[#allocation4 + $0x1b0] sm:$0xff] %vm1403, 0.0
          %1459 = vst.msk [vmem:[#allocation4 + $0x1b8] sm:$0xff] %vm1403, 0.0
          %1460 = vst.msk [vmem:[#allocation4 + $0x1c0] sm:$0xff] %vm1403, 0.0
          %1461 = vst.msk [vmem:[#allocation4 + $0x1c8] sm:$0xff] %vm1403, 0.0
          %1462 = vst.msk [vmem:[#allocation4 + $0x1d0] sm:$0xff] %vm1403, 0.0
          %1463 = vst.msk [vmem:[#allocation4 + $0x1d8] sm:$0xff] %vm1403, 0.0
          %1464 = vst.msk [vmem:[#allocation4 + $0x1e0] sm:$0xff] %vm1403, 0.0
          %1465 = vst.msk [vmem:[#allocation4 + $0x1e8] sm:$0xff] %vm1403, 0.0
          %1466 = vst.msk [vmem:[#allocation4 + $0x1f0] sm:$0xff] %vm1403, 0.0
          %1467 = vst.msk [vmem:[#allocation4 + $0x1f8] sm:$0xff] %vm1403, 0.0
        $region195: #{tpu_custom_call.1} parent=174 // pred_fallthru
          _
        %v1468 = vld [vmem:[%s1209] sm:$0xff]
        %v1469 = vld [vmem:[%s1209 + $0x8] sm:$0xff]
        %v1470 = vld [vmem:[%s1209 + $0x10] sm:$0xff]
        %v1471 = vld [vmem:[%s1209 + $0x18] sm:$0xff]
        %v1472 = vld [vmem:[%s1209 + $0x20] sm:$0xff]
        %v1473 = vld [vmem:[%s1209 + $0x28] sm:$0xff]
        %v1474 = vld [vmem:[%s1209 + $0x30] sm:$0xff]
        %v1475 = vld [vmem:[%s1209 + $0x38] sm:$0xff]
        %v1476 = vld [vmem:[%s1209 + $0x40] sm:$0xff]
        %v1477 = vld [vmem:[%s1209 + $0x48] sm:$0xff]
        %v1478 = vld [vmem:[%s1209 + $0x50] sm:$0xff]
        %v1479 = vld [vmem:[%s1209 + $0x58] sm:$0xff]
        %v1480 = vld [vmem:[%s1209 + $0x60] sm:$0xff]
        %v1481 = vld [vmem:[%s1209 + $0x68] sm:$0xff]
        %v1482 = vld [vmem:[%s1209 + $0x70] sm:$0xff]
        %v1483 = vld [vmem:[%s1209 + $0x78] sm:$0xff]
        %v1484 = vld [vmem:[%s1209 + $0x80] sm:$0xff]
        %v1485 = vld [vmem:[%s1209 + $0x88] sm:$0xff]
        %v1486 = vld [vmem:[%s1209 + $0x90] sm:$0xff]
        %v1487 = vld [vmem:[%s1209 + $0x98] sm:$0xff]
        %v1488 = vld [vmem:[%s1209 + $0xa0] sm:$0xff]
        %v1489 = vld [vmem:[%s1209 + $0xa8] sm:$0xff]
        %v1490 = vld [vmem:[%s1209 + $0xb0] sm:$0xff]
        %v1491 = vld [vmem:[%s1209 + $0xb8] sm:$0xff]
        %v1492 = vld [vmem:[%s1209 + $0xc0] sm:$0xff]
        %v1493 = vld [vmem:[%s1209 + $0xc8] sm:$0xff]
        %v1494 = vld [vmem:[%s1209 + $0xd0] sm:$0xff]
        %v1495 = vld [vmem:[%s1209 + $0xd8] sm:$0xff]
        %v1496 = vld [vmem:[%s1209 + $0xe0] sm:$0xff]
        %v1497 = vld [vmem:[%s1209 + $0xe8] sm:$0xff]
        %v1498 = vld [vmem:[%s1209 + $0xf0] sm:$0xff]
        %v1499 = vld [vmem:[%s1209 + $0xf8] sm:$0xff]
        %v1500 = vld [vmem:[%s1209 + $0x100] sm:$0xff]
        %v1501 = vld [vmem:[%s1209 + $0x108] sm:$0xff]
        %v1502 = vld [vmem:[%s1209 + $0x110] sm:$0xff]
        %v1503 = vld [vmem:[%s1209 + $0x118] sm:$0xff]
        %v1504 = vld [vmem:[%s1209 + $0x120] sm:$0xff]
        %v1505 = vld [vmem:[%s1209 + $0x128] sm:$0xff]
        %v1506 = vld [vmem:[%s1209 + $0x130] sm:$0xff]
        %v1507 = vld [vmem:[%s1209 + $0x138] sm:$0xff]
        %v1508 = vld [vmem:[%s1209 + $0x140] sm:$0xff]
        %v1509 = vld [vmem:[%s1209 + $0x148] sm:$0xff]
        %v1510 = vld [vmem:[%s1209 + $0x150] sm:$0xff]
        %v1511 = vld [vmem:[%s1209 + $0x158] sm:$0xff]
        %v1512 = vld [vmem:[%s1209 + $0x160] sm:$0xff]
        %v1513 = vld [vmem:[%s1209 + $0x168] sm:$0xff]
        %v1514 = vld [vmem:[%s1209 + $0x170] sm:$0xff]
        %v1515 = vld [vmem:[%s1209 + $0x178] sm:$0xff]
        %v1516 = vld [vmem:[%s1209 + $0x180] sm:$0xff]
        %v1517 = vld [vmem:[%s1209 + $0x188] sm:$0xff]
        %v1518 = vld [vmem:[%s1209 + $0x190] sm:$0xff]
        %v1519 = vld [vmem:[%s1209 + $0x198] sm:$0xff]
        %v1520 = vld [vmem:[%s1209 + $0x1a0] sm:$0xff]
        %v1521 = vld [vmem:[%s1209 + $0x1a8] sm:$0xff]
        %v1522 = vld [vmem:[%s1209 + $0x1b0] sm:$0xff]
        %v1523 = vld [vmem:[%s1209 + $0x1b8] sm:$0xff]
        %v1524 = vld [vmem:[%s1209 + $0x1c0] sm:$0xff]
        %v1525 = vld [vmem:[%s1209 + $0x1c8] sm:$0xff]
        %v1526 = vld [vmem:[%s1209 + $0x1d0] sm:$0xff]
        %v1527 = vld [vmem:[%s1209 + $0x1d8] sm:$0xff]
        %v1528 = vld [vmem:[%s1209 + $0x1e0] sm:$0xff]
        %v1529 = vld [vmem:[%s1209 + $0x1e8] sm:$0xff]
        %v1530 = vld [vmem:[%s1209 + $0x1f0] sm:$0xff]
        %v1531 = vld [vmem:[%s1209 + $0x1f8] sm:$0xff]
        %v1532 = vmul.f32 %v1468, 0.125
        %v1533 = vmul.f32 %v1469, 0.125
        %v1534 = vmul.f32 %v1470, 0.125
        %v1535 = vmul.f32 %v1471, 0.125
        %v1536 = vmul.f32 %v1472, 0.125
        %v1537 = vmul.f32 %v1473, 0.125
        %v1538 = vmul.f32 %v1474, 0.125
        %v1539 = vmul.f32 %v1475, 0.125
        %v1540 = vmul.f32 %v1476, 0.125
        %v1541 = vmul.f32 %v1477, 0.125
        %v1542 = vmul.f32 %v1478, 0.125
        %v1543 = vmul.f32 %v1479, 0.125
        %v1544 = vmul.f32 %v1480, 0.125
        %v1545 = vmul.f32 %v1481, 0.125
        %v1546 = vmul.f32 %v1482, 0.125
        %v1547 = vmul.f32 %v1483, 0.125
        %v1548 = vmul.f32 %v1484, 0.125
        %v1549 = vmul.f32 %v1485, 0.125
        %v1550 = vmul.f32 %v1486, 0.125
        %v1551 = vmul.f32 %v1487, 0.125
        %v1552 = vmul.f32 %v1488, 0.125
        %v1553 = vmul.f32 %v1489, 0.125
        %v1554 = vmul.f32 %v1490, 0.125
        %v1555 = vmul.f32 %v1491, 0.125
        %v1556 = vmul.f32 %v1492, 0.125
        %v1557 = vmul.f32 %v1493, 0.125
        %v1558 = vmul.f32 %v1494, 0.125
        %v1559 = vmul.f32 %v1495, 0.125
        %v1560 = vmul.f32 %v1496, 0.125
        %v1561 = vmul.f32 %v1497, 0.125
        %v1562 = vmul.f32 %v1498, 0.125
        %v1563 = vmul.f32 %v1499, 0.125
        %v1564 = vmul.f32 %v1500, 0.125
        %v1565 = vmul.f32 %v1501, 0.125
        %v1566 = vmul.f32 %v1502, 0.125
        %v1567 = vmul.f32 %v1503, 0.125
        %v1568 = vmul.f32 %v1504, 0.125
        %v1569 = vmul.f32 %v1505, 0.125
        %v1570 = vmul.f32 %v1506, 0.125
        %v1571 = vmul.f32 %v1507, 0.125
        %v1572 = vmul.f32 %v1508, 0.125
        %v1573 = vmul.f32 %v1509, 0.125
        %v1574 = vmul.f32 %v1510, 0.125
        %v1575 = vmul.f32 %v1511, 0.125
        %v1576 = vmul.f32 %v1512, 0.125
        %v1577 = vmul.f32 %v1513, 0.125
        %v1578 = vmul.f32 %v1514, 0.125
        %v1579 = vmul.f32 %v1515, 0.125
        %v1580 = vmul.f32 %v1516, 0.125
        %v1581 = vmul.f32 %v1517, 0.125
        %v1582 = vmul.f32 %v1518, 0.125
        %v1583 = vmul.f32 %v1519, 0.125
        %v1584 = vmul.f32 %v1520, 0.125
        %v1585 = vmul.f32 %v1521, 0.125
        %v1586 = vmul.f32 %v1522, 0.125
        %v1587 = vmul.f32 %v1523, 0.125
        %v1588 = vmul.f32 %v1524, 0.125
        %v1589 = vmul.f32 %v1525, 0.125
        %v1590 = vmul.f32 %v1526, 0.125
        %v1591 = vmul.f32 %v1527, 0.125
        %v1592 = vmul.f32 %v1528, 0.125
        %v1593 = vmul.f32 %v1529, 0.125
        %v1594 = vmul.f32 %v1530, 0.125
        %v1595 = vmul.f32 %v1531, 0.125
        %v1596 = vld [vmem:[%s1216] sm:$0xff]
        %v1597 = vld [vmem:[%s1216 + $0x8] sm:$0xff]
        %v1598 = vld [vmem:[%s1216 + $0x10] sm:$0xff]
        %v1599 = vld [vmem:[%s1216 + $0x18] sm:$0xff]
        %v1600 = vld [vmem:[%s1216 + $0x20] sm:$0xff]
        %v1601 = vld [vmem:[%s1216 + $0x28] sm:$0xff]
        %v1602 = vld [vmem:[%s1216 + $0x30] sm:$0xff]
        %v1603 = vld [vmem:[%s1216 + $0x38] sm:$0xff]
        %v1604 = vld [vmem:[%s1216 + $0x40] sm:$0xff]
        %v1605 = vld [vmem:[%s1216 + $0x48] sm:$0xff]
        %v1606 = vld [vmem:[%s1216 + $0x50] sm:$0xff]
        %v1607 = vld [vmem:[%s1216 + $0x58] sm:$0xff]
        %v1608 = vld [vmem:[%s1216 + $0x60] sm:$0xff]
        %v1609 = vld [vmem:[%s1216 + $0x68] sm:$0xff]
        %v1610 = vld [vmem:[%s1216 + $0x70] sm:$0xff]
        %v1611 = vld [vmem:[%s1216 + $0x78] sm:$0xff]
        %v1612 = vld [vmem:[%s1216 + $0x80] sm:$0xff]
        %v1613 = vld [vmem:[%s1216 + $0x88] sm:$0xff]
        %v1614 = vld [vmem:[%s1216 + $0x90] sm:$0xff]
        %v1615 = vld [vmem:[%s1216 + $0x98] sm:$0xff]
        %v1616 = vld [vmem:[%s1216 + $0xa0] sm:$0xff]
        %v1617 = vld [vmem:[%s1216 + $0xa8] sm:$0xff]
        %v1618 = vld [vmem:[%s1216 + $0xb0] sm:$0xff]
        %v1619 = vld [vmem:[%s1216 + $0xb8] sm:$0xff]
        %v1620 = vld [vmem:[%s1216 + $0xc0] sm:$0xff]
        %v1621 = vld [vmem:[%s1216 + $0xc8] sm:$0xff]
        %v1622 = vld [vmem:[%s1216 + $0xd0] sm:$0xff]
        %v1623 = vld [vmem:[%s1216 + $0xd8] sm:$0xff]
        %v1624 = vld [vmem:[%s1216 + $0xe0] sm:$0xff]
        %v1625 = vld [vmem:[%s1216 + $0xe8] sm:$0xff]
        %v1626 = vld [vmem:[%s1216 + $0xf0] sm:$0xff]
        %v1627 = vld [vmem:[%s1216 + $0xf8] sm:$0xff]
        %v1628 = vld [vmem:[%s1216 + $0x100] sm:$0xff]
        %v1629 = vld [vmem:[%s1216 + $0x108] sm:$0xff]
        %v1630 = vld [vmem:[%s1216 + $0x110] sm:$0xff]
        %v1631 = vld [vmem:[%s1216 + $0x118] sm:$0xff]
        %v1632 = vld [vmem:[%s1216 + $0x120] sm:$0xff]
        %v1633 = vld [vmem:[%s1216 + $0x128] sm:$0xff]
        %v1634 = vld [vmem:[%s1216 + $0x130] sm:$0xff]
        %v1635 = vld [vmem:[%s1216 + $0x138] sm:$0xff]
        %v1636 = vld [vmem:[%s1216 + $0x140] sm:$0xff]
        %v1637 = vld [vmem:[%s1216 + $0x148] sm:$0xff]
        %v1638 = vld [vmem:[%s1216 + $0x150] sm:$0xff]
        %v1639 = vld [vmem:[%s1216 + $0x158] sm:$0xff]
        %v1640 = vld [vmem:[%s1216 + $0x160] sm:$0xff]
        %v1641 = vld [vmem:[%s1216 + $0x168] sm:$0xff]
        %v1642 = vld [vmem:[%s1216 + $0x170] sm:$0xff]
        %v1643 = vld [vmem:[%s1216 + $0x178] sm:$0xff]
        %v1644 = vld [vmem:[%s1216 + $0x180] sm:$0xff]
        %v1645 = vld [vmem:[%s1216 + $0x188] sm:$0xff]
        %v1646 = vld [vmem:[%s1216 + $0x190] sm:$0xff]
        %v1647 = vld [vmem:[%s1216 + $0x198] sm:$0xff]
        %v1648 = vld [vmem:[%s1216 + $0x1a0] sm:$0xff]
        %v1649 = vld [vmem:[%s1216 + $0x1a8] sm:$0xff]
        %v1650 = vld [vmem:[%s1216 + $0x1b0] sm:$0xff]
        %v1651 = vld [vmem:[%s1216 + $0x1b8] sm:$0xff]
        %v1652 = vld [vmem:[%s1216 + $0x1c0] sm:$0xff]
        %v1653 = vld [vmem:[%s1216 + $0x1c8] sm:$0xff]
        %v1654 = vld [vmem:[%s1216 + $0x1d0] sm:$0xff]
        %v1655 = vld [vmem:[%s1216 + $0x1d8] sm:$0xff]
        %v1656 = vld [vmem:[%s1216 + $0x1e0] sm:$0xff]
        %v1657 = vld [vmem:[%s1216 + $0x1e8] sm:$0xff]
        %v1658 = vld [vmem:[%s1216 + $0x1f0] sm:$0xff]
        %v1659 = vld [vmem:[%s1216 + $0x1f8] sm:$0xff]
        %v1660 = vld [vmem:[%s1223] sm:$0xff]
        %v1661 = vld [vmem:[%s1223 + $0x8] sm:$0xff]
        %v1662 = vld [vmem:[%s1223 + $0x10] sm:$0xff]
        %v1663 = vld [vmem:[%s1223 + $0x18] sm:$0xff]
        %v1664 = vld [vmem:[%s1223 + $0x20] sm:$0xff]
        %v1665 = vld [vmem:[%s1223 + $0x28] sm:$0xff]
        %v1666 = vld [vmem:[%s1223 + $0x30] sm:$0xff]
        %v1667 = vld [vmem:[%s1223 + $0x38] sm:$0xff]
        %v1668 = vld [vmem:[%s1223 + $0x40] sm:$0xff]
        %v1669 = vld [vmem:[%s1223 + $0x48] sm:$0xff]
        %v1670 = vld [vmem:[%s1223 + $0x50] sm:$0xff]
        %v1671 = vld [vmem:[%s1223 + $0x58] sm:$0xff]
        %v1672 = vld [vmem:[%s1223 + $0x60] sm:$0xff]
        %v1673 = vld [vmem:[%s1223 + $0x68] sm:$0xff]
        %v1674 = vld [vmem:[%s1223 + $0x70] sm:$0xff]
        %v1675 = vld [vmem:[%s1223 + $0x78] sm:$0xff]
        %v1676 = vld [vmem:[%s1223 + $0x80] sm:$0xff]
        %v1677 = vld [vmem:[%s1223 + $0x88] sm:$0xff]
        %v1678 = vld [vmem:[%s1223 + $0x90] sm:$0xff]
        %v1679 = vld [vmem:[%s1223 + $0x98] sm:$0xff]
        %v1680 = vld [vmem:[%s1223 + $0xa0] sm:$0xff]
        %v1681 = vld [vmem:[%s1223 + $0xa8] sm:$0xff]
        %v1682 = vld [vmem:[%s1223 + $0xb0] sm:$0xff]
        %v1683 = vld [vmem:[%s1223 + $0xb8] sm:$0xff]
        %v1684 = vld [vmem:[%s1223 + $0xc0] sm:$0xff]
        %v1685 = vld [vmem:[%s1223 + $0xc8] sm:$0xff]
        %v1686 = vld [vmem:[%s1223 + $0xd0] sm:$0xff]
        %v1687 = vld [vmem:[%s1223 + $0xd8] sm:$0xff]
        %v1688 = vld [vmem:[%s1223 + $0xe0] sm:$0xff]
        %v1689 = vld [vmem:[%s1223 + $0xe8] sm:$0xff]
        %v1690 = vld [vmem:[%s1223 + $0xf0] sm:$0xff]
        %v1691 = vld [vmem:[%s1223 + $0xf8] sm:$0xff]
        %v1692 = vld [vmem:[%s1223 + $0x100] sm:$0xff]
        %v1693 = vld [vmem:[%s1223 + $0x108] sm:$0xff]
        %v1694 = vld [vmem:[%s1223 + $0x110] sm:$0xff]
        %v1695 = vld [vmem:[%s1223 + $0x118] sm:$0xff]
        %v1696 = vld [vmem:[%s1223 + $0x120] sm:$0xff]
        %v1697 = vld [vmem:[%s1223 + $0x128] sm:$0xff]
        %v1698 = vld [vmem:[%s1223 + $0x130] sm:$0xff]
        %v1699 = vld [vmem:[%s1223 + $0x138] sm:$0xff]
        %v1700 = vld [vmem:[%s1223 + $0x140] sm:$0xff]
        %v1701 = vld [vmem:[%s1223 + $0x148] sm:$0xff]
        %v1702 = vld [vmem:[%s1223 + $0x150] sm:$0xff]
        %v1703 = vld [vmem:[%s1223 + $0x158] sm:$0xff]
        %v1704 = vld [vmem:[%s1223 + $0x160] sm:$0xff]
        %v1705 = vld [vmem:[%s1223 + $0x168] sm:$0xff]
        %v1706 = vld [vmem:[%s1223 + $0x170] sm:$0xff]
        %v1707 = vld [vmem:[%s1223 + $0x178] sm:$0xff]
        %v1708 = vld [vmem:[%s1223 + $0x180] sm:$0xff]
        %v1709 = vld [vmem:[%s1223 + $0x188] sm:$0xff]
        %v1710 = vld [vmem:[%s1223 + $0x190] sm:$0xff]
        %v1711 = vld [vmem:[%s1223 + $0x198] sm:$0xff]
        %v1712 = vld [vmem:[%s1223 + $0x1a0] sm:$0xff]
        %v1713 = vld [vmem:[%s1223 + $0x1a8] sm:$0xff]
        %v1714 = vld [vmem:[%s1223 + $0x1b0] sm:$0xff]
        %v1715 = vld [vmem:[%s1223 + $0x1b8] sm:$0xff]
        %v1716 = vld [vmem:[%s1223 + $0x1c0] sm:$0xff]
        %v1717 = vld [vmem:[%s1223 + $0x1c8] sm:$0xff]
        %v1718 = vld [vmem:[%s1223 + $0x1d0] sm:$0xff]
        %v1719 = vld [vmem:[%s1223 + $0x1d8] sm:$0xff]
        %v1720 = vld [vmem:[%s1223 + $0x1e0] sm:$0xff]
        %v1721 = vld [vmem:[%s1223 + $0x1e8] sm:$0xff]
        %v1722 = vld [vmem:[%s1223 + $0x1f0] sm:$0xff]
        %v1723 = vld [vmem:[%s1223 + $0x1f8] sm:$0xff]
        %v1724 = vld [vmem:[%s1230] sm:$0xf]
        %v1725 = vld [vmem:[%s1230 + $0x4] sm:$0xf]
        %v1726 = vld [vmem:[%s1230 + $0x8] sm:$0xf]
        %v1727 = vld [vmem:[%s1230 + $0xc] sm:$0xf]
        %v1728 = vld [vmem:[%s1230 + $0x10] sm:$0xf]
        %v1729 = vld [vmem:[%s1230 + $0x14] sm:$0xf]
        %v1730 = vld [vmem:[%s1230 + $0x18] sm:$0xf]
        %v1731 = vld [vmem:[%s1230 + $0x1c] sm:$0xf]
        %v1732 = vld [vmem:[%s1230 + $0x20] sm:$0xf]
        %v1733 = vld [vmem:[%s1230 + $0x24] sm:$0xf]
        %v1734 = vld [vmem:[%s1230 + $0x28] sm:$0xf]
        %v1735 = vld [vmem:[%s1230 + $0x2c] sm:$0xf]
        %v1736 = vld [vmem:[%s1230 + $0x30] sm:$0xf]
        %v1737 = vld [vmem:[%s1230 + $0x34] sm:$0xf]
        %v1738 = vld [vmem:[%s1230 + $0x38] sm:$0xf]
        %v1739 = vld [vmem:[%s1230 + $0x3c] sm:$0xf]
        %v1740 = vunpack.c.l.bf16 %v1724
        %v1741 = vunpack.c.l.bf16 %v1725
        %v1742 = vunpack.c.l.bf16 %v1726
        %v1743 = vunpack.c.l.bf16 %v1727
        %v1744 = vunpack.c.l.bf16 %v1728
        %v1745 = vunpack.c.l.bf16 %v1729
        %v1746 = vunpack.c.l.bf16 %v1730
        %v1747 = vunpack.c.l.bf16 %v1731
        %v1748 = vunpack.c.l.bf16 %v1732
        %v1749 = vunpack.c.l.bf16 %v1733
        %v1750 = vunpack.c.l.bf16 %v1734
        %v1751 = vunpack.c.l.bf16 %v1735
        %v1752 = vunpack.c.l.bf16 %v1736
        %v1753 = vunpack.c.l.bf16 %v1737
        %v1754 = vunpack.c.l.bf16 %v1738
        %v1755 = vunpack.c.l.bf16 %v1739
        %v1756 = vmul.f32 %v1740, -1e+30
        %v1757 = vmul.f32 %v1741, -1e+30
        %v1758 = vmul.f32 %v1742, -1e+30
        %v1759 = vmul.f32 %v1743, -1e+30
        %v1760 = vmul.f32 %v1744, -1e+30
        %v1761 = vmul.f32 %v1745, -1e+30
        %v1762 = vmul.f32 %v1746, -1e+30
        %v1763 = vmul.f32 %v1747, -1e+30
        %v1764 = vmul.f32 %v1748, -1e+30
        %v1765 = vmul.f32 %v1749, -1e+30
        %v1766 = vmul.f32 %v1750, -1e+30
        %v1767 = vmul.f32 %v1751, -1e+30
        %v1768 = vmul.f32 %v1752, -1e+30
        %v1769 = vmul.f32 %v1753, -1e+30
        %v1770 = vmul.f32 %v1754, -1e+30
        %v1771 = vmul.f32 %v1755, -1e+30
        %vm1772 = vcmask 523264
        %v1774 = vsel %vm1772, %v1532, 0
        %v1777 = vsel %vm1772, %v1533, 0
        %v1780 = vsel %vm1772, %v1534, 0
        %v1783 = vsel %vm1772, %v1535, 0
        %v1786 = vsel %vm1772, %v1536, 0
        %v1789 = vsel %vm1772, %v1537, 0
        %v1792 = vsel %vm1772, %v1538, 0
        %v1795 = vsel %vm1772, %v1539, 0
        %v1798 = vsel %vm1772, %v1540, 0
        %v1801 = vsel %vm1772, %v1541, 0
        %v1804 = vsel %vm1772, %v1542, 0
        %v1807 = vsel %vm1772, %v1543, 0
        %v1810 = vsel %vm1772, %v1544, 0
        %v1813 = vsel %vm1772, %v1545, 0
        %v1816 = vsel %vm1772, %v1546, 0
        %v1819 = vsel %vm1772, %v1547, 0
        %v1822 = vsel %vm1772, %v1596, 0
        %v1825 = vsel %vm1772, %v1597, 0
        %v1828 = vsel %vm1772, %v1598, 0
        %v1831 = vsel %vm1772, %v1599, 0
        %v1834 = vsel %vm1772, %v1600, 0
        %v1837 = vsel %vm1772, %v1601, 0
        %v1840 = vsel %vm1772, %v1602, 0
        %v1843 = vsel %vm1772, %v1603, 0
        %v1846 = vsel %vm1772, %v1604, 0
        %v1849 = vsel %vm1772, %v1605, 0
        %v1852 = vsel %vm1772, %v1606, 0
        %v1855 = vsel %vm1772, %v1607, 0
        %v1858 = vsel %vm1772, %v1608, 0
        %v1861 = vsel %vm1772, %v1609, 0
        %v1864 = vsel %vm1772, %v1610, 0
        %v1867 = vsel %vm1772, %v1611, 0
        %1869 = vmatprep.subr.mxu0 0.0
        %1870 = vmatpush1.xpose.msra.mxu0 %v1867
        %1871 = vmatprep.subr.mxu0 0.0
        %1872 = vmatpush1.xpose.msra.mxu0 %v1864
        %1873 = vmatprep.subr.mxu0 0.0
        %1874 = vmatpush1.xpose.msra.mxu0 %v1861
        %1875 = vmatprep.subr.mxu0 0.0
        %1876 = vmatpush1.xpose.msra.mxu0 %v1858
        %1877 = vmatprep.subr.mxu0 0.0
        %1878 = vmatpush1.xpose.msra.mxu0 %v1855
        %1879 = vmatprep.subr.mxu0 0.0
        %1880 = vmatpush1.xpose.msra.mxu0 %v1852
        %1881 = vmatprep.subr.mxu0 0.0
        %1882 = vmatpush1.xpose.msra.mxu0 %v1849
        %1883 = vmatprep.subr.mxu0 0.0
        %1884 = vmatpush1.xpose.msra.mxu0 %v1846
        %1885 = vmatprep.subr.mxu0 0.0
        %1886 = vmatpush1.xpose.msra.mxu0 %v1843
        %1887 = vmatprep.subr.mxu0 0.0
        %1888 = vmatpush1.xpose.msra.mxu0 %v1840
        %1889 = vmatprep.subr.mxu0 0.0
        %1890 = vmatpush1.xpose.msra.mxu0 %v1837
        %1891 = vmatprep.subr.mxu0 0.0
        %1892 = vmatpush1.xpose.msra.mxu0 %v1834
        %1893 = vmatprep.subr.mxu0 0.0
        %1894 = vmatpush1.xpose.msra.mxu0 %v1831
        %1895 = vmatprep.subr.mxu0 0.0
        %1896 = vmatpush1.xpose.msra.mxu0 %v1828
        %1897 = vmatprep.subr.mxu0 0.0
        %1898 = vmatpush1.xpose.msra.mxu0 %v1825
        %1899 = vmatprep.subr.mxu0 0.0
        %1900 = vmatpush1.xpose.msra.mxu0 %v1822
        %1901 = vmatprep.subr.mxu0 0.0
        %1902 = vmatpush2.xpose.msra.mxu0 0.0
        %1903 = vmatprep.subr.mxu0 0.0
        %1904 = vmatpush2.xpose.msra.mxu0 0.0
        %1905 = vmatprep.subr.mxu0 0.0
        %1906 = vmatpush2.xpose.msra.mxu0 0.0
        %1907 = vmatprep.subr.mxu0 0.0
        %1908 = vmatpush2.xpose.msra.mxu0 0.0
        %1909 = vmatprep.subr.mxu0 0.0
        %1910 = vmatpush2.xpose.msra.mxu0 0.0
        %1911 = vmatprep.subr.mxu0 0.0
        %1912 = vmatpush2.xpose.msra.mxu0 0.0
        %1913 = vmatprep.subr.mxu0 0.0
        %1914 = vmatpush2.xpose.msra.mxu0 0.0
        %1915 = vmatprep.subr.mxu0 0.0
        %1916 = vmatpush2.xpose.msra.mxu0 0.0
        %1917 = vmatprep.subr.mxu0 0.0
        %1918 = vmatpush2.xpose.msra.mxu0 0.0
        %1919 = vmatprep.subr.mxu0 0.0
        %1920 = vmatpush2.xpose.msra.mxu0 0.0
        %1921 = vmatprep.subr.mxu0 0.0
        %1922 = vmatpush2.xpose.msra.mxu0 0.0
        %1923 = vmatprep.subr.mxu0 0.0
        %1924 = vmatpush2.xpose.msra.mxu0 0.0
        %1925 = vmatprep.subr.mxu0 0.0
        %1926 = vmatpush2.xpose.msra.mxu0 0.0
        %1927 = vmatprep.subr.mxu0 0.0
        %1928 = vmatpush2.xpose.msra.mxu0 0.0
        %1929 = vmatprep.subr.mxu0 0.0
        %1930 = vmatpush2.xpose.msra.mxu0 0.0
        %1931 = vmatprep.subr.mxu0 0.0
        %1932 = vmatpush2.xpose.msra.mxu0 0.0
        %1933 = vmatprep.mubr.f32.mxu0 0.0
        %1934 = vmatmul.mubr.f32.gmra.mxu0 %v1774
        %v1935 = vpop.f32.mrf.mxu0
        %v1936 = vadd.f32 %v1756, %v1935
        %v1937 = vpop.f32.mrf.mxu0
        %1938 = vmatprep.mubr.f32.mxu0 0.0
        %1939 = vmatmul.mubr.f32.gmra.mxu0 %v1777
        %v1940 = vpop.f32.mrf.mxu0
        %v1941 = vadd.f32 %v1757, %v1940
        %v1942 = vpop.f32.mrf.mxu0
        %1943 = vmatprep.mubr.f32.mxu0 0.0
        %1944 = vmatmul.mubr.f32.gmra.mxu0 %v1780
        %v1945 = vpop.f32.mrf.mxu0
        %v1946 = vadd.f32 %v1758, %v1945
        %v1947 = vpop.f32.mrf.mxu0
        %1948 = vmatprep.mubr.f32.mxu0 0.0
        %1949 = vmatmul.mubr.f32.gmra.mxu0 %v1783
        %v1950 = vpop.f32.mrf.mxu0
        %v1951 = vadd.f32 %v1759, %v1950
        %v1952 = vpop.f32.mrf.mxu0
        %1953 = vmatprep.mubr.f32.mxu0 0.0
        %1954 = vmatmul.mubr.f32.gmra.mxu0 %v1786
        %v1955 = vpop.f32.mrf.mxu0
        %v1956 = vadd.f32 %v1760, %v1955
        %v1957 = vpop.f32.mrf.mxu0
        %1958 = vmatprep.mubr.f32.mxu0 0.0
        %1959 = vmatmul.mubr.f32.gmra.mxu0 %v1789
        %v1960 = vpop.f32.mrf.mxu0
        %v1961 = vadd.f32 %v1761, %v1960
        %v1962 = vpop.f32.mrf.mxu0
        %1963 = vmatprep.mubr.f32.mxu0 0.0
        %1964 = vmatmul.mubr.f32.gmra.mxu0 %v1792
        %v1965 = vpop.f32.mrf.mxu0
        %v1966 = vadd.f32 %v1762, %v1965
        %v1967 = vpop.f32.mrf.mxu0
        %1968 = vmatprep.mubr.f32.mxu0 0.0
        %1969 = vmatmul.mubr.f32.gmra.mxu0 %v1795
        %v1970 = vpop.f32.mrf.mxu0
        %v1971 = vadd.f32 %v1763, %v1970
        %v1972 = vpop.f32.mrf.mxu0
        %1973 = vmatprep.mubr.f32.mxu0 0.0
        %1974 = vmatmul.mubr.f32.gmra.mxu0 %v1798
        %v1975 = vpop.f32.mrf.mxu0
        %v1976 = vadd.f32 %v1764, %v1975
        %v1977 = vpop.f32.mrf.mxu0
        %1978 = vmatprep.mubr.f32.mxu0 0.0
        %1979 = vmatmul.mubr.f32.gmra.mxu0 %v1801
        %v1980 = vpop.f32.mrf.mxu0
        %v1981 = vadd.f32 %v1765, %v1980
        %v1982 = vpop.f32.mrf.mxu0
        %1983 = vmatprep.mubr.f32.mxu0 0.0
        %1984 = vmatmul.mubr.f32.gmra.mxu0 %v1804
        %v1985 = vpop.f32.mrf.mxu0
        %v1986 = vadd.f32 %v1766, %v1985
        %v1987 = vpop.f32.mrf.mxu0
        %1988 = vmatprep.mubr.f32.mxu0 0.0
        %1989 = vmatmul.mubr.f32.gmra.mxu0 %v1807
        %v1990 = vpop.f32.mrf.mxu0
        %v1991 = vadd.f32 %v1767, %v1990
        %v1992 = vpop.f32.mrf.mxu0
        %1993 = vmatprep.mubr.f32.mxu0 0.0
        %1994 = vmatmul.mubr.f32.gmra.mxu0 %v1810
        %v1995 = vpop.f32.mrf.mxu0
        %v1996 = vadd.f32 %v1768, %v1995
        %v1997 = vpop.f32.mrf.mxu0
        %1998 = vmatprep.mubr.f32.mxu0 0.0
        %1999 = vmatmul.mubr.f32.gmra.mxu0 %v1813
        %v2000 = vpop.f32.mrf.mxu0
        %v2001 = vadd.f32 %v1769, %v2000
        %v2002 = vpop.f32.mrf.mxu0
        %2003 = vmatprep.mubr.f32.mxu0 0.0
        %2004 = vmatmul.mubr.f32.gmra.mxu0 %v1816
        %v2005 = vpop.f32.mrf.mxu0
        %v2006 = vadd.f32 %v1770, %v2005
        %v2007 = vpop.f32.mrf.mxu0
        %2008 = vmatprep.mubr.f32.mxu0 0.0
        %2009 = vmatmul.mubr.f32.gmra.mxu0 %v1819
        %v2010 = vpop.f32.mrf.mxu0
        %v2011 = vadd.f32 %v1771, %v2010
        %v2012 = vpop.f32.mrf.mxu0
        %2013 = vdwg.mxu0
        %v2015 = vsel %vm1772, %v1548, 0
        %v2018 = vsel %vm1772, %v1549, 0
        %v2021 = vsel %vm1772, %v1550, 0
        %v2024 = vsel %vm1772, %v1551, 0
        %v2027 = vsel %vm1772, %v1552, 0
        %v2030 = vsel %vm1772, %v1553, 0
        %v2033 = vsel %vm1772, %v1554, 0
        %v2036 = vsel %vm1772, %v1555, 0
        %v2039 = vsel %vm1772, %v1556, 0
        %v2042 = vsel %vm1772, %v1557, 0
        %v2045 = vsel %vm1772, %v1558, 0
        %v2048 = vsel %vm1772, %v1559, 0
        %v2051 = vsel %vm1772, %v1560, 0
        %v2054 = vsel %vm1772, %v1561, 0
        %v2057 = vsel %vm1772, %v1562, 0
        %v2060 = vsel %vm1772, %v1563, 0
        %v2063 = vsel %vm1772, %v1612, 0
        %v2066 = vsel %vm1772, %v1613, 0
        %v2069 = vsel %vm1772, %v1614, 0
        %v2072 = vsel %vm1772, %v1615, 0
        %v2075 = vsel %vm1772, %v1616, 0
        %v2078 = vsel %vm1772, %v1617, 0
        %v2081 = vsel %vm1772, %v1618, 0
        %v2084 = vsel %vm1772, %v1619, 0
        %v2087 = vsel %vm1772, %v1620, 0
        %v2090 = vsel %vm1772, %v1621, 0
        %v2093 = vsel %vm1772, %v1622, 0
        %v2096 = vsel %vm1772, %v1623, 0
        %v2099 = vsel %vm1772, %v1624, 0
        %v2102 = vsel %vm1772, %v1625, 0
        %v2105 = vsel %vm1772, %v1626, 0
        %v2108 = vsel %vm1772, %v1627, 0
        %2110 = vmatprep.subr.mxu0 0.0
        %2111 = vmatpush1.xpose.msra.mxu0 %v2108
        %2112 = vmatprep.subr.mxu0 0.0
        %2113 = vmatpush1.xpose.msra.mxu0 %v2105
        %2114 = vmatprep.subr.mxu0 0.0
        %2115 = vmatpush1.xpose.msra.mxu0 %v2102
        %2116 = vmatprep.subr.mxu0 0.0
        %2117 = vmatpush1.xpose.msra.mxu0 %v2099
        %2118 = vmatprep.subr.mxu0 0.0
        %2119 = vmatpush1.xpose.msra.mxu0 %v2096
        %2120 = vmatprep.subr.mxu0 0.0
        %2121 = vmatpush1.xpose.msra.mxu0 %v2093
        %2122 = vmatprep.subr.mxu0 0.0
        %2123 = vmatpush1.xpose.msra.mxu0 %v2090
        %2124 = vmatprep.subr.mxu0 0.0
        %2125 = vmatpush1.xpose.msra.mxu0 %v2087
        %2126 = vmatprep.subr.mxu0 0.0
        %2127 = vmatpush1.xpose.msra.mxu0 %v2084
        %2128 = vmatprep.subr.mxu0 0.0
        %2129 = vmatpush1.xpose.msra.mxu0 %v2081
        %2130 = vmatprep.subr.mxu0 0.0
        %2131 = vmatpush1.xpose.msra.mxu0 %v2078
        %2132 = vmatprep.subr.mxu0 0.0
        %2133 = vmatpush1.xpose.msra.mxu0 %v2075
        %2134 = vmatprep.subr.mxu0 0.0
        %2135 = vmatpush1.xpose.msra.mxu0 %v2072
        %2136 = vmatprep.subr.mxu0 0.0
        %2137 = vmatpush1.xpose.msra.mxu0 %v2069
        %2138 = vmatprep.subr.mxu0 0.0
        %2139 = vmatpush1.xpose.msra.mxu0 %v2066
        %2140 = vmatprep.subr.mxu0 0.0
        %2141 = vmatpush1.xpose.msra.mxu0 %v2063
        %2142 = vmatprep.subr.mxu0 0.0
        %2143 = vmatpush2.xpose.msra.mxu0 0.0
        %2144 = vmatprep.subr.mxu0 0.0
        %2145 = vmatpush2.xpose.msra.mxu0 0.0
        %2146 = vmatprep.subr.mxu0 0.0
        %2147 = vmatpush2.xpose.msra.mxu0 0.0
        %2148 = vmatprep.subr.mxu0 0.0
        %2149 = vmatpush2.xpose.msra.mxu0 0.0
        %2150 = vmatprep.subr.mxu0 0.0
        %2151 = vmatpush2.xpose.msra.mxu0 0.0
        %2152 = vmatprep.subr.mxu0 0.0
        %2153 = vmatpush2.xpose.msra.mxu0 0.0
        %2154 = vmatprep.subr.mxu0 0.0
        %2155 = vmatpush2.xpose.msra.mxu0 0.0
        %2156 = vmatprep.subr.mxu0 0.0
        %2157 = vmatpush2.xpose.msra.mxu0 0.0
        %2158 = vmatprep.subr.mxu0 0.0
        %2159 = vmatpush2.xpose.msra.mxu0 0.0
        %2160 = vmatprep.subr.mxu0 0.0
        %2161 = vmatpush2.xpose.msra.mxu0 0.0
        %2162 = vmatprep.subr.mxu0 0.0
        %2163 = vmatpush2.xpose.msra.mxu0 0.0
        %2164 = vmatprep.subr.mxu0 0.0
        %2165 = vmatpush2.xpose.msra.mxu0 0.0
        %2166 = vmatprep.subr.mxu0 0.0
        %2167 = vmatpush2.xpose.msra.mxu0 0.0
        %2168 = vmatprep.subr.mxu0 0.0
        %2169 = vmatpush2.xpose.msra.mxu0 0.0
        %2170 = vmatprep.subr.mxu0 0.0
        %2171 = vmatpush2.xpose.msra.mxu0 0.0
        %2172 = vmatprep.subr.mxu0 0.0
        %2173 = vmatpush2.xpose.msra.mxu0 0.0
        %2174 = vmatprep.mubr.f32.mxu0 0.0
        %2175 = vmatmul.mubr.f32.gmra.mxu0 %v2015
        %v2176 = vpop.f32.mrf.mxu0
        %v2177 = vadd.f32 %v1756, %v2176
        %v2178 = vpop.f32.mrf.mxu0
        %2179 = vmatprep.mubr.f32.mxu0 0.0
        %2180 = vmatmul.mubr.f32.gmra.mxu0 %v2018
        %v2181 = vpop.f32.mrf.mxu0
        %v2182 = vadd.f32 %v1757, %v2181
        %v2183 = vpop.f32.mrf.mxu0
        %2184 = vmatprep.mubr.f32.mxu0 0.0
        %2185 = vmatmul.mubr.f32.gmra.mxu0 %v2021
        %v2186 = vpop.f32.mrf.mxu0
        %v2187 = vadd.f32 %v1758, %v2186
        %v2188 = vpop.f32.mrf.mxu0
        %2189 = vmatprep.mubr.f32.mxu0 0.0
        %2190 = vmatmul.mubr.f32.gmra.mxu0 %v2024
        %v2191 = vpop.f32.mrf.mxu0
        %v2192 = vadd.f32 %v1759, %v2191
        %v2193 = vpop.f32.mrf.mxu0
        %2194 = vmatprep.mubr.f32.mxu0 0.0
        %2195 = vmatmul.mubr.f32.gmra.mxu0 %v2027
        %v2196 = vpop.f32.mrf.mxu0
        %v2197 = vadd.f32 %v1760, %v2196
        %v2198 = vpop.f32.mrf.mxu0
        %2199 = vmatprep.mubr.f32.mxu0 0.0
        %2200 = vmatmul.mubr.f32.gmra.mxu0 %v2030
        %v2201 = vpop.f32.mrf.mxu0
        %v2202 = vadd.f32 %v1761, %v2201
        %v2203 = vpop.f32.mrf.mxu0
        %2204 = vmatprep.mubr.f32.mxu0 0.0
        %2205 = vmatmul.mubr.f32.gmra.mxu0 %v2033
        %v2206 = vpop.f32.mrf.mxu0
        %v2207 = vadd.f32 %v1762, %v2206
        %v2208 = vpop.f32.mrf.mxu0
        %2209 = vmatprep.mubr.f32.mxu0 0.0
        %2210 = vmatmul.mubr.f32.gmra.mxu0 %v2036
        %v2211 = vpop.f32.mrf.mxu0
        %v2212 = vadd.f32 %v1763, %v2211
        %v2213 = vpop.f32.mrf.mxu0
        %2214 = vmatprep.mubr.f32.mxu0 0.0
        %2215 = vmatmul.mubr.f32.gmra.mxu0 %v2039
        %v2216 = vpop.f32.mrf.mxu0
        %v2217 = vadd.f32 %v1764, %v2216
        %v2218 = vpop.f32.mrf.mxu0
        %2219 = vmatprep.mubr.f32.mxu0 0.0
        %2220 = vmatmul.mubr.f32.gmra.mxu0 %v2042
        %v2221 = vpop.f32.mrf.mxu0
        %v2222 = vadd.f32 %v1765, %v2221
        %v2223 = vpop.f32.mrf.mxu0
        %2224 = vmatprep.mubr.f32.mxu0 0.0
        %2225 = vmatmul.mubr.f32.gmra.mxu0 %v2045
        %v2226 = vpop.f32.mrf.mxu0
        %v2227 = vadd.f32 %v1766, %v2226
        %v2228 = vpop.f32.mrf.mxu0
        %2229 = vmatprep.mubr.f32.mxu0 0.0
        %2230 = vmatmul.mubr.f32.gmra.mxu0 %v2048
        %v2231 = vpop.f32.mrf.mxu0
        %v2232 = vadd.f32 %v1767, %v2231
        %v2233 = vpop.f32.mrf.mxu0
        %2234 = vmatprep.mubr.f32.mxu0 0.0
        %2235 = vmatmul.mubr.f32.gmra.mxu0 %v2051
        %v2236 = vpop.f32.mrf.mxu0
        %v2237 = vadd.f32 %v1768, %v2236
        %v2238 = vpop.f32.mrf.mxu0
        %2239 = vmatprep.mubr.f32.mxu0 0.0
        %2240 = vmatmul.mubr.f32.gmra.mxu0 %v2054
        %v2241 = vpop.f32.mrf.mxu0
        %v2242 = vadd.f32 %v1769, %v2241
        %v2243 = vpop.f32.mrf.mxu0
        %2244 = vmatprep.mubr.f32.mxu0 0.0
        %2245 = vmatmul.mubr.f32.gmra.mxu0 %v2057
        %v2246 = vpop.f32.mrf.mxu0
        %v2247 = vadd.f32 %v1770, %v2246
        %v2248 = vpop.f32.mrf.mxu0
        %2249 = vmatprep.mubr.f32.mxu0 0.0
        %2250 = vmatmul.mubr.f32.gmra.mxu0 %v2060
        %v2251 = vpop.f32.mrf.mxu0
        %v2252 = vadd.f32 %v1771, %v2251
        %v2253 = vpop.f32.mrf.mxu0
        %2254 = vdwg.mxu0
        %v2256 = vsel %vm1772, %v1564, 0
        %v2259 = vsel %vm1772, %v1565, 0
        %v2262 = vsel %vm1772, %v1566, 0
        %v2265 = vsel %vm1772, %v1567, 0
        %v2268 = vsel %vm1772, %v1568, 0
        %v2271 = vsel %vm1772, %v1569, 0
        %v2274 = vsel %vm1772, %v1570, 0
        %v2277 = vsel %vm1772, %v1571, 0
        %v2280 = vsel %vm1772, %v1572, 0
        %v2283 = vsel %vm1772, %v1573, 0
        %v2286 = vsel %vm1772, %v1574, 0
        %v2289 = vsel %vm1772, %v1575, 0
        %v2292 = vsel %vm1772, %v1576, 0
        %v2295 = vsel %vm1772, %v1577, 0
        %v2298 = vsel %vm1772, %v1578, 0
        %v2301 = vsel %vm1772, %v1579, 0
        %v2304 = vsel %vm1772, %v1628, 0
        %v2307 = vsel %vm1772, %v1629, 0
        %v2310 = vsel %vm1772, %v1630, 0
        %v2313 = vsel %vm1772, %v1631, 0
        %v2316 = vsel %vm1772, %v1632, 0
        %v2319 = vsel %vm1772, %v1633, 0
        %v2322 = vsel %vm1772, %v1634, 0
        %v2325 = vsel %vm1772, %v1635, 0
        %v2328 = vsel %vm1772, %v1636, 0
        %v2331 = vsel %vm1772, %v1637, 0
        %v2334 = vsel %vm1772, %v1638, 0
        %v2337 = vsel %vm1772, %v1639, 0
        %v2340 = vsel %vm1772, %v1640, 0
        %v2343 = vsel %vm1772, %v1641, 0
        %v2346 = vsel %vm1772, %v1642, 0
        %v2349 = vsel %vm1772, %v1643, 0
        %2351 = vmatprep.subr.mxu0 0.0
        %2352 = vmatpush1.xpose.msra.mxu0 %v2349
        %2353 = vmatprep.subr.mxu0 0.0
        %2354 = vmatpush1.xpose.msra.mxu0 %v2346
        %2355 = vmatprep.subr.mxu0 0.0
        %2356 = vmatpush1.xpose.msra.mxu0 %v2343
        %2357 = vmatprep.subr.mxu0 0.0
        %2358 = vmatpush1.xpose.msra.mxu0 %v2340
        %2359 = vmatprep.subr.mxu0 0.0
        %2360 = vmatpush1.xpose.msra.mxu0 %v2337
        %2361 = vmatprep.subr.mxu0 0.0
        %2362 = vmatpush1.xpose.msra.mxu0 %v2334
        %2363 = vmatprep.subr.mxu0 0.0
        %2364 = vmatpush1.xpose.msra.mxu0 %v2331
        %2365 = vmatprep.subr.mxu0 0.0
        %2366 = vmatpush1.xpose.msra.mxu0 %v2328
        %2367 = vmatprep.subr.mxu0 0.0
        %2368 = vmatpush1.xpose.msra.mxu0 %v2325
        %2369 = vmatprep.subr.mxu0 0.0
        %2370 = vmatpush1.xpose.msra.mxu0 %v2322
        %2371 = vmatprep.subr.mxu0 0.0
        %2372 = vmatpush1.xpose.msra.mxu0 %v2319
        %2373 = vmatprep.subr.mxu0 0.0
        %2374 = vmatpush1.xpose.msra.mxu0 %v2316
        %2375 = vmatprep.subr.mxu0 0.0
        %2376 = vmatpush1.xpose.msra.mxu0 %v2313
        %2377 = vmatprep.subr.mxu0 0.0
        %2378 = vmatpush1.xpose.msra.mxu0 %v2310
        %2379 = vmatprep.subr.mxu0 0.0
        %2380 = vmatpush1.xpose.msra.mxu0 %v2307
        %2381 = vmatprep.subr.mxu0 0.0
        %2382 = vmatpush1.xpose.msra.mxu0 %v2304
        %2383 = vmatprep.subr.mxu0 0.0
        %2384 = vmatpush2.xpose.msra.mxu0 0.0
        %2385 = vmatprep.subr.mxu0 0.0
        %2386 = vmatpush2.xpose.msra.mxu0 0.0
        %2387 = vmatprep.subr.mxu0 0.0
        %2388 = vmatpush2.xpose.msra.mxu0 0.0
        %2389 = vmatprep.subr.mxu0 0.0
        %2390 = vmatpush2.xpose.msra.mxu0 0.0
        %2391 = vmatprep.subr.mxu0 0.0
        %2392 = vmatpush2.xpose.msra.mxu0 0.0
        %2393 = vmatprep.subr.mxu0 0.0
        %2394 = vmatpush2.xpose.msra.mxu0 0.0
        %2395 = vmatprep.subr.mxu0 0.0
        %2396 = vmatpush2.xpose.msra.mxu0 0.0
        %2397 = vmatprep.subr.mxu0 0.0
        %2398 = vmatpush2.xpose.msra.mxu0 0.0
        %2399 = vmatprep.subr.mxu0 0.0
        %2400 = vmatpush2.xpose.msra.mxu0 0.0
        %2401 = vmatprep.subr.mxu0 0.0
        %2402 = vmatpush2.xpose.msra.mxu0 0.0
        %2403 = vmatprep.subr.mxu0 0.0
        %2404 = vmatpush2.xpose.msra.mxu0 0.0
        %2405 = vmatprep.subr.mxu0 0.0
        %2406 = vmatpush2.xpose.msra.mxu0 0.0
        %2407 = vmatprep.subr.mxu0 0.0
        %2408 = vmatpush2.xpose.msra.mxu0 0.0
        %2409 = vmatprep.subr.mxu0 0.0
        %2410 = vmatpush2.xpose.msra.mxu0 0.0
        %2411 = vmatprep.subr.mxu0 0.0
        %2412 = vmatpush2.xpose.msra.mxu0 0.0
        %2413 = vmatprep.subr.mxu0 0.0
        %2414 = vmatpush2.xpose.msra.mxu0 0.0
        %2415 = vmatprep.mubr.f32.mxu0 0.0
        %2416 = vmatmul.mubr.f32.gmra.mxu0 %v2256
        %v2417 = vpop.f32.mrf.mxu0
        %v2418 = vadd.f32 %v1756, %v2417
        %v2419 = vpop.f32.mrf.mxu0
        %2420 = vmatprep.mubr.f32.mxu0 0.0
        %2421 = vmatmul.mubr.f32.gmra.mxu0 %v2259
        %v2422 = vpop.f32.mrf.mxu0
        %v2423 = vadd.f32 %v1757, %v2422
        %v2424 = vpop.f32.mrf.mxu0
        %2425 = vmatprep.mubr.f32.mxu0 0.0
        %2426 = vmatmul.mubr.f32.gmra.mxu0 %v2262
        %v2427 = vpop.f32.mrf.mxu0
        %v2428 = vadd.f32 %v1758, %v2427
        %v2429 = vpop.f32.mrf.mxu0
        %2430 = vmatprep.mubr.f32.mxu0 0.0
        %2431 = vmatmul.mubr.f32.gmra.mxu0 %v2265
        %v2432 = vpop.f32.mrf.mxu0
        %v2433 = vadd.f32 %v1759, %v2432
        %v2434 = vpop.f32.mrf.mxu0
        %2435 = vmatprep.mubr.f32.mxu0 0.0
        %2436 = vmatmul.mubr.f32.gmra.mxu0 %v2268
        %v2437 = vpop.f32.mrf.mxu0
        %v2438 = vadd.f32 %v1760, %v2437
        %v2439 = vpop.f32.mrf.mxu0
        %2440 = vmatprep.mubr.f32.mxu0 0.0
        %2441 = vmatmul.mubr.f32.gmra.mxu0 %v2271
        %v2442 = vpop.f32.mrf.mxu0
        %v2443 = vadd.f32 %v1761, %v2442
        %v2444 = vpop.f32.mrf.mxu0
        %2445 = vmatprep.mubr.f32.mxu0 0.0
        %2446 = vmatmul.mubr.f32.gmra.mxu0 %v2274
        %v2447 = vpop.f32.mrf.mxu0
        %v2448 = vadd.f32 %v1762, %v2447
        %v2449 = vpop.f32.mrf.mxu0
        %2450 = vmatprep.mubr.f32.mxu0 0.0
        %2451 = vmatmul.mubr.f32.gmra.mxu0 %v2277
        %v2452 = vpop.f32.mrf.mxu0
        %v2453 = vadd.f32 %v1763, %v2452
        %v2454 = vpop.f32.mrf.mxu0
        %2455 = vmatprep.mubr.f32.mxu0 0.0
        %2456 = vmatmul.mubr.f32.gmra.mxu0 %v2280
        %v2457 = vpop.f32.mrf.mxu0
        %v2458 = vadd.f32 %v1764, %v2457
        %v2459 = vpop.f32.mrf.mxu0
        %2460 = vmatprep.mubr.f32.mxu0 0.0
        %2461 = vmatmul.mubr.f32.gmra.mxu0 %v2283
        %v2462 = vpop.f32.mrf.mxu0
        %v2463 = vadd.f32 %v1765, %v2462
        %v2464 = vpop.f32.mrf.mxu0
        %2465 = vmatprep.mubr.f32.mxu0 0.0
        %2466 = vmatmul.mubr.f32.gmra.mxu0 %v2286
        %v2467 = vpop.f32.mrf.mxu0
        %v2468 = vadd.f32 %v1766, %v2467
        %v2469 = vpop.f32.mrf.mxu0
        %2470 = vmatprep.mubr.f32.mxu0 0.0
        %2471 = vmatmul.mubr.f32.gmra.mxu0 %v2289
        %v2472 = vpop.f32.mrf.mxu0
        %v2473 = vadd.f32 %v1767, %v2472
        %v2474 = vpop.f32.mrf.mxu0
        %2475 = vmatprep.mubr.f32.mxu0 0.0
        %2476 = vmatmul.mubr.f32.gmra.mxu0 %v2292
        %v2477 = vpop.f32.mrf.mxu0
        %v2478 = vadd.f32 %v1768, %v2477
        %v2479 = vpop.f32.mrf.mxu0
        %2480 = vmatprep.mubr.f32.mxu0 0.0
        %2481 = vmatmul.mubr.f32.gmra.mxu0 %v2295
        %v2482 = vpop.f32.mrf.mxu0
        %v2483 = vadd.f32 %v1769, %v2482
        %v2484 = vpop.f32.mrf.mxu0
        %2485 = vmatprep.mubr.f32.mxu0 0.0
        %2486 = vmatmul.mubr.f32.gmra.mxu0 %v2298
        %v2487 = vpop.f32.mrf.mxu0
        %v2488 = vadd.f32 %v1770, %v2487
        %v2489 = vpop.f32.mrf.mxu0
        %2490 = vmatprep.mubr.f32.mxu0 0.0
        %2491 = vmatmul.mubr.f32.gmra.mxu0 %v2301
        %v2492 = vpop.f32.mrf.mxu0
        %v2493 = vadd.f32 %v1771, %v2492
        %v2494 = vpop.f32.mrf.mxu0
        %2495 = vdwg.mxu0
        %v2497 = vsel %vm1772, %v1580, 0
        %v2500 = vsel %vm1772, %v1581, 0
        %v2503 = vsel %vm1772, %v1582, 0
        %v2506 = vsel %vm1772, %v1583, 0
        %v2509 = vsel %vm1772, %v1584, 0
        %v2512 = vsel %vm1772, %v1585, 0
        %v2515 = vsel %vm1772, %v1586, 0
        %v2518 = vsel %vm1772, %v1587, 0
        %v2521 = vsel %vm1772, %v1588, 0
        %v2524 = vsel %vm1772, %v1589, 0
        %v2527 = vsel %vm1772, %v1590, 0
        %v2530 = vsel %vm1772, %v1591, 0
        %v2533 = vsel %vm1772, %v1592, 0
        %v2536 = vsel %vm1772, %v1593, 0
        %v2539 = vsel %vm1772, %v1594, 0
        %v2542 = vsel %vm1772, %v1595, 0
        %v2545 = vsel %vm1772, %v1644, 0
        %v2548 = vsel %vm1772, %v1645, 0
        %v2551 = vsel %vm1772, %v1646, 0
        %v2554 = vsel %vm1772, %v1647, 0
        %v2557 = vsel %vm1772, %v1648, 0
        %v2560 = vsel %vm1772, %v1649, 0
        %v2563 = vsel %vm1772, %v1650, 0
        %v2566 = vsel %vm1772, %v1651, 0
        %v2569 = vsel %vm1772, %v1652, 0
        %v2572 = vsel %vm1772, %v1653, 0
        %v2575 = vsel %vm1772, %v1654, 0
        %v2578 = vsel %vm1772, %v1655, 0
        %v2581 = vsel %vm1772, %v1656, 0
        %v2584 = vsel %vm1772, %v1657, 0
        %v2587 = vsel %vm1772, %v1658, 0
        %v2590 = vsel %vm1772, %v1659, 0
        %2592 = vmatprep.subr.mxu0 0.0
        %2593 = vmatpush1.xpose.msra.mxu0 %v2590
        %2594 = vmatprep.subr.mxu0 0.0
        %2595 = vmatpush1.xpose.msra.mxu0 %v2587
        %2596 = vmatprep.subr.mxu0 0.0
        %2597 = vmatpush1.xpose.msra.mxu0 %v2584
        %2598 = vmatprep.subr.mxu0 0.0
        %2599 = vmatpush1.xpose.msra.mxu0 %v2581
        %2600 = vmatprep.subr.mxu0 0.0
        %2601 = vmatpush1.xpose.msra.mxu0 %v2578
        %2602 = vmatprep.subr.mxu0 0.0
        %2603 = vmatpush1.xpose.msra.mxu0 %v2575
        %2604 = vmatprep.subr.mxu0 0.0
        %2605 = vmatpush1.xpose.msra.mxu0 %v2572
        %2606 = vmatprep.subr.mxu0 0.0
        %2607 = vmatpush1.xpose.msra.mxu0 %v2569
        %2608 = vmatprep.subr.mxu0 0.0
        %2609 = vmatpush1.xpose.msra.mxu0 %v2566
        %2610 = vmatprep.subr.mxu0 0.0
        %2611 = vmatpush1.xpose.msra.mxu0 %v2563
        %2612 = vmatprep.subr.mxu0 0.0
        %2613 = vmatpush1.xpose.msra.mxu0 %v2560
        %2614 = vmatprep.subr.mxu0 0.0
        %2615 = vmatpush1.xpose.msra.mxu0 %v2557
        %2616 = vmatprep.subr.mxu0 0.0
        %2617 = vmatpush1.xpose.msra.mxu0 %v2554
        %2618 = vmatprep.subr.mxu0 0.0
        %2619 = vmatpush1.xpose.msra.mxu0 %v2551
        %2620 = vmatprep.subr.mxu0 0.0
        %2621 = vmatpush1.xpose.msra.mxu0 %v2548
        %2622 = vmatprep.subr.mxu0 0.0
        %2623 = vmatpush1.xpose.msra.mxu0 %v2545
        %2624 = vmatprep.subr.mxu0 0.0
        %2625 = vmatpush2.xpose.msra.mxu0 0.0
        %2626 = vmatprep.subr.mxu0 0.0
        %2627 = vmatpush2.xpose.msra.mxu0 0.0
        %2628 = vmatprep.subr.mxu0 0.0
        %2629 = vmatpush2.xpose.msra.mxu0 0.0
        %2630 = vmatprep.subr.mxu0 0.0
        %2631 = vmatpush2.xpose.msra.mxu0 0.0
        %2632 = vmatprep.subr.mxu0 0.0
        %2633 = vmatpush2.xpose.msra.mxu0 0.0
        %2634 = vmatprep.subr.mxu0 0.0
        %2635 = vmatpush2.xpose.msra.mxu0 0.0
        %2636 = vmatprep.subr.mxu0 0.0
        %2637 = vmatpush2.xpose.msra.mxu0 0.0
        %2638 = vmatprep.subr.mxu0 0.0
        %2639 = vmatpush2.xpose.msra.mxu0 0.0
        %2640 = vmatprep.subr.mxu0 0.0
        %2641 = vmatpush2.xpose.msra.mxu0 0.0
        %2642 = vmatprep.subr.mxu0 0.0
        %2643 = vmatpush2.xpose.msra.mxu0 0.0
        %2644 = vmatprep.subr.mxu0 0.0
        %2645 = vmatpush2.xpose.msra.mxu0 0.0
        %2646 = vmatprep.subr.mxu0 0.0
        %2647 = vmatpush2.xpose.msra.mxu0 0.0
        %2648 = vmatprep.subr.mxu0 0.0
        %2649 = vmatpush2.xpose.msra.mxu0 0.0
        %2650 = vmatprep.subr.mxu0 0.0
        %2651 = vmatpush2.xpose.msra.mxu0 0.0
        %2652 = vmatprep.subr.mxu0 0.0
        %2653 = vmatpush2.xpose.msra.mxu0 0.0
        %2654 = vmatprep.subr.mxu0 0.0
        %2655 = vmatpush2.xpose.msra.mxu0 0.0
        %2656 = vmatprep.mubr.f32.mxu0 0.0
        %2657 = vmatmul.mubr.f32.gmra.mxu0 %v2497
        %v2658 = vpop.f32.mrf.mxu0
        %v2659 = vadd.f32 %v1756, %v2658
        %v2660 = vpop.f32.mrf.mxu0
        %2661 = vmatprep.mubr.f32.mxu0 0.0
        %2662 = vmatmul.mubr.f32.gmra.mxu0 %v2500
        %v2663 = vpop.f32.mrf.mxu0
        %v2664 = vadd.f32 %v1757, %v2663
        %v2665 = vpop.f32.mrf.mxu0
        %2666 = vmatprep.mubr.f32.mxu0 0.0
        %2667 = vmatmul.mubr.f32.gmra.mxu0 %v2503
        %v2668 = vpop.f32.mrf.mxu0
        %v2669 = vadd.f32 %v1758, %v2668
        %v2670 = vpop.f32.mrf.mxu0
        %2671 = vmatprep.mubr.f32.mxu0 0.0
        %2672 = vmatmul.mubr.f32.gmra.mxu0 %v2506
        %v2673 = vpop.f32.mrf.mxu0
        %v2674 = vadd.f32 %v1759, %v2673
        %v2675 = vpop.f32.mrf.mxu0
        %2676 = vmatprep.mubr.f32.mxu0 0.0
        %2677 = vmatmul.mubr.f32.gmra.mxu0 %v2509
        %v2678 = vpop.f32.mrf.mxu0
        %v2679 = vadd.f32 %v1760, %v2678
        %v2680 = vpop.f32.mrf.mxu0
        %2681 = vmatprep.mubr.f32.mxu0 0.0
        %2682 = vmatmul.mubr.f32.gmra.mxu0 %v2512
        %v2683 = vpop.f32.mrf.mxu0
        %v2684 = vadd.f32 %v1761, %v2683
        %v2685 = vpop.f32.mrf.mxu0
        %2686 = vmatprep.mubr.f32.mxu0 0.0
        %2687 = vmatmul.mubr.f32.gmra.mxu0 %v2515
        %v2688 = vpop.f32.mrf.mxu0
        %v2689 = vadd.f32 %v1762, %v2688
        %v2690 = vpop.f32.mrf.mxu0
        %2691 = vmatprep.mubr.f32.mxu0 0.0
        %2692 = vmatmul.mubr.f32.gmra.mxu0 %v2518
        %v2693 = vpop.f32.mrf.mxu0
        %v2694 = vadd.f32 %v1763, %v2693
        %v2695 = vpop.f32.mrf.mxu0
        %2696 = vmatprep.mubr.f32.mxu0 0.0
        %2697 = vmatmul.mubr.f32.gmra.mxu0 %v2521
        %v2698 = vpop.f32.mrf.mxu0
        %v2699 = vadd.f32 %v1764, %v2698
        %v2700 = vpop.f32.mrf.mxu0
        %2701 = vmatprep.mubr.f32.mxu0 0.0
        %2702 = vmatmul.mubr.f32.gmra.mxu0 %v2524
        %v2703 = vpop.f32.mrf.mxu0
        %v2704 = vadd.f32 %v1765, %v2703
        %v2705 = vpop.f32.mrf.mxu0
        %2706 = vmatprep.mubr.f32.mxu0 0.0
        %2707 = vmatmul.mubr.f32.gmra.mxu0 %v2527
        %v2708 = vpop.f32.mrf.mxu0
        %v2709 = vadd.f32 %v1766, %v2708
        %v2710 = vpop.f32.mrf.mxu0
        %2711 = vmatprep.mubr.f32.mxu0 0.0
        %2712 = vmatmul.mubr.f32.gmra.mxu0 %v2530
        %v2713 = vpop.f32.mrf.mxu0
        %v2714 = vadd.f32 %v1767, %v2713
        %v2715 = vpop.f32.mrf.mxu0
        %2716 = vmatprep.mubr.f32.mxu0 0.0
        %2717 = vmatmul.mubr.f32.gmra.mxu0 %v2533
        %v2718 = vpop.f32.mrf.mxu0
        %v2719 = vadd.f32 %v1768, %v2718
        %v2720 = vpop.f32.mrf.mxu0
        %2721 = vmatprep.mubr.f32.mxu0 0.0
        %2722 = vmatmul.mubr.f32.gmra.mxu0 %v2536
        %v2723 = vpop.f32.mrf.mxu0
        %v2724 = vadd.f32 %v1769, %v2723
        %v2725 = vpop.f32.mrf.mxu0
        %2726 = vmatprep.mubr.f32.mxu0 0.0
        %2727 = vmatmul.mubr.f32.gmra.mxu0 %v2539
        %v2728 = vpop.f32.mrf.mxu0
        %v2729 = vadd.f32 %v1770, %v2728
        %v2730 = vpop.f32.mrf.mxu0
        %2731 = vmatprep.mubr.f32.mxu0 0.0
        %2732 = vmatmul.mubr.f32.gmra.mxu0 %v2542
        %v2733 = vpop.f32.mrf.mxu0
        %v2734 = vadd.f32 %v1771, %v2733
        %v2735 = vpop.f32.mrf.mxu0
        %2736 = vdwg.mxu0
        %v2737 = vld [vmem:[#allocation2] sm:$0xff]
        %v2738 = vld [vmem:[#allocation2 + $0x8] sm:$0xff]
        %v2739 = vld [vmem:[#allocation2 + $0x10] sm:$0xff]
        %v2740 = vld [vmem:[#allocation2 + $0x18] sm:$0xff]
        %v2741 = vld [vmem:[#allocation2 + $0x20] sm:$0xff]
        %v2742 = vld [vmem:[#allocation2 + $0x28] sm:$0xff]
        %v2743 = vld [vmem:[#allocation2 + $0x30] sm:$0xff]
        %v2744 = vld [vmem:[#allocation2 + $0x38] sm:$0xff]
        %v2745 = vld [vmem:[#allocation2 + $0x40] sm:$0xff]
        %v2746 = vld [vmem:[#allocation2 + $0x48] sm:$0xff]
        %v2747 = vld [vmem:[#allocation2 + $0x50] sm:$0xff]
        %v2748 = vld [vmem:[#allocation2 + $0x58] sm:$0xff]
        %v2749 = vld [vmem:[#allocation2 + $0x60] sm:$0xff]
        %v2750 = vld [vmem:[#allocation2 + $0x68] sm:$0xff]
        %v2751 = vld [vmem:[#allocation2 + $0x70] sm:$0xff]
        %v2752 = vld [vmem:[#allocation2 + $0x78] sm:$0xff]
        %v2753 = vld [vmem:[#allocation2 + $0x80] sm:$0xff]
        %v2754 = vld [vmem:[#allocation2 + $0x88] sm:$0xff]
        %v2755 = vld [vmem:[#allocation2 + $0x90] sm:$0xff]
        %v2756 = vld [vmem:[#allocation2 + $0x98] sm:$0xff]
        %v2757 = vld [vmem:[#allocation2 + $0xa0] sm:$0xff]
        %v2758 = vld [vmem:[#allocation2 + $0xa8] sm:$0xff]
        %v2759 = vld [vmem:[#allocation2 + $0xb0] sm:$0xff]
        %v2760 = vld [vmem:[#allocation2 + $0xb8] sm:$0xff]
        %v2761 = vld [vmem:[#allocation2 + $0xc0] sm:$0xff]
        %v2762 = vld [vmem:[#allocation2 + $0xc8] sm:$0xff]
        %v2763 = vld [vmem:[#allocation2 + $0xd0] sm:$0xff]
        %v2764 = vld [vmem:[#allocation2 + $0xd8] sm:$0xff]
        %v2765 = vld [vmem:[#allocation2 + $0xe0] sm:$0xff]
        %v2766 = vld [vmem:[#allocation2 + $0xe8] sm:$0xff]
        %v2767 = vld [vmem:[#allocation2 + $0xf0] sm:$0xff]
        %v2768 = vld [vmem:[#allocation2 + $0xf8] sm:$0xff]
        %v2769 = vld [vmem:[#allocation2 + $0x100] sm:$0xff]
        %v2770 = vld [vmem:[#allocation2 + $0x108] sm:$0xff]
        %v2771 = vld [vmem:[#allocation2 + $0x110] sm:$0xff]
        %v2772 = vld [vmem:[#allocation2 + $0x118] sm:$0xff]
        %v2773 = vld [vmem:[#allocation2 + $0x120] sm:$0xff]
        %v2774 = vld [vmem:[#allocation2 + $0x128] sm:$0xff]
        %v2775 = vld [vmem:[#allocation2 + $0x130] sm:$0xff]
        %v2776 = vld [vmem:[#allocation2 + $0x138] sm:$0xff]
        %v2777 = vld [vmem:[#allocation2 + $0x140] sm:$0xff]
        %v2778 = vld [vmem:[#allocation2 + $0x148] sm:$0xff]
        %v2779 = vld [vmem:[#allocation2 + $0x150] sm:$0xff]
        %v2780 = vld [vmem:[#allocation2 + $0x158] sm:$0xff]
        %v2781 = vld [vmem:[#allocation2 + $0x160] sm:$0xff]
        %v2782 = vld [vmem:[#allocation2 + $0x168] sm:$0xff]
        %v2783 = vld [vmem:[#allocation2 + $0x170] sm:$0xff]
        %v2784 = vld [vmem:[#allocation2 + $0x178] sm:$0xff]
        %v2785 = vld [vmem:[#allocation2 + $0x180] sm:$0xff]
        %v2786 = vld [vmem:[#allocation2 + $0x188] sm:$0xff]
        %v2787 = vld [vmem:[#allocation2 + $0x190] sm:$0xff]
        %v2788 = vld [vmem:[#allocation2 + $0x198] sm:$0xff]
        %v2789 = vld [vmem:[#allocation2 + $0x1a0] sm:$0xff]
        %v2790 = vld [vmem:[#allocation2 + $0x1a8] sm:$0xff]
        %v2791 = vld [vmem:[#allocation2 + $0x1b0] sm:$0xff]
        %v2792 = vld [vmem:[#allocation2 + $0x1b8] sm:$0xff]
        %v2793 = vld [vmem:[#allocation2 + $0x1c0] sm:$0xff]
        %v2794 = vld [vmem:[#allocation2 + $0x1c8] sm:$0xff]
        %v2795 = vld [vmem:[#allocation2 + $0x1d0] sm:$0xff]
        %v2796 = vld [vmem:[#allocation2 + $0x1d8] sm:$0xff]
        %v2797 = vld [vmem:[#allocation2 + $0x1e0] sm:$0xff]
        %v2798 = vld [vmem:[#allocation2 + $0x1e8] sm:$0xff]
        %v2799 = vld [vmem:[#allocation2 + $0x1f0] sm:$0xff]
        %v2800 = vld [vmem:[#allocation2 + $0x1f8] sm:$0xff]
        %2801 = vmax.xlane.f32.xlu0 %v1936
        %v2802 = vpop.xlane.xlu0 %2801
        %2803 = vmax.xlane.f32.xlu0 %v1941
        %v2804 = vpop.xlane.xlu0 %2803
        %2805 = vmax.xlane.f32.xlu0 %v1946
        %v2806 = vpop.xlane.xlu0 %2805
        %2807 = vmax.xlane.f32.xlu0 %v1951
        %v2808 = vpop.xlane.xlu0 %2807
        %2809 = vmax.xlane.f32.xlu0 %v1956
        %v2810 = vpop.xlane.xlu0 %2809
        %2811 = vmax.xlane.f32.xlu0 %v1961
        %v2812 = vpop.xlane.xlu0 %2811
        %2813 = vmax.xlane.f32.xlu0 %v1966
        %v2814 = vpop.xlane.xlu0 %2813
        %2815 = vmax.xlane.f32.xlu0 %v1971
        %v2816 = vpop.xlane.xlu0 %2815
        %2817 = vmax.xlane.f32.xlu0 %v1976
        %v2818 = vpop.xlane.xlu0 %2817
        %2819 = vmax.xlane.f32.xlu0 %v1981
        %v2820 = vpop.xlane.xlu0 %2819
        %2821 = vmax.xlane.f32.xlu0 %v1986
        %v2822 = vpop.xlane.xlu0 %2821
        %2823 = vmax.xlane.f32.xlu0 %v1991
        %v2824 = vpop.xlane.xlu0 %2823
        %2825 = vmax.xlane.f32.xlu0 %v1996
        %v2826 = vpop.xlane.xlu0 %2825
        %2827 = vmax.xlane.f32.xlu0 %v2001
        %v2828 = vpop.xlane.xlu0 %2827
        %2829 = vmax.xlane.f32.xlu0 %v2006
        %v2830 = vpop.xlane.xlu0 %2829
        %2831 = vmax.xlane.f32.xlu0 %v2011
        %v2832 = vpop.xlane.xlu0 %2831
        %2833 = vmax.xlane.f32.xlu0 %v2177
        %v2834 = vpop.xlane.xlu0 %2833
        %2835 = vmax.xlane.f32.xlu0 %v2182
        %v2836 = vpop.xlane.xlu0 %2835
        %2837 = vmax.xlane.f32.xlu0 %v2187
        %v2838 = vpop.xlane.xlu0 %2837
        %2839 = vmax.xlane.f32.xlu0 %v2192
        %v2840 = vpop.xlane.xlu0 %2839
        %2841 = vmax.xlane.f32.xlu0 %v2197
        %v2842 = vpop.xlane.xlu0 %2841
        %2843 = vmax.xlane.f32.xlu0 %v2202
        %v2844 = vpop.xlane.xlu0 %2843
        %2845 = vmax.xlane.f32.xlu0 %v2207
        %v2846 = vpop.xlane.xlu0 %2845
        %2847 = vmax.xlane.f32.xlu0 %v2212
        %v2848 = vpop.xlane.xlu0 %2847
        %2849 = vmax.xlane.f32.xlu0 %v2217
        %v2850 = vpop.xlane.xlu0 %2849
        %2851 = vmax.xlane.f32.xlu0 %v2222
        %v2852 = vpop.xlane.xlu0 %2851
        %2853 = vmax.xlane.f32.xlu0 %v2227
        %v2854 = vpop.xlane.xlu0 %2853
        %2855 = vmax.xlane.f32.xlu0 %v2232
        %v2856 = vpop.xlane.xlu0 %2855
        %2857 = vmax.xlane.f32.xlu0 %v2237
        %v2858 = vpop.xlane.xlu0 %2857
        %2859 = vmax.xlane.f32.xlu0 %v2242
        %v2860 = vpop.xlane.xlu0 %2859
        %2861 = vmax.xlane.f32.xlu0 %v2247
        %v2862 = vpop.xlane.xlu0 %2861
        %2863 = vmax.xlane.f32.xlu0 %v2252
        %v2864 = vpop.xlane.xlu0 %2863
        %2865 = vmax.xlane.f32.xlu0 %v2418
        %v2866 = vpop.xlane.xlu0 %2865
        %2867 = vmax.xlane.f32.xlu0 %v2423
        %v2868 = vpop.xlane.xlu0 %2867
        %2869 = vmax.xlane.f32.xlu0 %v2428
        %v2870 = vpop.xlane.xlu0 %2869
        %2871 = vmax.xlane.f32.xlu0 %v2433
        %v2872 = vpop.xlane.xlu0 %2871
        %2873 = vmax.xlane.f32.xlu0 %v2438
        %v2874 = vpop.xlane.xlu0 %2873
        %2875 = vmax.xlane.f32.xlu0 %v2443
        %v2876 = vpop.xlane.xlu0 %2875
        %2877 = vmax.xlane.f32.xlu0 %v2448
        %v2878 = vpop.xlane.xlu0 %2877
        %2879 = vmax.xlane.f32.xlu0 %v2453
        %v2880 = vpop.xlane.xlu0 %2879
        %2881 = vmax.xlane.f32.xlu0 %v2458
        %v2882 = vpop.xlane.xlu0 %2881
        %2883 = vmax.xlane.f32.xlu0 %v2463
        %v2884 = vpop.xlane.xlu0 %2883
        %2885 = vmax.xlane.f32.xlu0 %v2468
        %v2886 = vpop.xlane.xlu0 %2885
        %2887 = vmax.xlane.f32.xlu0 %v2473
        %v2888 = vpop.xlane.xlu0 %2887
        %2889 = vmax.xlane.f32.xlu0 %v2478
        %v2890 = vpop.xlane.xlu0 %2889
        %2891 = vmax.xlane.f32.xlu0 %v2483
        %v2892 = vpop.xlane.xlu0 %2891
        %2893 = vmax.xlane.f32.xlu0 %v2488
        %v2894 = vpop.xlane.xlu0 %2893
        %2895 = vmax.xlane.f32.xlu0 %v2493
        %v2896 = vpop.xlane.xlu0 %2895
        %2897 = vmax.xlane.f32.xlu0 %v2659
        %v2898 = vpop.xlane.xlu0 %2897
        %2899 = vmax.xlane.f32.xlu0 %v2664
        %v2900 = vpop.xlane.xlu0 %2899
        %2901 = vmax.xlane.f32.xlu0 %v2669
        %v2902 = vpop.xlane.xlu0 %2901
        %2903 = vmax.xlane.f32.xlu0 %v2674
        %v2904 = vpop.xlane.xlu0 %2903
        %2905 = vmax.xlane.f32.xlu0 %v2679
        %v2906 = vpop.xlane.xlu0 %2905
        %2907 = vmax.xlane.f32.xlu0 %v2684
        %v2908 = vpop.xlane.xlu0 %2907
        %2909 = vmax.xlane.f32.xlu0 %v2689
        %v2910 = vpop.xlane.xlu0 %2909
        %2911 = vmax.xlane.f32.xlu0 %v2694
        %v2912 = vpop.xlane.xlu0 %2911
        %2913 = vmax.xlane.f32.xlu0 %v2699
        %v2914 = vpop.xlane.xlu0 %2913
        %2915 = vmax.xlane.f32.xlu0 %v2704
        %v2916 = vpop.xlane.xlu0 %2915
        %2917 = vmax.xlane.f32.xlu0 %v2709
        %v2918 = vpop.xlane.xlu0 %2917
        %2919 = vmax.xlane.f32.xlu0 %v2714
        %v2920 = vpop.xlane.xlu0 %2919
        %2921 = vmax.xlane.f32.xlu0 %v2719
        %v2922 = vpop.xlane.xlu0 %2921
        %2923 = vmax.xlane.f32.xlu0 %v2724
        %v2924 = vpop.xlane.xlu0 %2923
        %2925 = vmax.xlane.f32.xlu0 %v2729
        %v2926 = vpop.xlane.xlu0 %2925
        %2927 = vmax.xlane.f32.xlu0 %v2734
        %v2928 = vpop.xlane.xlu0 %2927
        %v2929 = vmax.f32 %v2737, %v2802
        %v2930 = vmax.f32 %v2738, %v2804
        %v2931 = vmax.f32 %v2739, %v2806
        %v2932 = vmax.f32 %v2740, %v2808
        %v2933 = vmax.f32 %v2741, %v2810
        %v2934 = vmax.f32 %v2742, %v2812
        %v2935 = vmax.f32 %v2743, %v2814
        %v2936 = vmax.f32 %v2744, %v2816
        %v2937 = vmax.f32 %v2745, %v2818
        %v2938 = vmax.f32 %v2746, %v2820
        %v2939 = vmax.f32 %v2747, %v2822
        %v2940 = vmax.f32 %v2748, %v2824
        %v2941 = vmax.f32 %v2749, %v2826
        %v2942 = vmax.f32 %v2750, %v2828
        %v2943 = vmax.f32 %v2751, %v2830
        %v2944 = vmax.f32 %v2752, %v2832
        %v2945 = vmax.f32 %v2753, %v2834
        %v2946 = vmax.f32 %v2754, %v2836
        %v2947 = vmax.f32 %v2755, %v2838
        %v2948 = vmax.f32 %v2756, %v2840
        %v2949 = vmax.f32 %v2757, %v2842
        %v2950 = vmax.f32 %v2758, %v2844
        %v2951 = vmax.f32 %v2759, %v2846
        %v2952 = vmax.f32 %v2760, %v2848
        %v2953 = vmax.f32 %v2761, %v2850
        %v2954 = vmax.f32 %v2762, %v2852
        %v2955 = vmax.f32 %v2763, %v2854
        %v2956 = vmax.f32 %v2764, %v2856
        %v2957 = vmax.f32 %v2765, %v2858
        %v2958 = vmax.f32 %v2766, %v2860
        %v2959 = vmax.f32 %v2767, %v2862
        %v2960 = vmax.f32 %v2768, %v2864
        %v2961 = vmax.f32 %v2769, %v2866
        %v2962 = vmax.f32 %v2770, %v2868
        %v2963 = vmax.f32 %v2771, %v2870
        %v2964 = vmax.f32 %v2772, %v2872
        %v2965 = vmax.f32 %v2773, %v2874
        %v2966 = vmax.f32 %v2774, %v2876
        %v2967 = vmax.f32 %v2775, %v2878
        %v2968 = vmax.f32 %v2776, %v2880
        %v2969 = vmax.f32 %v2777, %v2882
        %v2970 = vmax.f32 %v2778, %v2884
        %v2971 = vmax.f32 %v2779, %v2886
        %v2972 = vmax.f32 %v2780, %v2888
        %v2973 = vmax.f32 %v2781, %v2890
        %v2974 = vmax.f32 %v2782, %v2892
        %v2975 = vmax.f32 %v2783, %v2894
        %v2976 = vmax.f32 %v2784, %v2896
        %v2977 = vmax.f32 %v2785, %v2898
        %v2978 = vmax.f32 %v2786, %v2900
        %v2979 = vmax.f32 %v2787, %v2902
        %v2980 = vmax.f32 %v2788, %v2904
        %v2981 = vmax.f32 %v2789, %v2906
        %v2982 = vmax.f32 %v2790, %v2908
        %v2983 = vmax.f32 %v2791, %v2910
        %v2984 = vmax.f32 %v2792, %v2912
        %v2985 = vmax.f32 %v2793, %v2914
        %v2986 = vmax.f32 %v2794, %v2916
        %v2987 = vmax.f32 %v2795, %v2918
        %v2988 = vmax.f32 %v2796, %v2920
        %v2989 = vmax.f32 %v2797, %v2922
        %v2990 = vmax.f32 %v2798, %v2924
        %v2991 = vmax.f32 %v2799, %v2926
        %v2992 = vmax.f32 %v2800, %v2928
        %v2993 = vsub.f32 %v2737, %v2929
        %v2994 = vsub.f32 %v2738, %v2930
        %v2995 = vsub.f32 %v2739, %v2931
        %v2996 = vsub.f32 %v2740, %v2932
        %v2997 = vsub.f32 %v2741, %v2933
        %v2998 = vsub.f32 %v2742, %v2934
        %v2999 = vsub.f32 %v2743, %v2935
        %v3000 = vsub.f32 %v2744, %v2936
        %v3001 = vsub.f32 %v2745, %v2937
        %v3002 = vsub.f32 %v2746, %v2938
        %v3003 = vsub.f32 %v2747, %v2939
        %v3004 = vsub.f32 %v2748, %v2940
        %v3005 = vsub.f32 %v2749, %v2941
        %v3006 = vsub.f32 %v2750, %v2942
        %v3007 = vsub.f32 %v2751, %v2943
        %v3008 = vsub.f32 %v2752, %v2944
        %v3009 = vsub.f32 %v2753, %v2945
        %v3010 = vsub.f32 %v2754, %v2946
        %v3011 = vsub.f32 %v2755, %v2947
        %v3012 = vsub.f32 %v2756, %v2948
        %v3013 = vsub.f32 %v2757, %v2949
        %v3014 = vsub.f32 %v2758, %v2950
        %v3015 = vsub.f32 %v2759, %v2951
        %v3016 = vsub.f32 %v2760, %v2952
        %v3017 = vsub.f32 %v2761, %v2953
        %v3018 = vsub.f32 %v2762, %v2954
        %v3019 = vsub.f32 %v2763, %v2955
        %v3020 = vsub.f32 %v2764, %v2956
        %v3021 = vsub.f32 %v2765, %v2957
        %v3022 = vsub.f32 %v2766, %v2958
        %v3023 = vsub.f32 %v2767, %v2959
        %v3024 = vsub.f32 %v2768, %v2960
        %v3025 = vsub.f32 %v2769, %v2961
        %v3026 = vsub.f32 %v2770, %v2962
        %v3027 = vsub.f32 %v2771, %v2963
        %v3028 = vsub.f32 %v2772, %v2964
        %v3029 = vsub.f32 %v2773, %v2965
        %v3030 = vsub.f32 %v2774, %v2966
        %v3031 = vsub.f32 %v2775, %v2967
        %v3032 = vsub.f32 %v2776, %v2968
        %v3033 = vsub.f32 %v2777, %v2969
        %v3034 = vsub.f32 %v2778, %v2970
        %v3035 = vsub.f32 %v2779, %v2971
        %v3036 = vsub.f32 %v2780, %v2972
        %v3037 = vsub.f32 %v2781, %v2973
        %v3038 = vsub.f32 %v2782, %v2974
        %v3039 = vsub.f32 %v2783, %v2975
        %v3040 = vsub.f32 %v2784, %v2976
        %v3041 = vsub.f32 %v2785, %v2977
        %v3042 = vsub.f32 %v2786, %v2978
        %v3043 = vsub.f32 %v2787, %v2979
        %v3044 = vsub.f32 %v2788, %v2980
        %v3045 = vsub.f32 %v2789, %v2981
        %v3046 = vsub.f32 %v2790, %v2982
        %v3047 = vsub.f32 %v2791, %v2983
        %v3048 = vsub.f32 %v2792, %v2984
        %v3049 = vsub.f32 %v2793, %v2985
        %v3050 = vsub.f32 %v2794, %v2986
        %v3051 = vsub.f32 %v2795, %v2987
        %v3052 = vsub.f32 %v2796, %v2988
        %v3053 = vsub.f32 %v2797, %v2989
        %v3054 = vsub.f32 %v2798, %v2990
        %v3055 = vsub.f32 %v2799, %v2991
        %v3056 = vsub.f32 %v2800, %v2992
        %v3057 = vmul.f32 %v2993, 1.442695
        %v3058 = vpow.pop %v3057
        %v3059 = vmul.f32 %v2994, 1.442695
        %v3060 = vpow.pop %v3059
        %v3061 = vmul.f32 %v2995, 1.442695
        %v3062 = vpow.pop %v3061
        %v3063 = vmul.f32 %v2996, 1.442695
        %v3064 = vpow.pop %v3063
        %v3065 = vmul.f32 %v2997, 1.442695
        %v3066 = vpow.pop %v3065
        %v3067 = vmul.f32 %v2998, 1.442695
        %v3068 = vpow.pop %v3067
        %v3069 = vmul.f32 %v2999, 1.442695
        %v3070 = vpow.pop %v3069
        %v3071 = vmul.f32 %v3000, 1.442695
        %v3072 = vpow.pop %v3071
        %v3073 = vmul.f32 %v3001, 1.442695
        %v3074 = vpow.pop %v3073
        %v3075 = vmul.f32 %v3002, 1.442695
        %v3076 = vpow.pop %v3075
        %v3077 = vmul.f32 %v3003, 1.442695
        %v3078 = vpow.pop %v3077
        %v3079 = vmul.f32 %v3004, 1.442695
        %v3080 = vpow.pop %v3079
        %v3081 = vmul.f32 %v3005, 1.442695
        %v3082 = vpow.pop %v3081
        %v3083 = vmul.f32 %v3006, 1.442695
        %v3084 = vpow.pop %v3083
        %v3085 = vmul.f32 %v3007, 1.442695
        %v3086 = vpow.pop %v3085
        %v3087 = vmul.f32 %v3008, 1.442695
        %v3088 = vpow.pop %v3087
        %v3089 = vmul.f32 %v3009, 1.442695
        %v3090 = vpow.pop %v3089
        %v3091 = vmul.f32 %v3010, 1.442695
        %v3092 = vpow.pop %v3091
        %v3093 = vmul.f32 %v3011, 1.442695
        %v3094 = vpow.pop %v3093
        %v3095 = vmul.f32 %v3012, 1.442695
        %v3096 = vpow.pop %v3095
        %v3097 = vmul.f32 %v3013, 1.442695
        %v3098 = vpow.pop %v3097
        %v3099 = vmul.f32 %v3014, 1.442695
        %v3100 = vpow.pop %v3099
        %v3101 = vmul.f32 %v3015, 1.442695
        %v3102 = vpow.pop %v3101
        %v3103 = vmul.f32 %v3016, 1.442695
        %v3104 = vpow.pop %v3103
        %v3105 = vmul.f32 %v3017, 1.442695
        %v3106 = vpow.pop %v3105
        %v3107 = vmul.f32 %v3018, 1.442695
        %v3108 = vpow.pop %v3107
        %v3109 = vmul.f32 %v3019, 1.442695
        %v3110 = vpow.pop %v3109
        %v3111 = vmul.f32 %v3020, 1.442695
        %v3112 = vpow.pop %v3111
        %v3113 = vmul.f32 %v3021, 1.442695
        %v3114 = vpow.pop %v3113
        %v3115 = vmul.f32 %v3022, 1.442695
        %v3116 = vpow.pop %v3115
        %v3117 = vmul.f32 %v3023, 1.442695
        %v3118 = vpow.pop %v3117
        %v3119 = vmul.f32 %v3024, 1.442695
        %v3120 = vpow.pop %v3119
        %v3121 = vmul.f32 %v3025, 1.442695
        %v3122 = vpow.pop %v3121
        %v3123 = vmul.f32 %v3026, 1.442695
        %v3124 = vpow.pop %v3123
        %v3125 = vmul.f32 %v3027, 1.442695
        %v3126 = vpow.pop %v3125
        %v3127 = vmul.f32 %v3028, 1.442695
        %v3128 = vpow.pop %v3127
        %v3129 = vmul.f32 %v3029, 1.442695
        %v3130 = vpow.pop %v3129
        %v3131 = vmul.f32 %v3030, 1.442695
        %v3132 = vpow.pop %v3131
        %v3133 = vmul.f32 %v3031, 1.442695
        %v3134 = vpow.pop %v3133
        %v3135 = vmul.f32 %v3032, 1.442695
        %v3136 = vpow.pop %v3135
        %v3137 = vmul.f32 %v3033, 1.442695
        %v3138 = vpow.pop %v3137
        %v3139 = vmul.f32 %v3034, 1.442695
        %v3140 = vpow.pop %v3139
        %v3141 = vmul.f32 %v3035, 1.442695
        %v3142 = vpow.pop %v3141
        %v3143 = vmul.f32 %v3036, 1.442695
        %v3144 = vpow.pop %v3143
        %v3145 = vmul.f32 %v3037, 1.442695
        %v3146 = vpow.pop %v3145
        %v3147 = vmul.f32 %v3038, 1.442695
        %v3148 = vpow.pop %v3147
        %v3149 = vmul.f32 %v3039, 1.442695
        %v3150 = vpow.pop %v3149
        %v3151 = vmul.f32 %v3040, 1.442695
        %v3152 = vpow.pop %v3151
        %v3153 = vmul.f32 %v3041, 1.442695
        %v3154 = vpow.pop %v3153
        %v3155 = vmul.f32 %v3042, 1.442695
        %v3156 = vpow.pop %v3155
        %v3157 = vmul.f32 %v3043, 1.442695
        %v3158 = vpow.pop %v3157
        %v3159 = vmul.f32 %v3044, 1.442695
        %v3160 = vpow.pop %v3159
        %v3161 = vmul.f32 %v3045, 1.442695
        %v3162 = vpow.pop %v3161
        %v3163 = vmul.f32 %v3046, 1.442695
        %v3164 = vpow.pop %v3163
        %v3165 = vmul.f32 %v3047, 1.442695
        %v3166 = vpow.pop %v3165
        %v3167 = vmul.f32 %v3048, 1.442695
        %v3168 = vpow.pop %v3167
        %v3169 = vmul.f32 %v3049, 1.442695
        %v3170 = vpow.pop %v3169
        %v3171 = vmul.f32 %v3050, 1.442695
        %v3172 = vpow.pop %v3171
        %v3173 = vmul.f32 %v3051, 1.442695
        %v3174 = vpow.pop %v3173
        %v3175 = vmul.f32 %v3052, 1.442695
        %v3176 = vpow.pop %v3175
        %v3177 = vmul.f32 %v3053, 1.442695
        %v3178 = vpow.pop %v3177
        %v3179 = vmul.f32 %v3054, 1.442695
        %v3180 = vpow.pop %v3179
        %v3181 = vmul.f32 %v3055, 1.442695
        %v3182 = vpow.pop %v3181
        %v3183 = vmul.f32 %v3056, 1.442695
        %v3184 = vpow.pop %v3183
        %3186 = vset.pattern.permute.xlu0 0
        %3187 = vperm.xlu0 %3186, %v2929
        %v3188 = vpop.permute.xlu0 %3187
        %3191 = vset.pattern.permute.xlu0 0
        %3192 = vperm.xlu0 %3191, %v2930
        %v3193 = vpop.permute.xlu0 %3192
        %3196 = vset.pattern.permute.xlu0 0
        %3197 = vperm.xlu0 %3196, %v2931
        %v3198 = vpop.permute.xlu0 %3197
        %3201 = vset.pattern.permute.xlu0 0
        %3202 = vperm.xlu0 %3201, %v2932
        %v3203 = vpop.permute.xlu0 %3202
        %3206 = vset.pattern.permute.xlu0 0
        %3207 = vperm.xlu0 %3206, %v2933
        %v3208 = vpop.permute.xlu0 %3207
        %3211 = vset.pattern.permute.xlu0 0
        %3212 = vperm.xlu0 %3211, %v2934
        %v3213 = vpop.permute.xlu0 %3212
        %3216 = vset.pattern.permute.xlu0 0
        %3217 = vperm.xlu0 %3216, %v2935
        %v3218 = vpop.permute.xlu0 %3217
        %3221 = vset.pattern.permute.xlu0 0
        %3222 = vperm.xlu0 %3221, %v2936
        %v3223 = vpop.permute.xlu0 %3222
        %3226 = vset.pattern.permute.xlu0 0
        %3227 = vperm.xlu0 %3226, %v2937
        %v3228 = vpop.permute.xlu0 %3227
        %3231 = vset.pattern.permute.xlu0 0
        %3232 = vperm.xlu0 %3231, %v2938
        %v3233 = vpop.permute.xlu0 %3232
        %3236 = vset.pattern.permute.xlu0 0
        %3237 = vperm.xlu0 %3236, %v2939
        %v3238 = vpop.permute.xlu0 %3237
        %3241 = vset.pattern.permute.xlu0 0
        %3242 = vperm.xlu0 %3241, %v2940
        %v3243 = vpop.permute.xlu0 %3242
        %3246 = vset.pattern.permute.xlu0 0
        %3247 = vperm.xlu0 %3246, %v2941
        %v3248 = vpop.permute.xlu0 %3247
        %3251 = vset.pattern.permute.xlu0 0
        %3252 = vperm.xlu0 %3251, %v2942
        %v3253 = vpop.permute.xlu0 %3252
        %3256 = vset.pattern.permute.xlu0 0
        %3257 = vperm.xlu0 %3256, %v2943
        %v3258 = vpop.permute.xlu0 %3257
        %3261 = vset.pattern.permute.xlu0 0
        %3262 = vperm.xlu0 %3261, %v2944
        %v3263 = vpop.permute.xlu0 %3262
        %3266 = vset.pattern.permute.xlu0 0
        %3267 = vperm.xlu0 %3266, %v2945
        %v3268 = vpop.permute.xlu0 %3267
        %3271 = vset.pattern.permute.xlu0 0
        %3272 = vperm.xlu0 %3271, %v2946
        %v3273 = vpop.permute.xlu0 %3272
        %3276 = vset.pattern.permute.xlu0 0
        %3277 = vperm.xlu0 %3276, %v2947
        %v3278 = vpop.permute.xlu0 %3277
        %3281 = vset.pattern.permute.xlu0 0
        %3282 = vperm.xlu0 %3281, %v2948
        %v3283 = vpop.permute.xlu0 %3282
        %3286 = vset.pattern.permute.xlu0 0
        %3287 = vperm.xlu0 %3286, %v2949
        %v3288 = vpop.permute.xlu0 %3287
        %3291 = vset.pattern.permute.xlu0 0
        %3292 = vperm.xlu0 %3291, %v2950
        %v3293 = vpop.permute.xlu0 %3292
        %3296 = vset.pattern.permute.xlu0 0
        %3297 = vperm.xlu0 %3296, %v2951
        %v3298 = vpop.permute.xlu0 %3297
        %3301 = vset.pattern.permute.xlu0 0
        %3302 = vperm.xlu0 %3301, %v2952
        %v3303 = vpop.permute.xlu0 %3302
        %3306 = vset.pattern.permute.xlu0 0
        %3307 = vperm.xlu0 %3306, %v2953
        %v3308 = vpop.permute.xlu0 %3307
        %3311 = vset.pattern.permute.xlu0 0
        %3312 = vperm.xlu0 %3311, %v2954
        %v3313 = vpop.permute.xlu0 %3312
        %3316 = vset.pattern.permute.xlu0 0
        %3317 = vperm.xlu0 %3316, %v2955
        %v3318 = vpop.permute.xlu0 %3317
        %3321 = vset.pattern.permute.xlu0 0
        %3322 = vperm.xlu0 %3321, %v2956
        %v3323 = vpop.permute.xlu0 %3322
        %3326 = vset.pattern.permute.xlu0 0
        %3327 = vperm.xlu0 %3326, %v2957
        %v3328 = vpop.permute.xlu0 %3327
        %3331 = vset.pattern.permute.xlu0 0
        %3332 = vperm.xlu0 %3331, %v2958
        %v3333 = vpop.permute.xlu0 %3332
        %3336 = vset.pattern.permute.xlu0 0
        %3337 = vperm.xlu0 %3336, %v2959
        %v3338 = vpop.permute.xlu0 %3337
        %3341 = vset.pattern.permute.xlu0 0
        %3342 = vperm.xlu0 %3341, %v2960
        %v3343 = vpop.permute.xlu0 %3342
        %3346 = vset.pattern.permute.xlu0 0
        %3347 = vperm.xlu0 %3346, %v2961
        %v3348 = vpop.permute.xlu0 %3347
        %3351 = vset.pattern.permute.xlu0 0
        %3352 = vperm.xlu0 %3351, %v2962
        %v3353 = vpop.permute.xlu0 %3352
        %3356 = vset.pattern.permute.xlu0 0
        %3357 = vperm.xlu0 %3356, %v2963
        %v3358 = vpop.permute.xlu0 %3357
        %3361 = vset.pattern.permute.xlu0 0
        %3362 = vperm.xlu0 %3361, %v2964
        %v3363 = vpop.permute.xlu0 %3362
        %3366 = vset.pattern.permute.xlu0 0
        %3367 = vperm.xlu0 %3366, %v2965
        %v3368 = vpop.permute.xlu0 %3367
        %3371 = vset.pattern.permute.xlu0 0
        %3372 = vperm.xlu0 %3371, %v2966
        %v3373 = vpop.permute.xlu0 %3372
        %3376 = vset.pattern.permute.xlu0 0
        %3377 = vperm.xlu0 %3376, %v2967
        %v3378 = vpop.permute.xlu0 %3377
        %3381 = vset.pattern.permute.xlu0 0
        %3382 = vperm.xlu0 %3381, %v2968
        %v3383 = vpop.permute.xlu0 %3382
        %3386 = vset.pattern.permute.xlu0 0
        %3387 = vperm.xlu0 %3386, %v2969
        %v3388 = vpop.permute.xlu0 %3387
        %3391 = vset.pattern.permute.xlu0 0
        %3392 = vperm.xlu0 %3391, %v2970
        %v3393 = vpop.permute.xlu0 %3392
        %3396 = vset.pattern.permute.xlu0 0
        %3397 = vperm.xlu0 %3396, %v2971
        %v3398 = vpop.permute.xlu0 %3397
        %3401 = vset.pattern.permute.xlu0 0
        %3402 = vperm.xlu0 %3401, %v2972
        %v3403 = vpop.permute.xlu0 %3402
        %3406 = vset.pattern.permute.xlu0 0
        %3407 = vperm.xlu0 %3406, %v2973
        %v3408 = vpop.permute.xlu0 %3407
        %3411 = vset.pattern.permute.xlu0 0
        %3412 = vperm.xlu0 %3411, %v2974
        %v3413 = vpop.permute.xlu0 %3412
        %3416 = vset.pattern.permute.xlu0 0
        %3417 = vperm.xlu0 %3416, %v2975
        %v3418 = vpop.permute.xlu0 %3417
        %3421 = vset.pattern.permute.xlu0 0
        %3422 = vperm.xlu0 %3421, %v2976
        %v3423 = vpop.permute.xlu0 %3422
        %3426 = vset.pattern.permute.xlu0 0
        %3427 = vperm.xlu0 %3426, %v2977
        %v3428 = vpop.permute.xlu0 %3427
        %3431 = vset.pattern.permute.xlu0 0
        %3432 = vperm.xlu0 %3431, %v2978
        %v3433 = vpop.permute.xlu0 %3432
        %3436 = vset.pattern.permute.xlu0 0
        %3437 = vperm.xlu0 %3436, %v2979
        %v3438 = vpop.permute.xlu0 %3437
        %3441 = vset.pattern.permute.xlu0 0
        %3442 = vperm.xlu0 %3441, %v2980
        %v3443 = vpop.permute.xlu0 %3442
        %3446 = vset.pattern.permute.xlu0 0
        %3447 = vperm.xlu0 %3446, %v2981
        %v3448 = vpop.permute.xlu0 %3447
        %3451 = vset.pattern.permute.xlu0 0
        %3452 = vperm.xlu0 %3451, %v2982
        %v3453 = vpop.permute.xlu0 %3452
        %3456 = vset.pattern.permute.xlu0 0
        %3457 = vperm.xlu0 %3456, %v2983
        %v3458 = vpop.permute.xlu0 %3457
        %3461 = vset.pattern.permute.xlu0 0
        %3462 = vperm.xlu0 %3461, %v2984
        %v3463 = vpop.permute.xlu0 %3462
        %3466 = vset.pattern.permute.xlu0 0
        %3467 = vperm.xlu0 %3466, %v2985
        %v3468 = vpop.permute.xlu0 %3467
        %3471 = vset.pattern.permute.xlu0 0
        %3472 = vperm.xlu0 %3471, %v2986
        %v3473 = vpop.permute.xlu0 %3472
        %3476 = vset.pattern.permute.xlu0 0
        %3477 = vperm.xlu0 %3476, %v2987
        %v3478 = vpop.permute.xlu0 %3477
        %3481 = vset.pattern.permute.xlu0 0
        %3482 = vperm.xlu0 %3481, %v2988
        %v3483 = vpop.permute.xlu0 %3482
        %3486 = vset.pattern.permute.xlu0 0
        %3487 = vperm.xlu0 %3486, %v2989
        %v3488 = vpop.permute.xlu0 %3487
        %3491 = vset.pattern.permute.xlu0 0
        %3492 = vperm.xlu0 %3491, %v2990
        %v3493 = vpop.permute.xlu0 %3492
        %3496 = vset.pattern.permute.xlu0 0
        %3497 = vperm.xlu0 %3496, %v2991
        %v3498 = vpop.permute.xlu0 %3497
        %3501 = vset.pattern.permute.xlu0 0
        %3502 = vperm.xlu0 %3501, %v2992
        %v3503 = vpop.permute.xlu0 %3502
        %v3505 = vsub.f32 %v1936, %v3188
        %v3506 = vsub.f32 %v1941, %v3193
        %v3507 = vsub.f32 %v1946, %v3198
        %v3508 = vsub.f32 %v1951, %v3203
        %v3509 = vsub.f32 %v1956, %v3208
        %v3510 = vsub.f32 %v1961, %v3213
        %v3511 = vsub.f32 %v1966, %v3218
        %v3512 = vsub.f32 %v1971, %v3223
        %v3513 = vsub.f32 %v1976, %v3228
        %v3514 = vsub.f32 %v1981, %v3233
        %v3515 = vsub.f32 %v1986, %v3238
        %v3516 = vsub.f32 %v1991, %v3243
        %v3517 = vsub.f32 %v1996, %v3248
        %v3518 = vsub.f32 %v2001, %v3253
        %v3519 = vsub.f32 %v2006, %v3258
        %v3520 = vsub.f32 %v2011, %v3263
        %v3521 = vsub.f32 %v2177, %v3268
        %v3522 = vsub.f32 %v2182, %v3273
        %v3523 = vsub.f32 %v2187, %v3278
        %v3524 = vsub.f32 %v2192, %v3283
        %v3525 = vsub.f32 %v2197, %v3288
        %v3526 = vsub.f32 %v2202, %v3293
        %v3527 = vsub.f32 %v2207, %v3298
        %v3528 = vsub.f32 %v2212, %v3303
        %v3529 = vsub.f32 %v2217, %v3308
        %v3530 = vsub.f32 %v2222, %v3313
        %v3531 = vsub.f32 %v2227, %v3318
        %v3532 = vsub.f32 %v2232, %v3323
        %v3533 = vsub.f32 %v2237, %v3328
        %v3534 = vsub.f32 %v2242, %v3333
        %v3535 = vsub.f32 %v2247, %v3338
        %v3536 = vsub.f32 %v2252, %v3343
        %v3537 = vsub.f32 %v2418, %v3348
        %v3538 = vsub.f32 %v2423, %v3353
        %v3539 = vsub.f32 %v2428, %v3358
        %v3540 = vsub.f32 %v2433, %v3363
        %v3541 = vsub.f32 %v2438, %v3368
        %v3542 = vsub.f32 %v2443, %v3373
        %v3543 = vsub.f32 %v2448, %v3378
        %v3544 = vsub.f32 %v2453, %v3383
        %v3545 = vsub.f32 %v2458, %v3388
        %v3546 = vsub.f32 %v2463, %v3393
        %v3547 = vsub.f32 %v2468, %v3398
        %v3548 = vsub.f32 %v2473, %v3403
        %v3549 = vsub.f32 %v2478, %v3408
        %v3550 = vsub.f32 %v2483, %v3413
        %v3551 = vsub.f32 %v2488, %v3418
        %v3552 = vsub.f32 %v2493, %v3423
        %v3553 = vsub.f32 %v2659, %v3428
        %v3554 = vsub.f32 %v2664, %v3433
        %v3555 = vsub.f32 %v2669, %v3438
        %v3556 = vsub.f32 %v2674, %v3443
        %v3557 = vsub.f32 %v2679, %v3448
        %v3558 = vsub.f32 %v2684, %v3453
        %v3559 = vsub.f32 %v2689, %v3458
        %v3560 = vsub.f32 %v2694, %v3463
        %v3561 = vsub.f32 %v2699, %v3468
        %v3562 = vsub.f32 %v2704, %v3473
        %v3563 = vsub.f32 %v2709, %v3478
        %v3564 = vsub.f32 %v2714, %v3483
        %v3565 = vsub.f32 %v2719, %v3488
        %v3566 = vsub.f32 %v2724, %v3493
        %v3567 = vsub.f32 %v2729, %v3498
        %v3568 = vsub.f32 %v2734, %v3503
        %v3569 = vmul.f32 %v3505, 1.442695
        %v3570 = vpow.pop %v3569
        %v3571 = vmul.f32 %v3506, 1.442695
        %v3572 = vpow.pop %v3571
        %v3573 = vmul.f32 %v3507, 1.442695
        %v3574 = vpow.pop %v3573
        %v3575 = vmul.f32 %v3508, 1.442695
        %v3576 = vpow.pop %v3575
        %v3577 = vmul.f32 %v3509, 1.442695
        %v3578 = vpow.pop %v3577
        %v3579 = vmul.f32 %v3510, 1.442695
        %v3580 = vpow.pop %v3579
        %v3581 = vmul.f32 %v3511, 1.442695
        %v3582 = vpow.pop %v3581
        %v3583 = vmul.f32 %v3512, 1.442695
        %v3584 = vpow.pop %v3583
        %v3585 = vmul.f32 %v3513, 1.442695
        %v3586 = vpow.pop %v3585
        %v3587 = vmul.f32 %v3514, 1.442695
        %v3588 = vpow.pop %v3587
        %v3589 = vmul.f32 %v3515, 1.442695
        %v3590 = vpow.pop %v3589
        %v3591 = vmul.f32 %v3516, 1.442695
        %v3592 = vpow.pop %v3591
        %v3593 = vmul.f32 %v3517, 1.442695
        %v3594 = vpow.pop %v3593
        %v3595 = vmul.f32 %v3518, 1.442695
        %v3596 = vpow.pop %v3595
        %v3597 = vmul.f32 %v3519, 1.442695
        %v3598 = vpow.pop %v3597
        %v3599 = vmul.f32 %v3520, 1.442695
        %v3600 = vpow.pop %v3599
        %v3601 = vmul.f32 %v3521, 1.442695
        %v3602 = vpow.pop %v3601
        %v3603 = vmul.f32 %v3522, 1.442695
        %v3604 = vpow.pop %v3603
        %v3605 = vmul.f32 %v3523, 1.442695
        %v3606 = vpow.pop %v3605
        %v3607 = vmul.f32 %v3524, 1.442695
        %v3608 = vpow.pop %v3607
        %v3609 = vmul.f32 %v3525, 1.442695
        %v3610 = vpow.pop %v3609
        %v3611 = vmul.f32 %v3526, 1.442695
        %v3612 = vpow.pop %v3611
        %v3613 = vmul.f32 %v3527, 1.442695
        %v3614 = vpow.pop %v3613
        %v3615 = vmul.f32 %v3528, 1.442695
        %v3616 = vpow.pop %v3615
        %v3617 = vmul.f32 %v3529, 1.442695
        %v3618 = vpow.pop %v3617
        %v3619 = vmul.f32 %v3530, 1.442695
        %v3620 = vpow.pop %v3619
        %v3621 = vmul.f32 %v3531, 1.442695
        %v3622 = vpow.pop %v3621
        %v3623 = vmul.f32 %v3532, 1.442695
        %v3624 = vpow.pop %v3623
        %v3625 = vmul.f32 %v3533, 1.442695
        %v3626 = vpow.pop %v3625
        %v3627 = vmul.f32 %v3534, 1.442695
        %v3628 = vpow.pop %v3627
        %v3629 = vmul.f32 %v3535, 1.442695
        %v3630 = vpow.pop %v3629
        %v3631 = vmul.f32 %v3536, 1.442695
        %v3632 = vpow.pop %v3631
        %v3633 = vmul.f32 %v3537, 1.442695
        %v3634 = vpow.pop %v3633
        %v3635 = vmul.f32 %v3538, 1.442695
        %v3636 = vpow.pop %v3635
        %v3637 = vmul.f32 %v3539, 1.442695
        %v3638 = vpow.pop %v3637
        %v3639 = vmul.f32 %v3540, 1.442695
        %v3640 = vpow.pop %v3639
        %v3641 = vmul.f32 %v3541, 1.442695
        %v3642 = vpow.pop %v3641
        %v3643 = vmul.f32 %v3542, 1.442695
        %v3644 = vpow.pop %v3643
        %v3645 = vmul.f32 %v3543, 1.442695
        %v3646 = vpow.pop %v3645
        %v3647 = vmul.f32 %v3544, 1.442695
        %v3648 = vpow.pop %v3647
        %v3649 = vmul.f32 %v3545, 1.442695
        %v3650 = vpow.pop %v3649
        %v3651 = vmul.f32 %v3546, 1.442695
        %v3652 = vpow.pop %v3651
        %v3653 = vmul.f32 %v3547, 1.442695
        %v3654 = vpow.pop %v3653
        %v3655 = vmul.f32 %v3548, 1.442695
        %v3656 = vpow.pop %v3655
        %v3657 = vmul.f32 %v3549, 1.442695
        %v3658 = vpow.pop %v3657
        %v3659 = vmul.f32 %v3550, 1.442695
        %v3660 = vpow.pop %v3659
        %v3661 = vmul.f32 %v3551, 1.442695
        %v3662 = vpow.pop %v3661
        %v3663 = vmul.f32 %v3552, 1.442695
        %v3664 = vpow.pop %v3663
        %v3665 = vmul.f32 %v3553, 1.442695
        %v3666 = vpow.pop %v3665
        %v3667 = vmul.f32 %v3554, 1.442695
        %v3668 = vpow.pop %v3667
        %v3669 = vmul.f32 %v3555, 1.442695
        %v3670 = vpow.pop %v3669
        %v3671 = vmul.f32 %v3556, 1.442695
        %v3672 = vpow.pop %v3671
        %v3673 = vmul.f32 %v3557, 1.442695
        %v3674 = vpow.pop %v3673
        %v3675 = vmul.f32 %v3558, 1.442695
        %v3676 = vpow.pop %v3675
        %v3677 = vmul.f32 %v3559, 1.442695
        %v3678 = vpow.pop %v3677
        %v3679 = vmul.f32 %v3560, 1.442695
        %v3680 = vpow.pop %v3679
        %v3681 = vmul.f32 %v3561, 1.442695
        %v3682 = vpow.pop %v3681
        %v3683 = vmul.f32 %v3562, 1.442695
        %v3684 = vpow.pop %v3683
        %v3685 = vmul.f32 %v3563, 1.442695
        %v3686 = vpow.pop %v3685
        %v3687 = vmul.f32 %v3564, 1.442695
        %v3688 = vpow.pop %v3687
        %v3689 = vmul.f32 %v3565, 1.442695
        %v3690 = vpow.pop %v3689
        %v3691 = vmul.f32 %v3566, 1.442695
        %v3692 = vpow.pop %v3691
        %v3693 = vmul.f32 %v3567, 1.442695
        %v3694 = vpow.pop %v3693
        %v3695 = vmul.f32 %v3568, 1.442695
        %v3696 = vpow.pop %v3695
        %3697 = vadd.xlane.f32.xlu0 %v3570
        %v3698 = vpop.xlane.xlu0 %3697
        %3699 = vadd.xlane.f32.xlu0 %v3572
        %v3700 = vpop.xlane.xlu0 %3699
        %3701 = vadd.xlane.f32.xlu0 %v3574
        %v3702 = vpop.xlane.xlu0 %3701
        %3703 = vadd.xlane.f32.xlu0 %v3576
        %v3704 = vpop.xlane.xlu0 %3703
        %3705 = vadd.xlane.f32.xlu0 %v3578
        %v3706 = vpop.xlane.xlu0 %3705
        %3707 = vadd.xlane.f32.xlu0 %v3580
        %v3708 = vpop.xlane.xlu0 %3707
        %3709 = vadd.xlane.f32.xlu0 %v3582
        %v3710 = vpop.xlane.xlu0 %3709
        %3711 = vadd.xlane.f32.xlu0 %v3584
        %v3712 = vpop.xlane.xlu0 %3711
        %3713 = vadd.xlane.f32.xlu0 %v3586
        %v3714 = vpop.xlane.xlu0 %3713
        %3715 = vadd.xlane.f32.xlu0 %v3588
        %v3716 = vpop.xlane.xlu0 %3715
        %3717 = vadd.xlane.f32.xlu0 %v3590
        %v3718 = vpop.xlane.xlu0 %3717
        %3719 = vadd.xlane.f32.xlu0 %v3592
        %v3720 = vpop.xlane.xlu0 %3719
        %3721 = vadd.xlane.f32.xlu0 %v3594
        %v3722 = vpop.xlane.xlu0 %3721
        %3723 = vadd.xlane.f32.xlu0 %v3596
        %v3724 = vpop.xlane.xlu0 %3723
        %3725 = vadd.xlane.f32.xlu0 %v3598
        %v3726 = vpop.xlane.xlu0 %3725
        %3727 = vadd.xlane.f32.xlu0 %v3600
        %v3728 = vpop.xlane.xlu0 %3727
        %3729 = vadd.xlane.f32.xlu0 %v3602
        %v3730 = vpop.xlane.xlu0 %3729
        %3731 = vadd.xlane.f32.xlu0 %v3604
        %v3732 = vpop.xlane.xlu0 %3731
        %3733 = vadd.xlane.f32.xlu0 %v3606
        %v3734 = vpop.xlane.xlu0 %3733
        %3735 = vadd.xlane.f32.xlu0 %v3608
        %v3736 = vpop.xlane.xlu0 %3735
        %3737 = vadd.xlane.f32.xlu0 %v3610
        %v3738 = vpop.xlane.xlu0 %3737
        %3739 = vadd.xlane.f32.xlu0 %v3612
        %v3740 = vpop.xlane.xlu0 %3739
        %3741 = vadd.xlane.f32.xlu0 %v3614
        %v3742 = vpop.xlane.xlu0 %3741
        %3743 = vadd.xlane.f32.xlu0 %v3616
        %v3744 = vpop.xlane.xlu0 %3743
        %3745 = vadd.xlane.f32.xlu0 %v3618
        %v3746 = vpop.xlane.xlu0 %3745
        %3747 = vadd.xlane.f32.xlu0 %v3620
        %v3748 = vpop.xlane.xlu0 %3747
        %3749 = vadd.xlane.f32.xlu0 %v3622
        %v3750 = vpop.xlane.xlu0 %3749
        %3751 = vadd.xlane.f32.xlu0 %v3624
        %v3752 = vpop.xlane.xlu0 %3751
        %3753 = vadd.xlane.f32.xlu0 %v3626
        %v3754 = vpop.xlane.xlu0 %3753
        %3755 = vadd.xlane.f32.xlu0 %v3628
        %v3756 = vpop.xlane.xlu0 %3755
        %3757 = vadd.xlane.f32.xlu0 %v3630
        %v3758 = vpop.xlane.xlu0 %3757
        %3759 = vadd.xlane.f32.xlu0 %v3632
        %v3760 = vpop.xlane.xlu0 %3759
        %3761 = vadd.xlane.f32.xlu0 %v3634
        %v3762 = vpop.xlane.xlu0 %3761
        %3763 = vadd.xlane.f32.xlu0 %v3636
        %v3764 = vpop.xlane.xlu0 %3763
        %3765 = vadd.xlane.f32.xlu0 %v3638
        %v3766 = vpop.xlane.xlu0 %3765
        %3767 = vadd.xlane.f32.xlu0 %v3640
        %v3768 = vpop.xlane.xlu0 %3767
        %3769 = vadd.xlane.f32.xlu0 %v3642
        %v3770 = vpop.xlane.xlu0 %3769
        %3771 = vadd.xlane.f32.xlu0 %v3644
        %v3772 = vpop.xlane.xlu0 %3771
        %3773 = vadd.xlane.f32.xlu0 %v3646
        %v3774 = vpop.xlane.xlu0 %3773
        %3775 = vadd.xlane.f32.xlu0 %v3648
        %v3776 = vpop.xlane.xlu0 %3775
        %3777 = vadd.xlane.f32.xlu0 %v3650
        %v3778 = vpop.xlane.xlu0 %3777
        %3779 = vadd.xlane.f32.xlu0 %v3652
        %v3780 = vpop.xlane.xlu0 %3779
        %3781 = vadd.xlane.f32.xlu0 %v3654
        %v3782 = vpop.xlane.xlu0 %3781
        %3783 = vadd.xlane.f32.xlu0 %v3656
        %v3784 = vpop.xlane.xlu0 %3783
        %3785 = vadd.xlane.f32.xlu0 %v3658
        %v3786 = vpop.xlane.xlu0 %3785
        %3787 = vadd.xlane.f32.xlu0 %v3660
        %v3788 = vpop.xlane.xlu0 %3787
        %3789 = vadd.xlane.f32.xlu0 %v3662
        %v3790 = vpop.xlane.xlu0 %3789
        %3791 = vadd.xlane.f32.xlu0 %v3664
        %v3792 = vpop.xlane.xlu0 %3791
        %3793 = vadd.xlane.f32.xlu0 %v3666
        %v3794 = vpop.xlane.xlu0 %3793
        %3795 = vadd.xlane.f32.xlu0 %v3668
        %v3796 = vpop.xlane.xlu0 %3795
        %3797 = vadd.xlane.f32.xlu0 %v3670
        %v3798 = vpop.xlane.xlu0 %3797
        %3799 = vadd.xlane.f32.xlu0 %v3672
        %v3800 = vpop.xlane.xlu0 %3799
        %3801 = vadd.xlane.f32.xlu0 %v3674
        %v3802 = vpop.xlane.xlu0 %3801
        %3803 = vadd.xlane.f32.xlu0 %v3676
        %v3804 = vpop.xlane.xlu0 %3803
        %3805 = vadd.xlane.f32.xlu0 %v3678
        %v3806 = vpop.xlane.xlu0 %3805
        %3807 = vadd.xlane.f32.xlu0 %v3680
        %v3808 = vpop.xlane.xlu0 %3807
        %3809 = vadd.xlane.f32.xlu0 %v3682
        %v3810 = vpop.xlane.xlu0 %3809
        %3811 = vadd.xlane.f32.xlu0 %v3684
        %v3812 = vpop.xlane.xlu0 %3811
        %3813 = vadd.xlane.f32.xlu0 %v3686
        %v3814 = vpop.xlane.xlu0 %3813
        %3815 = vadd.xlane.f32.xlu0 %v3688
        %v3816 = vpop.xlane.xlu0 %3815
        %3817 = vadd.xlane.f32.xlu0 %v3690
        %v3818 = vpop.xlane.xlu0 %3817
        %3819 = vadd.xlane.f32.xlu0 %v3692
        %v3820 = vpop.xlane.xlu0 %3819
        %3821 = vadd.xlane.f32.xlu0 %v3694
        %v3822 = vpop.xlane.xlu0 %3821
        %3823 = vadd.xlane.f32.xlu0 %v3696
        %v3824 = vpop.xlane.xlu0 %3823
        %3825 = vmatprep.subr.mxu0 0.0
        %3826 = vmatpush1.msra.mxu0 %v1675
        %3827 = vmatprep.subr.mxu0 0.0
        %3828 = vmatpush1.msra.mxu0 %v1674
        %3829 = vmatprep.subr.mxu0 0.0
        %3830 = vmatpush1.msra.mxu0 %v1673
        %3831 = vmatprep.subr.mxu0 0.0
        %3832 = vmatpush1.msra.mxu0 %v1672
        %3833 = vmatprep.subr.mxu0 0.0
        %3834 = vmatpush1.msra.mxu0 %v1671
        %3835 = vmatprep.subr.mxu0 0.0
        %3836 = vmatpush1.msra.mxu0 %v1670
        %3837 = vmatprep.subr.mxu0 0.0
        %3838 = vmatpush1.msra.mxu0 %v1669
        %3839 = vmatprep.subr.mxu0 0.0
        %3840 = vmatpush1.msra.mxu0 %v1668
        %3841 = vmatprep.subr.mxu0 0.0
        %3842 = vmatpush1.msra.mxu0 %v1667
        %3843 = vmatprep.subr.mxu0 0.0
        %3844 = vmatpush1.msra.mxu0 %v1666
        %3845 = vmatprep.subr.mxu0 0.0
        %3846 = vmatpush1.msra.mxu0 %v1665
        %3847 = vmatprep.subr.mxu0 0.0
        %3848 = vmatpush1.msra.mxu0 %v1664
        %3849 = vmatprep.subr.mxu0 0.0
        %3850 = vmatpush1.msra.mxu0 %v1663
        %3851 = vmatprep.subr.mxu0 0.0
        %3852 = vmatpush1.msra.mxu0 %v1662
        %3853 = vmatprep.subr.mxu0 0.0
        %3854 = vmatpush1.msra.mxu0 %v1661
        %3855 = vmatprep.subr.mxu0 0.0
        %3856 = vmatpush1.msra.mxu0 %v1660
        %3857 = vmatprep.subr.mxu0 0.0
        %3858 = vmatpush2.msra.mxu0 0.0
        %3859 = vmatprep.subr.mxu0 0.0
        %3860 = vmatpush2.msra.mxu0 0.0
        %3861 = vmatprep.subr.mxu0 0.0
        %3862 = vmatpush2.msra.mxu0 0.0
        %3863 = vmatprep.subr.mxu0 0.0
        %3864 = vmatpush2.msra.mxu0 0.0
        %3865 = vmatprep.subr.mxu0 0.0
        %3866 = vmatpush2.msra.mxu0 0.0
        %3867 = vmatprep.subr.mxu0 0.0
        %3868 = vmatpush2.msra.mxu0 0.0
        %3869 = vmatprep.subr.mxu0 0.0
        %3870 = vmatpush2.msra.mxu0 0.0
        %3871 = vmatprep.subr.mxu0 0.0
        %3872 = vmatpush2.msra.mxu0 0.0
        %3873 = vmatprep.subr.mxu0 0.0
        %3874 = vmatpush2.msra.mxu0 0.0
        %3875 = vmatprep.subr.mxu0 0.0
        %3876 = vmatpush2.msra.mxu0 0.0
        %3877 = vmatprep.subr.mxu0 0.0
        %3878 = vmatpush2.msra.mxu0 0.0
        %3879 = vmatprep.subr.mxu0 0.0
        %3880 = vmatpush2.msra.mxu0 0.0
        %3881 = vmatprep.subr.mxu0 0.0
        %3882 = vmatpush2.msra.mxu0 0.0
        %3883 = vmatprep.subr.mxu0 0.0
        %3884 = vmatpush2.msra.mxu0 0.0
        %3885 = vmatprep.subr.mxu0 0.0
        %3886 = vmatpush2.msra.mxu0 0.0
        %3887 = vmatprep.subr.mxu0 0.0
        %3888 = vmatpush2.msra.mxu0 0.0
        %3889 = vmatprep.mubr.f32.mxu0 0.0
        %3890 = vmatmul.mubr.f32.gmra.mxu0 %v3570
        %v3891 = vpop.f32.mrf.mxu0
        %v3892 = vadd.f32 0.0, %v3891
        %v3893 = vpop.f32.mrf.mxu0
        %3894 = vmatprep.mubr.f32.mxu0 0.0
        %3895 = vmatmul.mubr.f32.gmra.mxu0 %v3572
        %v3896 = vpop.f32.mrf.mxu0
        %v3897 = vadd.f32 0.0, %v3896
        %v3898 = vpop.f32.mrf.mxu0
        %3899 = vmatprep.mubr.f32.mxu0 0.0
        %3900 = vmatmul.mubr.f32.gmra.mxu0 %v3574
        %v3901 = vpop.f32.mrf.mxu0
        %v3902 = vadd.f32 0.0, %v3901
        %v3903 = vpop.f32.mrf.mxu0
        %3904 = vmatprep.mubr.f32.mxu0 0.0
        %3905 = vmatmul.mubr.f32.gmra.mxu0 %v3576
        %v3906 = vpop.f32.mrf.mxu0
        %v3907 = vadd.f32 0.0, %v3906
        %v3908 = vpop.f32.mrf.mxu0
        %3909 = vmatprep.mubr.f32.mxu0 0.0
        %3910 = vmatmul.mubr.f32.gmra.mxu0 %v3578
        %v3911 = vpop.f32.mrf.mxu0
        %v3912 = vadd.f32 0.0, %v3911
        %v3913 = vpop.f32.mrf.mxu0
        %3914 = vmatprep.mubr.f32.mxu0 0.0
        %3915 = vmatmul.mubr.f32.gmra.mxu0 %v3580
        %v3916 = vpop.f32.mrf.mxu0
        %v3917 = vadd.f32 0.0, %v3916
        %v3918 = vpop.f32.mrf.mxu0
        %3919 = vmatprep.mubr.f32.mxu0 0.0
        %3920 = vmatmul.mubr.f32.gmra.mxu0 %v3582
        %v3921 = vpop.f32.mrf.mxu0
        %v3922 = vadd.f32 0.0, %v3921
        %v3923 = vpop.f32.mrf.mxu0
        %3924 = vmatprep.mubr.f32.mxu0 0.0
        %3925 = vmatmul.mubr.f32.gmra.mxu0 %v3584
        %v3926 = vpop.f32.mrf.mxu0
        %v3927 = vadd.f32 0.0, %v3926
        %v3928 = vpop.f32.mrf.mxu0
        %3929 = vmatprep.mubr.f32.mxu0 0.0
        %3930 = vmatmul.mubr.f32.gmra.mxu0 %v3586
        %v3931 = vpop.f32.mrf.mxu0
        %v3932 = vadd.f32 0.0, %v3931
        %v3933 = vpop.f32.mrf.mxu0
        %3934 = vmatprep.mubr.f32.mxu0 0.0
        %3935 = vmatmul.mubr.f32.gmra.mxu0 %v3588
        %v3936 = vpop.f32.mrf.mxu0
        %v3937 = vadd.f32 0.0, %v3936
        %v3938 = vpop.f32.mrf.mxu0
        %3939 = vmatprep.mubr.f32.mxu0 0.0
        %3940 = vmatmul.mubr.f32.gmra.mxu0 %v3590
        %v3941 = vpop.f32.mrf.mxu0
        %v3942 = vadd.f32 0.0, %v3941
        %v3943 = vpop.f32.mrf.mxu0
        %3944 = vmatprep.mubr.f32.mxu0 0.0
        %3945 = vmatmul.mubr.f32.gmra.mxu0 %v3592
        %v3946 = vpop.f32.mrf.mxu0
        %v3947 = vadd.f32 0.0, %v3946
        %v3948 = vpop.f32.mrf.mxu0
        %3949 = vmatprep.mubr.f32.mxu0 0.0
        %3950 = vmatmul.mubr.f32.gmra.mxu0 %v3594
        %v3951 = vpop.f32.mrf.mxu0
        %v3952 = vadd.f32 0.0, %v3951
        %v3953 = vpop.f32.mrf.mxu0
        %3954 = vmatprep.mubr.f32.mxu0 0.0
        %3955 = vmatmul.mubr.f32.gmra.mxu0 %v3596
        %v3956 = vpop.f32.mrf.mxu0
        %v3957 = vadd.f32 0.0, %v3956
        %v3958 = vpop.f32.mrf.mxu0
        %3959 = vmatprep.mubr.f32.mxu0 0.0
        %3960 = vmatmul.mubr.f32.gmra.mxu0 %v3598
        %v3961 = vpop.f32.mrf.mxu0
        %v3962 = vadd.f32 0.0, %v3961
        %v3963 = vpop.f32.mrf.mxu0
        %3964 = vmatprep.mubr.f32.mxu0 0.0
        %3965 = vmatmul.mubr.f32.gmra.mxu0 %v3600
        %v3966 = vpop.f32.mrf.mxu0
        %v3967 = vadd.f32 0.0, %v3966
        %v3968 = vpop.f32.mrf.mxu0
        %3969 = vdwg.mxu0
        %3970 = vmatprep.subr.mxu0 0.0
        %3971 = vmatpush1.msra.mxu0 %v1691
        %3972 = vmatprep.subr.mxu0 0.0
        %3973 = vmatpush1.msra.mxu0 %v1690
        %3974 = vmatprep.subr.mxu0 0.0
        %3975 = vmatpush1.msra.mxu0 %v1689
        %3976 = vmatprep.subr.mxu0 0.0
        %3977 = vmatpush1.msra.mxu0 %v1688
        %3978 = vmatprep.subr.mxu0 0.0
        %3979 = vmatpush1.msra.mxu0 %v1687
        %3980 = vmatprep.subr.mxu0 0.0
        %3981 = vmatpush1.msra.mxu0 %v1686
        %3982 = vmatprep.subr.mxu0 0.0
        %3983 = vmatpush1.msra.mxu0 %v1685
        %3984 = vmatprep.subr.mxu0 0.0
        %3985 = vmatpush1.msra.mxu0 %v1684
        %3986 = vmatprep.subr.mxu0 0.0
        %3987 = vmatpush1.msra.mxu0 %v1683
        %3988 = vmatprep.subr.mxu0 0.0
        %3989 = vmatpush1.msra.mxu0 %v1682
        %3990 = vmatprep.subr.mxu0 0.0
        %3991 = vmatpush1.msra.mxu0 %v1681
        %3992 = vmatprep.subr.mxu0 0.0
        %3993 = vmatpush1.msra.mxu0 %v1680
        %3994 = vmatprep.subr.mxu0 0.0
        %3995 = vmatpush1.msra.mxu0 %v1679
        %3996 = vmatprep.subr.mxu0 0.0
        %3997 = vmatpush1.msra.mxu0 %v1678
        %3998 = vmatprep.subr.mxu0 0.0
        %3999 = vmatpush1.msra.mxu0 %v1677
        %4000 = vmatprep.subr.mxu0 0.0
        %4001 = vmatpush1.msra.mxu0 %v1676
        %4002 = vmatprep.subr.mxu0 0.0
        %4003 = vmatpush2.msra.mxu0 0.0
        %4004 = vmatprep.subr.mxu0 0.0
        %4005 = vmatpush2.msra.mxu0 0.0
        %4006 = vmatprep.subr.mxu0 0.0
        %4007 = vmatpush2.msra.mxu0 0.0
        %4008 = vmatprep.subr.mxu0 0.0
        %4009 = vmatpush2.msra.mxu0 0.0
        %4010 = vmatprep.subr.mxu0 0.0
        %4011 = vmatpush2.msra.mxu0 0.0
        %4012 = vmatprep.subr.mxu0 0.0
        %4013 = vmatpush2.msra.mxu0 0.0
        %4014 = vmatprep.subr.mxu0 0.0
        %4015 = vmatpush2.msra.mxu0 0.0
        %4016 = vmatprep.subr.mxu0 0.0
        %4017 = vmatpush2.msra.mxu0 0.0
        %4018 = vmatprep.subr.mxu0 0.0
        %4019 = vmatpush2.msra.mxu0 0.0
        %4020 = vmatprep.subr.mxu0 0.0
        %4021 = vmatpush2.msra.mxu0 0.0
        %4022 = vmatprep.subr.mxu0 0.0
        %4023 = vmatpush2.msra.mxu0 0.0
        %4024 = vmatprep.subr.mxu0 0.0
        %4025 = vmatpush2.msra.mxu0 0.0
        %4026 = vmatprep.subr.mxu0 0.0
        %4027 = vmatpush2.msra.mxu0 0.0
        %4028 = vmatprep.subr.mxu0 0.0
        %4029 = vmatpush2.msra.mxu0 0.0
        %4030 = vmatprep.subr.mxu0 0.0
        %4031 = vmatpush2.msra.mxu0 0.0
        %4032 = vmatprep.subr.mxu0 0.0
        %4033 = vmatpush2.msra.mxu0 0.0
        %4034 = vmatprep.mubr.f32.mxu0 0.0
        %4035 = vmatmul.mubr.f32.gmra.mxu0 %v3602
        %v4036 = vpop.f32.mrf.mxu0
        %v4037 = vadd.f32 0.0, %v4036
        %v4038 = vpop.f32.mrf.mxu0
        %4039 = vmatprep.mubr.f32.mxu0 0.0
        %4040 = vmatmul.mubr.f32.gmra.mxu0 %v3604
        %v4041 = vpop.f32.mrf.mxu0
        %v4042 = vadd.f32 0.0, %v4041
        %v4043 = vpop.f32.mrf.mxu0
        %4044 = vmatprep.mubr.f32.mxu0 0.0
        %4045 = vmatmul.mubr.f32.gmra.mxu0 %v3606
        %v4046 = vpop.f32.mrf.mxu0
        %v4047 = vadd.f32 0.0, %v4046
        %v4048 = vpop.f32.mrf.mxu0
        %4049 = vmatprep.mubr.f32.mxu0 0.0
        %4050 = vmatmul.mubr.f32.gmra.mxu0 %v3608
        %v4051 = vpop.f32.mrf.mxu0
        %v4052 = vadd.f32 0.0, %v4051
        %v4053 = vpop.f32.mrf.mxu0
        %4054 = vmatprep.mubr.f32.mxu0 0.0
        %4055 = vmatmul.mubr.f32.gmra.mxu0 %v3610
        %v4056 = vpop.f32.mrf.mxu0
        %v4057 = vadd.f32 0.0, %v4056
        %v4058 = vpop.f32.mrf.mxu0
        %4059 = vmatprep.mubr.f32.mxu0 0.0
        %4060 = vmatmul.mubr.f32.gmra.mxu0 %v3612
        %v4061 = vpop.f32.mrf.mxu0
        %v4062 = vadd.f32 0.0, %v4061
        %v4063 = vpop.f32.mrf.mxu0
        %4064 = vmatprep.mubr.f32.mxu0 0.0
        %4065 = vmatmul.mubr.f32.gmra.mxu0 %v3614
        %v4066 = vpop.f32.mrf.mxu0
        %v4067 = vadd.f32 0.0, %v4066
        %v4068 = vpop.f32.mrf.mxu0
        %4069 = vmatprep.mubr.f32.mxu0 0.0
        %4070 = vmatmul.mubr.f32.gmra.mxu0 %v3616
        %v4071 = vpop.f32.mrf.mxu0
        %v4072 = vadd.f32 0.0, %v4071
        %v4073 = vpop.f32.mrf.mxu0
        %4074 = vmatprep.mubr.f32.mxu0 0.0
        %4075 = vmatmul.mubr.f32.gmra.mxu0 %v3618
        %v4076 = vpop.f32.mrf.mxu0
        %v4077 = vadd.f32 0.0, %v4076
        %v4078 = vpop.f32.mrf.mxu0
        %4079 = vmatprep.mubr.f32.mxu0 0.0
        %4080 = vmatmul.mubr.f32.gmra.mxu0 %v3620
        %v4081 = vpop.f32.mrf.mxu0
        %v4082 = vadd.f32 0.0, %v4081
        %v4083 = vpop.f32.mrf.mxu0
        %4084 = vmatprep.mubr.f32.mxu0 0.0
        %4085 = vmatmul.mubr.f32.gmra.mxu0 %v3622
        %v4086 = vpop.f32.mrf.mxu0
        %v4087 = vadd.f32 0.0, %v4086
        %v4088 = vpop.f32.mrf.mxu0
        %4089 = vmatprep.mubr.f32.mxu0 0.0
        %4090 = vmatmul.mubr.f32.gmra.mxu0 %v3624
        %v4091 = vpop.f32.mrf.mxu0
        %v4092 = vadd.f32 0.0, %v4091
        %v4093 = vpop.f32.mrf.mxu0
        %4094 = vmatprep.mubr.f32.mxu0 0.0
        %4095 = vmatmul.mubr.f32.gmra.mxu0 %v3626
        %v4096 = vpop.f32.mrf.mxu0
        %v4097 = vadd.f32 0.0, %v4096
        %v4098 = vpop.f32.mrf.mxu0
        %4099 = vmatprep.mubr.f32.mxu0 0.0
        %4100 = vmatmul.mubr.f32.gmra.mxu0 %v3628
        %v4101 = vpop.f32.mrf.mxu0
        %v4102 = vadd.f32 0.0, %v4101
        %v4103 = vpop.f32.mrf.mxu0
        %4104 = vmatprep.mubr.f32.mxu0 0.0
        %4105 = vmatmul.mubr.f32.gmra.mxu0 %v3630
        %v4106 = vpop.f32.mrf.mxu0
        %v4107 = vadd.f32 0.0, %v4106
        %v4108 = vpop.f32.mrf.mxu0
        %4109 = vmatprep.mubr.f32.mxu0 0.0
        %4110 = vmatmul.mubr.f32.gmra.mxu0 %v3632
        %v4111 = vpop.f32.mrf.mxu0
        %v4112 = vadd.f32 0.0, %v4111
        %v4113 = vpop.f32.mrf.mxu0
        %4114 = vdwg.mxu0
        %4115 = vmatprep.subr.mxu0 0.0
        %4116 = vmatpush1.msra.mxu0 %v1707
        %4117 = vmatprep.subr.mxu0 0.0
        %4118 = vmatpush1.msra.mxu0 %v1706
        %4119 = vmatprep.subr.mxu0 0.0
        %4120 = vmatpush1.msra.mxu0 %v1705
        %4121 = vmatprep.subr.mxu0 0.0
        %4122 = vmatpush1.msra.mxu0 %v1704
        %4123 = vmatprep.subr.mxu0 0.0
        %4124 = vmatpush1.msra.mxu0 %v1703
        %4125 = vmatprep.subr.mxu0 0.0
        %4126 = vmatpush1.msra.mxu0 %v1702
        %4127 = vmatprep.subr.mxu0 0.0
        %4128 = vmatpush1.msra.mxu0 %v1701
        %4129 = vmatprep.subr.mxu0 0.0
        %4130 = vmatpush1.msra.mxu0 %v1700
        %4131 = vmatprep.subr.mxu0 0.0
        %4132 = vmatpush1.msra.mxu0 %v1699
        %4133 = vmatprep.subr.mxu0 0.0
        %4134 = vmatpush1.msra.mxu0 %v1698
        %4135 = vmatprep.subr.mxu0 0.0
        %4136 = vmatpush1.msra.mxu0 %v1697
        %4137 = vmatprep.subr.mxu0 0.0
        %4138 = vmatpush1.msra.mxu0 %v1696
        %4139 = vmatprep.subr.mxu0 0.0
        %4140 = vmatpush1.msra.mxu0 %v1695
        %4141 = vmatprep.subr.mxu0 0.0
        %4142 = vmatpush1.msra.mxu0 %v1694
        %4143 = vmatprep.subr.mxu0 0.0
        %4144 = vmatpush1.msra.mxu0 %v1693
        %4145 = vmatprep.subr.mxu0 0.0
        %4146 = vmatpush1.msra.mxu0 %v1692
        %4147 = vmatprep.subr.mxu0 0.0
        %4148 = vmatpush2.msra.mxu0 0.0
        %4149 = vmatprep.subr.mxu0 0.0
        %4150 = vmatpush2.msra.mxu0 0.0
        %4151 = vmatprep.subr.mxu0 0.0
        %4152 = vmatpush2.msra.mxu0 0.0
        %4153 = vmatprep.subr.mxu0 0.0
        %4154 = vmatpush2.msra.mxu0 0.0
        %4155 = vmatprep.subr.mxu0 0.0
        %4156 = vmatpush2.msra.mxu0 0.0
        %4157 = vmatprep.subr.mxu0 0.0
        %4158 = vmatpush2.msra.mxu0 0.0
        %4159 = vmatprep.subr.mxu0 0.0
        %4160 = vmatpush2.msra.mxu0 0.0
        %4161 = vmatprep.subr.mxu0 0.0
        %4162 = vmatpush2.msra.mxu0 0.0
        %4163 = vmatprep.subr.mxu0 0.0
        %4164 = vmatpush2.msra.mxu0 0.0
        %4165 = vmatprep.subr.mxu0 0.0
        %4166 = vmatpush2.msra.mxu0 0.0
        %4167 = vmatprep.subr.mxu0 0.0
        %4168 = vmatpush2.msra.mxu0 0.0
        %4169 = vmatprep.subr.mxu0 0.0
        %4170 = vmatpush2.msra.mxu0 0.0
        %4171 = vmatprep.subr.mxu0 0.0
        %4172 = vmatpush2.msra.mxu0 0.0
        %4173 = vmatprep.subr.mxu0 0.0
        %4174 = vmatpush2.msra.mxu0 0.0
        %4175 = vmatprep.subr.mxu0 0.0
        %4176 = vmatpush2.msra.mxu0 0.0
        %4177 = vmatprep.subr.mxu0 0.0
        %4178 = vmatpush2.msra.mxu0 0.0
        %4179 = vmatprep.mubr.f32.mxu0 0.0
        %4180 = vmatmul.mubr.f32.gmra.mxu0 %v3634
        %v4181 = vpop.f32.mrf.mxu0
        %v4182 = vadd.f32 0.0, %v4181
        %v4183 = vpop.f32.mrf.mxu0
        %4184 = vmatprep.mubr.f32.mxu0 0.0
        %4185 = vmatmul.mubr.f32.gmra.mxu0 %v3636
        %v4186 = vpop.f32.mrf.mxu0
        %v4187 = vadd.f32 0.0, %v4186
        %v4188 = vpop.f32.mrf.mxu0
        %4189 = vmatprep.mubr.f32.mxu0 0.0
        %4190 = vmatmul.mubr.f32.gmra.mxu0 %v3638
        %v4191 = vpop.f32.mrf.mxu0
        %v4192 = vadd.f32 0.0, %v4191
        %v4193 = vpop.f32.mrf.mxu0
        %4194 = vmatprep.mubr.f32.mxu0 0.0
        %4195 = vmatmul.mubr.f32.gmra.mxu0 %v3640
        %v4196 = vpop.f32.mrf.mxu0
        %v4197 = vadd.f32 0.0, %v4196
        %v4198 = vpop.f32.mrf.mxu0
        %4199 = vmatprep.mubr.f32.mxu0 0.0
        %4200 = vmatmul.mubr.f32.gmra.mxu0 %v3642
        %v4201 = vpop.f32.mrf.mxu0
        %v4202 = vadd.f32 0.0, %v4201
        %v4203 = vpop.f32.mrf.mxu0
        %4204 = vmatprep.mubr.f32.mxu0 0.0
        %4205 = vmatmul.mubr.f32.gmra.mxu0 %v3644
        %v4206 = vpop.f32.mrf.mxu0
        %v4207 = vadd.f32 0.0, %v4206
        %v4208 = vpop.f32.mrf.mxu0
        %4209 = vmatprep.mubr.f32.mxu0 0.0
        %4210 = vmatmul.mubr.f32.gmra.mxu0 %v3646
        %v4211 = vpop.f32.mrf.mxu0
        %v4212 = vadd.f32 0.0, %v4211
        %v4213 = vpop.f32.mrf.mxu0
        %4214 = vmatprep.mubr.f32.mxu0 0.0
        %4215 = vmatmul.mubr.f32.gmra.mxu0 %v3648
        %v4216 = vpop.f32.mrf.mxu0
        %v4217 = vadd.f32 0.0, %v4216
        %v4218 = vpop.f32.mrf.mxu0
        %4219 = vmatprep.mubr.f32.mxu0 0.0
        %4220 = vmatmul.mubr.f32.gmra.mxu0 %v3650
        %v4221 = vpop.f32.mrf.mxu0
        %v4222 = vadd.f32 0.0, %v4221
        %v4223 = vpop.f32.mrf.mxu0
        %4224 = vmatprep.mubr.f32.mxu0 0.0
        %4225 = vmatmul.mubr.f32.gmra.mxu0 %v3652
        %v4226 = vpop.f32.mrf.mxu0
        %v4227 = vadd.f32 0.0, %v4226
        %v4228 = vpop.f32.mrf.mxu0
        %4229 = vmatprep.mubr.f32.mxu0 0.0
        %4230 = vmatmul.mubr.f32.gmra.mxu0 %v3654
        %v4231 = vpop.f32.mrf.mxu0
        %v4232 = vadd.f32 0.0, %v4231
        %v4233 = vpop.f32.mrf.mxu0
        %4234 = vmatprep.mubr.f32.mxu0 0.0
        %4235 = vmatmul.mubr.f32.gmra.mxu0 %v3656
        %v4236 = vpop.f32.mrf.mxu0
        %v4237 = vadd.f32 0.0, %v4236
        %v4238 = vpop.f32.mrf.mxu0
        %4239 = vmatprep.mubr.f32.mxu0 0.0
        %4240 = vmatmul.mubr.f32.gmra.mxu0 %v3658
        %v4241 = vpop.f32.mrf.mxu0
        %v4242 = vadd.f32 0.0, %v4241
        %v4243 = vpop.f32.mrf.mxu0
        %4244 = vmatprep.mubr.f32.mxu0 0.0
        %4245 = vmatmul.mubr.f32.gmra.mxu0 %v3660
        %v4246 = vpop.f32.mrf.mxu0
        %v4247 = vadd.f32 0.0, %v4246
        %v4248 = vpop.f32.mrf.mxu0
        %4249 = vmatprep.mubr.f32.mxu0 0.0
        %4250 = vmatmul.mubr.f32.gmra.mxu0 %v3662
        %v4251 = vpop.f32.mrf.mxu0
        %v4252 = vadd.f32 0.0, %v4251
        %v4253 = vpop.f32.mrf.mxu0
        %4254 = vmatprep.mubr.f32.mxu0 0.0
        %4255 = vmatmul.mubr.f32.gmra.mxu0 %v3664
        %v4256 = vpop.f32.mrf.mxu0
        %v4257 = vadd.f32 0.0, %v4256
        %v4258 = vpop.f32.mrf.mxu0
        %4259 = vdwg.mxu0
        %4260 = vmatprep.subr.mxu0 0.0
        %4261 = vmatpush1.msra.mxu0 %v1723
        %4262 = vmatprep.subr.mxu0 0.0
        %4263 = vmatpush1.msra.mxu0 %v1722
        %4264 = vmatprep.subr.mxu0 0.0
        %4265 = vmatpush1.msra.mxu0 %v1721
        %4266 = vmatprep.subr.mxu0 0.0
        %4267 = vmatpush1.msra.mxu0 %v1720
        %4268 = vmatprep.subr.mxu0 0.0
        %4269 = vmatpush1.msra.mxu0 %v1719
        %4270 = vmatprep.subr.mxu0 0.0
        %4271 = vmatpush1.msra.mxu0 %v1718
        %4272 = vmatprep.subr.mxu0 0.0
        %4273 = vmatpush1.msra.mxu0 %v1717
        %4274 = vmatprep.subr.mxu0 0.0
        %4275 = vmatpush1.msra.mxu0 %v1716
        %4276 = vmatprep.subr.mxu0 0.0
        %4277 = vmatpush1.msra.mxu0 %v1715
        %4278 = vmatprep.subr.mxu0 0.0
        %4279 = vmatpush1.msra.mxu0 %v1714
        %4280 = vmatprep.subr.mxu0 0.0
        %4281 = vmatpush1.msra.mxu0 %v1713
        %4282 = vmatprep.subr.mxu0 0.0
        %4283 = vmatpush1.msra.mxu0 %v1712
        %4284 = vmatprep.subr.mxu0 0.0
        %4285 = vmatpush1.msra.mxu0 %v1711
        %4286 = vmatprep.subr.mxu0 0.0
        %4287 = vmatpush1.msra.mxu0 %v1710
        %4288 = vmatprep.subr.mxu0 0.0
        %4289 = vmatpush1.msra.mxu0 %v1709
        %4290 = vmatprep.subr.mxu0 0.0
        %4291 = vmatpush1.msra.mxu0 %v1708
        %4292 = vmatprep.subr.mxu0 0.0
        %4293 = vmatpush2.msra.mxu0 0.0
        %4294 = vmatprep.subr.mxu0 0.0
        %4295 = vmatpush2.msra.mxu0 0.0
        %4296 = vmatprep.subr.mxu0 0.0
        %4297 = vmatpush2.msra.mxu0 0.0
        %4298 = vmatprep.subr.mxu0 0.0
        %4299 = vmatpush2.msra.mxu0 0.0
        %4300 = vmatprep.subr.mxu0 0.0
        %4301 = vmatpush2.msra.mxu0 0.0
        %4302 = vmatprep.subr.mxu0 0.0
        %4303 = vmatpush2.msra.mxu0 0.0
        %4304 = vmatprep.subr.mxu0 0.0
        %4305 = vmatpush2.msra.mxu0 0.0
        %4306 = vmatprep.subr.mxu0 0.0
        %4307 = vmatpush2.msra.mxu0 0.0
        %4308 = vmatprep.subr.mxu0 0.0
        %4309 = vmatpush2.msra.mxu0 0.0
        %4310 = vmatprep.subr.mxu0 0.0
        %4311 = vmatpush2.msra.mxu0 0.0
        %4312 = vmatprep.subr.mxu0 0.0
        %4313 = vmatpush2.msra.mxu0 0.0
        %4314 = vmatprep.subr.mxu0 0.0
        %4315 = vmatpush2.msra.mxu0 0.0
        %4316 = vmatprep.subr.mxu0 0.0
        %4317 = vmatpush2.msra.mxu0 0.0
        %4318 = vmatprep.subr.mxu0 0.0
        %4319 = vmatpush2.msra.mxu0 0.0
        %4320 = vmatprep.subr.mxu0 0.0
        %4321 = vmatpush2.msra.mxu0 0.0
        %4322 = vmatprep.subr.mxu0 0.0
        %4323 = vmatpush2.msra.mxu0 0.0
        %4324 = vmatprep.mubr.f32.mxu0 0.0
        %4325 = vmatmul.mubr.f32.gmra.mxu0 %v3666
        %v4326 = vpop.f32.mrf.mxu0
        %v4327 = vadd.f32 0.0, %v4326
        %v4328 = vpop.f32.mrf.mxu0
        %4329 = vmatprep.mubr.f32.mxu0 0.0
        %4330 = vmatmul.mubr.f32.gmra.mxu0 %v3668
        %v4331 = vpop.f32.mrf.mxu0
        %v4332 = vadd.f32 0.0, %v4331
        %v4333 = vpop.f32.mrf.mxu0
        %4334 = vmatprep.mubr.f32.mxu0 0.0
        %4335 = vmatmul.mubr.f32.gmra.mxu0 %v3670
        %v4336 = vpop.f32.mrf.mxu0
        %v4337 = vadd.f32 0.0, %v4336
        %v4338 = vpop.f32.mrf.mxu0
        %4339 = vmatprep.mubr.f32.mxu0 0.0
        %4340 = vmatmul.mubr.f32.gmra.mxu0 %v3672
        %v4341 = vpop.f32.mrf.mxu0
        %v4342 = vadd.f32 0.0, %v4341
        %v4343 = vpop.f32.mrf.mxu0
        %4344 = vmatprep.mubr.f32.mxu0 0.0
        %4345 = vmatmul.mubr.f32.gmra.mxu0 %v3674
        %v4346 = vpop.f32.mrf.mxu0
        %v4347 = vadd.f32 0.0, %v4346
        %v4348 = vpop.f32.mrf.mxu0
        %4349 = vmatprep.mubr.f32.mxu0 0.0
        %4350 = vmatmul.mubr.f32.gmra.mxu0 %v3676
        %v4351 = vpop.f32.mrf.mxu0
        %v4352 = vadd.f32 0.0, %v4351
        %v4353 = vpop.f32.mrf.mxu0
        %4354 = vmatprep.mubr.f32.mxu0 0.0
        %4355 = vmatmul.mubr.f32.gmra.mxu0 %v3678
        %v4356 = vpop.f32.mrf.mxu0
        %v4357 = vadd.f32 0.0, %v4356
        %v4358 = vpop.f32.mrf.mxu0
        %4359 = vmatprep.mubr.f32.mxu0 0.0
        %4360 = vmatmul.mubr.f32.gmra.mxu0 %v3680
        %v4361 = vpop.f32.mrf.mxu0
        %v4362 = vadd.f32 0.0, %v4361
        %v4363 = vpop.f32.mrf.mxu0
        %4364 = vmatprep.mubr.f32.mxu0 0.0
        %4365 = vmatmul.mubr.f32.gmra.mxu0 %v3682
        %v4366 = vpop.f32.mrf.mxu0
        %v4367 = vadd.f32 0.0, %v4366
        %v4368 = vpop.f32.mrf.mxu0
        %4369 = vmatprep.mubr.f32.mxu0 0.0
        %4370 = vmatmul.mubr.f32.gmra.mxu0 %v3684
        %v4371 = vpop.f32.mrf.mxu0
        %v4372 = vadd.f32 0.0, %v4371
        %v4373 = vpop.f32.mrf.mxu0
        %4374 = vmatprep.mubr.f32.mxu0 0.0
        %4375 = vmatmul.mubr.f32.gmra.mxu0 %v3686
        %v4376 = vpop.f32.mrf.mxu0
        %v4377 = vadd.f32 0.0, %v4376
        %v4378 = vpop.f32.mrf.mxu0
        %4379 = vmatprep.mubr.f32.mxu0 0.0
        %4380 = vmatmul.mubr.f32.gmra.mxu0 %v3688
        %v4381 = vpop.f32.mrf.mxu0
        %v4382 = vadd.f32 0.0, %v4381
        %v4383 = vpop.f32.mrf.mxu0
        %4384 = vmatprep.mubr.f32.mxu0 0.0
        %4385 = vmatmul.mubr.f32.gmra.mxu0 %v3690
        %v4386 = vpop.f32.mrf.mxu0
        %v4387 = vadd.f32 0.0, %v4386
        %v4388 = vpop.f32.mrf.mxu0
        %4389 = vmatprep.mubr.f32.mxu0 0.0
        %4390 = vmatmul.mubr.f32.gmra.mxu0 %v3692
        %v4391 = vpop.f32.mrf.mxu0
        %v4392 = vadd.f32 0.0, %v4391
        %v4393 = vpop.f32.mrf.mxu0
        %4394 = vmatprep.mubr.f32.mxu0 0.0
        %4395 = vmatmul.mubr.f32.gmra.mxu0 %v3694
        %v4396 = vpop.f32.mrf.mxu0
        %v4397 = vadd.f32 0.0, %v4396
        %v4398 = vpop.f32.mrf.mxu0
        %4399 = vmatprep.mubr.f32.mxu0 0.0
        %4400 = vmatmul.mubr.f32.gmra.mxu0 %v3696
        %v4401 = vpop.f32.mrf.mxu0
        %v4402 = vadd.f32 0.0, %v4401
        %v4403 = vpop.f32.mrf.mxu0
        %4404 = vdwg.mxu0
        %v4405 = vld [vmem:[#allocation3] sm:$0xff]
        %v4406 = vld [vmem:[#allocation3 + $0x8] sm:$0xff]
        %v4407 = vld [vmem:[#allocation3 + $0x10] sm:$0xff]
        %v4408 = vld [vmem:[#allocation3 + $0x18] sm:$0xff]
        %v4409 = vld [vmem:[#allocation3 + $0x20] sm:$0xff]
        %v4410 = vld [vmem:[#allocation3 + $0x28] sm:$0xff]
        %v4411 = vld [vmem:[#allocation3 + $0x30] sm:$0xff]
        %v4412 = vld [vmem:[#allocation3 + $0x38] sm:$0xff]
        %v4413 = vld [vmem:[#allocation3 + $0x40] sm:$0xff]
        %v4414 = vld [vmem:[#allocation3 + $0x48] sm:$0xff]
        %v4415 = vld [vmem:[#allocation3 + $0x50] sm:$0xff]
        %v4416 = vld [vmem:[#allocation3 + $0x58] sm:$0xff]
        %v4417 = vld [vmem:[#allocation3 + $0x60] sm:$0xff]
        %v4418 = vld [vmem:[#allocation3 + $0x68] sm:$0xff]
        %v4419 = vld [vmem:[#allocation3 + $0x70] sm:$0xff]
        %v4420 = vld [vmem:[#allocation3 + $0x78] sm:$0xff]
        %v4421 = vld [vmem:[#allocation3 + $0x80] sm:$0xff]
        %v4422 = vld [vmem:[#allocation3 + $0x88] sm:$0xff]
        %v4423 = vld [vmem:[#allocation3 + $0x90] sm:$0xff]
        %v4424 = vld [vmem:[#allocation3 + $0x98] sm:$0xff]
        %v4425 = vld [vmem:[#allocation3 + $0xa0] sm:$0xff]
        %v4426 = vld [vmem:[#allocation3 + $0xa8] sm:$0xff]
        %v4427 = vld [vmem:[#allocation3 + $0xb0] sm:$0xff]
        %v4428 = vld [vmem:[#allocation3 + $0xb8] sm:$0xff]
        %v4429 = vld [vmem:[#allocation3 + $0xc0] sm:$0xff]
        %v4430 = vld [vmem:[#allocation3 + $0xc8] sm:$0xff]
        %v4431 = vld [vmem:[#allocation3 + $0xd0] sm:$0xff]
        %v4432 = vld [vmem:[#allocation3 + $0xd8] sm:$0xff]
        %v4433 = vld [vmem:[#allocation3 + $0xe0] sm:$0xff]
        %v4434 = vld [vmem:[#allocation3 + $0xe8] sm:$0xff]
        %v4435 = vld [vmem:[#allocation3 + $0xf0] sm:$0xff]
        %v4436 = vld [vmem:[#allocation3 + $0xf8] sm:$0xff]
        %v4437 = vld [vmem:[#allocation3 + $0x100] sm:$0xff]
        %v4438 = vld [vmem:[#allocation3 + $0x108] sm:$0xff]
        %v4439 = vld [vmem:[#allocation3 + $0x110] sm:$0xff]
        %v4440 = vld [vmem:[#allocation3 + $0x118] sm:$0xff]
        %v4441 = vld [vmem:[#allocation3 + $0x120] sm:$0xff]
        %v4442 = vld [vmem:[#allocation3 + $0x128] sm:$0xff]
        %v4443 = vld [vmem:[#allocation3 + $0x130] sm:$0xff]
        %v4444 = vld [vmem:[#allocation3 + $0x138] sm:$0xff]
        %v4445 = vld [vmem:[#allocation3 + $0x140] sm:$0xff]
        %v4446 = vld [vmem:[#allocation3 + $0x148] sm:$0xff]
        %v4447 = vld [vmem:[#allocation3 + $0x150] sm:$0xff]
        %v4448 = vld [vmem:[#allocation3 + $0x158] sm:$0xff]
        %v4449 = vld [vmem:[#allocation3 + $0x160] sm:$0xff]
        %v4450 = vld [vmem:[#allocation3 + $0x168] sm:$0xff]
        %v4451 = vld [vmem:[#allocation3 + $0x170] sm:$0xff]
        %v4452 = vld [vmem:[#allocation3 + $0x178] sm:$0xff]
        %v4453 = vld [vmem:[#allocation3 + $0x180] sm:$0xff]
        %v4454 = vld [vmem:[#allocation3 + $0x188] sm:$0xff]
        %v4455 = vld [vmem:[#allocation3 + $0x190] sm:$0xff]
        %v4456 = vld [vmem:[#allocation3 + $0x198] sm:$0xff]
        %v4457 = vld [vmem:[#allocation3 + $0x1a0] sm:$0xff]
        %v4458 = vld [vmem:[#allocation3 + $0x1a8] sm:$0xff]
        %v4459 = vld [vmem:[#allocation3 + $0x1b0] sm:$0xff]
        %v4460 = vld [vmem:[#allocation3 + $0x1b8] sm:$0xff]
        %v4461 = vld [vmem:[#allocation3 + $0x1c0] sm:$0xff]
        %v4462 = vld [vmem:[#allocation3 + $0x1c8] sm:$0xff]
        %v4463 = vld [vmem:[#allocation3 + $0x1d0] sm:$0xff]
        %v4464 = vld [vmem:[#allocation3 + $0x1d8] sm:$0xff]
        %v4465 = vld [vmem:[#allocation3 + $0x1e0] sm:$0xff]
        %v4466 = vld [vmem:[#allocation3 + $0x1e8] sm:$0xff]
        %v4467 = vld [vmem:[#allocation3 + $0x1f0] sm:$0xff]
        %v4468 = vld [vmem:[#allocation3 + $0x1f8] sm:$0xff]
        %v4469 = vmul.f32 %v3058, %v4405
        %v4470 = vmul.f32 %v3060, %v4406
        %v4471 = vmul.f32 %v3062, %v4407
        %v4472 = vmul.f32 %v3064, %v4408
        %v4473 = vmul.f32 %v3066, %v4409
        %v4474 = vmul.f32 %v3068, %v4410
        %v4475 = vmul.f32 %v3070, %v4411
        %v4476 = vmul.f32 %v3072, %v4412
        %v4477 = vmul.f32 %v3074, %v4413
        %v4478 = vmul.f32 %v3076, %v4414
        %v4479 = vmul.f32 %v3078, %v4415
        %v4480 = vmul.f32 %v3080, %v4416
        %v4481 = vmul.f32 %v3082, %v4417
        %v4482 = vmul.f32 %v3084, %v4418
        %v4483 = vmul.f32 %v3086, %v4419
        %v4484 = vmul.f32 %v3088, %v4420
        %v4485 = vmul.f32 %v3090, %v4421
        %v4486 = vmul.f32 %v3092, %v4422
        %v4487 = vmul.f32 %v3094, %v4423
        %v4488 = vmul.f32 %v3096, %v4424
        %v4489 = vmul.f32 %v3098, %v4425
        %v4490 = vmul.f32 %v3100, %v4426
        %v4491 = vmul.f32 %v3102, %v4427
        %v4492 = vmul.f32 %v3104, %v4428
        %v4493 = vmul.f32 %v3106, %v4429
        %v4494 = vmul.f32 %v3108, %v4430
        %v4495 = vmul.f32 %v3110, %v4431
        %v4496 = vmul.f32 %v3112, %v4432
        %v4497 = vmul.f32 %v3114, %v4433
        %v4498 = vmul.f32 %v3116, %v4434
        %v4499 = vmul.f32 %v3118, %v4435
        %v4500 = vmul.f32 %v3120, %v4436
        %v4501 = vmul.f32 %v3122, %v4437
        %v4502 = vmul.f32 %v3124, %v4438
        %v4503 = vmul.f32 %v3126, %v4439
        %v4504 = vmul.f32 %v3128, %v4440
        %v4505 = vmul.f32 %v3130, %v4441
        %v4506 = vmul.f32 %v3132, %v4442
        %v4507 = vmul.f32 %v3134, %v4443
        %v4508 = vmul.f32 %v3136, %v4444
        %v4509 = vmul.f32 %v3138, %v4445
        %v4510 = vmul.f32 %v3140, %v4446
        %v4511 = vmul.f32 %v3142, %v4447
        %v4512 = vmul.f32 %v3144, %v4448
        %v4513 = vmul.f32 %v3146, %v4449
        %v4514 = vmul.f32 %v3148, %v4450
        %v4515 = vmul.f32 %v3150, %v4451
        %v4516 = vmul.f32 %v3152, %v4452
        %v4517 = vmul.f32 %v3154, %v4453
        %v4518 = vmul.f32 %v3156, %v4454
        %v4519 = vmul.f32 %v3158, %v4455
        %v4520 = vmul.f32 %v3160, %v4456
        %v4521 = vmul.f32 %v3162, %v4457
        %v4522 = vmul.f32 %v3164, %v4458
        %v4523 = vmul.f32 %v3166, %v4459
        %v4524 = vmul.f32 %v3168, %v4460
        %v4525 = vmul.f32 %v3170, %v4461
        %v4526 = vmul.f32 %v3172, %v4462
        %v4527 = vmul.f32 %v3174, %v4463
        %v4528 = vmul.f32 %v3176, %v4464
        %v4529 = vmul.f32 %v3178, %v4465
        %v4530 = vmul.f32 %v3180, %v4466
        %v4531 = vmul.f32 %v3182, %v4467
        %v4532 = vmul.f32 %v3184, %v4468
        %v4533 = vadd.f32 %v4469, %v3698
        %v4534 = vadd.f32 %v4470, %v3700
        %v4535 = vadd.f32 %v4471, %v3702
        %v4536 = vadd.f32 %v4472, %v3704
        %v4537 = vadd.f32 %v4473, %v3706
        %v4538 = vadd.f32 %v4474, %v3708
        %v4539 = vadd.f32 %v4475, %v3710
        %v4540 = vadd.f32 %v4476, %v3712
        %v4541 = vadd.f32 %v4477, %v3714
        %v4542 = vadd.f32 %v4478, %v3716
        %v4543 = vadd.f32 %v4479, %v3718
        %v4544 = vadd.f32 %v4480, %v3720
        %v4545 = vadd.f32 %v4481, %v3722
        %v4546 = vadd.f32 %v4482, %v3724
        %v4547 = vadd.f32 %v4483, %v3726
        %v4548 = vadd.f32 %v4484, %v3728
        %v4549 = vadd.f32 %v4485, %v3730
        %v4550 = vadd.f32 %v4486, %v3732
        %v4551 = vadd.f32 %v4487, %v3734
        %v4552 = vadd.f32 %v4488, %v3736
        %v4553 = vadd.f32 %v4489, %v3738
        %v4554 = vadd.f32 %v4490, %v3740
        %v4555 = vadd.f32 %v4491, %v3742
        %v4556 = vadd.f32 %v4492, %v3744
        %v4557 = vadd.f32 %v4493, %v3746
        %v4558 = vadd.f32 %v4494, %v3748
        %v4559 = vadd.f32 %v4495, %v3750
        %v4560 = vadd.f32 %v4496, %v3752
        %v4561 = vadd.f32 %v4497, %v3754
        %v4562 = vadd.f32 %v4498, %v3756
        %v4563 = vadd.f32 %v4499, %v3758
        %v4564 = vadd.f32 %v4500, %v3760
        %v4565 = vadd.f32 %v4501, %v3762
        %v4566 = vadd.f32 %v4502, %v3764
        %v4567 = vadd.f32 %v4503, %v3766
        %v4568 = vadd.f32 %v4504, %v3768
        %v4569 = vadd.f32 %v4505, %v3770
        %v4570 = vadd.f32 %v4506, %v3772
        %v4571 = vadd.f32 %v4507, %v3774
        %v4572 = vadd.f32 %v4508, %v3776
        %v4573 = vadd.f32 %v4509, %v3778
        %v4574 = vadd.f32 %v4510, %v3780
        %v4575 = vadd.f32 %v4511, %v3782
        %v4576 = vadd.f32 %v4512, %v3784
        %v4577 = vadd.f32 %v4513, %v3786
        %v4578 = vadd.f32 %v4514, %v3788
        %v4579 = vadd.f32 %v4515, %v3790
        %v4580 = vadd.f32 %v4516, %v3792
        %v4581 = vadd.f32 %v4517, %v3794
        %v4582 = vadd.f32 %v4518, %v3796
        %v4583 = vadd.f32 %v4519, %v3798
        %v4584 = vadd.f32 %v4520, %v3800
        %v4585 = vadd.f32 %v4521, %v3802
        %v4586 = vadd.f32 %v4522, %v3804
        %v4587 = vadd.f32 %v4523, %v3806
        %v4588 = vadd.f32 %v4524, %v3808
        %v4589 = vadd.f32 %v4525, %v3810
        %v4590 = vadd.f32 %v4526, %v3812
        %v4591 = vadd.f32 %v4527, %v3814
        %v4592 = vadd.f32 %v4528, %v3816
        %v4593 = vadd.f32 %v4529, %v3818
        %v4594 = vadd.f32 %v4530, %v3820
        %v4595 = vadd.f32 %v4531, %v3822
        %v4596 = vadd.f32 %v4532, %v3824
        %vm4597 = vcmask 7168
        %4598 = vst.msk [vmem:[#allocation3] sm:$0xff] %vm4597, %v4533
        %4599 = vst.msk [vmem:[#allocation3 + $0x8] sm:$0xff] %vm4597, %v4534
        %4600 = vst.msk [vmem:[#allocation3 + $0x10] sm:$0xff] %vm4597, %v4535
        %4601 = vst.msk [vmem:[#allocation3 + $0x18] sm:$0xff] %vm4597, %v4536
        %4602 = vst.msk [vmem:[#allocation3 + $0x20] sm:$0xff] %vm4597, %v4537
        %4603 = vst.msk [vmem:[#allocation3 + $0x28] sm:$0xff] %vm4597, %v4538
        %4604 = vst.msk [vmem:[#allocation3 + $0x30] sm:$0xff] %vm4597, %v4539
        %4605 = vst.msk [vmem:[#allocation3 + $0x38] sm:$0xff] %vm4597, %v4540
        %4606 = vst.msk [vmem:[#allocation3 + $0x40] sm:$0xff] %vm4597, %v4541
        %4607 = vst.msk [vmem:[#allocation3 + $0x48] sm:$0xff] %vm4597, %v4542
        %4608 = vst.msk [vmem:[#allocation3 + $0x50] sm:$0xff] %vm4597, %v4543
        %4609 = vst.msk [vmem:[#allocation3 + $0x58] sm:$0xff] %vm4597, %v4544
        %4610 = vst.msk [vmem:[#allocation3 + $0x60] sm:$0xff] %vm4597, %v4545
        %4611 = vst.msk [vmem:[#allocation3 + $0x68] sm:$0xff] %vm4597, %v4546
        %4612 = vst.msk [vmem:[#allocation3 + $0x70] sm:$0xff] %vm4597, %v4547
        %4613 = vst.msk [vmem:[#allocation3 + $0x78] sm:$0xff] %vm4597, %v4548
        %4614 = vst.msk [vmem:[#allocation3 + $0x80] sm:$0xff] %vm4597, %v4549
        %4615 = vst.msk [vmem:[#allocation3 + $0x88] sm:$0xff] %vm4597, %v4550
        %4616 = vst.msk [vmem:[#allocation3 + $0x90] sm:$0xff] %vm4597, %v4551
        %4617 = vst.msk [vmem:[#allocation3 + $0x98] sm:$0xff] %vm4597, %v4552
        %4618 = vst.msk [vmem:[#allocation3 + $0xa0] sm:$0xff] %vm4597, %v4553
        %4619 = vst.msk [vmem:[#allocation3 + $0xa8] sm:$0xff] %vm4597, %v4554
        %4620 = vst.msk [vmem:[#allocation3 + $0xb0] sm:$0xff] %vm4597, %v4555
        %4621 = vst.msk [vmem:[#allocation3 + $0xb8] sm:$0xff] %vm4597, %v4556
        %4622 = vst.msk [vmem:[#allocation3 + $0xc0] sm:$0xff] %vm4597, %v4557
        %4623 = vst.msk [vmem:[#allocation3 + $0xc8] sm:$0xff] %vm4597, %v4558
        %4624 = vst.msk [vmem:[#allocation3 + $0xd0] sm:$0xff] %vm4597, %v4559
        %4625 = vst.msk [vmem:[#allocation3 + $0xd8] sm:$0xff] %vm4597, %v4560
        %4626 = vst.msk [vmem:[#allocation3 + $0xe0] sm:$0xff] %vm4597, %v4561
        %4627 = vst.msk [vmem:[#allocation3 + $0xe8] sm:$0xff] %vm4597, %v4562
        %4628 = vst.msk [vmem:[#allocation3 + $0xf0] sm:$0xff] %vm4597, %v4563
        %4629 = vst.msk [vmem:[#allocation3 + $0xf8] sm:$0xff] %vm4597, %v4564
        %4630 = vst.msk [vmem:[#allocation3 + $0x100] sm:$0xff] %vm4597, %v4565
        %4631 = vst.msk [vmem:[#allocation3 + $0x108] sm:$0xff] %vm4597, %v4566
        %4632 = vst.msk [vmem:[#allocation3 + $0x110] sm:$0xff] %vm4597, %v4567
        %4633 = vst.msk [vmem:[#allocation3 + $0x118] sm:$0xff] %vm4597, %v4568
        %4634 = vst.msk [vmem:[#allocation3 + $0x120] sm:$0xff] %vm4597, %v4569
        %4635 = vst.msk [vmem:[#allocation3 + $0x128] sm:$0xff] %vm4597, %v4570
        %4636 = vst.msk [vmem:[#allocation3 + $0x130] sm:$0xff] %vm4597, %v4571
        %4637 = vst.msk [vmem:[#allocation3 + $0x138] sm:$0xff] %vm4597, %v4572
        %4638 = vst.msk [vmem:[#allocation3 + $0x140] sm:$0xff] %vm4597, %v4573
        %4639 = vst.msk [vmem:[#allocation3 + $0x148] sm:$0xff] %vm4597, %v4574
        %4640 = vst.msk [vmem:[#allocation3 + $0x150] sm:$0xff] %vm4597, %v4575
        %4641 = vst.msk [vmem:[#allocation3 + $0x158] sm:$0xff] %vm4597, %v4576
        %4642 = vst.msk [vmem:[#allocation3 + $0x160] sm:$0xff] %vm4597, %v4577
        %4643 = vst.msk [vmem:[#allocation3 + $0x168] sm:$0xff] %vm4597, %v4578
        %4644 = vst.msk [vmem:[#allocation3 + $0x170] sm:$0xff] %vm4597, %v4579
        %4645 = vst.msk [vmem:[#allocation3 + $0x178] sm:$0xff] %vm4597, %v4580
        %4646 = vst.msk [vmem:[#allocation3 + $0x180] sm:$0xff] %vm4597, %v4581
        %4647 = vst.msk [vmem:[#allocation3 + $0x188] sm:$0xff] %vm4597, %v4582
        %4648 = vst.msk [vmem:[#allocation3 + $0x190] sm:$0xff] %vm4597, %v4583
        %4649 = vst.msk [vmem:[#allocation3 + $0x198] sm:$0xff] %vm4597, %v4584
        %4650 = vst.msk [vmem:[#allocation3 + $0x1a0] sm:$0xff] %vm4597, %v4585
        %4651 = vst.msk [vmem:[#allocation3 + $0x1a8] sm:$0xff] %vm4597, %v4586
        %4652 = vst.msk [vmem:[#allocation3 + $0x1b0] sm:$0xff] %vm4597, %v4587
        %4653 = vst.msk [vmem:[#allocation3 + $0x1b8] sm:$0xff] %vm4597, %v4588
        %4654 = vst.msk [vmem:[#allocation3 + $0x1c0] sm:$0xff] %vm4597, %v4589
        %4655 = vst.msk [vmem:[#allocation3 + $0x1c8] sm:$0xff] %vm4597, %v4590
        %4656 = vst.msk [vmem:[#allocation3 + $0x1d0] sm:$0xff] %vm4597, %v4591
        %4657 = vst.msk [vmem:[#allocation3 + $0x1d8] sm:$0xff] %vm4597, %v4592
        %4658 = vst.msk [vmem:[#allocation3 + $0x1e0] sm:$0xff] %vm4597, %v4593
        %4659 = vst.msk [vmem:[#allocation3 + $0x1e8] sm:$0xff] %vm4597, %v4594
        %4660 = vst.msk [vmem:[#allocation3 + $0x1f0] sm:$0xff] %vm4597, %v4595
        %4661 = vst.msk [vmem:[#allocation3 + $0x1f8] sm:$0xff] %vm4597, %v4596
        %v4662 = vld [vmem:[#allocation4] sm:$0xff]
        %v4663 = vld [vmem:[#allocation4 + $0x8] sm:$0xff]
        %v4664 = vld [vmem:[#allocation4 + $0x10] sm:$0xff]
        %v4665 = vld [vmem:[#allocation4 + $0x18] sm:$0xff]
        %v4666 = vld [vmem:[#allocation4 + $0x20] sm:$0xff]
        %v4667 = vld [vmem:[#allocation4 + $0x28] sm:$0xff]
        %v4668 = vld [vmem:[#allocation4 + $0x30] sm:$0xff]
        %v4669 = vld [vmem:[#allocation4 + $0x38] sm:$0xff]
        %v4670 = vld [vmem:[#allocation4 + $0x40] sm:$0xff]
        %v4671 = vld [vmem:[#allocation4 + $0x48] sm:$0xff]
        %v4672 = vld [vmem:[#allocation4 + $0x50] sm:$0xff]
        %v4673 = vld [vmem:[#allocation4 + $0x58] sm:$0xff]
        %v4674 = vld [vmem:[#allocation4 + $0x60] sm:$0xff]
        %v4675 = vld [vmem:[#allocation4 + $0x68] sm:$0xff]
        %v4676 = vld [vmem:[#allocation4 + $0x70] sm:$0xff]
        %v4677 = vld [vmem:[#allocation4 + $0x78] sm:$0xff]
        %v4678 = vld [vmem:[#allocation4 + $0x80] sm:$0xff]
        %v4679 = vld [vmem:[#allocation4 + $0x88] sm:$0xff]
        %v4680 = vld [vmem:[#allocation4 + $0x90] sm:$0xff]
        %v4681 = vld [vmem:[#allocation4 + $0x98] sm:$0xff]
        %v4682 = vld [vmem:[#allocation4 + $0xa0] sm:$0xff]
        %v4683 = vld [vmem:[#allocation4 + $0xa8] sm:$0xff]
        %v4684 = vld [vmem:[#allocation4 + $0xb0] sm:$0xff]
        %v4685 = vld [vmem:[#allocation4 + $0xb8] sm:$0xff]
        %v4686 = vld [vmem:[#allocation4 + $0xc0] sm:$0xff]
        %v4687 = vld [vmem:[#allocation4 + $0xc8] sm:$0xff]
        %v4688 = vld [vmem:[#allocation4 + $0xd0] sm:$0xff]
        %v4689 = vld [vmem:[#allocation4 + $0xd8] sm:$0xff]
        %v4690 = vld [vmem:[#allocation4 + $0xe0] sm:$0xff]
        %v4691 = vld [vmem:[#allocation4 + $0xe8] sm:$0xff]
        %v4692 = vld [vmem:[#allocation4 + $0xf0] sm:$0xff]
        %v4693 = vld [vmem:[#allocation4 + $0xf8] sm:$0xff]
        %v4694 = vld [vmem:[#allocation4 + $0x100] sm:$0xff]
        %v4695 = vld [vmem:[#allocation4 + $0x108] sm:$0xff]
        %v4696 = vld [vmem:[#allocation4 + $0x110] sm:$0xff]
        %v4697 = vld [vmem:[#allocation4 + $0x118] sm:$0xff]
        %v4698 = vld [vmem:[#allocation4 + $0x120] sm:$0xff]
        %v4699 = vld [vmem:[#allocation4 + $0x128] sm:$0xff]
        %v4700 = vld [vmem:[#allocation4 + $0x130] sm:$0xff]
        %v4701 = vld [vmem:[#allocation4 + $0x138] sm:$0xff]
        %v4702 = vld [vmem:[#allocation4 + $0x140] sm:$0xff]
        %v4703 = vld [vmem:[#allocation4 + $0x148] sm:$0xff]
        %v4704 = vld [vmem:[#allocation4 + $0x150] sm:$0xff]
        %v4705 = vld [vmem:[#allocation4 + $0x158] sm:$0xff]
        %v4706 = vld [vmem:[#allocation4 + $0x160] sm:$0xff]
        %v4707 = vld [vmem:[#allocation4 + $0x168] sm:$0xff]
        %v4708 = vld [vmem:[#allocation4 + $0x170] sm:$0xff]
        %v4709 = vld [vmem:[#allocation4 + $0x178] sm:$0xff]
        %v4710 = vld [vmem:[#allocation4 + $0x180] sm:$0xff]
        %v4711 = vld [vmem:[#allocation4 + $0x188] sm:$0xff]
        %v4712 = vld [vmem:[#allocation4 + $0x190] sm:$0xff]
        %v4713 = vld [vmem:[#allocation4 + $0x198] sm:$0xff]
        %v4714 = vld [vmem:[#allocation4 + $0x1a0] sm:$0xff]
        %v4715 = vld [vmem:[#allocation4 + $0x1a8] sm:$0xff]
        %v4716 = vld [vmem:[#allocation4 + $0x1b0] sm:$0xff]
        %v4717 = vld [vmem:[#allocation4 + $0x1b8] sm:$0xff]
        %v4718 = vld [vmem:[#allocation4 + $0x1c0] sm:$0xff]
        %v4719 = vld [vmem:[#allocation4 + $0x1c8] sm:$0xff]
        %v4720 = vld [vmem:[#allocation4 + $0x1d0] sm:$0xff]
        %v4721 = vld [vmem:[#allocation4 + $0x1d8] sm:$0xff]
        %v4722 = vld [vmem:[#allocation4 + $0x1e0] sm:$0xff]
        %v4723 = vld [vmem:[#allocation4 + $0x1e8] sm:$0xff]
        %v4724 = vld [vmem:[#allocation4 + $0x1f0] sm:$0xff]
        %v4725 = vld [vmem:[#allocation4 + $0x1f8] sm:$0xff]
        %4727 = vset.pattern.permute.xlu0 0
        %4728 = vperm.xlu0 %4727, %v3058
        %v4729 = vpop.permute.xlu0 %4728
        %4732 = vset.pattern.permute.xlu0 0
        %4733 = vperm.xlu0 %4732, %v3060
        %v4734 = vpop.permute.xlu0 %4733
        %4737 = vset.pattern.permute.xlu0 0
        %4738 = vperm.xlu0 %4737, %v3062
        %v4739 = vpop.permute.xlu0 %4738
        %4742 = vset.pattern.permute.xlu0 0
        %4743 = vperm.xlu0 %4742, %v3064
        %v4744 = vpop.permute.xlu0 %4743
        %4747 = vset.pattern.permute.xlu0 0
        %4748 = vperm.xlu0 %4747, %v3066
        %v4749 = vpop.permute.xlu0 %4748
        %4752 = vset.pattern.permute.xlu0 0
        %4753 = vperm.xlu0 %4752, %v3068
        %v4754 = vpop.permute.xlu0 %4753
        %4757 = vset.pattern.permute.xlu0 0
        %4758 = vperm.xlu0 %4757, %v3070
        %v4759 = vpop.permute.xlu0 %4758
        %4762 = vset.pattern.permute.xlu0 0
        %4763 = vperm.xlu0 %4762, %v3072
        %v4764 = vpop.permute.xlu0 %4763
        %4767 = vset.pattern.permute.xlu0 0
        %4768 = vperm.xlu0 %4767, %v3074
        %v4769 = vpop.permute.xlu0 %4768
        %4772 = vset.pattern.permute.xlu0 0
        %4773 = vperm.xlu0 %4772, %v3076
        %v4774 = vpop.permute.xlu0 %4773
        %4777 = vset.pattern.permute.xlu0 0
        %4778 = vperm.xlu0 %4777, %v3078
        %v4779 = vpop.permute.xlu0 %4778
        %4782 = vset.pattern.permute.xlu0 0
        %4783 = vperm.xlu0 %4782, %v3080
        %v4784 = vpop.permute.xlu0 %4783
        %4787 = vset.pattern.permute.xlu0 0
        %4788 = vperm.xlu0 %4787, %v3082
        %v4789 = vpop.permute.xlu0 %4788
        %4792 = vset.pattern.permute.xlu0 0
        %4793 = vperm.xlu0 %4792, %v3084
        %v4794 = vpop.permute.xlu0 %4793
        %4797 = vset.pattern.permute.xlu0 0
        %4798 = vperm.xlu0 %4797, %v3086
        %v4799 = vpop.permute.xlu0 %4798
        %4802 = vset.pattern.permute.xlu0 0
        %4803 = vperm.xlu0 %4802, %v3088
        %v4804 = vpop.permute.xlu0 %4803
        %4807 = vset.pattern.permute.xlu0 0
        %4808 = vperm.xlu0 %4807, %v3090
        %v4809 = vpop.permute.xlu0 %4808
        %4812 = vset.pattern.permute.xlu0 0
        %4813 = vperm.xlu0 %4812, %v3092
        %v4814 = vpop.permute.xlu0 %4813
        %4817 = vset.pattern.permute.xlu0 0
        %4818 = vperm.xlu0 %4817, %v3094
        %v4819 = vpop.permute.xlu0 %4818
        %4822 = vset.pattern.permute.xlu0 0
        %4823 = vperm.xlu0 %4822, %v3096
        %v4824 = vpop.permute.xlu0 %4823
        %4827 = vset.pattern.permute.xlu0 0
        %4828 = vperm.xlu0 %4827, %v3098
        %v4829 = vpop.permute.xlu0 %4828
        %4832 = vset.pattern.permute.xlu0 0
        %4833 = vperm.xlu0 %4832, %v3100
        %v4834 = vpop.permute.xlu0 %4833
        %4837 = vset.pattern.permute.xlu0 0
        %4838 = vperm.xlu0 %4837, %v3102
        %v4839 = vpop.permute.xlu0 %4838
        %4842 = vset.pattern.permute.xlu0 0
        %4843 = vperm.xlu0 %4842, %v3104
        %v4844 = vpop.permute.xlu0 %4843
        %4847 = vset.pattern.permute.xlu0 0
        %4848 = vperm.xlu0 %4847, %v3106
        %v4849 = vpop.permute.xlu0 %4848
        %4852 = vset.pattern.permute.xlu0 0
        %4853 = vperm.xlu0 %4852, %v3108
        %v4854 = vpop.permute.xlu0 %4853
        %4857 = vset.pattern.permute.xlu0 0
        %4858 = vperm.xlu0 %4857, %v3110
        %v4859 = vpop.permute.xlu0 %4858
        %4862 = vset.pattern.permute.xlu0 0
        %4863 = vperm.xlu0 %4862, %v3112
        %v4864 = vpop.permute.xlu0 %4863
        %4867 = vset.pattern.permute.xlu0 0
        %4868 = vperm.xlu0 %4867, %v3114
        %v4869 = vpop.permute.xlu0 %4868
        %4872 = vset.pattern.permute.xlu0 0
        %4873 = vperm.xlu0 %4872, %v3116
        %v4874 = vpop.permute.xlu0 %4873
        %4877 = vset.pattern.permute.xlu0 0
        %4878 = vperm.xlu0 %4877, %v3118
        %v4879 = vpop.permute.xlu0 %4878
        %4882 = vset.pattern.permute.xlu0 0
        %4883 = vperm.xlu0 %4882, %v3120
        %v4884 = vpop.permute.xlu0 %4883
        %4887 = vset.pattern.permute.xlu0 0
        %4888 = vperm.xlu0 %4887, %v3122
        %v4889 = vpop.permute.xlu0 %4888
        %4892 = vset.pattern.permute.xlu0 0
        %4893 = vperm.xlu0 %4892, %v3124
        %v4894 = vpop.permute.xlu0 %4893
        %4897 = vset.pattern.permute.xlu0 0
        %4898 = vperm.xlu0 %4897, %v3126
        %v4899 = vpop.permute.xlu0 %4898
        %4902 = vset.pattern.permute.xlu0 0
        %4903 = vperm.xlu0 %4902, %v3128
        %v4904 = vpop.permute.xlu0 %4903
        %4907 = vset.pattern.permute.xlu0 0
        %4908 = vperm.xlu0 %4907, %v3130
        %v4909 = vpop.permute.xlu0 %4908
        %4912 = vset.pattern.permute.xlu0 0
        %4913 = vperm.xlu0 %4912, %v3132
        %v4914 = vpop.permute.xlu0 %4913
        %4917 = vset.pattern.permute.xlu0 0
        %4918 = vperm.xlu0 %4917, %v3134
        %v4919 = vpop.permute.xlu0 %4918
        %4922 = vset.pattern.permute.xlu0 0
        %4923 = vperm.xlu0 %4922, %v3136
        %v4924 = vpop.permute.xlu0 %4923
        %4927 = vset.pattern.permute.xlu0 0
        %4928 = vperm.xlu0 %4927, %v3138
        %v4929 = vpop.permute.xlu0 %4928
        %4932 = vset.pattern.permute.xlu0 0
        %4933 = vperm.xlu0 %4932, %v3140
        %v4934 = vpop.permute.xlu0 %4933
        %4937 = vset.pattern.permute.xlu0 0
        %4938 = vperm.xlu0 %4937, %v3142
        %v4939 = vpop.permute.xlu0 %4938
        %4942 = vset.pattern.permute.xlu0 0
        %4943 = vperm.xlu0 %4942, %v3144
        %v4944 = vpop.permute.xlu0 %4943
        %4947 = vset.pattern.permute.xlu0 0
        %4948 = vperm.xlu0 %4947, %v3146
        %v4949 = vpop.permute.xlu0 %4948
        %4952 = vset.pattern.permute.xlu0 0
        %4953 = vperm.xlu0 %4952, %v3148
        %v4954 = vpop.permute.xlu0 %4953
        %4957 = vset.pattern.permute.xlu0 0
        %4958 = vperm.xlu0 %4957, %v3150
        %v4959 = vpop.permute.xlu0 %4958
        %4962 = vset.pattern.permute.xlu0 0
        %4963 = vperm.xlu0 %4962, %v3152
        %v4964 = vpop.permute.xlu0 %4963
        %4967 = vset.pattern.permute.xlu0 0
        %4968 = vperm.xlu0 %4967, %v3154
        %v4969 = vpop.permute.xlu0 %4968
        %4972 = vset.pattern.permute.xlu0 0
        %4973 = vperm.xlu0 %4972, %v3156
        %v4974 = vpop.permute.xlu0 %4973
        %4977 = vset.pattern.permute.xlu0 0
        %4978 = vperm.xlu0 %4977, %v3158
        %v4979 = vpop.permute.xlu0 %4978
        %4982 = vset.pattern.permute.xlu0 0
        %4983 = vperm.xlu0 %4982, %v3160
        %v4984 = vpop.permute.xlu0 %4983
        %4987 = vset.pattern.permute.xlu0 0
        %4988 = vperm.xlu0 %4987, %v3162
        %v4989 = vpop.permute.xlu0 %4988
        %4992 = vset.pattern.permute.xlu0 0
        %4993 = vperm.xlu0 %4992, %v3164
        %v4994 = vpop.permute.xlu0 %4993
        %4997 = vset.pattern.permute.xlu0 0
        %4998 = vperm.xlu0 %4997, %v3166
        %v4999 = vpop.permute.xlu0 %4998
        %5002 = vset.pattern.permute.xlu0 0
        %5003 = vperm.xlu0 %5002, %v3168
        %v5004 = vpop.permute.xlu0 %5003
        %5007 = vset.pattern.permute.xlu0 0
        %5008 = vperm.xlu0 %5007, %v3170
        %v5009 = vpop.permute.xlu0 %5008
        %5012 = vset.pattern.permute.xlu0 0
        %5013 = vperm.xlu0 %5012, %v3172
        %v5014 = vpop.permute.xlu0 %5013
        %5017 = vset.pattern.permute.xlu0 0
        %5018 = vperm.xlu0 %5017, %v3174
        %v5019 = vpop.permute.xlu0 %5018
        %5022 = vset.pattern.permute.xlu0 0
        %5023 = vperm.xlu0 %5022, %v3176
        %v5024 = vpop.permute.xlu0 %5023
        %5027 = vset.pattern.permute.xlu0 0
        %5028 = vperm.xlu0 %5027, %v3178
        %v5029 = vpop.permute.xlu0 %5028
        %5032 = vset.pattern.permute.xlu0 0
        %5033 = vperm.xlu0 %5032, %v3180
        %v5034 = vpop.permute.xlu0 %5033
        %5037 = vset.pattern.permute.xlu0 0
        %5038 = vperm.xlu0 %5037, %v3182
        %v5039 = vpop.permute.xlu0 %5038
        %5042 = vset.pattern.permute.xlu0 0
        %5043 = vperm.xlu0 %5042, %v3184
        %v5044 = vpop.permute.xlu0 %5043
        %v5046 = vmul.f32 %v4729, %v4662
        %v5047 = vmul.f32 %v4734, %v4663
        %v5048 = vmul.f32 %v4739, %v4664
        %v5049 = vmul.f32 %v4744, %v4665
        %v5050 = vmul.f32 %v4749, %v4666
        %v5051 = vmul.f32 %v4754, %v4667
        %v5052 = vmul.f32 %v4759, %v4668
        %v5053 = vmul.f32 %v4764, %v4669
        %v5054 = vmul.f32 %v4769, %v4670
        %v5055 = vmul.f32 %v4774, %v4671
        %v5056 = vmul.f32 %v4779, %v4672
        %v5057 = vmul.f32 %v4784, %v4673
        %v5058 = vmul.f32 %v4789, %v4674
        %v5059 = vmul.f32 %v4794, %v4675
        %v5060 = vmul.f32 %v4799, %v4676
        %v5061 = vmul.f32 %v4804, %v4677
        %v5062 = vmul.f32 %v4809, %v4678
        %v5063 = vmul.f32 %v4814, %v4679
        %v5064 = vmul.f32 %v4819, %v4680
        %v5065 = vmul.f32 %v4824, %v4681
        %v5066 = vmul.f32 %v4829, %v4682
        %v5067 = vmul.f32 %v4834, %v4683
        %v5068 = vmul.f32 %v4839, %v4684
        %v5069 = vmul.f32 %v4844, %v4685
        %v5070 = vmul.f32 %v4849, %v4686
        %v5071 = vmul.f32 %v4854, %v4687
        %v5072 = vmul.f32 %v4859, %v4688
        %v5073 = vmul.f32 %v4864, %v4689
        %v5074 = vmul.f32 %v4869, %v4690
        %v5075 = vmul.f32 %v4874, %v4691
        %v5076 = vmul.f32 %v4879, %v4692
        %v5077 = vmul.f32 %v4884, %v4693
        %v5078 = vmul.f32 %v4889, %v4694
        %v5079 = vmul.f32 %v4894, %v4695
        %v5080 = vmul.f32 %v4899, %v4696
        %v5081 = vmul.f32 %v4904, %v4697
        %v5082 = vmul.f32 %v4909, %v4698
        %v5083 = vmul.f32 %v4914, %v4699
        %v5084 = vmul.f32 %v4919, %v4700
        %v5085 = vmul.f32 %v4924, %v4701
        %v5086 = vmul.f32 %v4929, %v4702
        %v5087 = vmul.f32 %v4934, %v4703
        %v5088 = vmul.f32 %v4939, %v4704
        %v5089 = vmul.f32 %v4944, %v4705
        %v5090 = vmul.f32 %v4949, %v4706
        %v5091 = vmul.f32 %v4954, %v4707
        %v5092 = vmul.f32 %v4959, %v4708
        %v5093 = vmul.f32 %v4964, %v4709
        %v5094 = vmul.f32 %v4969, %v4710
        %v5095 = vmul.f32 %v4974, %v4711
        %v5096 = vmul.f32 %v4979, %v4712
        %v5097 = vmul.f32 %v4984, %v4713
        %v5098 = vmul.f32 %v4989, %v4714
        %v5099 = vmul.f32 %v4994, %v4715
        %v5100 = vmul.f32 %v4999, %v4716
        %v5101 = vmul.f32 %v5004, %v4717
        %v5102 = vmul.f32 %v5009, %v4718
        %v5103 = vmul.f32 %v5014, %v4719
        %v5104 = vmul.f32 %v5019, %v4720
        %v5105 = vmul.f32 %v5024, %v4721
        %v5106 = vmul.f32 %v5029, %v4722
        %v5107 = vmul.f32 %v5034, %v4723
        %v5108 = vmul.f32 %v5039, %v4724
        %v5109 = vmul.f32 %v5044, %v4725
        %v5110 = vadd.f32 %v5046, %v3892
        %v5111 = vadd.f32 %v5047, %v3897
        %v5112 = vadd.f32 %v5048, %v3902
        %v5113 = vadd.f32 %v5049, %v3907
        %v5114 = vadd.f32 %v5050, %v3912
        %v5115 = vadd.f32 %v5051, %v3917
        %v5116 = vadd.f32 %v5052, %v3922
        %v5117 = vadd.f32 %v5053, %v3927
        %v5118 = vadd.f32 %v5054, %v3932
        %v5119 = vadd.f32 %v5055, %v3937
        %v5120 = vadd.f32 %v5056, %v3942
        %v5121 = vadd.f32 %v5057, %v3947
        %v5122 = vadd.f32 %v5058, %v3952
        %v5123 = vadd.f32 %v5059, %v3957
        %v5124 = vadd.f32 %v5060, %v3962
        %v5125 = vadd.f32 %v5061, %v3967
        %v5126 = vadd.f32 %v5062, %v4037
        %v5127 = vadd.f32 %v5063, %v4042
        %v5128 = vadd.f32 %v5064, %v4047
        %v5129 = vadd.f32 %v5065, %v4052
        %v5130 = vadd.f32 %v5066, %v4057
        %v5131 = vadd.f32 %v5067, %v4062
        %v5132 = vadd.f32 %v5068, %v4067
        %v5133 = vadd.f32 %v5069, %v4072
        %v5134 = vadd.f32 %v5070, %v4077
        %v5135 = vadd.f32 %v5071, %v4082
        %v5136 = vadd.f32 %v5072, %v4087
        %v5137 = vadd.f32 %v5073, %v4092
        %v5138 = vadd.f32 %v5074, %v4097
        %v5139 = vadd.f32 %v5075, %v4102
        %v5140 = vadd.f32 %v5076, %v4107
        %v5141 = vadd.f32 %v5077, %v4112
        %v5142 = vadd.f32 %v5078, %v4182
        %v5143 = vadd.f32 %v5079, %v4187
        %v5144 = vadd.f32 %v5080, %v4192
        %v5145 = vadd.f32 %v5081, %v4197
        %v5146 = vadd.f32 %v5082, %v4202
        %v5147 = vadd.f32 %v5083, %v4207
        %v5148 = vadd.f32 %v5084, %v4212
        %v5149 = vadd.f32 %v5085, %v4217
        %v5150 = vadd.f32 %v5086, %v4222
        %v5151 = vadd.f32 %v5087, %v4227
        %v5152 = vadd.f32 %v5088, %v4232
        %v5153 = vadd.f32 %v5089, %v4237
        %v5154 = vadd.f32 %v5090, %v4242
        %v5155 = vadd.f32 %v5091, %v4247
        %v5156 = vadd.f32 %v5092, %v4252
        %v5157 = vadd.f32 %v5093, %v4257
        %v5158 = vadd.f32 %v5094, %v4327
        %v5159 = vadd.f32 %v5095, %v4332
        %v5160 = vadd.f32 %v5096, %v4337
        %v5161 = vadd.f32 %v5097, %v4342
        %v5162 = vadd.f32 %v5098, %v4347
        %v5163 = vadd.f32 %v5099, %v4352
        %v5164 = vadd.f32 %v5100, %v4357
        %v5165 = vadd.f32 %v5101, %v4362
        %v5166 = vadd.f32 %v5102, %v4367
        %v5167 = vadd.f32 %v5103, %v4372
        %v5168 = vadd.f32 %v5104, %v4377
        %v5169 = vadd.f32 %v5105, %v4382
        %v5170 = vadd.f32 %v5106, %v4387
        %v5171 = vadd.f32 %v5107, %v4392
        %v5172 = vadd.f32 %v5108, %v4397
        %v5173 = vadd.f32 %v5109, %v4402
        %5174 = vst.msk [vmem:[#allocation4] sm:$0xff] %vm1772, %v5110
        %5175 = vst.msk [vmem:[#allocation4 + $0x8] sm:$0xff] %vm1772, %v5111
        %5176 = vst.msk [vmem:[#allocation4 + $0x10] sm:$0xff] %vm1772, %v5112
        %5177 = vst.msk [vmem:[#allocation4 + $0x18] sm:$0xff] %vm1772, %v5113
        %5178 = vst.msk [vmem:[#allocation4 + $0x20] sm:$0xff] %vm1772, %v5114
        %5179 = vst.msk [vmem:[#allocation4 + $0x28] sm:$0xff] %vm1772, %v5115
        %5180 = vst.msk [vmem:[#allocation4 + $0x30] sm:$0xff] %vm1772, %v5116
        %5181 = vst.msk [vmem:[#allocation4 + $0x38] sm:$0xff] %vm1772, %v5117
        %5182 = vst.msk [vmem:[#allocation4 + $0x40] sm:$0xff] %vm1772, %v5118
        %5183 = vst.msk [vmem:[#allocation4 + $0x48] sm:$0xff] %vm1772, %v5119
        %5184 = vst.msk [vmem:[#allocation4 + $0x50] sm:$0xff] %vm1772, %v5120
        %5185 = vst.msk [vmem:[#allocation4 + $0x58] sm:$0xff] %vm1772, %v5121
        %5186 = vst.msk [vmem:[#allocation4 + $0x60] sm:$0xff] %vm1772, %v5122
        %5187 = vst.msk [vmem:[#allocation4 + $0x68] sm:$0xff] %vm1772, %v5123
        %5188 = vst.msk [vmem:[#allocation4 + $0x70] sm:$0xff] %vm1772, %v5124
        %5189 = vst.msk [vmem:[#allocation4 + $0x78] sm:$0xff] %vm1772, %v5125
        %5190 = vst.msk [vmem:[#allocation4 + $0x80] sm:$0xff] %vm1772, %v5126
        %5191 = vst.msk [vmem:[#allocation4 + $0x88] sm:$0xff] %vm1772, %v5127
        %5192 = vst.msk [vmem:[#allocation4 + $0x90] sm:$0xff] %vm1772, %v5128
        %5193 = vst.msk [vmem:[#allocation4 + $0x98] sm:$0xff] %vm1772, %v5129
        %5194 = vst.msk [vmem:[#allocation4 + $0xa0] sm:$0xff] %vm1772, %v5130
        %5195 = vst.msk [vmem:[#allocation4 + $0xa8] sm:$0xff] %vm1772, %v5131
        %5196 = vst.msk [vmem:[#allocation4 + $0xb0] sm:$0xff] %vm1772, %v5132
        %5197 = vst.msk [vmem:[#allocation4 + $0xb8] sm:$0xff] %vm1772, %v5133
        %5198 = vst.msk [vmem:[#allocation4 + $0xc0] sm:$0xff] %vm1772, %v5134
        %5199 = vst.msk [vmem:[#allocation4 + $0xc8] sm:$0xff] %vm1772, %v5135
        %5200 = vst.msk [vmem:[#allocation4 + $0xd0] sm:$0xff] %vm1772, %v5136
        %5201 = vst.msk [vmem:[#allocation4 + $0xd8] sm:$0xff] %vm1772, %v5137
        %5202 = vst.msk [vmem:[#allocation4 + $0xe0] sm:$0xff] %vm1772, %v5138
        %5203 = vst.msk [vmem:[#allocation4 + $0xe8] sm:$0xff] %vm1772, %v5139
        %5204 = vst.msk [vmem:[#allocation4 + $0xf0] sm:$0xff] %vm1772, %v5140
        %5205 = vst.msk [vmem:[#allocation4 + $0xf8] sm:$0xff] %vm1772, %v5141
        %5206 = vst.msk [vmem:[#allocation4 + $0x100] sm:$0xff] %vm1772, %v5142
        %5207 = vst.msk [vmem:[#allocation4 + $0x108] sm:$0xff] %vm1772, %v5143
        %5208 = vst.msk [vmem:[#allocation4 + $0x110] sm:$0xff] %vm1772, %v5144
        %5209 = vst.msk [vmem:[#allocation4 + $0x118] sm:$0xff] %vm1772, %v5145
        %5210 = vst.msk [vmem:[#allocation4 + $0x120] sm:$0xff] %vm1772, %v5146
        %5211 = vst.msk [vmem:[#allocation4 + $0x128] sm:$0xff] %vm1772, %v5147
        %5212 = vst.msk [vmem:[#allocation4 + $0x130] sm:$0xff] %vm1772, %v5148
        %5213 = vst.msk [vmem:[#allocation4 + $0x138] sm:$0xff] %vm1772, %v5149
        %5214 = vst.msk [vmem:[#allocation4 + $0x140] sm:$0xff] %vm1772, %v5150
        %5215 = vst.msk [vmem:[#allocation4 + $0x148] sm:$0xff] %vm1772, %v5151
        %5216 = vst.msk [vmem:[#allocation4 + $0x150] sm:$0xff] %vm1772, %v5152
        %5217 = vst.msk [vmem:[#allocation4 + $0x158] sm:$0xff] %vm1772, %v5153
        %5218 = vst.msk [vmem:[#allocation4 + $0x160] sm:$0xff] %vm1772, %v5154
        %5219 = vst.msk [vmem:[#allocation4 + $0x168] sm:$0xff] %vm1772, %v5155
        %5220 = vst.msk [vmem:[#allocation4 + $0x170] sm:$0xff] %vm1772, %v5156
        %5221 = vst.msk [vmem:[#allocation4 + $0x178] sm:$0xff] %vm1772, %v5157
        %5222 = vst.msk [vmem:[#allocation4 + $0x180] sm:$0xff] %vm1772, %v5158
        %5223 = vst.msk [vmem:[#allocation4 + $0x188] sm:$0xff] %vm1772, %v5159
        %5224 = vst.msk [vmem:[#allocation4 + $0x190] sm:$0xff] %vm1772, %v5160
        %5225 = vst.msk [vmem:[#allocation4 + $0x198] sm:$0xff] %vm1772, %v5161
        %5226 = vst.msk [vmem:[#allocation4 + $0x1a0] sm:$0xff] %vm1772, %v5162
        %5227 = vst.msk [vmem:[#allocation4 + $0x1a8] sm:$0xff] %vm1772, %v5163
        %5228 = vst.msk [vmem:[#allocation4 + $0x1b0] sm:$0xff] %vm1772, %v5164
        %5229 = vst.msk [vmem:[#allocation4 + $0x1b8] sm:$0xff] %vm1772, %v5165
        %5230 = vst.msk [vmem:[#allocation4 + $0x1c0] sm:$0xff] %vm1772, %v5166
        %5231 = vst.msk [vmem:[#allocation4 + $0x1c8] sm:$0xff] %vm1772, %v5167
        %5232 = vst.msk [vmem:[#allocation4 + $0x1d0] sm:$0xff] %vm1772, %v5168
        %5233 = vst.msk [vmem:[#allocation4 + $0x1d8] sm:$0xff] %vm1772, %v5169
        %5234 = vst.msk [vmem:[#allocation4 + $0x1e0] sm:$0xff] %vm1772, %v5170
        %5235 = vst.msk [vmem:[#allocation4 + $0x1e8] sm:$0xff] %vm1772, %v5171
        %5236 = vst.msk [vmem:[#allocation4 + $0x1f0] sm:$0xff] %vm1772, %v5172
        %5237 = vst.msk [vmem:[#allocation4 + $0x1f8] sm:$0xff] %vm1772, %v5173
        %5238 = vst.msk [vmem:[#allocation2] sm:$0xff] %vm4597, %v2929
        %5239 = vst.msk [vmem:[#allocation2 + $0x8] sm:$0xff] %vm4597, %v2930
        %5240 = vst.msk [vmem:[#allocation2 + $0x10] sm:$0xff] %vm4597, %v2931
        %5241 = vst.msk [vmem:[#allocation2 + $0x18] sm:$0xff] %vm4597, %v2932
        %5242 = vst.msk [vmem:[#allocation2 + $0x20] sm:$0xff] %vm4597, %v2933
        %5243 = vst.msk [vmem:[#allocation2 + $0x28] sm:$0xff] %vm4597, %v2934
        %5244 = vst.msk [vmem:[#allocation2 + $0x30] sm:$0xff] %vm4597, %v2935
        %5245 = vst.msk [vmem:[#allocation2 + $0x38] sm:$0xff] %vm4597, %v2936
        %5246 = vst.msk [vmem:[#allocation2 + $0x40] sm:$0xff] %vm4597, %v2937
        %5247 = vst.msk [vmem:[#allocation2 + $0x48] sm:$0xff] %vm4597, %v2938
        %5248 = vst.msk [vmem:[#allocation2 + $0x50] sm:$0xff] %vm4597, %v2939
        %5249 = vst.msk [vmem:[#allocation2 + $0x58] sm:$0xff] %vm4597, %v2940
        %5250 = vst.msk [vmem:[#allocation2 + $0x60] sm:$0xff] %vm4597, %v2941
        %5251 = vst.msk [vmem:[#allocation2 + $0x68] sm:$0xff] %vm4597, %v2942
        %5252 = vst.msk [vmem:[#allocation2 + $0x70] sm:$0xff] %vm4597, %v2943
        %5253 = vst.msk [vmem:[#allocation2 + $0x78] sm:$0xff] %vm4597, %v2944
        %5254 = vst.msk [vmem:[#allocation2 + $0x80] sm:$0xff] %vm4597, %v2945
        %5255 = vst.msk [vmem:[#allocation2 + $0x88] sm:$0xff] %vm4597, %v2946
        %5256 = vst.msk [vmem:[#allocation2 + $0x90] sm:$0xff] %vm4597, %v2947
        %5257 = vst.msk [vmem:[#allocation2 + $0x98] sm:$0xff] %vm4597, %v2948
        %5258 = vst.msk [vmem:[#allocation2 + $0xa0] sm:$0xff] %vm4597, %v2949
        %5259 = vst.msk [vmem:[#allocation2 + $0xa8] sm:$0xff] %vm4597, %v2950
        %5260 = vst.msk [vmem:[#allocation2 + $0xb0] sm:$0xff] %vm4597, %v2951
        %5261 = vst.msk [vmem:[#allocation2 + $0xb8] sm:$0xff] %vm4597, %v2952
        %5262 = vst.msk [vmem:[#allocation2 + $0xc0] sm:$0xff] %vm4597, %v2953
        %5263 = vst.msk [vmem:[#allocation2 + $0xc8] sm:$0xff] %vm4597, %v2954
        %5264 = vst.msk [vmem:[#allocation2 + $0xd0] sm:$0xff] %vm4597, %v2955
        %5265 = vst.msk [vmem:[#allocation2 + $0xd8] sm:$0xff] %vm4597, %v2956
        %5266 = vst.msk [vmem:[#allocation2 + $0xe0] sm:$0xff] %vm4597, %v2957
        %5267 = vst.msk [vmem:[#allocation2 + $0xe8] sm:$0xff] %vm4597, %v2958
        %5268 = vst.msk [vmem:[#allocation2 + $0xf0] sm:$0xff] %vm4597, %v2959
        %5269 = vst.msk [vmem:[#allocation2 + $0xf8] sm:$0xff] %vm4597, %v2960
        %5270 = vst.msk [vmem:[#allocation2 + $0x100] sm:$0xff] %vm4597, %v2961
        %5271 = vst.msk [vmem:[#allocation2 + $0x108] sm:$0xff] %vm4597, %v2962
        %5272 = vst.msk [vmem:[#allocation2 + $0x110] sm:$0xff] %vm4597, %v2963
        %5273 = vst.msk [vmem:[#allocation2 + $0x118] sm:$0xff] %vm4597, %v2964
        %5274 = vst.msk [vmem:[#allocation2 + $0x120] sm:$0xff] %vm4597, %v2965
        %5275 = vst.msk [vmem:[#allocation2 + $0x128] sm:$0xff] %vm4597, %v2966
        %5276 = vst.msk [vmem:[#allocation2 + $0x130] sm:$0xff] %vm4597, %v2967
        %5277 = vst.msk [vmem:[#allocation2 + $0x138] sm:$0xff] %vm4597, %v2968
        %5278 = vst.msk [vmem:[#allocation2 + $0x140] sm:$0xff] %vm4597, %v2969
        %5279 = vst.msk [vmem:[#allocation2 + $0x148] sm:$0xff] %vm4597, %v2970
        %5280 = vst.msk [vmem:[#allocation2 + $0x150] sm:$0xff] %vm4597, %v2971
        %5281 = vst.msk [vmem:[#allocation2 + $0x158] sm:$0xff] %vm4597, %v2972
        %5282 = vst.msk [vmem:[#allocation2 + $0x160] sm:$0xff] %vm4597, %v2973
        %5283 = vst.msk [vmem:[#allocation2 + $0x168] sm:$0xff] %vm4597, %v2974
        %5284 = vst.msk [vmem:[#allocation2 + $0x170] sm:$0xff] %vm4597, %v2975
        %5285 = vst.msk [vmem:[#allocation2 + $0x178] sm:$0xff] %vm4597, %v2976
        %5286 = vst.msk [vmem:[#allocation2 + $0x180] sm:$0xff] %vm4597, %v2977
        %5287 = vst.msk [vmem:[#allocation2 + $0x188] sm:$0xff] %vm4597, %v2978
        %5288 = vst.msk [vmem:[#allocation2 + $0x190] sm:$0xff] %vm4597, %v2979
        %5289 = vst.msk [vmem:[#allocation2 + $0x198] sm:$0xff] %vm4597, %v2980
        %5290 = vst.msk [vmem:[#allocation2 + $0x1a0] sm:$0xff] %vm4597, %v2981
        %5291 = vst.msk [vmem:[#allocation2 + $0x1a8] sm:$0xff] %vm4597, %v2982
        %5292 = vst.msk [vmem:[#allocation2 + $0x1b0] sm:$0xff] %vm4597, %v2983
        %5293 = vst.msk [vmem:[#allocation2 + $0x1b8] sm:$0xff] %vm4597, %v2984
        %5294 = vst.msk [vmem:[#allocation2 + $0x1c0] sm:$0xff] %vm4597, %v2985
        %5295 = vst.msk [vmem:[#allocation2 + $0x1c8] sm:$0xff] %vm4597, %v2986
        %5296 = vst.msk [vmem:[#allocation2 + $0x1d0] sm:$0xff] %vm4597, %v2987
        %5297 = vst.msk [vmem:[#allocation2 + $0x1d8] sm:$0xff] %vm4597, %v2988
        %5298 = vst.msk [vmem:[#allocation2 + $0x1e0] sm:$0xff] %vm4597, %v2989
        %5299 = vst.msk [vmem:[#allocation2 + $0x1e8] sm:$0xff] %vm4597, %v2990
        %5300 = vst.msk [vmem:[#allocation2 + $0x1f0] sm:$0xff] %vm4597, %v2991
        %5301 = vst.msk [vmem:[#allocation2 + $0x1f8] sm:$0xff] %vm4597, %v2992
        %p5302 = scmp.eq.s32.totalorder %s25, 1
        // Predicated region
        $region196: #{tpu_custom_call.1} parent=174 // pred_check
          %p5303 = pneg %p5302
        $region197: #{tpu_custom_call.1} parent=174 // pred_check_branch
          %5305 = sbr.rel (%p5303) target = $region199
        $region198: #{tpu_custom_call.1} parent=174 // pred_region
          %v5306 = vld [vmem:[#allocation3] sm:$0xff]
          %v5307 = vld [vmem:[#allocation3 + $0x8] sm:$0xff]
          %v5308 = vld [vmem:[#allocation3 + $0x10] sm:$0xff]
          %v5309 = vld [vmem:[#allocation3 + $0x18] sm:$0xff]
          %v5310 = vld [vmem:[#allocation3 + $0x20] sm:$0xff]
          %v5311 = vld [vmem:[#allocation3 + $0x28] sm:$0xff]
          %v5312 = vld [vmem:[#allocation3 + $0x30] sm:$0xff]
          %v5313 = vld [vmem:[#allocation3 + $0x38] sm:$0xff]
          %v5314 = vld [vmem:[#allocation3 + $0x40] sm:$0xff]
          %v5315 = vld [vmem:[#allocation3 + $0x48] sm:$0xff]
          %v5316 = vld [vmem:[#allocation3 + $0x50] sm:$0xff]
          %v5317 = vld [vmem:[#allocation3 + $0x58] sm:$0xff]
          %v5318 = vld [vmem:[#allocation3 + $0x60] sm:$0xff]
          %v5319 = vld [vmem:[#allocation3 + $0x68] sm:$0xff]
          %v5320 = vld [vmem:[#allocation3 + $0x70] sm:$0xff]
          %v5321 = vld [vmem:[#allocation3 + $0x78] sm:$0xff]
          %v5322 = vld [vmem:[#allocation3 + $0x80] sm:$0xff]
          %v5323 = vld [vmem:[#allocation3 + $0x88] sm:$0xff]
          %v5324 = vld [vmem:[#allocation3 + $0x90] sm:$0xff]
          %v5325 = vld [vmem:[#allocation3 + $0x98] sm:$0xff]
          %v5326 = vld [vmem:[#allocation3 + $0xa0] sm:$0xff]
          %v5327 = vld [vmem:[#allocation3 + $0xa8] sm:$0xff]
          %v5328 = vld [vmem:[#allocation3 + $0xb0] sm:$0xff]
          %v5329 = vld [vmem:[#allocation3 + $0xb8] sm:$0xff]
          %v5330 = vld [vmem:[#allocation3 + $0xc0] sm:$0xff]
          %v5331 = vld [vmem:[#allocation3 + $0xc8] sm:$0xff]
          %v5332 = vld [vmem:[#allocation3 + $0xd0] sm:$0xff]
          %v5333 = vld [vmem:[#allocation3 + $0xd8] sm:$0xff]
          %v5334 = vld [vmem:[#allocation3 + $0xe0] sm:$0xff]
          %v5335 = vld [vmem:[#allocation3 + $0xe8] sm:$0xff]
          %v5336 = vld [vmem:[#allocation3 + $0xf0] sm:$0xff]
          %v5337 = vld [vmem:[#allocation3 + $0xf8] sm:$0xff]
          %v5338 = vld [vmem:[#allocation3 + $0x100] sm:$0xff]
          %v5339 = vld [vmem:[#allocation3 + $0x108] sm:$0xff]
          %v5340 = vld [vmem:[#allocation3 + $0x110] sm:$0xff]
          %v5341 = vld [vmem:[#allocation3 + $0x118] sm:$0xff]
          %v5342 = vld [vmem:[#allocation3 + $0x120] sm:$0xff]
          %v5343 = vld [vmem:[#allocation3 + $0x128] sm:$0xff]
          %v5344 = vld [vmem:[#allocation3 + $0x130] sm:$0xff]
          %v5345 = vld [vmem:[#allocation3 + $0x138] sm:$0xff]
          %v5346 = vld [vmem:[#allocation3 + $0x140] sm:$0xff]
          %v5347 = vld [vmem:[#allocation3 + $0x148] sm:$0xff]
          %v5348 = vld [vmem:[#allocation3 + $0x150] sm:$0xff]
          %v5349 = vld [vmem:[#allocation3 + $0x158] sm:$0xff]
          %v5350 = vld [vmem:[#allocation3 + $0x160] sm:$0xff]
          %v5351 = vld [vmem:[#allocation3 + $0x168] sm:$0xff]
          %v5352 = vld [vmem:[#allocation3 + $0x170] sm:$0xff]
          %v5353 = vld [vmem:[#allocation3 + $0x178] sm:$0xff]
          %v5354 = vld [vmem:[#allocation3 + $0x180] sm:$0xff]
          %v5355 = vld [vmem:[#allocation3 + $0x188] sm:$0xff]
          %v5356 = vld [vmem:[#allocation3 + $0x190] sm:$0xff]
          %v5357 = vld [vmem:[#allocation3 + $0x198] sm:$0xff]
          %v5358 = vld [vmem:[#allocation3 + $0x1a0] sm:$0xff]
          %v5359 = vld [vmem:[#allocation3 + $0x1a8] sm:$0xff]
          %v5360 = vld [vmem:[#allocation3 + $0x1b0] sm:$0xff]
          %v5361 = vld [vmem:[#allocation3 + $0x1b8] sm:$0xff]
          %v5362 = vld [vmem:[#allocation3 + $0x1c0] sm:$0xff]
          %v5363 = vld [vmem:[#allocation3 + $0x1c8] sm:$0xff]
          %v5364 = vld [vmem:[#allocation3 + $0x1d0] sm:$0xff]
          %v5365 = vld [vmem:[#allocation3 + $0x1d8] sm:$0xff]
          %v5366 = vld [vmem:[#allocation3 + $0x1e0] sm:$0xff]
          %v5367 = vld [vmem:[#allocation3 + $0x1e8] sm:$0xff]
          %v5368 = vld [vmem:[#allocation3 + $0x1f0] sm:$0xff]
          %v5369 = vld [vmem:[#allocation3 + $0x1f8] sm:$0xff]
          %v5370 = vrcp.pop %v5306
          %v5371 = vrcp.pop %v5307
          %v5372 = vrcp.pop %v5308
          %v5373 = vrcp.pop %v5309
          %v5374 = vrcp.pop %v5310
          %v5375 = vrcp.pop %v5311
          %v5376 = vrcp.pop %v5312
          %v5377 = vrcp.pop %v5313
          %v5378 = vrcp.pop %v5314
          %v5379 = vrcp.pop %v5315
          %v5380 = vrcp.pop %v5316
          %v5381 = vrcp.pop %v5317
          %v5382 = vrcp.pop %v5318
          %v5383 = vrcp.pop %v5319
          %v5384 = vrcp.pop %v5320
          %v5385 = vrcp.pop %v5321
          %v5386 = vrcp.pop %v5322
          %v5387 = vrcp.pop %v5323
          %v5388 = vrcp.pop %v5324
          %v5389 = vrcp.pop %v5325
          %v5390 = vrcp.pop %v5326
          %v5391 = vrcp.pop %v5327
          %v5392 = vrcp.pop %v5328
          %v5393 = vrcp.pop %v5329
          %v5394 = vrcp.pop %v5330
          %v5395 = vrcp.pop %v5331
          %v5396 = vrcp.pop %v5332
          %v5397 = vrcp.pop %v5333
          %v5398 = vrcp.pop %v5334
          %v5399 = vrcp.pop %v5335
          %v5400 = vrcp.pop %v5336
          %v5401 = vrcp.pop %v5337
          %v5402 = vrcp.pop %v5338
          %v5403 = vrcp.pop %v5339
          %v5404 = vrcp.pop %v5340
          %v5405 = vrcp.pop %v5341
          %v5406 = vrcp.pop %v5342
          %v5407 = vrcp.pop %v5343
          %v5408 = vrcp.pop %v5344
          %v5409 = vrcp.pop %v5345
          %v5410 = vrcp.pop %v5346
          %v5411 = vrcp.pop %v5347
          %v5412 = vrcp.pop %v5348
          %v5413 = vrcp.pop %v5349
          %v5414 = vrcp.pop %v5350
          %v5415 = vrcp.pop %v5351
          %v5416 = vrcp.pop %v5352
          %v5417 = vrcp.pop %v5353
          %v5418 = vrcp.pop %v5354
          %v5419 = vrcp.pop %v5355
          %v5420 = vrcp.pop %v5356
          %v5421 = vrcp.pop %v5357
          %v5422 = vrcp.pop %v5358
          %v5423 = vrcp.pop %v5359
          %v5424 = vrcp.pop %v5360
          %v5425 = vrcp.pop %v5361
          %v5426 = vrcp.pop %v5362
          %v5427 = vrcp.pop %v5363
          %v5428 = vrcp.pop %v5364
          %v5429 = vrcp.pop %v5365
          %v5430 = vrcp.pop %v5366
          %v5431 = vrcp.pop %v5367
          %v5432 = vrcp.pop %v5368
          %v5433 = vrcp.pop %v5369
          %v5434 = vld [vmem:[#allocation4] sm:$0xff]
          %v5435 = vld [vmem:[#allocation4 + $0x8] sm:$0xff]
          %v5436 = vld [vmem:[#allocation4 + $0x10] sm:$0xff]
          %v5437 = vld [vmem:[#allocation4 + $0x18] sm:$0xff]
          %v5438 = vld [vmem:[#allocation4 + $0x20] sm:$0xff]
          %v5439 = vld [vmem:[#allocation4 + $0x28] sm:$0xff]
          %v5440 = vld [vmem:[#allocation4 + $0x30] sm:$0xff]
          %v5441 = vld [vmem:[#allocation4 + $0x38] sm:$0xff]
          %v5442 = vld [vmem:[#allocation4 + $0x40] sm:$0xff]
          %v5443 = vld [vmem:[#allocation4 + $0x48] sm:$0xff]
          %v5444 = vld [vmem:[#allocation4 + $0x50] sm:$0xff]
          %v5445 = vld [vmem:[#allocation4 + $0x58] sm:$0xff]
          %v5446 = vld [vmem:[#allocation4 + $0x60] sm:$0xff]
          %v5447 = vld [vmem:[#allocation4 + $0x68] sm:$0xff]
          %v5448 = vld [vmem:[#allocation4 + $0x70] sm:$0xff]
          %v5449 = vld [vmem:[#allocation4 + $0x78] sm:$0xff]
          %v5450 = vld [vmem:[#allocation4 + $0x80] sm:$0xff]
          %v5451 = vld [vmem:[#allocation4 + $0x88] sm:$0xff]
          %v5452 = vld [vmem:[#allocation4 + $0x90] sm:$0xff]
          %v5453 = vld [vmem:[#allocation4 + $0x98] sm:$0xff]
          %v5454 = vld [vmem:[#allocation4 + $0xa0] sm:$0xff]
          %v5455 = vld [vmem:[#allocation4 + $0xa8] sm:$0xff]
          %v5456 = vld [vmem:[#allocation4 + $0xb0] sm:$0xff]
          %v5457 = vld [vmem:[#allocation4 + $0xb8] sm:$0xff]
          %v5458 = vld [vmem:[#allocation4 + $0xc0] sm:$0xff]
          %v5459 = vld [vmem:[#allocation4 + $0xc8] sm:$0xff]
          %v5460 = vld [vmem:[#allocation4 + $0xd0] sm:$0xff]
          %v5461 = vld [vmem:[#allocation4 + $0xd8] sm:$0xff]
          %v5462 = vld [vmem:[#allocation4 + $0xe0] sm:$0xff]
          %v5463 = vld [vmem:[#allocation4 + $0xe8] sm:$0xff]
          %v5464 = vld [vmem:[#allocation4 + $0xf0] sm:$0xff]
          %v5465 = vld [vmem:[#allocation4 + $0xf8] sm:$0xff]
          %v5466 = vld [vmem:[#allocation4 + $0x100] sm:$0xff]
          %v5467 = vld [vmem:[#allocation4 + $0x108] sm:$0xff]
          %v5468 = vld [vmem:[#allocation4 + $0x110] sm:$0xff]
          %v5469 = vld [vmem:[#allocation4 + $0x118] sm:$0xff]
          %v5470 = vld [vmem:[#allocation4 + $0x120] sm:$0xff]
          %v5471 = vld [vmem:[#allocation4 + $0x128] sm:$0xff]
          %v5472 = vld [vmem:[#allocation4 + $0x130] sm:$0xff]
          %v5473 = vld [vmem:[#allocation4 + $0x138] sm:$0xff]
          %v5474 = vld [vmem:[#allocation4 + $0x140] sm:$0xff]
          %v5475 = vld [vmem:[#allocation4 + $0x148] sm:$0xff]
          %v5476 = vld [vmem:[#allocation4 + $0x150] sm:$0xff]
          %v5477 = vld [vmem:[#allocation4 + $0x158] sm:$0xff]
          %v5478 = vld [vmem:[#allocation4 + $0x160] sm:$0xff]
          %v5479 = vld [vmem:[#allocation4 + $0x168] sm:$0xff]
          %v5480 = vld [vmem:[#allocation4 + $0x170] sm:$0xff]
          %v5481 = vld [vmem:[#allocation4 + $0x178] sm:$0xff]
          %v5482 = vld [vmem:[#allocation4 + $0x180] sm:$0xff]
          %v5483 = vld [vmem:[#allocation4 + $0x188] sm:$0xff]
          %v5484 = vld [vmem:[#allocation4 + $0x190] sm:$0xff]
          %v5485 = vld [vmem:[#allocation4 + $0x198] sm:$0xff]
          %v5486 = vld [vmem:[#allocation4 + $0x1a0] sm:$0xff]
          %v5487 = vld [vmem:[#allocation4 + $0x1a8] sm:$0xff]
          %v5488 = vld [vmem:[#allocation4 + $0x1b0] sm:$0xff]
          %v5489 = vld [vmem:[#allocation4 + $0x1b8] sm:$0xff]
          %v5490 = vld [vmem:[#allocation4 + $0x1c0] sm:$0xff]
          %v5491 = vld [vmem:[#allocation4 + $0x1c8] sm:$0xff]
          %v5492 = vld [vmem:[#allocation4 + $0x1d0] sm:$0xff]
          %v5493 = vld [vmem:[#allocation4 + $0x1d8] sm:$0xff]
          %v5494 = vld [vmem:[#allocation4 + $0x1e0] sm:$0xff]
          %v5495 = vld [vmem:[#allocation4 + $0x1e8] sm:$0xff]
          %v5496 = vld [vmem:[#allocation4 + $0x1f0] sm:$0xff]
          %v5497 = vld [vmem:[#allocation4 + $0x1f8] sm:$0xff]
          %5499 = vset.pattern.permute.xlu0 0
          %5500 = vperm.xlu0 %5499, %v5370
          %v5501 = vpop.permute.xlu0 %5500
          %5504 = vset.pattern.permute.xlu0 0
          %5505 = vperm.xlu0 %5504, %v5371
          %v5506 = vpop.permute.xlu0 %5505
          %5509 = vset.pattern.permute.xlu0 0
          %5510 = vperm.xlu0 %5509, %v5372
          %v5511 = vpop.permute.xlu0 %5510
          %5514 = vset.pattern.permute.xlu0 0
          %5515 = vperm.xlu0 %5514, %v5373
          %v5516 = vpop.permute.xlu0 %5515
          %5519 = vset.pattern.permute.xlu0 0
          %5520 = vperm.xlu0 %5519, %v5374
          %v5521 = vpop.permute.xlu0 %5520
          %5524 = vset.pattern.permute.xlu0 0
          %5525 = vperm.xlu0 %5524, %v5375
          %v5526 = vpop.permute.xlu0 %5525
          %5529 = vset.pattern.permute.xlu0 0
          %5530 = vperm.xlu0 %5529, %v5376
          %v5531 = vpop.permute.xlu0 %5530
          %5534 = vset.pattern.permute.xlu0 0
          %5535 = vperm.xlu0 %5534, %v5377
          %v5536 = vpop.permute.xlu0 %5535
          %5539 = vset.pattern.permute.xlu0 0
          %5540 = vperm.xlu0 %5539, %v5378
          %v5541 = vpop.permute.xlu0 %5540
          %5544 = vset.pattern.permute.xlu0 0
          %5545 = vperm.xlu0 %5544, %v5379
          %v5546 = vpop.permute.xlu0 %5545
          %5549 = vset.pattern.permute.xlu0 0
          %5550 = vperm.xlu0 %5549, %v5380
          %v5551 = vpop.permute.xlu0 %5550
          %5554 = vset.pattern.permute.xlu0 0
          %5555 = vperm.xlu0 %5554, %v5381
          %v5556 = vpop.permute.xlu0 %5555
          %5559 = vset.pattern.permute.xlu0 0
          %5560 = vperm.xlu0 %5559, %v5382
          %v5561 = vpop.permute.xlu0 %5560
          %5564 = vset.pattern.permute.xlu0 0
          %5565 = vperm.xlu0 %5564, %v5383
          %v5566 = vpop.permute.xlu0 %5565
          %5569 = vset.pattern.permute.xlu0 0
          %5570 = vperm.xlu0 %5569, %v5384
          %v5571 = vpop.permute.xlu0 %5570
          %5574 = vset.pattern.permute.xlu0 0
          %5575 = vperm.xlu0 %5574, %v5385
          %v5576 = vpop.permute.xlu0 %5575
          %5579 = vset.pattern.permute.xlu0 0
          %5580 = vperm.xlu0 %5579, %v5386
          %v5581 = vpop.permute.xlu0 %5580
          %5584 = vset.pattern.permute.xlu0 0
          %5585 = vperm.xlu0 %5584, %v5387
          %v5586 = vpop.permute.xlu0 %5585
          %5589 = vset.pattern.permute.xlu0 0
          %5590 = vperm.xlu0 %5589, %v5388
          %v5591 = vpop.permute.xlu0 %5590
          %5594 = vset.pattern.permute.xlu0 0
          %5595 = vperm.xlu0 %5594, %v5389
          %v5596 = vpop.permute.xlu0 %5595
          %5599 = vset.pattern.permute.xlu0 0
          %5600 = vperm.xlu0 %5599, %v5390
          %v5601 = vpop.permute.xlu0 %5600
          %5604 = vset.pattern.permute.xlu0 0
          %5605 = vperm.xlu0 %5604, %v5391
          %v5606 = vpop.permute.xlu0 %5605
          %5609 = vset.pattern.permute.xlu0 0
          %5610 = vperm.xlu0 %5609, %v5392
          %v5611 = vpop.permute.xlu0 %5610
          %5614 = vset.pattern.permute.xlu0 0
          %5615 = vperm.xlu0 %5614, %v5393
          %v5616 = vpop.permute.xlu0 %5615
          %5619 = vset.pattern.permute.xlu0 0
          %5620 = vperm.xlu0 %5619, %v5394
          %v5621 = vpop.permute.xlu0 %5620
          %5624 = vset.pattern.permute.xlu0 0
          %5625 = vperm.xlu0 %5624, %v5395
          %v5626 = vpop.permute.xlu0 %5625
          %5629 = vset.pattern.permute.xlu0 0
          %5630 = vperm.xlu0 %5629, %v5396
          %v5631 = vpop.permute.xlu0 %5630
          %5634 = vset.pattern.permute.xlu0 0
          %5635 = vperm.xlu0 %5634, %v5397
          %v5636 = vpop.permute.xlu0 %5635
          %5639 = vset.pattern.permute.xlu0 0
          %5640 = vperm.xlu0 %5639, %v5398
          %v5641 = vpop.permute.xlu0 %5640
          %5644 = vset.pattern.permute.xlu0 0
          %5645 = vperm.xlu0 %5644, %v5399
          %v5646 = vpop.permute.xlu0 %5645
          %5649 = vset.pattern.permute.xlu0 0
          %5650 = vperm.xlu0 %5649, %v5400
          %v5651 = vpop.permute.xlu0 %5650
          %5654 = vset.pattern.permute.xlu0 0
          %5655 = vperm.xlu0 %5654, %v5401
          %v5656 = vpop.permute.xlu0 %5655
          %5659 = vset.pattern.permute.xlu0 0
          %5660 = vperm.xlu0 %5659, %v5402
          %v5661 = vpop.permute.xlu0 %5660
          %5664 = vset.pattern.permute.xlu0 0
          %5665 = vperm.xlu0 %5664, %v5403
          %v5666 = vpop.permute.xlu0 %5665
          %5669 = vset.pattern.permute.xlu0 0
          %5670 = vperm.xlu0 %5669, %v5404
          %v5671 = vpop.permute.xlu0 %5670
          %5674 = vset.pattern.permute.xlu0 0
          %5675 = vperm.xlu0 %5674, %v5405
          %v5676 = vpop.permute.xlu0 %5675
          %5679 = vset.pattern.permute.xlu0 0
          %5680 = vperm.xlu0 %5679, %v5406
          %v5681 = vpop.permute.xlu0 %5680
          %5684 = vset.pattern.permute.xlu0 0
          %5685 = vperm.xlu0 %5684, %v5407
          %v5686 = vpop.permute.xlu0 %5685
          %5689 = vset.pattern.permute.xlu0 0
          %5690 = vperm.xlu0 %5689, %v5408
          %v5691 = vpop.permute.xlu0 %5690
          %5694 = vset.pattern.permute.xlu0 0
          %5695 = vperm.xlu0 %5694, %v5409
          %v5696 = vpop.permute.xlu0 %5695
          %5699 = vset.pattern.permute.xlu0 0
          %5700 = vperm.xlu0 %5699, %v5410
          %v5701 = vpop.permute.xlu0 %5700
          %5704 = vset.pattern.permute.xlu0 0
          %5705 = vperm.xlu0 %5704, %v5411
          %v5706 = vpop.permute.xlu0 %5705
          %5709 = vset.pattern.permute.xlu0 0
          %5710 = vperm.xlu0 %5709, %v5412
          %v5711 = vpop.permute.xlu0 %5710
          %5714 = vset.pattern.permute.xlu0 0
          %5715 = vperm.xlu0 %5714, %v5413
          %v5716 = vpop.permute.xlu0 %5715
          %5719 = vset.pattern.permute.xlu0 0
          %5720 = vperm.xlu0 %5719, %v5414
          %v5721 = vpop.permute.xlu0 %5720
          %5724 = vset.pattern.permute.xlu0 0
          %5725 = vperm.xlu0 %5724, %v5415
          %v5726 = vpop.permute.xlu0 %5725
          %5729 = vset.pattern.permute.xlu0 0
          %5730 = vperm.xlu0 %5729, %v5416
          %v5731 = vpop.permute.xlu0 %5730
          %5734 = vset.pattern.permute.xlu0 0
          %5735 = vperm.xlu0 %5734, %v5417
          %v5736 = vpop.permute.xlu0 %5735
          %5739 = vset.pattern.permute.xlu0 0
          %5740 = vperm.xlu0 %5739, %v5418
          %v5741 = vpop.permute.xlu0 %5740
          %5744 = vset.pattern.permute.xlu0 0
          %5745 = vperm.xlu0 %5744, %v5419
          %v5746 = vpop.permute.xlu0 %5745
          %5749 = vset.pattern.permute.xlu0 0
          %5750 = vperm.xlu0 %5749, %v5420
          %v5751 = vpop.permute.xlu0 %5750
          %5754 = vset.pattern.permute.xlu0 0
          %5755 = vperm.xlu0 %5754, %v5421
          %v5756 = vpop.permute.xlu0 %5755
          %5759 = vset.pattern.permute.xlu0 0
          %5760 = vperm.xlu0 %5759, %v5422
          %v5761 = vpop.permute.xlu0 %5760
          %5764 = vset.pattern.permute.xlu0 0
          %5765 = vperm.xlu0 %5764, %v5423
          %v5766 = vpop.permute.xlu0 %5765
          %5769 = vset.pattern.permute.xlu0 0
          %5770 = vperm.xlu0 %5769, %v5424
          %v5771 = vpop.permute.xlu0 %5770
          %5774 = vset.pattern.permute.xlu0 0
          %5775 = vperm.xlu0 %5774, %v5425
          %v5776 = vpop.permute.xlu0 %5775
          %5779 = vset.pattern.permute.xlu0 0
          %5780 = vperm.xlu0 %5779, %v5426
          %v5781 = vpop.permute.xlu0 %5780
          %5784 = vset.pattern.permute.xlu0 0
          %5785 = vperm.xlu0 %5784, %v5427
          %v5786 = vpop.permute.xlu0 %5785
          %5789 = vset.pattern.permute.xlu0 0
          %5790 = vperm.xlu0 %5789, %v5428
          %v5791 = vpop.permute.xlu0 %5790
          %5794 = vset.pattern.permute.xlu0 0
          %5795 = vperm.xlu0 %5794, %v5429
          %v5796 = vpop.permute.xlu0 %5795
          %5799 = vset.pattern.permute.xlu0 0
          %5800 = vperm.xlu0 %5799, %v5430
          %v5801 = vpop.permute.xlu0 %5800
          %5804 = vset.pattern.permute.xlu0 0
          %5805 = vperm.xlu0 %5804, %v5431
          %v5806 = vpop.permute.xlu0 %5805
          %5809 = vset.pattern.permute.xlu0 0
          %5810 = vperm.xlu0 %5809, %v5432
          %v5811 = vpop.permute.xlu0 %5810
          %5814 = vset.pattern.permute.xlu0 0
          %5815 = vperm.xlu0 %5814, %v5433
          %v5816 = vpop.permute.xlu0 %5815
          %v5818 = vmul.f32 %v5434, %v5501
          %v5819 = vmul.f32 %v5435, %v5506
          %v5820 = vmul.f32 %v5436, %v5511
          %v5821 = vmul.f32 %v5437, %v5516
          %v5822 = vmul.f32 %v5438, %v5521
          %v5823 = vmul.f32 %v5439, %v5526
          %v5824 = vmul.f32 %v5440, %v5531
          %v5825 = vmul.f32 %v5441, %v5536
          %v5826 = vmul.f32 %v5442, %v5541
          %v5827 = vmul.f32 %v5443, %v5546
          %v5828 = vmul.f32 %v5444, %v5551
          %v5829 = vmul.f32 %v5445, %v5556
          %v5830 = vmul.f32 %v5446, %v5561
          %v5831 = vmul.f32 %v5447, %v5566
          %v5832 = vmul.f32 %v5448, %v5571
          %v5833 = vmul.f32 %v5449, %v5576
          %v5834 = vmul.f32 %v5450, %v5581
          %v5835 = vmul.f32 %v5451, %v5586
          %v5836 = vmul.f32 %v5452, %v5591
          %v5837 = vmul.f32 %v5453, %v5596
          %v5838 = vmul.f32 %v5454, %v5601
          %v5839 = vmul.f32 %v5455, %v5606
          %v5840 = vmul.f32 %v5456, %v5611
          %v5841 = vmul.f32 %v5457, %v5616
          %v5842 = vmul.f32 %v5458, %v5621
          %v5843 = vmul.f32 %v5459, %v5626
          %v5844 = vmul.f32 %v5460, %v5631
          %v5845 = vmul.f32 %v5461, %v5636
          %v5846 = vmul.f32 %v5462, %v5641
          %v5847 = vmul.f32 %v5463, %v5646
          %v5848 = vmul.f32 %v5464, %v5651
          %v5849 = vmul.f32 %v5465, %v5656
          %v5850 = vmul.f32 %v5466, %v5661
          %v5851 = vmul.f32 %v5467, %v5666
          %v5852 = vmul.f32 %v5468, %v5671
          %v5853 = vmul.f32 %v5469, %v5676
          %v5854 = vmul.f32 %v5470, %v5681
          %v5855 = vmul.f32 %v5471, %v5686
          %v5856 = vmul.f32 %v5472, %v5691
          %v5857 = vmul.f32 %v5473, %v5696
          %v5858 = vmul.f32 %v5474, %v5701
          %v5859 = vmul.f32 %v5475, %v5706
          %v5860 = vmul.f32 %v5476, %v5711
          %v5861 = vmul.f32 %v5477, %v5716
          %v5862 = vmul.f32 %v5478, %v5721
          %v5863 = vmul.f32 %v5479, %v5726
          %v5864 = vmul.f32 %v5480, %v5731
          %v5865 = vmul.f32 %v5481, %v5736
          %v5866 = vmul.f32 %v5482, %v5741
          %v5867 = vmul.f32 %v5483, %v5746
          %v5868 = vmul.f32 %v5484, %v5751
          %v5869 = vmul.f32 %v5485, %v5756
          %v5870 = vmul.f32 %v5486, %v5761
          %v5871 = vmul.f32 %v5487, %v5766
          %v5872 = vmul.f32 %v5488, %v5771
          %v5873 = vmul.f32 %v5489, %v5776
          %v5874 = vmul.f32 %v5490, %v5781
          %v5875 = vmul.f32 %v5491, %v5786
          %v5876 = vmul.f32 %v5492, %v5791
          %v5877 = vmul.f32 %v5493, %v5796
          %v5878 = vmul.f32 %v5494, %v5801
          %v5879 = vmul.f32 %v5495, %v5806
          %v5880 = vmul.f32 %v5496, %v5811
          %v5881 = vmul.f32 %v5497, %v5816
          %5898 = vrot.lane.b32.xlu0 %v5834, 64
          %v5899 = vpop.permute.xlu0 %5898
          %5900 = vrot.lane.b32.xlu0 %v5835, 64
          %v5901 = vpop.permute.xlu0 %5900
          %5902 = vrot.lane.b32.xlu0 %v5836, 64
          %v5903 = vpop.permute.xlu0 %5902
          %5904 = vrot.lane.b32.xlu0 %v5837, 64
          %v5905 = vpop.permute.xlu0 %5904
          %5906 = vrot.lane.b32.xlu0 %v5838, 64
          %v5907 = vpop.permute.xlu0 %5906
          %5908 = vrot.lane.b32.xlu0 %v5839, 64
          %v5909 = vpop.permute.xlu0 %5908
          %5910 = vrot.lane.b32.xlu0 %v5840, 64
          %v5911 = vpop.permute.xlu0 %5910
          %5912 = vrot.lane.b32.xlu0 %v5841, 64
          %v5913 = vpop.permute.xlu0 %5912
          %5914 = vrot.lane.b32.xlu0 %v5842, 64
          %v5915 = vpop.permute.xlu0 %5914
          %5916 = vrot.lane.b32.xlu0 %v5843, 64
          %v5917 = vpop.permute.xlu0 %5916
          %5918 = vrot.lane.b32.xlu0 %v5844, 64
          %v5919 = vpop.permute.xlu0 %5918
          %5920 = vrot.lane.b32.xlu0 %v5845, 64
          %v5921 = vpop.permute.xlu0 %5920
          %5922 = vrot.lane.b32.xlu0 %v5846, 64
          %v5923 = vpop.permute.xlu0 %5922
          %5924 = vrot.lane.b32.xlu0 %v5847, 64
          %v5925 = vpop.permute.xlu0 %5924
          %5926 = vrot.lane.b32.xlu0 %v5848, 64
          %v5927 = vpop.permute.xlu0 %5926
          %5928 = vrot.lane.b32.xlu0 %v5849, 64
          %v5929 = vpop.permute.xlu0 %5928
          %5962 = vrot.lane.b32.xlu0 %v5866, 64
          %v5963 = vpop.permute.xlu0 %5962
          %5964 = vrot.lane.b32.xlu0 %v5867, 64
          %v5965 = vpop.permute.xlu0 %5964
          %5966 = vrot.lane.b32.xlu0 %v5868, 64
          %v5967 = vpop.permute.xlu0 %5966
          %5968 = vrot.lane.b32.xlu0 %v5869, 64
          %v5969 = vpop.permute.xlu0 %5968
          %5970 = vrot.lane.b32.xlu0 %v5870, 64
          %v5971 = vpop.permute.xlu0 %5970
          %5972 = vrot.lane.b32.xlu0 %v5871, 64
          %v5973 = vpop.permute.xlu0 %5972
          %5974 = vrot.lane.b32.xlu0 %v5872, 64
          %v5975 = vpop.permute.xlu0 %5974
          %5976 = vrot.lane.b32.xlu0 %v5873, 64
          %v5977 = vpop.permute.xlu0 %5976
          %5978 = vrot.lane.b32.xlu0 %v5874, 64
          %v5979 = vpop.permute.xlu0 %5978
          %5980 = vrot.lane.b32.xlu0 %v5875, 64
          %v5981 = vpop.permute.xlu0 %5980
          %5982 = vrot.lane.b32.xlu0 %v5876, 64
          %v5983 = vpop.permute.xlu0 %5982
          %5984 = vrot.lane.b32.xlu0 %v5877, 64
          %v5985 = vpop.permute.xlu0 %5984
          %5986 = vrot.lane.b32.xlu0 %v5878, 64
          %v5987 = vpop.permute.xlu0 %5986
          %5988 = vrot.lane.b32.xlu0 %v5879, 64
          %v5989 = vpop.permute.xlu0 %5988
          %5990 = vrot.lane.b32.xlu0 %v5880, 64
          %v5991 = vpop.permute.xlu0 %5990
          %5992 = vrot.lane.b32.xlu0 %v5881, 64
          %v5993 = vpop.permute.xlu0 %5992
          %v6010 = vsel %vm1772, %v5818, %v5899
          %v6011 = vsel %vm1772, %v5819, %v5901
          %v6012 = vsel %vm1772, %v5820, %v5903
          %v6013 = vsel %vm1772, %v5821, %v5905
          %v6014 = vsel %vm1772, %v5822, %v5907
          %v6015 = vsel %vm1772, %v5823, %v5909
          %v6016 = vsel %vm1772, %v5824, %v5911
          %v6017 = vsel %vm1772, %v5825, %v5913
          %v6018 = vsel %vm1772, %v5826, %v5915
          %v6019 = vsel %vm1772, %v5827, %v5917
          %v6020 = vsel %vm1772, %v5828, %v5919
          %v6021 = vsel %vm1772, %v5829, %v5921
          %v6022 = vsel %vm1772, %v5830, %v5923
          %v6023 = vsel %vm1772, %v5831, %v5925
          %v6024 = vsel %vm1772, %v5832, %v5927
          %v6025 = vsel %vm1772, %v5833, %v5929
          %v6026 = vsel %vm1772, %v5850, %v5963
          %v6027 = vsel %vm1772, %v5851, %v5965
          %v6028 = vsel %vm1772, %v5852, %v5967
          %v6029 = vsel %vm1772, %v5853, %v5969
          %v6030 = vsel %vm1772, %v5854, %v5971
          %v6031 = vsel %vm1772, %v5855, %v5973
          %v6032 = vsel %vm1772, %v5856, %v5975
          %v6033 = vsel %vm1772, %v5857, %v5977
          %v6034 = vsel %vm1772, %v5858, %v5979
          %v6035 = vsel %vm1772, %v5859, %v5981
          %v6036 = vsel %vm1772, %v5860, %v5983
          %v6037 = vsel %vm1772, %v5861, %v5985
          %v6038 = vsel %vm1772, %v5862, %v5987
          %v6039 = vsel %vm1772, %v5863, %v5989
          %v6040 = vsel %vm1772, %v5864, %v5991
          %v6041 = vsel %vm1772, %v5865, %v5993
          %6042 = vst [vmem:[%s1264] sm:$0xff] %v6010
          %6043 = vst [vmem:[%s1264 + $0x8] sm:$0xff] %v6026
          %6044 = vst [vmem:[%s1264 + $0x10] sm:$0xff] %v6011
          %6045 = vst [vmem:[%s1264 + $0x18] sm:$0xff] %v6027
          %6046 = vst [vmem:[%s1264 + $0x20] sm:$0xff] %v6012
          %6047 = vst [vmem:[%s1264 + $0x28] sm:$0xff] %v6028
          %6048 = vst [vmem:[%s1264 + $0x30] sm:$0xff] %v6013
          %6049 = vst [vmem:[%s1264 + $0x38] sm:$0xff] %v6029
          %6050 = vst [vmem:[%s1264 + $0x40] sm:$0xff] %v6014
          %6051 = vst [vmem:[%s1264 + $0x48] sm:$0xff] %v6030
          %6052 = vst [vmem:[%s1264 + $0x50] sm:$0xff] %v6015
          %6053 = vst [vmem:[%s1264 + $0x58] sm:$0xff] %v6031
          %6054 = vst [vmem:[%s1264 + $0x60] sm:$0xff] %v6016
          %6055 = vst [vmem:[%s1264 + $0x68] sm:$0xff] %v6032
          %6056 = vst [vmem:[%s1264 + $0x70] sm:$0xff] %v6017
          %6057 = vst [vmem:[%s1264 + $0x78] sm:$0xff] %v6033
          %6058 = vst [vmem:[%s1264 + $0x80] sm:$0xff] %v6018
          %6059 = vst [vmem:[%s1264 + $0x88] sm:$0xff] %v6034
          %6060 = vst [vmem:[%s1264 + $0x90] sm:$0xff] %v6019
          %6061 = vst [vmem:[%s1264 + $0x98] sm:$0xff] %v6035
          %6062 = vst [vmem:[%s1264 + $0xa0] sm:$0xff] %v6020
          %6063 = vst [vmem:[%s1264 + $0xa8] sm:$0xff] %v6036
          %6064 = vst [vmem:[%s1264 + $0xb0] sm:$0xff] %v6021
          %6065 = vst [vmem:[%s1264 + $0xb8] sm:$0xff] %v6037
          %6066 = vst [vmem:[%s1264 + $0xc0] sm:$0xff] %v6022
          %6067 = vst [vmem:[%s1264 + $0xc8] sm:$0xff] %v6038
          %6068 = vst [vmem:[%s1264 + $0xd0] sm:$0xff] %v6023
          %6069 = vst [vmem:[%s1264 + $0xd8] sm:$0xff] %v6039
          %6070 = vst [vmem:[%s1264 + $0xe0] sm:$0xff] %v6024
          %6071 = vst [vmem:[%s1264 + $0xe8] sm:$0xff] %v6040
          %6072 = vst [vmem:[%s1264 + $0xf0] sm:$0xff] %v6025
          %6073 = vst [vmem:[%s1264 + $0xf8] sm:$0xff] %v6041
        $region199: #{tpu_custom_call.1} parent=174 // pred_fallthru
          _
        %s6074 = sand.u32 %s161, 1
        %s6075 = scalar_lea.sflag [#allocation10], %s6074
        %s6076 = sand.u32 %s161, 1
        %s6077 = smul.addr %s6076, 256
        %s6078 = scalar_lea.vmem [#allocation9], %s6077
        // Predicated region
        $region200: #{tpu_custom_call.1} parent=174 // pred_check
          %p6079 = pneg %p171
        $region201: #{tpu_custom_call.1} parent=174 // pred_check_branch
          %6081 = sbr.rel (%p6079) target = $region203
        $region202: #{tpu_custom_call.1} parent=174 // pred_region
          %s6082 = smul.u32 16, %s24
          %s6084 = ssub.s32 4096, 4096
          %6085 = vsyncadd %s6075, %s6084
          %s6086 = smul.addr %s6082, 2
          %s6087 = smul.addr %s23, 64
          %s6088 = sadd.s32 %s6086, %s6087
          %s6089 = smul.addr %s6088, 128
          %s6090 = scalar_lea.hbm %s4, %s6089
          %s6091 = sshll.u32 %s6078, 4
          %s6092 = int_to_ptr.vmem [resolvable:$true] %s6091
          %6097 = dma.vmem_to_hbm [thread:$0]  %s6092, 4096, %s6090, %s6075, 256, 256, 16
        $region203: #{tpu_custom_call.1} parent=174 // pred_fallthru
          _
      $region175: #{tpu_custom_call.1} parent=5 // pred_fallthru
        _
      %p6098 = scmp.le.s32.totalorder 2, %s13
      // Predicated region
      $region204: #{tpu_custom_call.1} parent=5 // pred_check
        %p6099 = pneg %p6098
      $region205: #{tpu_custom_call.1} parent=5 // pred_check_branch
        %6101 = sbr.rel (%p6099) target = $region207
      $region206: #{tpu_custom_call.1} parent=5 // pred_region
        %s6102 = ssub.s32 %s13, 2
        // Predicated region
        $region208: #{tpu_custom_call.1} parent=206 // pred_check
          %p6103 = pneg %p177
        $region209: #{tpu_custom_call.1} parent=206 // pred_check_branch
          %6105 = sbr.rel (%p6103) target = $region211
        $region210: #{tpu_custom_call.1} parent=206 // pred_region
          %s6106 = sand.u32 %s162, 1
          %s6107 = scalar_lea.sflag [#allocation10], %s6106
          %s6108 = sand.u32 %s162, 1
          %s6109 = smul.addr %s6108, 256
          %s6110 = scalar_lea.vmem [#allocation9], %s6109
          %6111 = dma.done %s6107, 4096
        $region211: #{tpu_custom_call.1} parent=206 // pred_fallthru
          _
      $region207: #{tpu_custom_call.1} parent=5 // pred_fallthru
        _
    $region6: #{tpu_custom_call.1} parent=1 // loop_footer
      %s17 = sadd.s32 1, %s13
    $region7: #{tpu_custom_call.1} parent=1 // loop_footer_branch
      %12 = sbr.rel target = $region3
    $region8: #{tpu_custom_call.1} parent=1 // loop_exit
      _
    %6112 = vsyncpa [#allocation10], 1
    %s6113 = scalar_lea.sflag [#allocation10], 1
    %6114 = vsyncpa %s6113, 1

</llo_original>
